<compile_context>
chip_gen: v7x
topology: tpu7x:2x2x1
jax: 0.10.0
libtpu: 0.0.40
codegen_flags: <defaults>
</compile_context>

<pallas_src>
import functools
import random

import jax
import jax.numpy as jnp
from jax.experimental import pallas as pl
from jax.experimental.pallas import tpu as pltpu

# Problem sizes (small, consistent with the module)
B = 2           # batch
S_VID = 8       # encoder (video) sequence length
T_TRG = 8       # target sequence length
HID = 32        # hid_dim
EMB = 16        # emb_dim
OUT = 30        # output_size (hard-coded by `.view(-1, 30)` in the reference)
OUT_PAD = 128   # lane-dense padded logits / one-hot width
LIN = 256       # encoder Linear(2 -> 256) output / encoder GRU input size
FC1 = 256       # fc_1 output width
NEG = -1e30     # pad-lane logit bias (ignored by argmax and log-sum-exp, f32 only)
NSTEP = T_TRG - 1


# --------------------------------------------------------------------------------------
# Packed parameter blob layouts (static, shared by init_params and the kernel)
# --------------------------------------------------------------------------------------
_SPEC256 = (
    ("enc_wl_T", 2), ("enc_bl", 1),
    ("w1h_T", HID), ("w1c_T", HID), ("b1", 1),
    ("E_fc1", OUT_PAD),
)
_SPEC128 = (
    ("enc_wih_T", LIN), ("enc_gi_bias", 1),
    ("w2_T", FC1), ("b2", 1),
)
_SPEC32 = (
    ("enc_whh_r_T", HID), ("enc_whh_z_T", HID), ("enc_whh_n_T", HID), ("enc_bhn", 1),
    ("E_gi_r", OUT_PAD), ("E_gi_z", OUT_PAD), ("E_gi_n", OUT_PAD),
    ("dWc_r_T", HID), ("dWc_z_T", HID), ("dWc_n_T", HID),
    ("dWhh_r_T", HID), ("dWhh_z_T", HID), ("dWhh_n_T", HID),
    ("dec_b_r", 1), ("dec_b_z", 1), ("dec_b_in", 1), ("dec_b_hn", 1),
)


def _layout(spec):
    d, off = {}, 0
    for name, rows in spec:
        d[name] = (off, rows)
        off += rows
    return d


_L256, _L128, _L32 = _layout(_SPEC256), _layout(_SPEC128), _layout(_SPEC32)


# --------------------------------------------------------------------------------------
# Fused kernel: encoder GRU + decoder loop (unrolled) + deferred batched CE loss
# --------------------------------------------------------------------------------------
def _fused_kernel(tf_schedule,
                  src_ref, trg_oh_ref, w256_ref, w128_ref, w32_ref,
                  loss_ref,
                  hid_scr, fc1_scr):
    f32 = jnp.float32
    dot = functools.partial(jnp.dot, preferred_element_type=f32)

    def g256(name):
        o, n = _L256[name]
        return w256_ref[o:o + n, :]

    def g128(name):
        o, n = _L128[name]
        return w128_ref[o:o + n, :]

    def g32(name):
        o, n = _L32[name]
        return w32_ref[o:o + n, :]

    # ------------------------------- Encoder -----------------------------------------
    # TODO(synk): Dropout(0.5) between Linear and ReLU is omitted (eval mode).
    x_all = jnp.maximum(dot(src_ref[...], g256("enc_wl_T")) + g256("enc_bl"), 0.0)
    # ih gates for all steps at once (lanes >= 3H are zero-padded)
    gi_all = dot(x_all, g128("enc_wih_T")) + g128("enc_gi_bias")        # (S*B, 128)
    gi_r_all = gi_all[:, 0:HID]          # per-gate split done ONCE, off the per-step chain
    gi_z_all = gi_all[:, HID:2 * HID]
    gi_n_all = gi_all[:, 2 * HID:3 * HID]

    ewhh_r = g32("enc_whh_r_T")
    ewhh_z = g32("enc_whh_z_T")
    ewhh_n = g32("enc_whh_n_T")
    ebhn = g32("enc_bhn")

    # step 0 with h == 0 (hh matmuls vanish)
    r0 = jax.nn.sigmoid(gi_r_all[0:B])
    z0 = jax.nn.sigmoid(gi_z_all[0:B])
    n0 = jnp.tanh(gi_n_all[0:B] + r0 * ebhn)
    h = n0 - z0 * n0

    for t in range(1, S_VID):            # true recurrence -> static unroll, per-gate refs
        gh_r = dot(h, ewhh_r)
        gh_z = dot(h, ewhh_z)
        gh_n = dot(h, ewhh_n) + ebhn
        r = jax.nn.sigmoid(gi_r_all[t * B:(t + 1) * B] + gh_r)
        z = jax.nn.sigmoid(gi_z_all[t * B:(t + 1) * B] + gh_z)
        n = jnp.tanh(gi_n_all[t * B:(t + 1) * B] + r * gh_n)
        h = n + z * (h - n)

    context = h                                                         # (B, HID)
    hidden = h                                                          # hidden = context.clone()

    # ------------------- Decoder precompute (loop-invariant, off the chain) ----------
    gi_ctx_r = dot(context, g32("dWc_r_T")) + g32("dec_b_r")            # (B, HID)
    gi_ctx_z = dot(context, g32("dWc_z_T")) + g32("dec_b_z")
    gi_ctx_n = dot(context, g32("dWc_n_T")) + g32("dec_b_in")
    fc1_ctx = dot(context, g256("w1c_T")) + g256("b1")                  # (B, FC1)

    E_gi_r = g32("E_gi_r")
    E_gi_z = g32("E_gi_z")
    E_gi_n = g32("E_gi_n")
    E_fc1 = g256("E_fc1")
    dwhh_r = g32("dWhh_r_T")
    dwhh_z = g32("dWhh_z_T")
    dwhh_n = g32("dWhh_n_T")
    db_hn = g32("dec_b_hn")
    w1h_T = g256("w1h_T")
    w2_T = g128("w2_T")
    b2 = g128("b2")

    # Teacher-forced inputs are known up front: precompute their embedding contributions
    # for ALL target tokens in one batched matmul each (time-major rows t*B + b).
    trg_oh = trg_oh_ref[...]                                            # (T*B, 128)
    trg_gi_r = dot(trg_oh, E_gi_r)                                      # (T*B, HID)
    trg_gi_z = dot(trg_oh, E_gi_z)
    trg_gi_n = dot(trg_oh, E_gi_n)
    trg_fc1 = dot(trg_oh, E_fc1)                                        # (T*B, FC1)

    lane_f = jax.lax.broadcasted_iota(jnp.int32, (B, OUT_PAD), 1).astype(f32)
    pad_f = float(OUT_PAD)

    # step-1 decoder input = trg[0]
    cur_gi_r = trg_gi_r[0:B]
    cur_gi_z = trg_gi_z[0:B]
    cur_gi_n = trg_gi_n[0:B]
    cur_fc1_base = trg_fc1[0:B] + fc1_ctx        # emb + context + b1 contribution to fc_1

    # ------------------------------ Decoder loop --------------------------------------
    for t in range(1, T_TRG):                    # 7 steps, statically unrolled
        # GRU cell on [emb ; context]; ctx/bias terms hoisted, per-gate hh matmuls
        gh_r = dot(hidden, dwhh_r)
        gh_z = dot(hidden, dwhh_z)
        gh_n = dot(hidden, dwhh_n) + db_hn
        r = jax.nn.sigmoid(cur_gi_r + gi_ctx_r + gh_r)
        z = jax.nn.sigmoid(cur_gi_z + gi_ctx_z + gh_z)
        n = jnp.tanh(cur_gi_n + gi_ctx_n + r * gh_n)
        hidden = n + z * (hidden - n)

        # stash for the deferred (batched) logits / CE pass
        row = (t - 1) * B
        hid_scr[row:row + B, :] = hidden
        fc1_scr[row:row + B, :] = cur_fc1_base

        if t < T_TRG - 1:                        # prepare next step's input
            if tf_schedule[t - 1]:
                # teacher forcing: next input = trg[t] (precomputed, just sliced)
                cur_gi_r = trg_gi_r[t * B:(t + 1) * B]
                cur_gi_z = trg_gi_z[t * B:(t + 1) * B]
                cur_gi_n = trg_gi_n[t * B:(t + 1) * B]
                cur_fc1_base = trg_fc1[t * B:(t + 1) * B] + fc1_ctx
            else:
                # argmax feedback: this step's logits are on the critical path
                o = jnp.maximum(cur_fc1_base + dot(hidden, w1h_T), 0.0)
                pred = dot(o, w2_T) + b2                                # (B, 128)
                m = jnp.max(pred, axis=-1, keepdims=True)
                cand = jnp.where(pred == m, lane_f, pad_f)              # first-max tie-break
                tok_f = jnp.min(cand, axis=-1, keepdims=True)
                oh = (lane_f == tok_f).astype(f32)                      # one-hot of argmax
                cur_gi_r = dot(oh, E_gi_r)
                cur_gi_z = dot(oh, E_gi_z)
                cur_gi_n = dot(oh, E_gi_n)
                cur_fc1_base = dot(oh, E_fc1) + fc1_ctx

    # ------------- Deferred, batched fc_1 / fc_2 / cross-entropy (M = 14) -------------
    fc1_all = fc1_scr[...] + dot(hid_scr[...], w1h_T)                   # (NSTEP*B, FC1)
    o_all = jnp.maximum(fc1_all, 0.0)
    pred_all = dot(o_all, w2_T) + b2                                    # (NSTEP*B, 128)
    label_oh = trg_oh[B:, :]                                            # labels = trg[1:]
    m_all = jnp.max(pred_all, axis=-1, keepdims=True)
    lse = m_all + jnp.log(jnp.sum(jnp.exp(pred_all - m_all), axis=-1, keepdims=True))
    picked = jnp.sum(label_oh * pred_all, axis=-1, keepdims=True)       # (NSTEP*B, 1)
    loss_ref[...] = jnp.sum(lse - picked, axis=0, keepdims=True) / float(NSTEP * B)


# --------------------------------------------------------------------------------------
# Wrapper
# --------------------------------------------------------------------------------------
def model_forward(vid, trg, blobs, tf_schedule):
    """vid: (B, S, 2) f32, trg: (B, T) int32, tf_schedule: static tuple of bool."""
    # time-major flatten of the video input (tiny one-time layout op)
    src = jnp.transpose(vid, (1, 0, 2)).reshape(S_VID * B, 2).astype(jnp.float32)
    # time-major one-hot of the target tokens (row = t*B + b): serves as the TF-input
    # selector AND the CE label mask — pure layout plumbing in the wrapper (8 KiB).
    trg_tm = jnp.transpose(trg.astype(jnp.int32), (1, 0)).reshape(T_TRG * B, 1)
    trg_oh = (trg_tm == jnp.arange(OUT_PAD, dtype=jnp.int32)[None, :]).astype(jnp.float32)

    kernel = functools.partial(_fused_kernel, tuple(bool(x) for x in tf_schedule))
    loss = pl.pallas_call(
        kernel,
        out_shape=jax.ShapeDtypeStruct((1, 1), jnp.float32),
        scratch_shapes=[
            pltpu.VMEM((NSTEP * B, HID), jnp.float32),   # per-step hidden states
            pltpu.VMEM((NSTEP * B, FC1), jnp.float32),   # per-step fc_1 emb+ctx base
        ],
    )(src, trg_oh, blobs["w256"], blobs["w128"], blobs["w32"])
    return loss[0, 0]


# --------------------------------------------------------------------------------------
# Parameter init (deterministic, synthetic) + packing into 3 blobs
# --------------------------------------------------------------------------------------
def init_params(key):
    ks = jax.random.split(key, 15)

    def nrm(k, shape, scale=0.1):
        return jax.random.normal(k, shape, dtype=jnp.float32) * scale

    enc_wl = nrm(ks[0], (LIN, 2))                 # Linear(2, 256)
    enc_bl = nrm(ks[1], (LIN,))
    enc_wih = nrm(ks[2], (3 * HID, LIN))          # GRU(256, HID), gate order [r, z, n]
    enc_whh = nrm(ks[3], (3 * HID, HID))
    enc_bih = nrm(ks[4], (3 * HID,))
    enc_bhh = nrm(ks[5], (3 * HID,))

    emb = nrm(ks[6], (OUT, EMB), 1.0)             # Embedding(OUT, EMB)
    dec_wih = nrm(ks[7], (3 * HID, EMB + HID))    # GRU(EMB+HID, HID)
    dec_whh = nrm(ks[8], (3 * HID, HID))
    dec_bih = nrm(ks[9], (3 * HID,))
    dec_bhh = nrm(ks[10], (3 * HID,))
    w1 = nrm(ks[11], (FC1, EMB + 2 * HID))        # fc_1
    b1 = nrm(ks[12], (FC1,))
    w2 = nrm(ks[13], (OUT, FC1))                  # fc_2
    b2 = nrm(ks[14], (OUT,))

    # Encoder: fold b_ih + b_hh for the r/z gates into the hoisted input-gate bias;
    # b_hn stays separate (it sits inside the r*(...) term of the n gate).
    enc_gi_bias = jnp.concatenate([
        enc_bih[:HID] + enc_bhh[:HID],
        enc_bih[HID:2 * HID] + enc_bhh[HID:2 * HID],
        enc_bih[2 * HID:],
    ]).reshape(1, 3 * HID)

    # Fold embedding + ReLU into downstream weights: relu(onehot@E) == onehot@relu(E),
    # so precompose relu(E) with the decoder GRU emb-columns and the fc_1 emb-columns.
    relu_emb = jnp.zeros((OUT_PAD, EMB), jnp.float32).at[:OUT].set(jnp.maximum(emb, 0.0))
    dwih_e = dec_wih[:, :EMB]                     # (3H, EMB)
    dwih_c = dec_wih[:, EMB:]                     # (3H, HID)
    w1_T = w1.T                                   # (EMB+2H, FC1)

    t256 = {
        "enc_wl_T": enc_wl.T,                                   # (2, 256)
        "enc_bl": enc_bl.reshape(1, LIN),
        "w1h_T": w1_T[EMB:EMB + HID],                           # (HID, 256)
        "w1c_T": w1_T[EMB + HID:],                              # (HID, 256)
        "b1": b1.reshape(1, FC1),
        "E_fc1": relu_emb @ w1_T[:EMB],                         # (128, 256)
    }
    t128 = {
        "enc_wih_T": jnp.zeros((LIN, OUT_PAD), jnp.float32).at[:, :3 * HID].set(enc_wih.T),
        "enc_gi_bias": jnp.zeros((1, OUT_PAD), jnp.float32).at[:, :3 * HID].set(enc_gi_bias),
        "w2_T": jnp.zeros((FC1, OUT_PAD), jnp.float32).at[:, :OUT].set(w2.T),
        "b2": jnp.full((1, OUT_PAD), NEG, jnp.float32).at[0, :OUT].set(b2),
    }
    t32 = {
        "enc_whh_r_T": enc_whh[:HID].T,
        "enc_whh_z_T": enc_whh[HID:2 * HID].T,
        "enc_whh_n_T": enc_whh[2 * HID:].T,
        "enc_bhn": enc_bhh[2 * HID:].reshape(1, HID),
        "E_gi_r": relu_emb @ dwih_e[:HID].T,                    # (128, HID)
        "E_gi_z": relu_emb @ dwih_e[HID:2 * HID].T,
        "E_gi_n": relu_emb @ dwih_e[2 * HID:].T,
        "dWc_r_T": dwih_c[:HID].T,
        "dWc_z_T": dwih_c[HID:2 * HID].T,
        "dWc_n_T": dwih_c[2 * HID:].T,
        "dWhh_r_T": dec_whh[:HID].T,
        "dWhh_z_T": dec_whh[HID:2 * HID].T,
        "dWhh_n_T": dec_whh[2 * HID:].T,
        "dec_b_r": (dec_bih[:HID] + dec_bhh[:HID]).reshape(1, HID),
        "dec_b_z": (dec_bih[HID:2 * HID] + dec_bhh[HID:2 * HID]).reshape(1, HID),
        "dec_b_in": dec_bih[2 * HID:].reshape(1, HID),
        "dec_b_hn": dec_bhh[2 * HID:].reshape(1, HID),
    }

    def pack(spec, tensors):
        parts = []
        for name, rows in spec:
            arr = jnp.asarray(tensors[name], jnp.float32)
            assert arr.shape[0] == rows, (name, arr.shape, rows)
            parts.append(arr)
        return jnp.concatenate(parts, axis=0)

    return {
        "w256": pack(_SPEC256, t256),   # (196, 256)
        "w128": pack(_SPEC128, t128),   # (514, 128)
        "w32": pack(_SPEC32, t32),      # (677, 32)
    }


if __name__ == "__main__":
    key = jax.random.PRNGKey(0)
    kp, kv, kt = jax.random.split(key, 3)
    blobs = init_params(kp)

    vid = jax.random.normal(kv, (B, S_VID, 2), dtype=jnp.float32)
    trg = jax.random.randint(kt, (B, T_TRG), 0, OUT, dtype=jnp.int32)

    random.seed(0)  # deterministic teacher-forcing schedule (trace-time, like the ref)
    tf_schedule = tuple(random.random() < 0.55 for _ in range(T_TRG - 1))

    fwd = jax.jit(model_forward, static_argnums=3)
    loss = fwd(vid, trg, blobs, tf_schedule)
    jax.block_until_ready(loss)
    print("KERNEL_OK")
</pallas_src>

<mosaic_0001>
module attributes {stable_mosaic.version = 11 : i64} {
  func.func @_fused_kernel(%arg0: memref<16x2xf32, #tpu.memory_space<vmem>>, %arg1: memref<16x128xf32, #tpu.memory_space<vmem>>, %arg2: memref<196x256xf32, #tpu.memory_space<vmem>>, %arg3: memref<514x128xf32, #tpu.memory_space<vmem>>, %arg4: memref<677x32xf32, #tpu.memory_space<vmem>>, %arg5: memref<1x1xf32, #tpu.memory_space<vmem>>, %arg6: memref<14x32xf32, #tpu.memory_space<vmem>>, %arg7: memref<14x256xf32, #tpu.memory_space<vmem>>) attributes {dimension_semantics = [], scalar_prefetch = 0 : i64, scratch_operands = 2 : i64, tpu.core_type = #tpu.core_type<tc>} {
    %c0 = arith.constant 0 : index
    %c0_0 = arith.constant 0 : index
    %0 = vector.load %arg0[%c0, %c0_0] : memref<16x2xf32, #tpu.memory_space<vmem>>, vector<16x2xf32>
    %c0_1 = arith.constant 0 : index
    %c0_2 = arith.constant 0 : index
    %1 = vector.load %arg2[%c0_1, %c0_2] : memref<196x256xf32, #tpu.memory_space<vmem>>, vector<2x256xf32>
    %cst = arith.constant dense<0.000000e+00> : vector<16x256xf32>
    %2 = tpu.matmul %0, %1, %cst {dimension_numbers = #tpu.dot_dimension_numbers<[1], [0], [0], [1], [0, 0, 1, 1], [], []>} : vector<16x2xf32>, vector<2x256xf32>, vector<16x256xf32> -> vector<16x256xf32>
    %c2 = arith.constant 2 : index
    %c0_3 = arith.constant 0 : index
    %3 = vector.load %arg2[%c2, %c0_3] : memref<196x256xf32, #tpu.memory_space<vmem>>, vector<1x256xf32>
    %4 = vector.broadcast %3 : vector<1x256xf32> to vector<16x256xf32>
    %5 = arith.addf %2, %4 : vector<16x256xf32>
    %cst_4 = arith.constant 0.000000e+00 : f32
    %6 = vector.broadcast %cst_4 : f32 to vector<16x256xf32>
    %7 = arith.maximumf %5, %6 : vector<16x256xf32>
    %c0_5 = arith.constant 0 : index
    %c0_6 = arith.constant 0 : index
    %8 = vector.load %arg3[%c0_5, %c0_6] : memref<514x128xf32, #tpu.memory_space<vmem>>, vector<256x128xf32>
    %cst_7 = arith.constant dense<0.000000e+00> : vector<16x128xf32>
    %9 = tpu.matmul %7, %8, %cst_7 {dimension_numbers = #tpu.dot_dimension_numbers<[1], [0], [0], [1], [0, 0, 1, 1], [], []>} : vector<16x256xf32>, vector<256x128xf32>, vector<16x128xf32> -> vector<16x128xf32>
    %c256 = arith.constant 256 : index
    %c0_8 = arith.constant 0 : index
    %10 = vector.load %arg3[%c256, %c0_8] : memref<514x128xf32, #tpu.memory_space<vmem>>, vector<1x128xf32>
    %11 = vector.broadcast %10 : vector<1x128xf32> to vector<16x128xf32>
    %12 = arith.addf %9, %11 : vector<16x128xf32>
    %13 = vector.extract_strided_slice %12 {offsets = [0, 0], sizes = [16, 32], strides = [1, 1]} : vector<16x128xf32> to vector<16x32xf32>
    %14 = vector.extract_strided_slice %12 {offsets = [0, 32], sizes = [16, 32], strides = [1, 1]} : vector<16x128xf32> to vector<16x32xf32>
    %15 = vector.extract_strided_slice %12 {offsets = [0, 64], sizes = [16, 32], strides = [1, 1]} : vector<16x128xf32> to vector<16x32xf32>
    %c0_9 = arith.constant 0 : index
    %c0_10 = arith.constant 0 : index
    %16 = vector.load %arg4[%c0_9, %c0_10] : memref<677x32xf32, #tpu.memory_space<vmem>>, vector<32x32xf32>
    %c32 = arith.constant 32 : index
    %c0_11 = arith.constant 0 : index
    %17 = vector.load %arg4[%c32, %c0_11] : memref<677x32xf32, #tpu.memory_space<vmem>>, vector<32x32xf32>
    %c64 = arith.constant 64 : index
    %c0_12 = arith.constant 0 : index
    %18 = vector.load %arg4[%c64, %c0_12] : memref<677x32xf32, #tpu.memory_space<vmem>>, vector<32x32xf32>
    %c96 = arith.constant 96 : index
    %c0_13 = arith.constant 0 : index
    %19 = vector.load %arg4[%c96, %c0_13] : memref<677x32xf32, #tpu.memory_space<vmem>>, vector<1x32xf32>
    %20 = vector.extract_strided_slice %13 {offsets = [0, 0], sizes = [2, 32], strides = [1, 1]} : vector<16x32xf32> to vector<2x32xf32>
    %21 = arith.negf %20 : vector<2x32xf32>
    %22 = math.exp %21 : vector<2x32xf32>
    %cst_14 = arith.constant 1.000000e+00 : f32
    %23 = vector.broadcast %cst_14 : f32 to vector<2x32xf32>
    %24 = arith.addf %23, %22 : vector<2x32xf32>
    %25 = arith.divf %23, %24 : vector<2x32xf32>
    %26 = vector.extract_strided_slice %14 {offsets = [0, 0], sizes = [2, 32], strides = [1, 1]} : vector<16x32xf32> to vector<2x32xf32>
    %27 = arith.negf %26 : vector<2x32xf32>
    %28 = math.exp %27 : vector<2x32xf32>
    %cst_15 = arith.constant 1.000000e+00 : f32
    %29 = vector.broadcast %cst_15 : f32 to vector<2x32xf32>
    %30 = arith.addf %29, %28 : vector<2x32xf32>
    %31 = arith.divf %29, %30 : vector<2x32xf32>
    %32 = vector.extract_strided_slice %15 {offsets = [0, 0], sizes = [2, 32], strides = [1, 1]} : vector<16x32xf32> to vector<2x32xf32>
    %33 = vector.broadcast %19 : vector<1x32xf32> to vector<2x32xf32>
    %34 = arith.mulf %25, %33 : vector<2x32xf32>
    %35 = arith.addf %32, %34 : vector<2x32xf32>
    %36 = math.tanh %35 : vector<2x32xf32>
    %37 = arith.mulf %31, %36 : vector<2x32xf32>
    %38 = arith.subf %36, %37 : vector<2x32xf32>
    %cst_16 = arith.constant dense<0.000000e+00> : vector<2x32xf32>
    %39 = tpu.matmul %38, %16, %cst_16 {dimension_numbers = #tpu.dot_dimension_numbers<[1], [0], [0], [1], [0, 0, 1, 1], [], []>} : vector<2x32xf32>, vector<32x32xf32>, vector<2x32xf32> -> vector<2x32xf32>
    %cst_17 = arith.constant dense<0.000000e+00> : vector<2x32xf32>
    %40 = tpu.matmul %38, %17, %cst_17 {dimension_numbers = #tpu.dot_dimension_numbers<[1], [0], [0], [1], [0, 0, 1, 1], [], []>} : vector<2x32xf32>, vector<32x32xf32>, vector<2x32xf32> -> vector<2x32xf32>
    %cst_18 = arith.constant dense<0.000000e+00> : vector<2x32xf32>
    %41 = tpu.matmul %38, %18, %cst_18 {dimension_numbers = #tpu.dot_dimension_numbers<[1], [0], [0], [1], [0, 0, 1, 1], [], []>} : vector<2x32xf32>, vector<32x32xf32>, vector<2x32xf32> -> vector<2x32xf32>
    %42 = vector.broadcast %19 : vector<1x32xf32> to vector<2x32xf32>
    %43 = arith.addf %41, %42 : vector<2x32xf32>
    %44 = vector.extract_strided_slice %13 {offsets = [2, 0], sizes = [2, 32], strides = [1, 1]} : vector<16x32xf32> to vector<2x32xf32>
    %45 = arith.addf %44, %39 : vector<2x32xf32>
    %46 = arith.negf %45 : vector<2x32xf32>
    %47 = math.exp %46 : vector<2x32xf32>
    %cst_19 = arith.constant 1.000000e+00 : f32
    %48 = vector.broadcast %cst_19 : f32 to vector<2x32xf32>
    %49 = arith.addf %48, %47 : vector<2x32xf32>
    %50 = arith.divf %48, %49 : vector<2x32xf32>
    %51 = vector.extract_strided_slice %14 {offsets = [2, 0], sizes = [2, 32], strides = [1, 1]} : vector<16x32xf32> to vector<2x32xf32>
    %52 = arith.addf %51, %40 : vector<2x32xf32>
    %53 = arith.negf %52 : vector<2x32xf32>
    %54 = math.exp %53 : vector<2x32xf32>
    %cst_20 = arith.constant 1.000000e+00 : f32
    %55 = vector.broadcast %cst_20 : f32 to vector<2x32xf32>
    %56 = arith.addf %55, %54 : vector<2x32xf32>
    %57 = arith.divf %55, %56 : vector<2x32xf32>
    %58 = vector.extract_strided_slice %15 {offsets = [2, 0], sizes = [2, 32], strides = [1, 1]} : vector<16x32xf32> to vector<2x32xf32>
    %59 = arith.mulf %50, %43 : vector<2x32xf32>
    %60 = arith.addf %58, %59 : vector<2x32xf32>
    %61 = math.tanh %60 : vector<2x32xf32>
    %62 = arith.subf %38, %61 : vector<2x32xf32>
    %63 = arith.mulf %57, %62 : vector<2x32xf32>
    %64 = arith.addf %61, %63 : vector<2x32xf32>
    %cst_21 = arith.constant dense<0.000000e+00> : vector<2x32xf32>
    %65 = tpu.matmul %64, %16, %cst_21 {dimension_numbers = #tpu.dot_dimension_numbers<[1], [0], [0], [1], [0, 0, 1, 1], [], []>} : vector<2x32xf32>, vector<32x32xf32>, vector<2x32xf32> -> vector<2x32xf32>
    %cst_22 = arith.constant dense<0.000000e+00> : vector<2x32xf32>
    %66 = tpu.matmul %64, %17, %cst_22 {dimension_numbers = #tpu.dot_dimension_numbers<[1], [0], [0], [1], [0, 0, 1, 1], [], []>} : vector<2x32xf32>, vector<32x32xf32>, vector<2x32xf32> -> vector<2x32xf32>
    %cst_23 = arith.constant dense<0.000000e+00> : vector<2x32xf32>
    %67 = tpu.matmul %64, %18, %cst_23 {dimension_numbers = #tpu.dot_dimension_numbers<[1], [0], [0], [1], [0, 0, 1, 1], [], []>} : vector<2x32xf32>, vector<32x32xf32>, vector<2x32xf32> -> vector<2x32xf32>
    %68 = vector.broadcast %19 : vector<1x32xf32> to vector<2x32xf32>
    %69 = arith.addf %67, %68 : vector<2x32xf32>
    %70 = vector.extract_strided_slice %13 {offsets = [4, 0], sizes = [2, 32], strides = [1, 1]} : vector<16x32xf32> to vector<2x32xf32>
    %71 = arith.addf %70, %65 : vector<2x32xf32>
    %72 = arith.negf %71 : vector<2x32xf32>
    %73 = math.exp %72 : vector<2x32xf32>
    %cst_24 = arith.constant 1.000000e+00 : f32
    %74 = vector.broadcast %cst_24 : f32 to vector<2x32xf32>
    %75 = arith.addf %74, %73 : vector<2x32xf32>
    %76 = arith.divf %74, %75 : vector<2x32xf32>
    %77 = vector.extract_strided_slice %14 {offsets = [4, 0], sizes = [2, 32], strides = [1, 1]} : vector<16x32xf32> to vector<2x32xf32>
    %78 = arith.addf %77, %66 : vector<2x32xf32>
    %79 = arith.negf %78 : vector<2x32xf32>
    %80 = math.exp %79 : vector<2x32xf32>
    %cst_25 = arith.constant 1.000000e+00 : f32
    %81 = vector.broadcast %cst_25 : f32 to vector<2x32xf32>
    %82 = arith.addf %81, %80 : vector<2x32xf32>
    %83 = arith.divf %81, %82 : vector<2x32xf32>
    %84 = vector.extract_strided_slice %15 {offsets = [4, 0], sizes = [2, 32], strides = [1, 1]} : vector<16x32xf32> to vector<2x32xf32>
    %85 = arith.mulf %76, %69 : vector<2x32xf32>
    %86 = arith.addf %84, %85 : vector<2x32xf32>
    %87 = math.tanh %86 : vector<2x32xf32>
    %88 = arith.subf %64, %87 : vector<2x32xf32>
    %89 = arith.mulf %83, %88 : vector<2x32xf32>
    %90 = arith.addf %87, %89 : vector<2x32xf32>
    %cst_26 = arith.constant dense<0.000000e+00> : vector<2x32xf32>
    %91 = tpu.matmul %90, %16, %cst_26 {dimension_numbers = #tpu.dot_dimension_numbers<[1], [0], [0], [1], [0, 0, 1, 1], [], []>} : vector<2x32xf32>, vector<32x32xf32>, vector<2x32xf32> -> vector<2x32xf32>
    %cst_27 = arith.constant dense<0.000000e+00> : vector<2x32xf32>
    %92 = tpu.matmul %90, %17, %cst_27 {dimension_numbers = #tpu.dot_dimension_numbers<[1], [0], [0], [1], [0, 0, 1, 1], [], []>} : vector<2x32xf32>, vector<32x32xf32>, vector<2x32xf32> -> vector<2x32xf32>
    %cst_28 = arith.constant dense<0.000000e+00> : vector<2x32xf32>
    %93 = tpu.matmul %90, %18, %cst_28 {dimension_numbers = #tpu.dot_dimension_numbers<[1], [0], [0], [1], [0, 0, 1, 1], [], []>} : vector<2x32xf32>, vector<32x32xf32>, vector<2x32xf32> -> vector<2x32xf32>
    %94 = vector.broadcast %19 : vector<1x32xf32> to vector<2x32xf32>
    %95 = arith.addf %93, %94 : vector<2x32xf32>
    %96 = vector.extract_strided_slice %13 {offsets = [6, 0], sizes = [2, 32], strides = [1, 1]} : vector<16x32xf32> to vector<2x32xf32>
    %97 = arith.addf %96, %91 : vector<2x32xf32>
    %98 = arith.negf %97 : vector<2x32xf32>
    %99 = math.exp %98 : vector<2x32xf32>
    %cst_29 = arith.constant 1.000000e+00 : f32
    %100 = vector.broadcast %cst_29 : f32 to vector<2x32xf32>
    %101 = arith.addf %100, %99 : vector<2x32xf32>
    %102 = arith.divf %100, %101 : vector<2x32xf32>
    %103 = vector.extract_strided_slice %14 {offsets = [6, 0], sizes = [2, 32], strides = [1, 1]} : vector<16x32xf32> to vector<2x32xf32>
    %104 = arith.addf %103, %92 : vector<2x32xf32>
    %105 = arith.negf %104 : vector<2x32xf32>
    %106 = math.exp %105 : vector<2x32xf32>
    %cst_30 = arith.constant 1.000000e+00 : f32
    %107 = vector.broadcast %cst_30 : f32 to vector<2x32xf32>
    %108 = arith.addf %107, %106 : vector<2x32xf32>
    %109 = arith.divf %107, %108 : vector<2x32xf32>
    %110 = vector.extract_strided_slice %15 {offsets = [6, 0], sizes = [2, 32], strides = [1, 1]} : vector<16x32xf32> to vector<2x32xf32>
    %111 = arith.mulf %102, %95 : vector<2x32xf32>
    %112 = arith.addf %110, %111 : vector<2x32xf32>
    %113 = math.tanh %112 : vector<2x32xf32>
    %114 = arith.subf %90, %113 : vector<2x32xf32>
    %115 = arith.mulf %109, %114 : vector<2x32xf32>
    %116 = arith.addf %113, %115 : vector<2x32xf32>
    %cst_31 = arith.constant dense<0.000000e+00> : vector<2x32xf32>
    %117 = tpu.matmul %116, %16, %cst_31 {dimension_numbers = #tpu.dot_dimension_numbers<[1], [0], [0], [1], [0, 0, 1, 1], [], []>} : vector<2x32xf32>, vector<32x32xf32>, vector<2x32xf32> -> vector<2x32xf32>
    %cst_32 = arith.constant dense<0.000000e+00> : vector<2x32xf32>
    %118 = tpu.matmul %116, %17, %cst_32 {dimension_numbers = #tpu.dot_dimension_numbers<[1], [0], [0], [1], [0, 0, 1, 1], [], []>} : vector<2x32xf32>, vector<32x32xf32>, vector<2x32xf32> -> vector<2x32xf32>
    %cst_33 = arith.constant dense<0.000000e+00> : vector<2x32xf32>
    %119 = tpu.matmul %116, %18, %cst_33 {dimension_numbers = #tpu.dot_dimension_numbers<[1], [0], [0], [1], [0, 0, 1, 1], [], []>} : vector<2x32xf32>, vector<32x32xf32>, vector<2x32xf32> -> vector<2x32xf32>
    %120 = vector.broadcast %19 : vector<1x32xf32> to vector<2x32xf32>
    %121 = arith.addf %119, %120 : vector<2x32xf32>
    %122 = vector.extract_strided_slice %13 {offsets = [8, 0], sizes = [2, 32], strides = [1, 1]} : vector<16x32xf32> to vector<2x32xf32>
    %123 = arith.addf %122, %117 : vector<2x32xf32>
    %124 = arith.negf %123 : vector<2x32xf32>
    %125 = math.exp %124 : vector<2x32xf32>
    %cst_34 = arith.constant 1.000000e+00 : f32
    %126 = vector.broadcast %cst_34 : f32 to vector<2x32xf32>
    %127 = arith.addf %126, %125 : vector<2x32xf32>
    %128 = arith.divf %126, %127 : vector<2x32xf32>
    %129 = vector.extract_strided_slice %14 {offsets = [8, 0], sizes = [2, 32], strides = [1, 1]} : vector<16x32xf32> to vector<2x32xf32>
    %130 = arith.addf %129, %118 : vector<2x32xf32>
    %131 = arith.negf %130 : vector<2x32xf32>
    %132 = math.exp %131 : vector<2x32xf32>
    %cst_35 = arith.constant 1.000000e+00 : f32
    %133 = vector.broadcast %cst_35 : f32 to vector<2x32xf32>
    %134 = arith.addf %133, %132 : vector<2x32xf32>
    %135 = arith.divf %133, %134 : vector<2x32xf32>
    %136 = vector.extract_strided_slice %15 {offsets = [8, 0], sizes = [2, 32], strides = [1, 1]} : vector<16x32xf32> to vector<2x32xf32>
    %137 = arith.mulf %128, %121 : vector<2x32xf32>
    %138 = arith.addf %136, %137 : vector<2x32xf32>
    %139 = math.tanh %138 : vector<2x32xf32>
    %140 = arith.subf %116, %139 : vector<2x32xf32>
    %141 = arith.mulf %135, %140 : vector<2x32xf32>
    %142 = arith.addf %139, %141 : vector<2x32xf32>
    %cst_36 = arith.constant dense<0.000000e+00> : vector<2x32xf32>
    %143 = tpu.matmul %142, %16, %cst_36 {dimension_numbers = #tpu.dot_dimension_numbers<[1], [0], [0], [1], [0, 0, 1, 1], [], []>} : vector<2x32xf32>, vector<32x32xf32>, vector<2x32xf32> -> vector<2x32xf32>
    %cst_37 = arith.constant dense<0.000000e+00> : vector<2x32xf32>
    %144 = tpu.matmul %142, %17, %cst_37 {dimension_numbers = #tpu.dot_dimension_numbers<[1], [0], [0], [1], [0, 0, 1, 1], [], []>} : vector<2x32xf32>, vector<32x32xf32>, vector<2x32xf32> -> vector<2x32xf32>
    %cst_38 = arith.constant dense<0.000000e+00> : vector<2x32xf32>
    %145 = tpu.matmul %142, %18, %cst_38 {dimension_numbers = #tpu.dot_dimension_numbers<[1], [0], [0], [1], [0, 0, 1, 1], [], []>} : vector<2x32xf32>, vector<32x32xf32>, vector<2x32xf32> -> vector<2x32xf32>
    %146 = vector.broadcast %19 : vector<1x32xf32> to vector<2x32xf32>
    %147 = arith.addf %145, %146 : vector<2x32xf32>
    %148 = vector.extract_strided_slice %13 {offsets = [10, 0], sizes = [2, 32], strides = [1, 1]} : vector<16x32xf32> to vector<2x32xf32>
    %149 = arith.addf %148, %143 : vector<2x32xf32>
    %150 = arith.negf %149 : vector<2x32xf32>
    %151 = math.exp %150 : vector<2x32xf32>
    %cst_39 = arith.constant 1.000000e+00 : f32
    %152 = vector.broadcast %cst_39 : f32 to vector<2x32xf32>
    %153 = arith.addf %152, %151 : vector<2x32xf32>
    %154 = arith.divf %152, %153 : vector<2x32xf32>
    %155 = vector.extract_strided_slice %14 {offsets = [10, 0], sizes = [2, 32], strides = [1, 1]} : vector<16x32xf32> to vector<2x32xf32>
    %156 = arith.addf %155, %144 : vector<2x32xf32>
    %157 = arith.negf %156 : vector<2x32xf32>
    %158 = math.exp %157 : vector<2x32xf32>
    %cst_40 = arith.constant 1.000000e+00 : f32
    %159 = vector.broadcast %cst_40 : f32 to vector<2x32xf32>
    %160 = arith.addf %159, %158 : vector<2x32xf32>
    %161 = arith.divf %159, %160 : vector<2x32xf32>
    %162 = vector.extract_strided_slice %15 {offsets = [10, 0], sizes = [2, 32], strides = [1, 1]} : vector<16x32xf32> to vector<2x32xf32>
    %163 = arith.mulf %154, %147 : vector<2x32xf32>
    %164 = arith.addf %162, %163 : vector<2x32xf32>
    %165 = math.tanh %164 : vector<2x32xf32>
    %166 = arith.subf %142, %165 : vector<2x32xf32>
    %167 = arith.mulf %161, %166 : vector<2x32xf32>
    %168 = arith.addf %165, %167 : vector<2x32xf32>
    %cst_41 = arith.constant dense<0.000000e+00> : vector<2x32xf32>
    %169 = tpu.matmul %168, %16, %cst_41 {dimension_numbers = #tpu.dot_dimension_numbers<[1], [0], [0], [1], [0, 0, 1, 1], [], []>} : vector<2x32xf32>, vector<32x32xf32>, vector<2x32xf32> -> vector<2x32xf32>
    %cst_42 = arith.constant dense<0.000000e+00> : vector<2x32xf32>
    %170 = tpu.matmul %168, %17, %cst_42 {dimension_numbers = #tpu.dot_dimension_numbers<[1], [0], [0], [1], [0, 0, 1, 1], [], []>} : vector<2x32xf32>, vector<32x32xf32>, vector<2x32xf32> -> vector<2x32xf32>
    %cst_43 = arith.constant dense<0.000000e+00> : vector<2x32xf32>
    %171 = tpu.matmul %168, %18, %cst_43 {dimension_numbers = #tpu.dot_dimension_numbers<[1], [0], [0], [1], [0, 0, 1, 1], [], []>} : vector<2x32xf32>, vector<32x32xf32>, vector<2x32xf32> -> vector<2x32xf32>
    %172 = vector.broadcast %19 : vector<1x32xf32> to vector<2x32xf32>
    %173 = arith.addf %171, %172 : vector<2x32xf32>
    %174 = vector.extract_strided_slice %13 {offsets = [12, 0], sizes = [2, 32], strides = [1, 1]} : vector<16x32xf32> to vector<2x32xf32>
    %175 = arith.addf %174, %169 : vector<2x32xf32>
    %176 = arith.negf %175 : vector<2x32xf32>
    %177 = math.exp %176 : vector<2x32xf32>
    %cst_44 = arith.constant 1.000000e+00 : f32
    %178 = vector.broadcast %cst_44 : f32 to vector<2x32xf32>
    %179 = arith.addf %178, %177 : vector<2x32xf32>
    %180 = arith.divf %178, %179 : vector<2x32xf32>
    %181 = vector.extract_strided_slice %14 {offsets = [12, 0], sizes = [2, 32], strides = [1, 1]} : vector<16x32xf32> to vector<2x32xf32>
    %182 = arith.addf %181, %170 : vector<2x32xf32>
    %183 = arith.negf %182 : vector<2x32xf32>
    %184 = math.exp %183 : vector<2x32xf32>
    %cst_45 = arith.constant 1.000000e+00 : f32
    %185 = vector.broadcast %cst_45 : f32 to vector<2x32xf32>
    %186 = arith.addf %185, %184 : vector<2x32xf32>
    %187 = arith.divf %185, %186 : vector<2x32xf32>
    %188 = vector.extract_strided_slice %15 {offsets = [12, 0], sizes = [2, 32], strides = [1, 1]} : vector<16x32xf32> to vector<2x32xf32>
    %189 = arith.mulf %180, %173 : vector<2x32xf32>
    %190 = arith.addf %188, %189 : vector<2x32xf32>
    %191 = math.tanh %190 : vector<2x32xf32>
    %192 = arith.subf %168, %191 : vector<2x32xf32>
    %193 = arith.mulf %187, %192 : vector<2x32xf32>
    %194 = arith.addf %191, %193 : vector<2x32xf32>
    %cst_46 = arith.constant dense<0.000000e+00> : vector<2x32xf32>
    %195 = tpu.matmul %194, %16, %cst_46 {dimension_numbers = #tpu.dot_dimension_numbers<[1], [0], [0], [1], [0, 0, 1, 1], [], []>} : vector<2x32xf32>, vector<32x32xf32>, vector<2x32xf32> -> vector<2x32xf32>
    %cst_47 = arith.constant dense<0.000000e+00> : vector<2x32xf32>
    %196 = tpu.matmul %194, %17, %cst_47 {dimension_numbers = #tpu.dot_dimension_numbers<[1], [0], [0], [1], [0, 0, 1, 1], [], []>} : vector<2x32xf32>, vector<32x32xf32>, vector<2x32xf32> -> vector<2x32xf32>
    %cst_48 = arith.constant dense<0.000000e+00> : vector<2x32xf32>
    %197 = tpu.matmul %194, %18, %cst_48 {dimension_numbers = #tpu.dot_dimension_numbers<[1], [0], [0], [1], [0, 0, 1, 1], [], []>} : vector<2x32xf32>, vector<32x32xf32>, vector<2x32xf32> -> vector<2x32xf32>
    %198 = vector.broadcast %19 : vector<1x32xf32> to vector<2x32xf32>
    %199 = arith.addf %197, %198 : vector<2x32xf32>
    %200 = vector.extract_strided_slice %13 {offsets = [14, 0], sizes = [2, 32], strides = [1, 1]} : vector<16x32xf32> to vector<2x32xf32>
    %201 = arith.addf %200, %195 : vector<2x32xf32>
    %202 = arith.negf %201 : vector<2x32xf32>
    %203 = math.exp %202 : vector<2x32xf32>
    %cst_49 = arith.constant 1.000000e+00 : f32
    %204 = vector.broadcast %cst_49 : f32 to vector<2x32xf32>
    %205 = arith.addf %204, %203 : vector<2x32xf32>
    %206 = arith.divf %204, %205 : vector<2x32xf32>
    %207 = vector.extract_strided_slice %14 {offsets = [14, 0], sizes = [2, 32], strides = [1, 1]} : vector<16x32xf32> to vector<2x32xf32>
    %208 = arith.addf %207, %196 : vector<2x32xf32>
    %209 = arith.negf %208 : vector<2x32xf32>
    %210 = math.exp %209 : vector<2x32xf32>
    %cst_50 = arith.constant 1.000000e+00 : f32
    %211 = vector.broadcast %cst_50 : f32 to vector<2x32xf32>
    %212 = arith.addf %211, %210 : vector<2x32xf32>
    %213 = arith.divf %211, %212 : vector<2x32xf32>
    %214 = vector.extract_strided_slice %15 {offsets = [14, 0], sizes = [2, 32], strides = [1, 1]} : vector<16x32xf32> to vector<2x32xf32>
    %215 = arith.mulf %206, %199 : vector<2x32xf32>
    %216 = arith.addf %214, %215 : vector<2x32xf32>
    %217 = math.tanh %216 : vector<2x32xf32>
    %218 = arith.subf %194, %217 : vector<2x32xf32>
    %219 = arith.mulf %213, %218 : vector<2x32xf32>
    %220 = arith.addf %217, %219 : vector<2x32xf32>
    %c481 = arith.constant 481 : index
    %c0_51 = arith.constant 0 : index
    %221 = vector.load %arg4[%c481, %c0_51] : memref<677x32xf32, #tpu.memory_space<vmem>>, vector<32x32xf32>
    %cst_52 = arith.constant dense<0.000000e+00> : vector<2x32xf32>
    %222 = tpu.matmul %220, %221, %cst_52 {dimension_numbers = #tpu.dot_dimension_numbers<[1], [0], [0], [1], [0, 0, 1, 1], [], []>} : vector<2x32xf32>, vector<32x32xf32>, vector<2x32xf32> -> vector<2x32xf32>
    %c673 = arith.constant 673 : index
    %c0_53 = arith.constant 0 : index
    %223 = vector.load %arg4[%c673, %c0_53] : memref<677x32xf32, #tpu.memory_space<vmem>>, vector<1x32xf32>
    %224 = vector.broadcast %223 : vector<1x32xf32> to vector<2x32xf32>
    %225 = arith.addf %222, %224 : vector<2x32xf32>
    %c513 = arith.constant 513 : index
    %c0_54 = arith.constant 0 : index
    %226 = vector.load %arg4[%c513, %c0_54] : memref<677x32xf32, #tpu.memory_space<vmem>>, vector<32x32xf32>
    %cst_55 = arith.constant dense<0.000000e+00> : vector<2x32xf32>
    %227 = tpu.matmul %220, %226, %cst_55 {dimension_numbers = #tpu.dot_dimension_numbers<[1], [0], [0], [1], [0, 0, 1, 1], [], []>} : vector<2x32xf32>, vector<32x32xf32>, vector<2x32xf32> -> vector<2x32xf32>
    %c674 = arith.constant 674 : index
    %c0_56 = arith.constant 0 : index
    %228 = vector.load %arg4[%c674, %c0_56] : memref<677x32xf32, #tpu.memory_space<vmem>>, vector<1x32xf32>
    %229 = vector.broadcast %228 : vector<1x32xf32> to vector<2x32xf32>
    %230 = arith.addf %227, %229 : vector<2x32xf32>
    %c545 = arith.constant 545 : index
    %c0_57 = arith.constant 0 : index
    %231 = vector.load %arg4[%c545, %c0_57] : memref<677x32xf32, #tpu.memory_space<vmem>>, vector<32x32xf32>
    %cst_58 = arith.constant dense<0.000000e+00> : vector<2x32xf32>
    %232 = tpu.matmul %220, %231, %cst_58 {dimension_numbers = #tpu.dot_dimension_numbers<[1], [0], [0], [1], [0, 0, 1, 1], [], []>} : vector<2x32xf32>, vector<32x32xf32>, vector<2x32xf32> -> vector<2x32xf32>
    %c675 = arith.constant 675 : index
    %c0_59 = arith.constant 0 : index
    %233 = vector.load %arg4[%c675, %c0_59] : memref<677x32xf32, #tpu.memory_space<vmem>>, vector<1x32xf32>
    %234 = vector.broadcast %233 : vector<1x32xf32> to vector<2x32xf32>
    %235 = arith.addf %232, %234 : vector<2x32xf32>
    %c35 = arith.constant 35 : index
    %c0_60 = arith.constant 0 : index
    %236 = vector.load %arg2[%c35, %c0_60] : memref<196x256xf32, #tpu.memory_space<vmem>>, vector<32x256xf32>
    %cst_61 = arith.constant dense<0.000000e+00> : vector<2x256xf32>
    %237 = tpu.matmul %220, %236, %cst_61 {dimension_numbers = #tpu.dot_dimension_numbers<[1], [0], [0], [1], [0, 0, 1, 1], [], []>} : vector<2x32xf32>, vector<32x256xf32>, vector<2x256xf32> -> vector<2x256xf32>
    %c67 = arith.constant 67 : index
    %c0_62 = arith.constant 0 : index
    %238 = vector.load %arg2[%c67, %c0_62] : memref<196x256xf32, #tpu.memory_space<vmem>>, vector<1x256xf32>
    %239 = vector.broadcast %238 : vector<1x256xf32> to vector<2x256xf32>
    %240 = arith.addf %237, %239 : vector<2x256xf32>
    %c97 = arith.constant 97 : index
    %c0_63 = arith.constant 0 : index
    %241 = vector.load %arg4[%c97, %c0_63] : memref<677x32xf32, #tpu.memory_space<vmem>>, vector<128x32xf32>
    %c225 = arith.constant 225 : index
    %c0_64 = arith.constant 0 : index
    %242 = vector.load %arg4[%c225, %c0_64] : memref<677x32xf32, #tpu.memory_space<vmem>>, vector<128x32xf32>
    %c353 = arith.constant 353 : index
    %c0_65 = arith.constant 0 : index
    %243 = vector.load %arg4[%c353, %c0_65] : memref<677x32xf32, #tpu.memory_space<vmem>>, vector<128x32xf32>
    %c68 = arith.constant 68 : index
    %c0_66 = arith.constant 0 : index
    %244 = vector.load %arg2[%c68, %c0_66] : memref<196x256xf32, #tpu.memory_space<vmem>>, vector<128x256xf32>
    %c577 = arith.constant 577 : index
    %c0_67 = arith.constant 0 : index
    %245 = vector.load %arg4[%c577, %c0_67] : memref<677x32xf32, #tpu.memory_space<vmem>>, vector<32x32xf32>
    %c609 = arith.constant 609 : index
    %c0_68 = arith.constant 0 : index
    %246 = vector.load %arg4[%c609, %c0_68] : memref<677x32xf32, #tpu.memory_space<vmem>>, vector<32x32xf32>
    %c641 = arith.constant 641 : index
    %c0_69 = arith.constant 0 : index
    %247 = vector.load %arg4[%c641, %c0_69] : memref<677x32xf32, #tpu.memory_space<vmem>>, vector<32x32xf32>
    %c676 = arith.constant 676 : index
    %c0_70 = arith.constant 0 : index
    %248 = vector.load %arg4[%c676, %c0_70] : memref<677x32xf32, #tpu.memory_space<vmem>>, vector<1x32xf32>
    %c3 = arith.constant 3 : index
    %c0_71 = arith.constant 0 : index
    %249 = vector.load %arg2[%c3, %c0_71] : memref<196x256xf32, #tpu.memory_space<vmem>>, vector<32x256xf32>
    %c257 = arith.constant 257 : index
    %c0_72 = arith.constant 0 : index
    %250 = vector.load %arg3[%c257, %c0_72] : memref<514x128xf32, #tpu.memory_space<vmem>>, vector<256x128xf32>
    %c513_73 = arith.constant 513 : index
    %c0_74 = arith.constant 0 : index
    %251 = vector.load %arg3[%c513_73, %c0_74] : memref<514x128xf32, #tpu.memory_space<vmem>>, vector<1x128xf32>
    %c0_75 = arith.constant 0 : index
    %c0_76 = arith.constant 0 : index
    %252 = vector.load %arg1[%c0_75, %c0_76] : memref<16x128xf32, #tpu.memory_space<vmem>>, vector<16x128xf32>
    %cst_77 = arith.constant dense<0.000000e+00> : vector<16x32xf32>
    %253 = tpu.matmul %252, %241, %cst_77 {dimension_numbers = #tpu.dot_dimension_numbers<[1], [0], [0], [1], [0, 0, 1, 1], [], []>} : vector<16x128xf32>, vector<128x32xf32>, vector<16x32xf32> -> vector<16x32xf32>
    %cst_78 = arith.constant dense<0.000000e+00> : vector<16x32xf32>
    %254 = tpu.matmul %252, %242, %cst_78 {dimension_numbers = #tpu.dot_dimension_numbers<[1], [0], [0], [1], [0, 0, 1, 1], [], []>} : vector<16x128xf32>, vector<128x32xf32>, vector<16x32xf32> -> vector<16x32xf32>
    %cst_79 = arith.constant dense<0.000000e+00> : vector<16x32xf32>
    %255 = tpu.matmul %252, %243, %cst_79 {dimension_numbers = #tpu.dot_dimension_numbers<[1], [0], [0], [1], [0, 0, 1, 1], [], []>} : vector<16x128xf32>, vector<128x32xf32>, vector<16x32xf32> -> vector<16x32xf32>
    %cst_80 = arith.constant dense<0.000000e+00> : vector<16x256xf32>
    %256 = tpu.matmul %252, %244, %cst_80 {dimension_numbers = #tpu.dot_dimension_numbers<[1], [0], [0], [1], [0, 0, 1, 1], [], []>} : vector<16x128xf32>, vector<128x256xf32>, vector<16x256xf32> -> vector<16x256xf32>
    %257 = tpu.iota {dimensions = array<i32: 1>} : vector<2x128xi32>
    %258 = arith.sitofp %257 : vector<2x128xi32> to vector<2x128xf32>
    %259 = vector.extract_strided_slice %253 {offsets = [0, 0], sizes = [2, 32], strides = [1, 1]} : vector<16x32xf32> to vector<2x32xf32>
    %260 = vector.extract_strided_slice %254 {offsets = [0, 0], sizes = [2, 32], strides = [1, 1]} : vector<16x32xf32> to vector<2x32xf32>
    %261 = vector.extract_strided_slice %255 {offsets = [0, 0], sizes = [2, 32], strides = [1, 1]} : vector<16x32xf32> to vector<2x32xf32>
    %262 = vector.extract_strided_slice %256 {offsets = [0, 0], sizes = [2, 256], strides = [1, 1]} : vector<16x256xf32> to vector<2x256xf32>
    %263 = arith.addf %262, %240 : vector<2x256xf32>
    %cst_81 = arith.constant dense<0.000000e+00> : vector<2x32xf32>
    %264 = tpu.matmul %220, %245, %cst_81 {dimension_numbers = #tpu.dot_dimension_numbers<[1], [0], [0], [1], [0, 0, 1, 1], [], []>} : vector<2x32xf32>, vector<32x32xf32>, vector<2x32xf32> -> vector<2x32xf32>
    %cst_82 = arith.constant dense<0.000000e+00> : vector<2x32xf32>
    %265 = tpu.matmul %220, %246, %cst_82 {dimension_numbers = #tpu.dot_dimension_numbers<[1], [0], [0], [1], [0, 0, 1, 1], [], []>} : vector<2x32xf32>, vector<32x32xf32>, vector<2x32xf32> -> vector<2x32xf32>
    %cst_83 = arith.constant dense<0.000000e+00> : vector<2x32xf32>
    %266 = tpu.matmul %220, %247, %cst_83 {dimension_numbers = #tpu.dot_dimension_numbers<[1], [0], [0], [1], [0, 0, 1, 1], [], []>} : vector<2x32xf32>, vector<32x32xf32>, vector<2x32xf32> -> vector<2x32xf32>
    %267 = vector.broadcast %248 : vector<1x32xf32> to vector<2x32xf32>
    %268 = arith.addf %266, %267 : vector<2x32xf32>
    %269 = arith.addf %259, %225 : vector<2x32xf32>
    %270 = arith.addf %269, %264 : vector<2x32xf32>
    %271 = arith.negf %270 : vector<2x32xf32>
    %272 = math.exp %271 : vector<2x32xf32>
    %cst_84 = arith.constant 1.000000e+00 : f32
    %273 = vector.broadcast %cst_84 : f32 to vector<2x32xf32>
    %274 = arith.addf %273, %272 : vector<2x32xf32>
    %275 = arith.divf %273, %274 : vector<2x32xf32>
    %276 = arith.addf %260, %230 : vector<2x32xf32>
    %277 = arith.addf %276, %265 : vector<2x32xf32>
    %278 = arith.negf %277 : vector<2x32xf32>
    %279 = math.exp %278 : vector<2x32xf32>
    %cst_85 = arith.constant 1.000000e+00 : f32
    %280 = vector.broadcast %cst_85 : f32 to vector<2x32xf32>
    %281 = arith.addf %280, %279 : vector<2x32xf32>
    %282 = arith.divf %280, %281 : vector<2x32xf32>
    %283 = arith.addf %261, %235 : vector<2x32xf32>
    %284 = arith.mulf %275, %268 : vector<2x32xf32>
    %285 = arith.addf %283, %284 : vector<2x32xf32>
    %286 = math.tanh %285 : vector<2x32xf32>
    %287 = arith.subf %220, %286 : vector<2x32xf32>
    %288 = arith.mulf %282, %287 : vector<2x32xf32>
    %289 = arith.addf %286, %288 : vector<2x32xf32>
    %c0_86 = arith.constant 0 : index
    %c0_87 = arith.constant 0 : index
    %290 = vector.load %arg6[%c0_86, %c0_87] : memref<14x32xf32, #tpu.memory_space<vmem>>, vector<2x32xf32>
    tpu.vector_store %arg6[%c0_86, %c0_87], %289 {strides = array<i32>} : memref<14x32xf32, #tpu.memory_space<vmem>>, vector<2x32xf32>,
    %c0_88 = arith.constant 0 : index
    %c0_89 = arith.constant 0 : index
    %291 = vector.load %arg7[%c0_88, %c0_89] : memref<14x256xf32, #tpu.memory_space<vmem>>, vector<2x256xf32>
    tpu.vector_store %arg7[%c0_88, %c0_89], %263 {strides = array<i32>} : memref<14x256xf32, #tpu.memory_space<vmem>>, vector<2x256xf32>,
    %cst_90 = arith.constant dense<0.000000e+00> : vector<2x256xf32>
    %292 = tpu.matmul %289, %249, %cst_90 {dimension_numbers = #tpu.dot_dimension_numbers<[1], [0], [0], [1], [0, 0, 1, 1], [], []>} : vector<2x32xf32>, vector<32x256xf32>, vector<2x256xf32> -> vector<2x256xf32>
    %293 = arith.addf %263, %292 : vector<2x256xf32>
    %cst_91 = arith.constant 0.000000e+00 : f32
    %294 = vector.broadcast %cst_91 : f32 to vector<2x256xf32>
    %295 = arith.maximumf %293, %294 : vector<2x256xf32>
    %cst_92 = arith.constant dense<0.000000e+00> : vector<2x128xf32>
    %296 = tpu.matmul %295, %250, %cst_92 {dimension_numbers = #tpu.dot_dimension_numbers<[1], [0], [0], [1], [0, 0, 1, 1], [], []>} : vector<2x256xf32>, vector<256x128xf32>, vector<2x128xf32> -> vector<2x128xf32>
    %297 = vector.broadcast %251 : vector<1x128xf32> to vector<2x128xf32>
    %298 = arith.addf %296, %297 : vector<2x128xf32>
    %cst_93 = arith.constant dense<0xFF800000> : vector<2xf32>
    %299 = vector.multi_reduction <maximumf>, %298, %cst_93 [1] : vector<2x128xf32> to vector<2xf32>
    %300 = vector.shape_cast %299 : vector<2xf32> to vector<2x1xf32>
    %301 = vector.broadcast %300 : vector<2x1xf32> to vector<2x128xf32>
    %302 = arith.cmpf oeq, %298, %301 : vector<2x128xf32>
    %cst_94 = arith.constant 1.280000e+02 : f32
    %303 = vector.broadcast %cst_94 : f32 to vector<2x128xf32>
    %304 = arith.select %302, %258, %303 : vector<2x128xi1>, vector<2x128xf32>
    %cst_95 = arith.constant dense<0x7F800000> : vector<2xf32>
    %305 = vector.multi_reduction <minimumf>, %304, %cst_95 [1] : vector<2x128xf32> to vector<2xf32>
    %306 = vector.shape_cast %305 : vector<2xf32> to vector<2x1xf32>
    %307 = vector.broadcast %306 : vector<2x1xf32> to vector<2x128xf32>
    %308 = arith.cmpf oeq, %258, %307 : vector<2x128xf32>
    %309 = arith.extui %308 : vector<2x128xi1> to vector<2x128xi32>
    %310 = arith.sitofp %309 : vector<2x128xi32> to vector<2x128xf32>
    %cst_96 = arith.constant dense<0.000000e+00> : vector<2x32xf32>
    %311 = tpu.matmul %310, %241, %cst_96 {dimension_numbers = #tpu.dot_dimension_numbers<[1], [0], [0], [1], [0, 0, 1, 1], [], []>} : vector<2x128xf32>, vector<128x32xf32>, vector<2x32xf32> -> vector<2x32xf32>
    %cst_97 = arith.constant dense<0.000000e+00> : vector<2x32xf32>
    %312 = tpu.matmul %310, %242, %cst_97 {dimension_numbers = #tpu.dot_dimension_numbers<[1], [0], [0], [1], [0, 0, 1, 1], [], []>} : vector<2x128xf32>, vector<128x32xf32>, vector<2x32xf32> -> vector<2x32xf32>
    %cst_98 = arith.constant dense<0.000000e+00> : vector<2x32xf32>
    %313 = tpu.matmul %310, %243, %cst_98 {dimension_numbers = #tpu.dot_dimension_numbers<[1], [0], [0], [1], [0, 0, 1, 1], [], []>} : vector<2x128xf32>, vector<128x32xf32>, vector<2x32xf32> -> vector<2x32xf32>
    %cst_99 = arith.constant dense<0.000000e+00> : vector<2x256xf32>
    %314 = tpu.matmul %310, %244, %cst_99 {dimension_numbers = #tpu.dot_dimension_numbers<[1], [0], [0], [1], [0, 0, 1, 1], [], []>} : vector<2x128xf32>, vector<128x256xf32>, vector<2x256xf32> -> vector<2x256xf32>
    %315 = arith.addf %314, %240 : vector<2x256xf32>
    %cst_100 = arith.constant dense<0.000000e+00> : vector<2x32xf32>
    %316 = tpu.matmul %289, %245, %cst_100 {dimension_numbers = #tpu.dot_dimension_numbers<[1], [0], [0], [1], [0, 0, 1, 1], [], []>} : vector<2x32xf32>, vector<32x32xf32>, vector<2x32xf32> -> vector<2x32xf32>
    %cst_101 = arith.constant dense<0.000000e+00> : vector<2x32xf32>
    %317 = tpu.matmul %289, %246, %cst_101 {dimension_numbers = #tpu.dot_dimension_numbers<[1], [0], [0], [1], [0, 0, 1, 1], [], []>} : vector<2x32xf32>, vector<32x32xf32>, vector<2x32xf32> -> vector<2x32xf32>
    %cst_102 = arith.constant dense<0.000000e+00> : vector<2x32xf32>
    %318 = tpu.matmul %289, %247, %cst_102 {dimension_numbers = #tpu.dot_dimension_numbers<[1], [0], [0], [1], [0, 0, 1, 1], [], []>} : vector<2x32xf32>, vector<32x32xf32>, vector<2x32xf32> -> vector<2x32xf32>
    %319 = vector.broadcast %248 : vector<1x32xf32> to vector<2x32xf32>
    %320 = arith.addf %318, %319 : vector<2x32xf32>
    %321 = arith.addf %311, %225 : vector<2x32xf32>
    %322 = arith.addf %321, %316 : vector<2x32xf32>
    %323 = arith.negf %322 : vector<2x32xf32>
    %324 = math.exp %323 : vector<2x32xf32>
    %cst_103 = arith.constant 1.000000e+00 : f32
    %325 = vector.broadcast %cst_103 : f32 to vector<2x32xf32>
    %326 = arith.addf %325, %324 : vector<2x32xf32>
    %327 = arith.divf %325, %326 : vector<2x32xf32>
    %328 = arith.addf %312, %230 : vector<2x32xf32>
    %329 = arith.addf %328, %317 : vector<2x32xf32>
    %330 = arith.negf %329 : vector<2x32xf32>
    %331 = math.exp %330 : vector<2x32xf32>
    %cst_104 = arith.constant 1.000000e+00 : f32
    %332 = vector.broadcast %cst_104 : f32 to vector<2x32xf32>
    %333 = arith.addf %332, %331 : vector<2x32xf32>
    %334 = arith.divf %332, %333 : vector<2x32xf32>
    %335 = arith.addf %313, %235 : vector<2x32xf32>
    %336 = arith.mulf %327, %320 : vector<2x32xf32>
    %337 = arith.addf %335, %336 : vector<2x32xf32>
    %338 = math.tanh %337 : vector<2x32xf32>
    %339 = arith.subf %289, %338 : vector<2x32xf32>
    %340 = arith.mulf %334, %339 : vector<2x32xf32>
    %341 = arith.addf %338, %340 : vector<2x32xf32>
    %c2_105 = arith.constant 2 : index
    %c0_106 = arith.constant 0 : index
    %342 = vector.load %arg6[%c2_105, %c0_106] : memref<14x32xf32, #tpu.memory_space<vmem>>, vector<2x32xf32>
    tpu.vector_store %arg6[%c2_105, %c0_106], %341 {strides = array<i32>} : memref<14x32xf32, #tpu.memory_space<vmem>>, vector<2x32xf32>,
    %c2_107 = arith.constant 2 : index
    %c0_108 = arith.constant 0 : index
    %343 = vector.load %arg7[%c2_107, %c0_108] : memref<14x256xf32, #tpu.memory_space<vmem>>, vector<2x256xf32>
    tpu.vector_store %arg7[%c2_107, %c0_108], %315 {strides = array<i32>} : memref<14x256xf32, #tpu.memory_space<vmem>>, vector<2x256xf32>,
    %cst_109 = arith.constant dense<0.000000e+00> : vector<2x256xf32>
    %344 = tpu.matmul %341, %249, %cst_109 {dimension_numbers = #tpu.dot_dimension_numbers<[1], [0], [0], [1], [0, 0, 1, 1], [], []>} : vector<2x32xf32>, vector<32x256xf32>, vector<2x256xf32> -> vector<2x256xf32>
    %345 = arith.addf %315, %344 : vector<2x256xf32>
    %cst_110 = arith.constant 0.000000e+00 : f32
    %346 = vector.broadcast %cst_110 : f32 to vector<2x256xf32>
    %347 = arith.maximumf %345, %346 : vector<2x256xf32>
    %cst_111 = arith.constant dense<0.000000e+00> : vector<2x128xf32>
    %348 = tpu.matmul %347, %250, %cst_111 {dimension_numbers = #tpu.dot_dimension_numbers<[1], [0], [0], [1], [0, 0, 1, 1], [], []>} : vector<2x256xf32>, vector<256x128xf32>, vector<2x128xf32> -> vector<2x128xf32>
    %349 = vector.broadcast %251 : vector<1x128xf32> to vector<2x128xf32>
    %350 = arith.addf %348, %349 : vector<2x128xf32>
    %cst_112 = arith.constant dense<0xFF800000> : vector<2xf32>
    %351 = vector.multi_reduction <maximumf>, %350, %cst_112 [1] : vector<2x128xf32> to vector<2xf32>
    %352 = vector.shape_cast %351 : vector<2xf32> to vector<2x1xf32>
    %353 = vector.broadcast %352 : vector<2x1xf32> to vector<2x128xf32>
    %354 = arith.cmpf oeq, %350, %353 : vector<2x128xf32>
    %cst_113 = arith.constant 1.280000e+02 : f32
    %355 = vector.broadcast %cst_113 : f32 to vector<2x128xf32>
    %356 = arith.select %354, %258, %355 : vector<2x128xi1>, vector<2x128xf32>
    %cst_114 = arith.constant dense<0x7F800000> : vector<2xf32>
    %357 = vector.multi_reduction <minimumf>, %356, %cst_114 [1] : vector<2x128xf32> to vector<2xf32>
    %358 = vector.shape_cast %357 : vector<2xf32> to vector<2x1xf32>
    %359 = vector.broadcast %358 : vector<2x1xf32> to vector<2x128xf32>
    %360 = arith.cmpf oeq, %258, %359 : vector<2x128xf32>
    %361 = arith.extui %360 : vector<2x128xi1> to vector<2x128xi32>
    %362 = arith.sitofp %361 : vector<2x128xi32> to vector<2x128xf32>
    %cst_115 = arith.constant dense<0.000000e+00> : vector<2x32xf32>
    %363 = tpu.matmul %362, %241, %cst_115 {dimension_numbers = #tpu.dot_dimension_numbers<[1], [0], [0], [1], [0, 0, 1, 1], [], []>} : vector<2x128xf32>, vector<128x32xf32>, vector<2x32xf32> -> vector<2x32xf32>
    %cst_116 = arith.constant dense<0.000000e+00> : vector<2x32xf32>
    %364 = tpu.matmul %362, %242, %cst_116 {dimension_numbers = #tpu.dot_dimension_numbers<[1], [0], [0], [1], [0, 0, 1, 1], [], []>} : vector<2x128xf32>, vector<128x32xf32>, vector<2x32xf32> -> vector<2x32xf32>
    %cst_117 = arith.constant dense<0.000000e+00> : vector<2x32xf32>
    %365 = tpu.matmul %362, %243, %cst_117 {dimension_numbers = #tpu.dot_dimension_numbers<[1], [0], [0], [1], [0, 0, 1, 1], [], []>} : vector<2x128xf32>, vector<128x32xf32>, vector<2x32xf32> -> vector<2x32xf32>
    %cst_118 = arith.constant dense<0.000000e+00> : vector<2x256xf32>
    %366 = tpu.matmul %362, %244, %cst_118 {dimension_numbers = #tpu.dot_dimension_numbers<[1], [0], [0], [1], [0, 0, 1, 1], [], []>} : vector<2x128xf32>, vector<128x256xf32>, vector<2x256xf32> -> vector<2x256xf32>
    %367 = arith.addf %366, %240 : vector<2x256xf32>
    %cst_119 = arith.constant dense<0.000000e+00> : vector<2x32xf32>
    %368 = tpu.matmul %341, %245, %cst_119 {dimension_numbers = #tpu.dot_dimension_numbers<[1], [0], [0], [1], [0, 0, 1, 1], [], []>} : vector<2x32xf32>, vector<32x32xf32>, vector<2x32xf32> -> vector<2x32xf32>
    %cst_120 = arith.constant dense<0.000000e+00> : vector<2x32xf32>
    %369 = tpu.matmul %341, %246, %cst_120 {dimension_numbers = #tpu.dot_dimension_numbers<[1], [0], [0], [1], [0, 0, 1, 1], [], []>} : vector<2x32xf32>, vector<32x32xf32>, vector<2x32xf32> -> vector<2x32xf32>
    %cst_121 = arith.constant dense<0.000000e+00> : vector<2x32xf32>
    %370 = tpu.matmul %341, %247, %cst_121 {dimension_numbers = #tpu.dot_dimension_numbers<[1], [0], [0], [1], [0, 0, 1, 1], [], []>} : vector<2x32xf32>, vector<32x32xf32>, vector<2x32xf32> -> vector<2x32xf32>
    %371 = vector.broadcast %248 : vector<1x32xf32> to vector<2x32xf32>
    %372 = arith.addf %370, %371 : vector<2x32xf32>
    %373 = arith.addf %363, %225 : vector<2x32xf32>
    %374 = arith.addf %373, %368 : vector<2x32xf32>
    %375 = arith.negf %374 : vector<2x32xf32>
    %376 = math.exp %375 : vector<2x32xf32>
    %cst_122 = arith.constant 1.000000e+00 : f32
    %377 = vector.broadcast %cst_122 : f32 to vector<2x32xf32>
    %378 = arith.addf %377, %376 : vector<2x32xf32>
    %379 = arith.divf %377, %378 : vector<2x32xf32>
    %380 = arith.addf %364, %230 : vector<2x32xf32>
    %381 = arith.addf %380, %369 : vector<2x32xf32>
    %382 = arith.negf %381 : vector<2x32xf32>
    %383 = math.exp %382 : vector<2x32xf32>
    %cst_123 = arith.constant 1.000000e+00 : f32
    %384 = vector.broadcast %cst_123 : f32 to vector<2x32xf32>
    %385 = arith.addf %384, %383 : vector<2x32xf32>
    %386 = arith.divf %384, %385 : vector<2x32xf32>
    %387 = arith.addf %365, %235 : vector<2x32xf32>
    %388 = arith.mulf %379, %372 : vector<2x32xf32>
    %389 = arith.addf %387, %388 : vector<2x32xf32>
    %390 = math.tanh %389 : vector<2x32xf32>
    %391 = arith.subf %341, %390 : vector<2x32xf32>
    %392 = arith.mulf %386, %391 : vector<2x32xf32>
    %393 = arith.addf %390, %392 : vector<2x32xf32>
    %c4 = arith.constant 4 : index
    %c0_124 = arith.constant 0 : index
    %394 = vector.load %arg6[%c4, %c0_124] : memref<14x32xf32, #tpu.memory_space<vmem>>, vector<2x32xf32>
    tpu.vector_store %arg6[%c4, %c0_124], %393 {strides = array<i32>} : memref<14x32xf32, #tpu.memory_space<vmem>>, vector<2x32xf32>,
    %c4_125 = arith.constant 4 : index
    %c0_126 = arith.constant 0 : index
    %395 = vector.load %arg7[%c4_125, %c0_126] : memref<14x256xf32, #tpu.memory_space<vmem>>, vector<2x256xf32>
    tpu.vector_store %arg7[%c4_125, %c0_126], %367 {strides = array<i32>} : memref<14x256xf32, #tpu.memory_space<vmem>>, vector<2x256xf32>,
    %396 = vector.extract_strided_slice %253 {offsets = [6, 0], sizes = [2, 32], strides = [1, 1]} : vector<16x32xf32> to vector<2x32xf32>
    %397 = vector.extract_strided_slice %254 {offsets = [6, 0], sizes = [2, 32], strides = [1, 1]} : vector<16x32xf32> to vector<2x32xf32>
    %398 = vector.extract_strided_slice %255 {offsets = [6, 0], sizes = [2, 32], strides = [1, 1]} : vector<16x32xf32> to vector<2x32xf32>
    %399 = vector.extract_strided_slice %256 {offsets = [6, 0], sizes = [2, 256], strides = [1, 1]} : vector<16x256xf32> to vector<2x256xf32>
    %400 = arith.addf %399, %240 : vector<2x256xf32>
    %cst_127 = arith.constant dense<0.000000e+00> : vector<2x32xf32>
    %401 = tpu.matmul %393, %245, %cst_127 {dimension_numbers = #tpu.dot_dimension_numbers<[1], [0], [0], [1], [0, 0, 1, 1], [], []>} : vector<2x32xf32>, vector<32x32xf32>, vector<2x32xf32> -> vector<2x32xf32>
    %cst_128 = arith.constant dense<0.000000e+00> : vector<2x32xf32>
    %402 = tpu.matmul %393, %246, %cst_128 {dimension_numbers = #tpu.dot_dimension_numbers<[1], [0], [0], [1], [0, 0, 1, 1], [], []>} : vector<2x32xf32>, vector<32x32xf32>, vector<2x32xf32> -> vector<2x32xf32>
    %cst_129 = arith.constant dense<0.000000e+00> : vector<2x32xf32>
    %403 = tpu.matmul %393, %247, %cst_129 {dimension_numbers = #tpu.dot_dimension_numbers<[1], [0], [0], [1], [0, 0, 1, 1], [], []>} : vector<2x32xf32>, vector<32x32xf32>, vector<2x32xf32> -> vector<2x32xf32>
    %404 = vector.broadcast %248 : vector<1x32xf32> to vector<2x32xf32>
    %405 = arith.addf %403, %404 : vector<2x32xf32>
    %406 = arith.addf %396, %225 : vector<2x32xf32>
    %407 = arith.addf %406, %401 : vector<2x32xf32>
    %408 = arith.negf %407 : vector<2x32xf32>
    %409 = math.exp %408 : vector<2x32xf32>
    %cst_130 = arith.constant 1.000000e+00 : f32
    %410 = vector.broadcast %cst_130 : f32 to vector<2x32xf32>
    %411 = arith.addf %410, %409 : vector<2x32xf32>
    %412 = arith.divf %410, %411 : vector<2x32xf32>
    %413 = arith.addf %397, %230 : vector<2x32xf32>
    %414 = arith.addf %413, %402 : vector<2x32xf32>
    %415 = arith.negf %414 : vector<2x32xf32>
    %416 = math.exp %415 : vector<2x32xf32>
    %cst_131 = arith.constant 1.000000e+00 : f32
    %417 = vector.broadcast %cst_131 : f32 to vector<2x32xf32>
    %418 = arith.addf %417, %416 : vector<2x32xf32>
    %419 = arith.divf %417, %418 : vector<2x32xf32>
    %420 = arith.addf %398, %235 : vector<2x32xf32>
    %421 = arith.mulf %412, %405 : vector<2x32xf32>
    %422 = arith.addf %420, %421 : vector<2x32xf32>
    %423 = math.tanh %422 : vector<2x32xf32>
    %424 = arith.subf %393, %423 : vector<2x32xf32>
    %425 = arith.mulf %419, %424 : vector<2x32xf32>
    %426 = arith.addf %423, %425 : vector<2x32xf32>
    %c6 = arith.constant 6 : index
    %c0_132 = arith.constant 0 : index
    %427 = vector.load %arg6[%c6, %c0_132] : memref<14x32xf32, #tpu.memory_space<vmem>>, vector<2x32xf32>
    tpu.vector_store %arg6[%c6, %c0_132], %426 {strides = array<i32>} : memref<14x32xf32, #tpu.memory_space<vmem>>, vector<2x32xf32>,
    %c6_133 = arith.constant 6 : index
    %c0_134 = arith.constant 0 : index
    %428 = vector.load %arg7[%c6_133, %c0_134] : memref<14x256xf32, #tpu.memory_space<vmem>>, vector<2x256xf32>
    tpu.vector_store %arg7[%c6_133, %c0_134], %400 {strides = array<i32>} : memref<14x256xf32, #tpu.memory_space<vmem>>, vector<2x256xf32>,
    %429 = vector.extract_strided_slice %253 {offsets = [8, 0], sizes = [2, 32], strides = [1, 1]} : vector<16x32xf32> to vector<2x32xf32>
    %430 = vector.extract_strided_slice %254 {offsets = [8, 0], sizes = [2, 32], strides = [1, 1]} : vector<16x32xf32> to vector<2x32xf32>
    %431 = vector.extract_strided_slice %255 {offsets = [8, 0], sizes = [2, 32], strides = [1, 1]} : vector<16x32xf32> to vector<2x32xf32>
    %432 = vector.extract_strided_slice %256 {offsets = [8, 0], sizes = [2, 256], strides = [1, 1]} : vector<16x256xf32> to vector<2x256xf32>
    %433 = arith.addf %432, %240 : vector<2x256xf32>
    %cst_135 = arith.constant dense<0.000000e+00> : vector<2x32xf32>
    %434 = tpu.matmul %426, %245, %cst_135 {dimension_numbers = #tpu.dot_dimension_numbers<[1], [0], [0], [1], [0, 0, 1, 1], [], []>} : vector<2x32xf32>, vector<32x32xf32>, vector<2x32xf32> -> vector<2x32xf32>
    %cst_136 = arith.constant dense<0.000000e+00> : vector<2x32xf32>
    %435 = tpu.matmul %426, %246, %cst_136 {dimension_numbers = #tpu.dot_dimension_numbers<[1], [0], [0], [1], [0, 0, 1, 1], [], []>} : vector<2x32xf32>, vector<32x32xf32>, vector<2x32xf32> -> vector<2x32xf32>
    %cst_137 = arith.constant dense<0.000000e+00> : vector<2x32xf32>
    %436 = tpu.matmul %426, %247, %cst_137 {dimension_numbers = #tpu.dot_dimension_numbers<[1], [0], [0], [1], [0, 0, 1, 1], [], []>} : vector<2x32xf32>, vector<32x32xf32>, vector<2x32xf32> -> vector<2x32xf32>
    %437 = vector.broadcast %248 : vector<1x32xf32> to vector<2x32xf32>
    %438 = arith.addf %436, %437 : vector<2x32xf32>
    %439 = arith.addf %429, %225 : vector<2x32xf32>
    %440 = arith.addf %439, %434 : vector<2x32xf32>
    %441 = arith.negf %440 : vector<2x32xf32>
    %442 = math.exp %441 : vector<2x32xf32>
    %cst_138 = arith.constant 1.000000e+00 : f32
    %443 = vector.broadcast %cst_138 : f32 to vector<2x32xf32>
    %444 = arith.addf %443, %442 : vector<2x32xf32>
    %445 = arith.divf %443, %444 : vector<2x32xf32>
    %446 = arith.addf %430, %230 : vector<2x32xf32>
    %447 = arith.addf %446, %435 : vector<2x32xf32>
    %448 = arith.negf %447 : vector<2x32xf32>
    %449 = math.exp %448 : vector<2x32xf32>
    %cst_139 = arith.constant 1.000000e+00 : f32
    %450 = vector.broadcast %cst_139 : f32 to vector<2x32xf32>
    %451 = arith.addf %450, %449 : vector<2x32xf32>
    %452 = arith.divf %450, %451 : vector<2x32xf32>
    %453 = arith.addf %431, %235 : vector<2x32xf32>
    %454 = arith.mulf %445, %438 : vector<2x32xf32>
    %455 = arith.addf %453, %454 : vector<2x32xf32>
    %456 = math.tanh %455 : vector<2x32xf32>
    %457 = arith.subf %426, %456 : vector<2x32xf32>
    %458 = arith.mulf %452, %457 : vector<2x32xf32>
    %459 = arith.addf %456, %458 : vector<2x32xf32>
    %c8 = arith.constant 8 : index
    %c0_140 = arith.constant 0 : index
    %460 = vector.load %arg6[%c8, %c0_140] : memref<14x32xf32, #tpu.memory_space<vmem>>, vector<2x32xf32>
    tpu.vector_store %arg6[%c8, %c0_140], %459 {strides = array<i32>} : memref<14x32xf32, #tpu.memory_space<vmem>>, vector<2x32xf32>,
    %c8_141 = arith.constant 8 : index
    %c0_142 = arith.constant 0 : index
    %461 = vector.load %arg7[%c8_141, %c0_142] : memref<14x256xf32, #tpu.memory_space<vmem>>, vector<2x256xf32>
    tpu.vector_store %arg7[%c8_141, %c0_142], %433 {strides = array<i32>} : memref<14x256xf32, #tpu.memory_space<vmem>>, vector<2x256xf32>,
    %462 = vector.extract_strided_slice %253 {offsets = [10, 0], sizes = [2, 32], strides = [1, 1]} : vector<16x32xf32> to vector<2x32xf32>
    %463 = vector.extract_strided_slice %254 {offsets = [10, 0], sizes = [2, 32], strides = [1, 1]} : vector<16x32xf32> to vector<2x32xf32>
    %464 = vector.extract_strided_slice %255 {offsets = [10, 0], sizes = [2, 32], strides = [1, 1]} : vector<16x32xf32> to vector<2x32xf32>
    %465 = vector.extract_strided_slice %256 {offsets = [10, 0], sizes = [2, 256], strides = [1, 1]} : vector<16x256xf32> to vector<2x256xf32>
    %466 = arith.addf %465, %240 : vector<2x256xf32>
    %cst_143 = arith.constant dense<0.000000e+00> : vector<2x32xf32>
    %467 = tpu.matmul %459, %245, %cst_143 {dimension_numbers = #tpu.dot_dimension_numbers<[1], [0], [0], [1], [0, 0, 1, 1], [], []>} : vector<2x32xf32>, vector<32x32xf32>, vector<2x32xf32> -> vector<2x32xf32>
    %cst_144 = arith.constant dense<0.000000e+00> : vector<2x32xf32>
    %468 = tpu.matmul %459, %246, %cst_144 {dimension_numbers = #tpu.dot_dimension_numbers<[1], [0], [0], [1], [0, 0, 1, 1], [], []>} : vector<2x32xf32>, vector<32x32xf32>, vector<2x32xf32> -> vector<2x32xf32>
    %cst_145 = arith.constant dense<0.000000e+00> : vector<2x32xf32>
    %469 = tpu.matmul %459, %247, %cst_145 {dimension_numbers = #tpu.dot_dimension_numbers<[1], [0], [0], [1], [0, 0, 1, 1], [], []>} : vector<2x32xf32>, vector<32x32xf32>, vector<2x32xf32> -> vector<2x32xf32>
    %470 = vector.broadcast %248 : vector<1x32xf32> to vector<2x32xf32>
    %471 = arith.addf %469, %470 : vector<2x32xf32>
    %472 = arith.addf %462, %225 : vector<2x32xf32>
    %473 = arith.addf %472, %467 : vector<2x32xf32>
    %474 = arith.negf %473 : vector<2x32xf32>
    %475 = math.exp %474 : vector<2x32xf32>
    %cst_146 = arith.constant 1.000000e+00 : f32
    %476 = vector.broadcast %cst_146 : f32 to vector<2x32xf32>
    %477 = arith.addf %476, %475 : vector<2x32xf32>
    %478 = arith.divf %476, %477 : vector<2x32xf32>
    %479 = arith.addf %463, %230 : vector<2x32xf32>
    %480 = arith.addf %479, %468 : vector<2x32xf32>
    %481 = arith.negf %480 : vector<2x32xf32>
    %482 = math.exp %481 : vector<2x32xf32>
    %cst_147 = arith.constant 1.000000e+00 : f32
    %483 = vector.broadcast %cst_147 : f32 to vector<2x32xf32>
    %484 = arith.addf %483, %482 : vector<2x32xf32>
    %485 = arith.divf %483, %484 : vector<2x32xf32>
    %486 = arith.addf %464, %235 : vector<2x32xf32>
    %487 = arith.mulf %478, %471 : vector<2x32xf32>
    %488 = arith.addf %486, %487 : vector<2x32xf32>
    %489 = math.tanh %488 : vector<2x32xf32>
    %490 = arith.subf %459, %489 : vector<2x32xf32>
    %491 = arith.mulf %485, %490 : vector<2x32xf32>
    %492 = arith.addf %489, %491 : vector<2x32xf32>
    %c10 = arith.constant 10 : index
    %c0_148 = arith.constant 0 : index
    %493 = vector.load %arg6[%c10, %c0_148] : memref<14x32xf32, #tpu.memory_space<vmem>>, vector<2x32xf32>
    tpu.vector_store %arg6[%c10, %c0_148], %492 {strides = array<i32>} : memref<14x32xf32, #tpu.memory_space<vmem>>, vector<2x32xf32>,
    %c10_149 = arith.constant 10 : index
    %c0_150 = arith.constant 0 : index
    %494 = vector.load %arg7[%c10_149, %c0_150] : memref<14x256xf32, #tpu.memory_space<vmem>>, vector<2x256xf32>
    tpu.vector_store %arg7[%c10_149, %c0_150], %466 {strides = array<i32>} : memref<14x256xf32, #tpu.memory_space<vmem>>, vector<2x256xf32>,
    %495 = vector.extract_strided_slice %253 {offsets = [12, 0], sizes = [2, 32], strides = [1, 1]} : vector<16x32xf32> to vector<2x32xf32>
    %496 = vector.extract_strided_slice %254 {offsets = [12, 0], sizes = [2, 32], strides = [1, 1]} : vector<16x32xf32> to vector<2x32xf32>
    %497 = vector.extract_strided_slice %255 {offsets = [12, 0], sizes = [2, 32], strides = [1, 1]} : vector<16x32xf32> to vector<2x32xf32>
    %498 = vector.extract_strided_slice %256 {offsets = [12, 0], sizes = [2, 256], strides = [1, 1]} : vector<16x256xf32> to vector<2x256xf32>
    %499 = arith.addf %498, %240 : vector<2x256xf32>
    %cst_151 = arith.constant dense<0.000000e+00> : vector<2x32xf32>
    %500 = tpu.matmul %492, %245, %cst_151 {dimension_numbers = #tpu.dot_dimension_numbers<[1], [0], [0], [1], [0, 0, 1, 1], [], []>} : vector<2x32xf32>, vector<32x32xf32>, vector<2x32xf32> -> vector<2x32xf32>
    %cst_152 = arith.constant dense<0.000000e+00> : vector<2x32xf32>
    %501 = tpu.matmul %492, %246, %cst_152 {dimension_numbers = #tpu.dot_dimension_numbers<[1], [0], [0], [1], [0, 0, 1, 1], [], []>} : vector<2x32xf32>, vector<32x32xf32>, vector<2x32xf32> -> vector<2x32xf32>
    %cst_153 = arith.constant dense<0.000000e+00> : vector<2x32xf32>
    %502 = tpu.matmul %492, %247, %cst_153 {dimension_numbers = #tpu.dot_dimension_numbers<[1], [0], [0], [1], [0, 0, 1, 1], [], []>} : vector<2x32xf32>, vector<32x32xf32>, vector<2x32xf32> -> vector<2x32xf32>
    %503 = vector.broadcast %248 : vector<1x32xf32> to vector<2x32xf32>
    %504 = arith.addf %502, %503 : vector<2x32xf32>
    %505 = arith.addf %495, %225 : vector<2x32xf32>
    %506 = arith.addf %505, %500 : vector<2x32xf32>
    %507 = arith.negf %506 : vector<2x32xf32>
    %508 = math.exp %507 : vector<2x32xf32>
    %cst_154 = arith.constant 1.000000e+00 : f32
    %509 = vector.broadcast %cst_154 : f32 to vector<2x32xf32>
    %510 = arith.addf %509, %508 : vector<2x32xf32>
    %511 = arith.divf %509, %510 : vector<2x32xf32>
    %512 = arith.addf %496, %230 : vector<2x32xf32>
    %513 = arith.addf %512, %501 : vector<2x32xf32>
    %514 = arith.negf %513 : vector<2x32xf32>
    %515 = math.exp %514 : vector<2x32xf32>
    %cst_155 = arith.constant 1.000000e+00 : f32
    %516 = vector.broadcast %cst_155 : f32 to vector<2x32xf32>
    %517 = arith.addf %516, %515 : vector<2x32xf32>
    %518 = arith.divf %516, %517 : vector<2x32xf32>
    %519 = arith.addf %497, %235 : vector<2x32xf32>
    %520 = arith.mulf %511, %504 : vector<2x32xf32>
    %521 = arith.addf %519, %520 : vector<2x32xf32>
    %522 = math.tanh %521 : vector<2x32xf32>
    %523 = arith.subf %492, %522 : vector<2x32xf32>
    %524 = arith.mulf %518, %523 : vector<2x32xf32>
    %525 = arith.addf %522, %524 : vector<2x32xf32>
    %c12 = arith.constant 12 : index
    %c0_156 = arith.constant 0 : index
    %526 = vector.load %arg6[%c12, %c0_156] : memref<14x32xf32, #tpu.memory_space<vmem>>, vector<2x32xf32>
    tpu.vector_store %arg6[%c12, %c0_156], %525 {strides = array<i32>} : memref<14x32xf32, #tpu.memory_space<vmem>>, vector<2x32xf32>,
    %c12_157 = arith.constant 12 : index
    %c0_158 = arith.constant 0 : index
    %527 = vector.load %arg7[%c12_157, %c0_158] : memref<14x256xf32, #tpu.memory_space<vmem>>, vector<2x256xf32>
    tpu.vector_store %arg7[%c12_157, %c0_158], %499 {strides = array<i32>} : memref<14x256xf32, #tpu.memory_space<vmem>>, vector<2x256xf32>,
    %c0_159 = arith.constant 0 : index
    %c0_160 = arith.constant 0 : index
    %528 = vector.load %arg7[%c0_159, %c0_160] : memref<14x256xf32, #tpu.memory_space<vmem>>, vector<14x256xf32>
    %c0_161 = arith.constant 0 : index
    %c0_162 = arith.constant 0 : index
    %529 = vector.load %arg6[%c0_161, %c0_162] : memref<14x32xf32, #tpu.memory_space<vmem>>, vector<14x32xf32>
    %cst_163 = arith.constant dense<0.000000e+00> : vector<14x256xf32>
    %530 = tpu.matmul %529, %249, %cst_163 {dimension_numbers = #tpu.dot_dimension_numbers<[1], [0], [0], [1], [0, 0, 1, 1], [], []>} : vector<14x32xf32>, vector<32x256xf32>, vector<14x256xf32> -> vector<14x256xf32>
    %531 = arith.addf %528, %530 : vector<14x256xf32>
    %cst_164 = arith.constant 0.000000e+00 : f32
    %532 = vector.broadcast %cst_164 : f32 to vector<14x256xf32>
    %533 = arith.maximumf %531, %532 : vector<14x256xf32>
    %cst_165 = arith.constant dense<0.000000e+00> : vector<14x128xf32>
    %534 = tpu.matmul %533, %250, %cst_165 {dimension_numbers = #tpu.dot_dimension_numbers<[1], [0], [0], [1], [0, 0, 1, 1], [], []>} : vector<14x256xf32>, vector<256x128xf32>, vector<14x128xf32> -> vector<14x128xf32>
    %535 = vector.broadcast %251 : vector<1x128xf32> to vector<14x128xf32>
    %536 = arith.addf %534, %535 : vector<14x128xf32>
    %537 = vector.extract_strided_slice %252 {offsets = [2, 0], sizes = [14, 128], strides = [1, 1]} : vector<16x128xf32> to vector<14x128xf32>
    %cst_166 = arith.constant dense<0xFF800000> : vector<14xf32>
    %538 = vector.multi_reduction <maximumf>, %536, %cst_166 [1] : vector<14x128xf32> to vector<14xf32>
    %539 = vector.shape_cast %538 : vector<14xf32> to vector<14x1xf32>
    %540 = vector.broadcast %539 : vector<14x1xf32> to vector<14x128xf32>
    %541 = arith.subf %536, %540 : vector<14x128xf32>
    %542 = math.exp %541 : vector<14x128xf32>
    %cst_167 = arith.constant dense<0.000000e+00> : vector<14xf32>
    %543 = vector.multi_reduction <add>, %542, %cst_167 [1] : vector<14x128xf32> to vector<14xf32>
    %544 = vector.shape_cast %543 : vector<14xf32> to vector<14x1xf32>
    %545 = math.log %544 : vector<14x1xf32>
    %546 = arith.addf %539, %545 : vector<14x1xf32>
    %547 = arith.mulf %537, %536 : vector<14x128xf32>
    %cst_168 = arith.constant dense<0.000000e+00> : vector<14xf32>
    %548 = vector.multi_reduction <add>, %547, %cst_168 [1] : vector<14x128xf32> to vector<14xf32>
    %549 = vector.shape_cast %548 : vector<14xf32> to vector<14x1xf32>
    %550 = arith.subf %546, %549 : vector<14x1xf32>
    %cst_169 = arith.constant dense<0.000000e+00> : vector<1xf32>
    %551 = vector.multi_reduction <add>, %550, %cst_169 [0] : vector<14x1xf32> to vector<1xf32>
    %552 = vector.shape_cast %551 : vector<1xf32> to vector<1x1xf32>
    %cst_170 = arith.constant 1.400000e+01 : f32
    %553 = vector.broadcast %cst_170 : f32 to vector<1x1xf32>
    %554 = arith.divf %552, %553 : vector<1x1xf32>
    %c0_171 = arith.constant 0 : index
    %c0_172 = arith.constant 0 : index
    %555 = vector.load %arg5[%c0_171, %c0_172] : memref<1x1xf32, #tpu.memory_space<vmem>>, vector<1x1xf32>
    tpu.vector_store %arg5[%c0_171, %c0_172], %554 {strides = array<i32>} : memref<1x1xf32, #tpu.memory_space<vmem>>, vector<1x1xf32>,
    return
  }
}

</mosaic_0001>

<llo_original>
// kernel: eq.8
$region0: #{eq.8}
  %s0 = inlined_call_operand.vmem [shape: s32[8,2], index: 0, kind: input, shape index: {}]
  %s1 = inlined_call_operand.vmem [shape: s32[16], index: 1, kind: output, shape index: {}]
  $region1: #{eq.8} parent=0
    #allocation0 [shape = 'u8[4096]{0}', space=vmem, size = 0x1000, scoped, tag = 'scoped mem for output reshape']
    %v2 = vld [vmem:[%s0] sm:$0x1]
    %vm3 = vcmask 15360
    %4 = vst.msk [vmem:[#allocation0] sm:$0x1] %vm3, %v2
    %s5 = scalar_lea.vmem %s0, 7
    %v6 = vld [vmem:[%s5] sm:$0x1]
    %7 = vrot.lane.b32.xlu0 %v6, 14
    %v8 = vpop.permute.xlu0 %7
    %vm9 = vcmask 130160
    %10 = vst.msk [vmem:[#allocation0] sm:$0x1] %vm9, %v8
    %s11 = scalar_lea.vmem %s0, 6
    %v12 = vld [vmem:[%s11] sm:$0x1]
    %13 = vrot.lane.b32.xlu0 %v12, 12
    %v14 = vpop.permute.xlu0 %13
    %vm15 = vcmask 113760
    %16 = vst.msk [vmem:[#allocation0] sm:$0x1] %vm15, %v14
    %s17 = scalar_lea.vmem %s0, 5
    %v18 = vld [vmem:[%s17] sm:$0x1]
    %19 = vrot.lane.b32.xlu0 %v18, 10
    %v20 = vpop.permute.xlu0 %19
    %vm21 = vcmask 97360
    %22 = vst.msk [vmem:[#allocation0] sm:$0x1] %vm21, %v20
    %s23 = scalar_lea.vmem %s0, 4
    %v24 = vld [vmem:[%s23] sm:$0x1]
    %25 = vrot.lane.b32.xlu0 %v24, 8
    %v26 = vpop.permute.xlu0 %25
    %vm27 = vcmask 80960
    %28 = vst.msk [vmem:[#allocation0] sm:$0x1] %vm27, %v26
    %s29 = scalar_lea.vmem %s0, 3
    %v30 = vld [vmem:[%s29] sm:$0x1]
    %31 = vrot.lane.b32.xlu0 %v30, 6
    %v32 = vpop.permute.xlu0 %31
    %vm33 = vcmask 64560
    %34 = vst.msk [vmem:[#allocation0] sm:$0x1] %vm33, %v32
    %s35 = scalar_lea.vmem %s0, 2
    %v36 = vld [vmem:[%s35] sm:$0x1]
    %37 = vrot.lane.b32.xlu0 %v36, 4
    %v38 = vpop.permute.xlu0 %37
    %vm39 = vcmask 48160
    %40 = vst.msk [vmem:[#allocation0] sm:$0x1] %vm39, %v38
    %s41 = scalar_lea.vmem %s0, 1
    %v42 = vld [vmem:[%s41] sm:$0x1]
    %43 = vrot.lane.b32.xlu0 %v42, 2
    %v44 = vpop.permute.xlu0 %43
    %vm45 = vcmask 31760
    %46 = vst.msk [vmem:[#allocation0] sm:$0x1] %vm45, %v44
    %s48 = sshllo.u32 0, 1
    %v50 = vld [vmem:[#allocation0] sm:%s48]
    %s51 = sshllo.u32 0, 1
    %52 = vst [vmem:[%s1] sm:%s51] %v50

// kernel: model_forward.1
$region0: #{model_forward.1}
  #allocation0 [shape = 'u32[]', space=smem, size = 0x4, offset = 0x4, fixed_abs, tag = 'smem constant byte address 0x4 - core index']
  #allocation1 [shape = 'u32[144,128]{1,0:T(1,128)}', space=vmem, size = 0x12000, scoped, tag = 'internal scratch']
  #allocation2 [shape = 'f32[14,32]{1,0:T(8,128)}', space=vmem, size = 0x2000, scoped, tag = 'scratch operand']
  #allocation3 [shape = 'f32[14,256]{1,0:T(8,128)}', space=vmem, size = 0x4000, scoped, tag = 'scratch operand']
  %s0 = inlined_call_operand.vmem [shape: f32[16,2], index: 0, kind: input, shape index: {}]
  %s1 = inlined_call_operand.vmem [shape: f32[16,128], index: 1, kind: input, shape index: {}]
  %s2 = inlined_call_operand.vmem [shape: f32[196,256], index: 2, kind: input, shape index: {}]
  %s3 = inlined_call_operand.vmem [shape: f32[514,128], index: 3, kind: input, shape index: {}]
  %s4 = inlined_call_operand.vmem [shape: f32[677,32], index: 4, kind: input, shape index: {}]
  %s5 = inlined_call_operand.hbm [shape: f32[1,1], index: 5, kind: output, shape index: {}]
  %s6 = sld [smem:[#allocation0]]
  $region30: #{model_forward.1} parent=0
    _
  %s8 = ssub.s32 1, %s6
  %s9 = scalar_select 0, %s8, %s6
  $region1: #{model_forward.1} parent=0
    #allocation4 [shape = 'u8[512]{0}', space=vmem, size = 0x400, scoped, tag = 'output window, operand 0, single buffered']
    #allocation5 [shape = 's32[1]{0}', space=sflag, size = 0x4, scoped, tag = 'scoped memory for model_forward.1']
    %10 = vsyncpa [#allocation5], 0
    // Predicated region
    $region2: #{model_forward.1} parent=1 // pred_check
      _
    $region3: #{model_forward.1} parent=1 // pred_check_branch
      %12 = sbr.rel (0) target = $region5
    $region4: #{model_forward.1} parent=1 // pred_region
      _
    $region5: #{model_forward.1} parent=1 // pred_fallthru
      _
    // Predicated region
    $region6: #{model_forward.1} parent=1 // pred_check
      _
    $region7: #{model_forward.1} parent=1 // pred_check_branch
      %14 = sbr.rel (0) target = $region9
    $region8: #{model_forward.1} parent=1 // pred_region
      _
    $region9: #{model_forward.1} parent=1 // pred_fallthru
      _
    // Predicated region
    $region10: #{model_forward.1} parent=1 // pred_check
      _
    $region11: #{model_forward.1} parent=1 // pred_check_branch
      %16 = sbr.rel (0) target = $region13
    $region12: #{model_forward.1} parent=1 // pred_region
      _
    $region13: #{model_forward.1} parent=1 // pred_fallthru
      _
    // Predicated region
    $region14: #{model_forward.1} parent=1 // pred_check
      _
    $region15: #{model_forward.1} parent=1 // pred_check_branch
      %18 = sbr.rel (0) target = $region17
    $region16: #{model_forward.1} parent=1 // pred_region
      _
    $region17: #{model_forward.1} parent=1 // pred_fallthru
      _
    // Predicated region
    $region18: #{model_forward.1} parent=1 // pred_check
      _
    $region19: #{model_forward.1} parent=1 // pred_check_branch
      %20 = sbr.rel (0) target = $region21
    $region20: #{model_forward.1} parent=1 // pred_region
      _
    $region21: #{model_forward.1} parent=1 // pred_fallthru
      _
    %v21 = vld [vmem:[%s0] sm:$0xff]
    %v22 = vld [vmem:[%s0 + $0x8] sm:$0xff]
    %v23 = vld [vmem:[%s2] sm:$0x3]
    %v24 = vld [vmem:[%s2 + $0x8] sm:$0x3]
    %s25 = scalar_lea.vmem %s2, 2
    %v26 = vld [vmem:[%s25] ss:$8 sm:$0x3]
    %v28 = vlaneseq
    %v29 = vshrl.u32 %v28, 7
    %v30 = vsub.s32 0, %v29
    %v31 = vrot.slane %v26, %v30
    %v32 = vlaneseq
    %v33 = vshrl.u32 %v32, 7
    %v34 = vsub.s32 1, %v33
    %v35 = vrot.slane %v26, %v34
    %vm38 = vcmask 15360
    %v40 = vsel %vm38, %v21, 0
    %v43 = vsel %vm38, %v22, 0
    %vm45 = vcmask 1041408
    %v47 = vsel %vm45, %v23, 0
    %v50 = vsel %vm45, %v24, 0
    %52 = vmatprep.subr.mxu0 %v50
    %53 = vmatpush1.msra.mxu0 %v47
    %54 = vmatprep.subr.mxu0 0.0
    %55 = vmatpush1.msra.mxu0 0.0
    %56 = vmatprep.subr.mxu0 0.0
    %57 = vmatpush1.msra.mxu0 0.0
    %58 = vmatprep.subr.mxu0 0.0
    %59 = vmatpush1.msra.mxu0 0.0
    %60 = vmatprep.subr.mxu0 0.0
    %61 = vmatpush1.msra.mxu0 0.0
    %62 = vmatprep.subr.mxu0 0.0
    %63 = vmatpush1.msra.mxu0 0.0
    %64 = vmatprep.subr.mxu0 0.0
    %65 = vmatpush1.msra.mxu0 0.0
    %66 = vmatprep.subr.mxu0 0.0
    %67 = vmatpush1.msra.mxu0 0.0
    %68 = vmatprep.subr.mxu0 0.0
    %69 = vmatpush1.msra.mxu0 0.0
    %70 = vmatprep.subr.mxu0 0.0
    %71 = vmatpush1.msra.mxu0 0.0
    %72 = vmatprep.subr.mxu0 0.0
    %73 = vmatpush1.msra.mxu0 0.0
    %74 = vmatprep.subr.mxu0 0.0
    %75 = vmatpush1.msra.mxu0 0.0
    %76 = vmatprep.subr.mxu0 0.0
    %77 = vmatpush1.msra.mxu0 0.0
    %78 = vmatprep.subr.mxu0 0.0
    %79 = vmatpush1.msra.mxu0 0.0
    %80 = vmatprep.subr.mxu0 0.0
    %81 = vmatpush1.msra.mxu0 0.0
    %82 = vmatprep.subr.mxu0 0.0
    %83 = vmatpush1.msra.mxu0 0.0
    %84 = vmatprep.subr.mxu0 0.0
    %85 = vmatpush1.msra.mxu0 0.0
    %86 = vmatprep.subr.mxu0 0.0
    %87 = vmatpush1.msra.mxu0 0.0
    %88 = vmatprep.subr.mxu0 0.0
    %89 = vmatpush1.msra.mxu0 0.0
    %90 = vmatprep.subr.mxu0 0.0
    %91 = vmatpush1.msra.mxu0 0.0
    %92 = vmatprep.subr.mxu0 0.0
    %93 = vmatpush1.msra.mxu0 0.0
    %94 = vmatprep.subr.mxu0 0.0
    %95 = vmatpush1.msra.mxu0 0.0
    %96 = vmatprep.subr.mxu0 0.0
    %97 = vmatpush1.msra.mxu0 0.0
    %98 = vmatprep.subr.mxu0 0.0
    %99 = vmatpush1.msra.mxu0 0.0
    %100 = vmatprep.subr.mxu0 0.0
    %101 = vmatpush1.msra.mxu0 0.0
    %102 = vmatprep.subr.mxu0 0.0
    %103 = vmatpush1.msra.mxu0 0.0
    %104 = vmatprep.subr.mxu0 0.0
    %105 = vmatpush1.msra.mxu0 0.0
    %106 = vmatprep.subr.mxu0 0.0
    %107 = vmatpush1.msra.mxu0 0.0
    %108 = vmatprep.subr.mxu0 0.0
    %109 = vmatpush1.msra.mxu0 0.0
    %110 = vmatprep.subr.mxu0 0.0
    %111 = vmatpush1.msra.mxu0 0.0
    %112 = vmatprep.subr.mxu0 0.0
    %113 = vmatpush1.msra.mxu0 0.0
    %114 = vmatprep.subr.mxu0 0.0
    %115 = vmatpush1.msra.mxu0 0.0
    %116 = vmatprep.mubr.f32.mxu0 0.0
    %117 = vmatmul.mubr.f32.gmra.mrb[0].mxu0 %v40
    %v118 = vpop.f32.mrb[0].mxu0
    %v119 = vadd.f32 %v31, %v118
    %v120 = vpop.f32.mrb[0].mxu0
    %v121 = vadd.f32 %v35, %v120
    %122 = vmatprep.mubr.f32.mxu0 0.0
    %123 = vmatmul.mubr.f32.gmra.mrb[0].mxu0 %v43
    %v124 = vpop.f32.mrb[0].mxu0
    %v125 = vadd.f32 %v31, %v124
    %v126 = vpop.f32.mrb[0].mxu0
    %v127 = vadd.f32 %v35, %v126
    %128 = vdwg.mxu0
    %v129 = vmax.f32 %v119, 0.0
    %v130 = vmax.f32 %v121, 0.0
    %v131 = vmax.f32 %v125, 0.0
    %v132 = vmax.f32 %v127, 0.0
    %v133 = vld [vmem:[%s3] sm:$0xff]
    %v134 = vld [vmem:[%s3 + $0x8] sm:$0xff]
    %v135 = vld [vmem:[%s3 + $0x10] sm:$0xff]
    %v136 = vld [vmem:[%s3 + $0x18] sm:$0xff]
    %v137 = vld [vmem:[%s3 + $0x20] sm:$0xff]
    %v138 = vld [vmem:[%s3 + $0x28] sm:$0xff]
    %v139 = vld [vmem:[%s3 + $0x30] sm:$0xff]
    %v140 = vld [vmem:[%s3 + $0x38] sm:$0xff]
    %v141 = vld [vmem:[%s3 + $0x40] sm:$0xff]
    %v142 = vld [vmem:[%s3 + $0x48] sm:$0xff]
    %v143 = vld [vmem:[%s3 + $0x50] sm:$0xff]
    %v144 = vld [vmem:[%s3 + $0x58] sm:$0xff]
    %v145 = vld [vmem:[%s3 + $0x60] sm:$0xff]
    %v146 = vld [vmem:[%s3 + $0x68] sm:$0xff]
    %v147 = vld [vmem:[%s3 + $0x70] sm:$0xff]
    %v148 = vld [vmem:[%s3 + $0x78] sm:$0xff]
    %v149 = vld [vmem:[%s3 + $0x80] sm:$0xff]
    %v150 = vld [vmem:[%s3 + $0x88] sm:$0xff]
    %v151 = vld [vmem:[%s3 + $0x90] sm:$0xff]
    %v152 = vld [vmem:[%s3 + $0x98] sm:$0xff]
    %v153 = vld [vmem:[%s3 + $0xa0] sm:$0xff]
    %v154 = vld [vmem:[%s3 + $0xa8] sm:$0xff]
    %v155 = vld [vmem:[%s3 + $0xb0] sm:$0xff]
    %v156 = vld [vmem:[%s3 + $0xb8] sm:$0xff]
    %v157 = vld [vmem:[%s3 + $0xc0] sm:$0xff]
    %v158 = vld [vmem:[%s3 + $0xc8] sm:$0xff]
    %v159 = vld [vmem:[%s3 + $0xd0] sm:$0xff]
    %v160 = vld [vmem:[%s3 + $0xd8] sm:$0xff]
    %v161 = vld [vmem:[%s3 + $0xe0] sm:$0xff]
    %v162 = vld [vmem:[%s3 + $0xe8] sm:$0xff]
    %v163 = vld [vmem:[%s3 + $0xf0] sm:$0xff]
    %v164 = vld [vmem:[%s3 + $0xf8] sm:$0xff]
    %v165 = vld [vmem:[%s3 + $0x100] sm:$0x1]
    %v166 = vlaneseq
    %v167 = vshrl.u32 %v166, 7
    %v168 = vsub.s32 0, %v167
    %v169 = vrot.slane %v165, %v168
    %170 = vmatprep.subr.mxu0 0.0
    %171 = vmatpush1.msra.mxu0 %v133
    %172 = vmatprep.subr.mxu0 0.0
    %173 = vmatpush1.msra.mxu0 %v134
    %174 = vmatprep.subr.mxu0 0.0
    %175 = vmatpush1.msra.mxu0 %v135
    %176 = vmatprep.subr.mxu0 0.0
    %177 = vmatpush1.msra.mxu0 %v136
    %178 = vmatprep.subr.mxu0 0.0
    %179 = vmatpush1.msra.mxu0 %v137
    %180 = vmatprep.subr.mxu0 0.0
    %181 = vmatpush1.msra.mxu0 %v138
    %182 = vmatprep.subr.mxu0 0.0
    %183 = vmatpush1.msra.mxu0 %v139
    %184 = vmatprep.subr.mxu0 0.0
    %185 = vmatpush1.msra.mxu0 %v140
    %186 = vmatprep.subr.mxu0 0.0
    %187 = vmatpush1.msra.mxu0 %v141
    %188 = vmatprep.subr.mxu0 0.0
    %189 = vmatpush1.msra.mxu0 %v142
    %190 = vmatprep.subr.mxu0 0.0
    %191 = vmatpush1.msra.mxu0 %v143
    %192 = vmatprep.subr.mxu0 0.0
    %193 = vmatpush1.msra.mxu0 %v144
    %194 = vmatprep.subr.mxu0 0.0
    %195 = vmatpush1.msra.mxu0 %v145
    %196 = vmatprep.subr.mxu0 0.0
    %197 = vmatpush1.msra.mxu0 %v146
    %198 = vmatprep.subr.mxu0 0.0
    %199 = vmatpush1.msra.mxu0 %v147
    %200 = vmatprep.subr.mxu0 0.0
    %201 = vmatpush1.msra.mxu0 %v148
    %202 = vmatprep.subr.mxu0 0.0
    %203 = vmatpush1.msra.mxu0 %v149
    %204 = vmatprep.subr.mxu0 0.0
    %205 = vmatpush1.msra.mxu0 %v150
    %206 = vmatprep.subr.mxu0 0.0
    %207 = vmatpush1.msra.mxu0 %v151
    %208 = vmatprep.subr.mxu0 0.0
    %209 = vmatpush1.msra.mxu0 %v152
    %210 = vmatprep.subr.mxu0 0.0
    %211 = vmatpush1.msra.mxu0 %v153
    %212 = vmatprep.subr.mxu0 0.0
    %213 = vmatpush1.msra.mxu0 %v154
    %214 = vmatprep.subr.mxu0 0.0
    %215 = vmatpush1.msra.mxu0 %v155
    %216 = vmatprep.subr.mxu0 0.0
    %217 = vmatpush1.msra.mxu0 %v156
    %218 = vmatprep.subr.mxu0 0.0
    %219 = vmatpush1.msra.mxu0 %v157
    %220 = vmatprep.subr.mxu0 0.0
    %221 = vmatpush1.msra.mxu0 %v158
    %222 = vmatprep.subr.mxu0 0.0
    %223 = vmatpush1.msra.mxu0 %v159
    %224 = vmatprep.subr.mxu0 0.0
    %225 = vmatpush1.msra.mxu0 %v160
    %226 = vmatprep.subr.mxu0 0.0
    %227 = vmatpush1.msra.mxu0 %v161
    %228 = vmatprep.subr.mxu0 0.0
    %229 = vmatpush1.msra.mxu0 %v162
    %230 = vmatprep.subr.mxu0 0.0
    %231 = vmatpush1.msra.mxu0 %v163
    %232 = vmatprep.subr.mxu0 0.0
    %233 = vmatpush1.msra.mxu0 %v164
    %234 = vmatprep.mubr.f32.mxu0 %v130
    %235 = vmatmul.mubr.f32.gmra.mrb[0].mxu0 %v129
    %v236 = vpop.f32.mrb[0].mxu0
    %v237 = vadd.f32 %v169, %v236
    %v238 = vpop.f32.mrb[0].mxu0
    %239 = vmatprep.mubr.f32.mxu0 %v132
    %240 = vmatmul.mubr.f32.gmra.mrb[0].mxu0 %v131
    %v241 = vpop.f32.mrb[0].mxu0
    %v242 = vadd.f32 %v169, %v241
    %v243 = vpop.f32.mrb[0].mxu0
    %244 = vdwg.mxu0
    %v245 = vld [vmem:[%s4] sm:$0xff]
    %v246 = vld [vmem:[%s4 + $0x8] sm:$0xff]
    %v247 = vld [vmem:[%s4 + $0x10] sm:$0xff]
    %v248 = vld [vmem:[%s4 + $0x18] sm:$0xff]
    %v249 = vld [vmem:[%s4 + $0x20] sm:$0xff]
    %v250 = vld [vmem:[%s4 + $0x28] sm:$0xff]
    %v251 = vld [vmem:[%s4 + $0x30] sm:$0xff]
    %v252 = vld [vmem:[%s4 + $0x38] sm:$0xff]
    %v253 = vld [vmem:[%s4 + $0x40] sm:$0xff]
    %v254 = vld [vmem:[%s4 + $0x48] sm:$0xff]
    %v255 = vld [vmem:[%s4 + $0x50] sm:$0xff]
    %v256 = vld [vmem:[%s4 + $0x58] sm:$0xff]
    %v257 = vld [vmem:[%s4 + $0x60] sm:$0x1]
    %v258 = vxor.u32 %v237, 2147483648
    %v259 = vmul.f32 %v258, 1.442695
    %v260 = vpow.pop %v259
    %v261 = vadd.f32 %v260, 1.0
    %v262 = vrcp.pop %v261
    %v263 = vmul.f32 1.0, %v262
    %v264 = vlaneseq
    %v265 = vshrl.u32 %v264, 7
    %v266 = vsub.s32 0, %v265
    %v267 = vrot.slane %v257, %v266
    %v268 = vmul.f32 %v263, %v267
    %270 = vrot.lane.b32.xlu0 %v268, 64
    %v271 = vpop.permute.xlu0 %270
    %v273 = vadd.f32 %v237, %v271
    %v274 = vtanh.pop %v273
    %276 = vrot.lane.b32.xlu0 %v274, 96
    %v277 = vpop.permute.xlu0 %276
    %v279 = vmul.f32 %v263, %v277
    %281 = vrot.lane.b32.xlu0 %v279, 32
    %v282 = vpop.permute.xlu0 %281
    %v284 = vsub.f32 %v274, %v282
    %286 = vrot.lane.b32.xlu0 %v284, 64
    %v287 = vpop.permute.xlu0 %286
    %vm288 = vcmask 261120
    %v289 = vsel %vm288, %v287, 0
    %291 = vmatprep.subr.mxu0 0.0
    %292 = vmatpush1.msra.mxu0 %v245
    %293 = vmatprep.subr.mxu0 0.0
    %294 = vmatpush1.msra.mxu0 %v246
    %295 = vmatprep.subr.mxu0 0.0
    %296 = vmatpush1.msra.mxu0 %v247
    %297 = vmatprep.subr.mxu0 0.0
    %298 = vmatpush1.msra.mxu0 %v248
    %299 = vmatprep.subr.mxu0 0.0
    %300 = vmatpush1.msra.mxu0 0.0
    %301 = vmatprep.subr.mxu0 0.0
    %302 = vmatpush1.msra.mxu0 0.0
    %303 = vmatprep.subr.mxu0 0.0
    %304 = vmatpush1.msra.mxu0 0.0
    %305 = vmatprep.subr.mxu0 0.0
    %306 = vmatpush1.msra.mxu0 0.0
    %307 = vmatprep.subr.mxu0 0.0
    %308 = vmatpush1.msra.mxu0 0.0
    %309 = vmatprep.subr.mxu0 0.0
    %310 = vmatpush1.msra.mxu0 0.0
    %311 = vmatprep.subr.mxu0 0.0
    %312 = vmatpush1.msra.mxu0 0.0
    %313 = vmatprep.subr.mxu0 0.0
    %314 = vmatpush1.msra.mxu0 0.0
    %315 = vmatprep.subr.mxu0 0.0
    %316 = vmatpush1.msra.mxu0 0.0
    %317 = vmatprep.subr.mxu0 0.0
    %318 = vmatpush1.msra.mxu0 0.0
    %319 = vmatprep.subr.mxu0 0.0
    %320 = vmatpush1.msra.mxu0 0.0
    %321 = vmatprep.subr.mxu0 0.0
    %322 = vmatpush1.msra.mxu0 0.0
    %323 = vmatprep.subr.mxu0 0.0
    %324 = vmatpush1.msra.mxu0 0.0
    %325 = vmatprep.subr.mxu0 0.0
    %326 = vmatpush1.msra.mxu0 0.0
    %327 = vmatprep.subr.mxu0 0.0
    %328 = vmatpush1.msra.mxu0 0.0
    %329 = vmatprep.subr.mxu0 0.0
    %330 = vmatpush1.msra.mxu0 0.0
    %331 = vmatprep.subr.mxu0 0.0
    %332 = vmatpush1.msra.mxu0 0.0
    %333 = vmatprep.subr.mxu0 0.0
    %334 = vmatpush1.msra.mxu0 0.0
    %335 = vmatprep.subr.mxu0 0.0
    %336 = vmatpush1.msra.mxu0 0.0
    %337 = vmatprep.subr.mxu0 0.0
    %338 = vmatpush1.msra.mxu0 0.0
    %339 = vmatprep.subr.mxu0 0.0
    %340 = vmatpush1.msra.mxu0 0.0
    %341 = vmatprep.subr.mxu0 0.0
    %342 = vmatpush1.msra.mxu0 0.0
    %343 = vmatprep.subr.mxu0 0.0
    %344 = vmatpush1.msra.mxu0 0.0
    %345 = vmatprep.subr.mxu0 0.0
    %346 = vmatpush1.msra.mxu0 0.0
    %347 = vmatprep.subr.mxu0 0.0
    %348 = vmatpush1.msra.mxu0 0.0
    %349 = vmatprep.subr.mxu0 0.0
    %350 = vmatpush1.msra.mxu0 0.0
    %351 = vmatprep.subr.mxu0 0.0
    %352 = vmatpush1.msra.mxu0 0.0
    %353 = vmatprep.subr.mxu0 0.0
    %354 = vmatpush1.msra.mxu0 0.0
    %355 = vmatprep.mubr.f32.mxu0 0.0
    %356 = vmatmul.mubr.f32.gmra.mrb[0].mxu0 %v289
    %v357 = vpop.f32.mrb[0].mxu0
    %v358 = vadd.f32 0.0, %v357
    %v359 = vpop.f32.mrb[0].mxu0
    %360 = vdwg.mxu0
    %361 = vmatprep.subr.mxu0 0.0
    %362 = vmatpush1.msra.mxu0 %v249
    %363 = vmatprep.subr.mxu0 0.0
    %364 = vmatpush1.msra.mxu0 %v250
    %365 = vmatprep.subr.mxu0 0.0
    %366 = vmatpush1.msra.mxu0 %v251
    %367 = vmatprep.subr.mxu0 0.0
    %368 = vmatpush1.msra.mxu0 %v252
    %369 = vmatprep.subr.mxu0 0.0
    %370 = vmatpush1.msra.mxu0 0.0
    %371 = vmatprep.subr.mxu0 0.0
    %372 = vmatpush1.msra.mxu0 0.0
    %373 = vmatprep.subr.mxu0 0.0
    %374 = vmatpush1.msra.mxu0 0.0
    %375 = vmatprep.subr.mxu0 0.0
    %376 = vmatpush1.msra.mxu0 0.0
    %377 = vmatprep.subr.mxu0 0.0
    %378 = vmatpush1.msra.mxu0 0.0
    %379 = vmatprep.subr.mxu0 0.0
    %380 = vmatpush1.msra.mxu0 0.0
    %381 = vmatprep.subr.mxu0 0.0
    %382 = vmatpush1.msra.mxu0 0.0
    %383 = vmatprep.subr.mxu0 0.0
    %384 = vmatpush1.msra.mxu0 0.0
    %385 = vmatprep.subr.mxu0 0.0
    %386 = vmatpush1.msra.mxu0 0.0
    %387 = vmatprep.subr.mxu0 0.0
    %388 = vmatpush1.msra.mxu0 0.0
    %389 = vmatprep.subr.mxu0 0.0
    %390 = vmatpush1.msra.mxu0 0.0
    %391 = vmatprep.subr.mxu0 0.0
    %392 = vmatpush1.msra.mxu0 0.0
    %393 = vmatprep.subr.mxu0 0.0
    %394 = vmatpush1.msra.mxu0 0.0
    %395 = vmatprep.subr.mxu0 0.0
    %396 = vmatpush1.msra.mxu0 0.0
    %397 = vmatprep.subr.mxu0 0.0
    %398 = vmatpush1.msra.mxu0 0.0
    %399 = vmatprep.subr.mxu0 0.0
    %400 = vmatpush1.msra.mxu0 0.0
    %401 = vmatprep.subr.mxu0 0.0
    %402 = vmatpush1.msra.mxu0 0.0
    %403 = vmatprep.subr.mxu0 0.0
    %404 = vmatpush1.msra.mxu0 0.0
    %405 = vmatprep.subr.mxu0 0.0
    %406 = vmatpush1.msra.mxu0 0.0
    %407 = vmatprep.subr.mxu0 0.0
    %408 = vmatpush1.msra.mxu0 0.0
    %409 = vmatprep.subr.mxu0 0.0
    %410 = vmatpush1.msra.mxu0 0.0
    %411 = vmatprep.subr.mxu0 0.0
    %412 = vmatpush1.msra.mxu0 0.0
    %413 = vmatprep.subr.mxu0 0.0
    %414 = vmatpush1.msra.mxu0 0.0
    %415 = vmatprep.subr.mxu0 0.0
    %416 = vmatpush1.msra.mxu0 0.0
    %417 = vmatprep.subr.mxu0 0.0
    %418 = vmatpush1.msra.mxu0 0.0
    %419 = vmatprep.subr.mxu0 0.0
    %420 = vmatpush1.msra.mxu0 0.0
    %421 = vmatprep.subr.mxu0 0.0
    %422 = vmatpush1.msra.mxu0 0.0
    %423 = vmatprep.subr.mxu0 0.0
    %424 = vmatpush1.msra.mxu0 0.0
    %425 = vmatprep.mubr.f32.mxu0 0.0
    %426 = vmatmul.mubr.f32.gmra.mrb[0].mxu0 %v289
    %v427 = vpop.f32.mrb[0].mxu0
    %v428 = vadd.f32 0.0, %v427
    %v429 = vpop.f32.mrb[0].mxu0
    %430 = vdwg.mxu0
    %431 = vmatprep.subr.mxu0 0.0
    %432 = vmatpush1.msra.mxu0 %v253
    %433 = vmatprep.subr.mxu0 0.0
    %434 = vmatpush1.msra.mxu0 %v254
    %435 = vmatprep.subr.mxu0 0.0
    %436 = vmatpush1.msra.mxu0 %v255
    %437 = vmatprep.subr.mxu0 0.0
    %438 = vmatpush1.msra.mxu0 %v256
    %439 = vmatprep.subr.mxu0 0.0
    %440 = vmatpush1.msra.mxu0 0.0
    %441 = vmatprep.subr.mxu0 0.0
    %442 = vmatpush1.msra.mxu0 0.0
    %443 = vmatprep.subr.mxu0 0.0
    %444 = vmatpush1.msra.mxu0 0.0
    %445 = vmatprep.subr.mxu0 0.0
    %446 = vmatpush1.msra.mxu0 0.0
    %447 = vmatprep.subr.mxu0 0.0
    %448 = vmatpush1.msra.mxu0 0.0
    %449 = vmatprep.subr.mxu0 0.0
    %450 = vmatpush1.msra.mxu0 0.0
    %451 = vmatprep.subr.mxu0 0.0
    %452 = vmatpush1.msra.mxu0 0.0
    %453 = vmatprep.subr.mxu0 0.0
    %454 = vmatpush1.msra.mxu0 0.0
    %455 = vmatprep.subr.mxu0 0.0
    %456 = vmatpush1.msra.mxu0 0.0
    %457 = vmatprep.subr.mxu0 0.0
    %458 = vmatpush1.msra.mxu0 0.0
    %459 = vmatprep.subr.mxu0 0.0
    %460 = vmatpush1.msra.mxu0 0.0
    %461 = vmatprep.subr.mxu0 0.0
    %462 = vmatpush1.msra.mxu0 0.0
    %463 = vmatprep.subr.mxu0 0.0
    %464 = vmatpush1.msra.mxu0 0.0
    %465 = vmatprep.subr.mxu0 0.0
    %466 = vmatpush1.msra.mxu0 0.0
    %467 = vmatprep.subr.mxu0 0.0
    %468 = vmatpush1.msra.mxu0 0.0
    %469 = vmatprep.subr.mxu0 0.0
    %470 = vmatpush1.msra.mxu0 0.0
    %471 = vmatprep.subr.mxu0 0.0
    %472 = vmatpush1.msra.mxu0 0.0
    %473 = vmatprep.subr.mxu0 0.0
    %474 = vmatpush1.msra.mxu0 0.0
    %475 = vmatprep.subr.mxu0 0.0
    %476 = vmatpush1.msra.mxu0 0.0
    %477 = vmatprep.subr.mxu0 0.0
    %478 = vmatpush1.msra.mxu0 0.0
    %479 = vmatprep.subr.mxu0 0.0
    %480 = vmatpush1.msra.mxu0 0.0
    %481 = vmatprep.subr.mxu0 0.0
    %482 = vmatpush1.msra.mxu0 0.0
    %483 = vmatprep.subr.mxu0 0.0
    %484 = vmatpush1.msra.mxu0 0.0
    %485 = vmatprep.subr.mxu0 0.0
    %486 = vmatpush1.msra.mxu0 0.0
    %487 = vmatprep.subr.mxu0 0.0
    %488 = vmatpush1.msra.mxu0 0.0
    %489 = vmatprep.subr.mxu0 0.0
    %490 = vmatpush1.msra.mxu0 0.0
    %491 = vmatprep.subr.mxu0 0.0
    %492 = vmatpush1.msra.mxu0 0.0
    %493 = vmatprep.subr.mxu0 0.0
    %494 = vmatpush1.msra.mxu0 0.0
    %495 = vmatprep.mubr.f32.mxu0 0.0
    %496 = vmatmul.mubr.f32.gmra.mrb[0].mxu0 %v289
    %v497 = vpop.f32.mrb[0].mxu0
    %v498 = vadd.f32 %v267, %v497
    %v499 = vpop.f32.mrb[0].mxu0
    %500 = vdwg.mxu0
    %v502 = vrot.slane %v358, 6
    %v504 = vadd.f32 %v237, %v502
    %v505 = vxor.u32 %v504, 2147483648
    %v506 = vmul.f32 %v505, 1.442695
    %v507 = vpow.pop %v506
    %v508 = vadd.f32 %v507, 1.0
    %v509 = vrcp.pop %v508
    %v510 = vmul.f32 1.0, %v509
    %v512 = vrot.slane %v428, 6
    %513 = vrot.lane.b32.xlu0 %v512, 32
    %v514 = vpop.permute.xlu0 %513
    %v516 = vadd.f32 %v237, %v514
    %v517 = vxor.u32 %v516, 2147483648
    %v518 = vmul.f32 %v517, 1.442695
    %v519 = vpow.pop %v518
    %v520 = vadd.f32 %v519, 1.0
    %v521 = vrcp.pop %v520
    %v522 = vmul.f32 1.0, %v521
    %v524 = vrot.slane %v498, 6
    %v526 = vmul.f32 %v510, %v524
    %528 = vrot.lane.b32.xlu0 %v526, 64
    %v529 = vpop.permute.xlu0 %528
    %v531 = vadd.f32 %v237, %v529
    %v532 = vtanh.pop %v531
    %v534 = vrot.slane %v532, 2
    %v536 = vsub.f32 %v284, %v534
    %v538 = vrot.slane %v536, 6
    %539 = vrot.lane.b32.xlu0 %v538, 96
    %v540 = vpop.permute.xlu0 %539
    %v542 = vmul.f32 %v522, %v540
    %544 = vrot.lane.b32.xlu0 %v542, 32
    %v545 = vpop.permute.xlu0 %544
    %v547 = vadd.f32 %v532, %v545
    %v549 = vrot.slane %v547, 2
    %550 = vrot.lane.b32.xlu0 %v549, 64
    %v551 = vpop.permute.xlu0 %550
    %v552 = vsel %vm288, %v551, 0
    %554 = vmatprep.subr.mxu0 0.0
    %555 = vmatpush1.msra.mxu0 %v245
    %556 = vmatprep.subr.mxu0 0.0
    %557 = vmatpush1.msra.mxu0 %v246
    %558 = vmatprep.subr.mxu0 0.0
    %559 = vmatpush1.msra.mxu0 %v247
    %560 = vmatprep.subr.mxu0 0.0
    %561 = vmatpush1.msra.mxu0 %v248
    %562 = vmatprep.subr.mxu0 0.0
    %563 = vmatpush1.msra.mxu0 0.0
    %564 = vmatprep.subr.mxu0 0.0
    %565 = vmatpush1.msra.mxu0 0.0
    %566 = vmatprep.subr.mxu0 0.0
    %567 = vmatpush1.msra.mxu0 0.0
    %568 = vmatprep.subr.mxu0 0.0
    %569 = vmatpush1.msra.mxu0 0.0
    %570 = vmatprep.subr.mxu0 0.0
    %571 = vmatpush1.msra.mxu0 0.0
    %572 = vmatprep.subr.mxu0 0.0
    %573 = vmatpush1.msra.mxu0 0.0
    %574 = vmatprep.subr.mxu0 0.0
    %575 = vmatpush1.msra.mxu0 0.0
    %576 = vmatprep.subr.mxu0 0.0
    %577 = vmatpush1.msra.mxu0 0.0
    %578 = vmatprep.subr.mxu0 0.0
    %579 = vmatpush1.msra.mxu0 0.0
    %580 = vmatprep.subr.mxu0 0.0
    %581 = vmatpush1.msra.mxu0 0.0
    %582 = vmatprep.subr.mxu0 0.0
    %583 = vmatpush1.msra.mxu0 0.0
    %584 = vmatprep.subr.mxu0 0.0
    %585 = vmatpush1.msra.mxu0 0.0
    %586 = vmatprep.subr.mxu0 0.0
    %587 = vmatpush1.msra.mxu0 0.0
    %588 = vmatprep.subr.mxu0 0.0
    %589 = vmatpush1.msra.mxu0 0.0
    %590 = vmatprep.subr.mxu0 0.0
    %591 = vmatpush1.msra.mxu0 0.0
    %592 = vmatprep.subr.mxu0 0.0
    %593 = vmatpush1.msra.mxu0 0.0
    %594 = vmatprep.subr.mxu0 0.0
    %595 = vmatpush1.msra.mxu0 0.0
    %596 = vmatprep.subr.mxu0 0.0
    %597 = vmatpush1.msra.mxu0 0.0
    %598 = vmatprep.subr.mxu0 0.0
    %599 = vmatpush1.msra.mxu0 0.0
    %600 = vmatprep.subr.mxu0 0.0
    %601 = vmatpush1.msra.mxu0 0.0
    %602 = vmatprep.subr.mxu0 0.0
    %603 = vmatpush1.msra.mxu0 0.0
    %604 = vmatprep.subr.mxu0 0.0
    %605 = vmatpush1.msra.mxu0 0.0
    %606 = vmatprep.subr.mxu0 0.0
    %607 = vmatpush1.msra.mxu0 0.0
    %608 = vmatprep.subr.mxu0 0.0
    %609 = vmatpush1.msra.mxu0 0.0
    %610 = vmatprep.subr.mxu0 0.0
    %611 = vmatpush1.msra.mxu0 0.0
    %612 = vmatprep.subr.mxu0 0.0
    %613 = vmatpush1.msra.mxu0 0.0
    %614 = vmatprep.subr.mxu0 0.0
    %615 = vmatpush1.msra.mxu0 0.0
    %616 = vmatprep.subr.mxu0 0.0
    %617 = vmatpush1.msra.mxu0 0.0
    %618 = vmatprep.mubr.f32.mxu0 0.0
    %619 = vmatmul.mubr.f32.gmra.mrb[0].mxu0 %v552
    %v620 = vpop.f32.mrb[0].mxu0
    %v621 = vadd.f32 0.0, %v620
    %v622 = vpop.f32.mrb[0].mxu0
    %623 = vdwg.mxu0
    %624 = vmatprep.subr.mxu0 0.0
    %625 = vmatpush1.msra.mxu0 %v249
    %626 = vmatprep.subr.mxu0 0.0
    %627 = vmatpush1.msra.mxu0 %v250
    %628 = vmatprep.subr.mxu0 0.0
    %629 = vmatpush1.msra.mxu0 %v251
    %630 = vmatprep.subr.mxu0 0.0
    %631 = vmatpush1.msra.mxu0 %v252
    %632 = vmatprep.subr.mxu0 0.0
    %633 = vmatpush1.msra.mxu0 0.0
    %634 = vmatprep.subr.mxu0 0.0
    %635 = vmatpush1.msra.mxu0 0.0
    %636 = vmatprep.subr.mxu0 0.0
    %637 = vmatpush1.msra.mxu0 0.0
    %638 = vmatprep.subr.mxu0 0.0
    %639 = vmatpush1.msra.mxu0 0.0
    %640 = vmatprep.subr.mxu0 0.0
    %641 = vmatpush1.msra.mxu0 0.0
    %642 = vmatprep.subr.mxu0 0.0
    %643 = vmatpush1.msra.mxu0 0.0
    %644 = vmatprep.subr.mxu0 0.0
    %645 = vmatpush1.msra.mxu0 0.0
    %646 = vmatprep.subr.mxu0 0.0
    %647 = vmatpush1.msra.mxu0 0.0
    %648 = vmatprep.subr.mxu0 0.0
    %649 = vmatpush1.msra.mxu0 0.0
    %650 = vmatprep.subr.mxu0 0.0
    %651 = vmatpush1.msra.mxu0 0.0
    %652 = vmatprep.subr.mxu0 0.0
    %653 = vmatpush1.msra.mxu0 0.0
    %654 = vmatprep.subr.mxu0 0.0
    %655 = vmatpush1.msra.mxu0 0.0
    %656 = vmatprep.subr.mxu0 0.0
    %657 = vmatpush1.msra.mxu0 0.0
    %658 = vmatprep.subr.mxu0 0.0
    %659 = vmatpush1.msra.mxu0 0.0
    %660 = vmatprep.subr.mxu0 0.0
    %661 = vmatpush1.msra.mxu0 0.0
    %662 = vmatprep.subr.mxu0 0.0
    %663 = vmatpush1.msra.mxu0 0.0
    %664 = vmatprep.subr.mxu0 0.0
    %665 = vmatpush1.msra.mxu0 0.0
    %666 = vmatprep.subr.mxu0 0.0
    %667 = vmatpush1.msra.mxu0 0.0
    %668 = vmatprep.subr.mxu0 0.0
    %669 = vmatpush1.msra.mxu0 0.0
    %670 = vmatprep.subr.mxu0 0.0
    %671 = vmatpush1.msra.mxu0 0.0
    %672 = vmatprep.subr.mxu0 0.0
    %673 = vmatpush1.msra.mxu0 0.0
    %674 = vmatprep.subr.mxu0 0.0
    %675 = vmatpush1.msra.mxu0 0.0
    %676 = vmatprep.subr.mxu0 0.0
    %677 = vmatpush1.msra.mxu0 0.0
    %678 = vmatprep.subr.mxu0 0.0
    %679 = vmatpush1.msra.mxu0 0.0
    %680 = vmatprep.subr.mxu0 0.0
    %681 = vmatpush1.msra.mxu0 0.0
    %682 = vmatprep.subr.mxu0 0.0
    %683 = vmatpush1.msra.mxu0 0.0
    %684 = vmatprep.subr.mxu0 0.0
    %685 = vmatpush1.msra.mxu0 0.0
    %686 = vmatprep.subr.mxu0 0.0
    %687 = vmatpush1.msra.mxu0 0.0
    %688 = vmatprep.mubr.f32.mxu0 0.0
    %689 = vmatmul.mubr.f32.gmra.mrb[0].mxu0 %v552
    %v690 = vpop.f32.mrb[0].mxu0
    %v691 = vadd.f32 0.0, %v690
    %v692 = vpop.f32.mrb[0].mxu0
    %693 = vdwg.mxu0
    %694 = vmatprep.subr.mxu0 0.0
    %695 = vmatpush1.msra.mxu0 %v253
    %696 = vmatprep.subr.mxu0 0.0
    %697 = vmatpush1.msra.mxu0 %v254
    %698 = vmatprep.subr.mxu0 0.0
    %699 = vmatpush1.msra.mxu0 %v255
    %700 = vmatprep.subr.mxu0 0.0
    %701 = vmatpush1.msra.mxu0 %v256
    %702 = vmatprep.subr.mxu0 0.0
    %703 = vmatpush1.msra.mxu0 0.0
    %704 = vmatprep.subr.mxu0 0.0
    %705 = vmatpush1.msra.mxu0 0.0
    %706 = vmatprep.subr.mxu0 0.0
    %707 = vmatpush1.msra.mxu0 0.0
    %708 = vmatprep.subr.mxu0 0.0
    %709 = vmatpush1.msra.mxu0 0.0
    %710 = vmatprep.subr.mxu0 0.0
    %711 = vmatpush1.msra.mxu0 0.0
    %712 = vmatprep.subr.mxu0 0.0
    %713 = vmatpush1.msra.mxu0 0.0
    %714 = vmatprep.subr.mxu0 0.0
    %715 = vmatpush1.msra.mxu0 0.0
    %716 = vmatprep.subr.mxu0 0.0
    %717 = vmatpush1.msra.mxu0 0.0
    %718 = vmatprep.subr.mxu0 0.0
    %719 = vmatpush1.msra.mxu0 0.0
    %720 = vmatprep.subr.mxu0 0.0
    %721 = vmatpush1.msra.mxu0 0.0
    %722 = vmatprep.subr.mxu0 0.0
    %723 = vmatpush1.msra.mxu0 0.0
    %724 = vmatprep.subr.mxu0 0.0
    %725 = vmatpush1.msra.mxu0 0.0
    %726 = vmatprep.subr.mxu0 0.0
    %727 = vmatpush1.msra.mxu0 0.0
    %728 = vmatprep.subr.mxu0 0.0
    %729 = vmatpush1.msra.mxu0 0.0
    %730 = vmatprep.subr.mxu0 0.0
    %731 = vmatpush1.msra.mxu0 0.0
    %732 = vmatprep.subr.mxu0 0.0
    %733 = vmatpush1.msra.mxu0 0.0
    %734 = vmatprep.subr.mxu0 0.0
    %735 = vmatpush1.msra.mxu0 0.0
    %736 = vmatprep.subr.mxu0 0.0
    %737 = vmatpush1.msra.mxu0 0.0
    %738 = vmatprep.subr.mxu0 0.0
    %739 = vmatpush1.msra.mxu0 0.0
    %740 = vmatprep.subr.mxu0 0.0
    %741 = vmatpush1.msra.mxu0 0.0
    %742 = vmatprep.subr.mxu0 0.0
    %743 = vmatpush1.msra.mxu0 0.0
    %744 = vmatprep.subr.mxu0 0.0
    %745 = vmatpush1.msra.mxu0 0.0
    %746 = vmatprep.subr.mxu0 0.0
    %747 = vmatpush1.msra.mxu0 0.0
    %748 = vmatprep.subr.mxu0 0.0
    %749 = vmatpush1.msra.mxu0 0.0
    %750 = vmatprep.subr.mxu0 0.0
    %751 = vmatpush1.msra.mxu0 0.0
    %752 = vmatprep.subr.mxu0 0.0
    %753 = vmatpush1.msra.mxu0 0.0
    %754 = vmatprep.subr.mxu0 0.0
    %755 = vmatpush1.msra.mxu0 0.0
    %756 = vmatprep.subr.mxu0 0.0
    %757 = vmatpush1.msra.mxu0 0.0
    %758 = vmatprep.mubr.f32.mxu0 0.0
    %759 = vmatmul.mubr.f32.gmra.mrb[0].mxu0 %v552
    %v760 = vpop.f32.mrb[0].mxu0
    %v761 = vadd.f32 %v267, %v760
    %v762 = vpop.f32.mrb[0].mxu0
    %763 = vdwg.mxu0
    %v765 = vrot.slane %v621, 4
    %v767 = vadd.f32 %v237, %v765
    %v768 = vxor.u32 %v767, 2147483648
    %v769 = vmul.f32 %v768, 1.442695
    %v770 = vpow.pop %v769
    %v771 = vadd.f32 %v770, 1.0
    %v772 = vrcp.pop %v771
    %v773 = vmul.f32 1.0, %v772
    %v775 = vrot.slane %v691, 4
    %776 = vrot.lane.b32.xlu0 %v775, 32
    %v777 = vpop.permute.xlu0 %776
    %v779 = vadd.f32 %v237, %v777
    %v780 = vxor.u32 %v779, 2147483648
    %v781 = vmul.f32 %v780, 1.442695
    %v782 = vpow.pop %v781
    %v783 = vadd.f32 %v782, 1.0
    %v784 = vrcp.pop %v783
    %v785 = vmul.f32 1.0, %v784
    %v787 = vrot.slane %v761, 4
    %v789 = vmul.f32 %v773, %v787
    %791 = vrot.lane.b32.xlu0 %v789, 64
    %v792 = vpop.permute.xlu0 %791
    %v794 = vadd.f32 %v237, %v792
    %v795 = vtanh.pop %v794
    %v797 = vrot.slane %v795, 2
    %v799 = vsub.f32 %v547, %v797
    %v801 = vrot.slane %v799, 6
    %802 = vrot.lane.b32.xlu0 %v801, 96
    %v803 = vpop.permute.xlu0 %802
    %v805 = vmul.f32 %v785, %v803
    %807 = vrot.lane.b32.xlu0 %v805, 32
    %v808 = vpop.permute.xlu0 %807
    %v810 = vadd.f32 %v795, %v808
    %v812 = vrot.slane %v810, 4
    %813 = vrot.lane.b32.xlu0 %v812, 64
    %v814 = vpop.permute.xlu0 %813
    %v815 = vsel %vm288, %v814, 0
    %817 = vmatprep.subr.mxu0 0.0
    %818 = vmatpush1.msra.mxu0 %v245
    %819 = vmatprep.subr.mxu0 0.0
    %820 = vmatpush1.msra.mxu0 %v246
    %821 = vmatprep.subr.mxu0 0.0
    %822 = vmatpush1.msra.mxu0 %v247
    %823 = vmatprep.subr.mxu0 0.0
    %824 = vmatpush1.msra.mxu0 %v248
    %825 = vmatprep.subr.mxu0 0.0
    %826 = vmatpush1.msra.mxu0 0.0
    %827 = vmatprep.subr.mxu0 0.0
    %828 = vmatpush1.msra.mxu0 0.0
    %829 = vmatprep.subr.mxu0 0.0
    %830 = vmatpush1.msra.mxu0 0.0
    %831 = vmatprep.subr.mxu0 0.0
    %832 = vmatpush1.msra.mxu0 0.0
    %833 = vmatprep.subr.mxu0 0.0
    %834 = vmatpush1.msra.mxu0 0.0
    %835 = vmatprep.subr.mxu0 0.0
    %836 = vmatpush1.msra.mxu0 0.0
    %837 = vmatprep.subr.mxu0 0.0
    %838 = vmatpush1.msra.mxu0 0.0
    %839 = vmatprep.subr.mxu0 0.0
    %840 = vmatpush1.msra.mxu0 0.0
    %841 = vmatprep.subr.mxu0 0.0
    %842 = vmatpush1.msra.mxu0 0.0
    %843 = vmatprep.subr.mxu0 0.0
    %844 = vmatpush1.msra.mxu0 0.0
    %845 = vmatprep.subr.mxu0 0.0
    %846 = vmatpush1.msra.mxu0 0.0
    %847 = vmatprep.subr.mxu0 0.0
    %848 = vmatpush1.msra.mxu0 0.0
    %849 = vmatprep.subr.mxu0 0.0
    %850 = vmatpush1.msra.mxu0 0.0
    %851 = vmatprep.subr.mxu0 0.0
    %852 = vmatpush1.msra.mxu0 0.0
    %853 = vmatprep.subr.mxu0 0.0
    %854 = vmatpush1.msra.mxu0 0.0
    %855 = vmatprep.subr.mxu0 0.0
    %856 = vmatpush1.msra.mxu0 0.0
    %857 = vmatprep.subr.mxu0 0.0
    %858 = vmatpush1.msra.mxu0 0.0
    %859 = vmatprep.subr.mxu0 0.0
    %860 = vmatpush1.msra.mxu0 0.0
    %861 = vmatprep.subr.mxu0 0.0
    %862 = vmatpush1.msra.mxu0 0.0
    %863 = vmatprep.subr.mxu0 0.0
    %864 = vmatpush1.msra.mxu0 0.0
    %865 = vmatprep.subr.mxu0 0.0
    %866 = vmatpush1.msra.mxu0 0.0
    %867 = vmatprep.subr.mxu0 0.0
    %868 = vmatpush1.msra.mxu0 0.0
    %869 = vmatprep.subr.mxu0 0.0
    %870 = vmatpush1.msra.mxu0 0.0
    %871 = vmatprep.subr.mxu0 0.0
    %872 = vmatpush1.msra.mxu0 0.0
    %873 = vmatprep.subr.mxu0 0.0
    %874 = vmatpush1.msra.mxu0 0.0
    %875 = vmatprep.subr.mxu0 0.0
    %876 = vmatpush1.msra.mxu0 0.0
    %877 = vmatprep.subr.mxu0 0.0
    %878 = vmatpush1.msra.mxu0 0.0
    %879 = vmatprep.subr.mxu0 0.0
    %880 = vmatpush1.msra.mxu0 0.0
    %881 = vmatprep.mubr.f32.mxu0 0.0
    %882 = vmatmul.mubr.f32.gmra.mrb[0].mxu0 %v815
    %v883 = vpop.f32.mrb[0].mxu0
    %v884 = vadd.f32 0.0, %v883
    %v885 = vpop.f32.mrb[0].mxu0
    %886 = vdwg.mxu0
    %887 = vmatprep.subr.mxu0 0.0
    %888 = vmatpush1.msra.mxu0 %v249
    %889 = vmatprep.subr.mxu0 0.0
    %890 = vmatpush1.msra.mxu0 %v250
    %891 = vmatprep.subr.mxu0 0.0
    %892 = vmatpush1.msra.mxu0 %v251
    %893 = vmatprep.subr.mxu0 0.0
    %894 = vmatpush1.msra.mxu0 %v252
    %895 = vmatprep.subr.mxu0 0.0
    %896 = vmatpush1.msra.mxu0 0.0
    %897 = vmatprep.subr.mxu0 0.0
    %898 = vmatpush1.msra.mxu0 0.0
    %899 = vmatprep.subr.mxu0 0.0
    %900 = vmatpush1.msra.mxu0 0.0
    %901 = vmatprep.subr.mxu0 0.0
    %902 = vmatpush1.msra.mxu0 0.0
    %903 = vmatprep.subr.mxu0 0.0
    %904 = vmatpush1.msra.mxu0 0.0
    %905 = vmatprep.subr.mxu0 0.0
    %906 = vmatpush1.msra.mxu0 0.0
    %907 = vmatprep.subr.mxu0 0.0
    %908 = vmatpush1.msra.mxu0 0.0
    %909 = vmatprep.subr.mxu0 0.0
    %910 = vmatpush1.msra.mxu0 0.0
    %911 = vmatprep.subr.mxu0 0.0
    %912 = vmatpush1.msra.mxu0 0.0
    %913 = vmatprep.subr.mxu0 0.0
    %914 = vmatpush1.msra.mxu0 0.0
    %915 = vmatprep.subr.mxu0 0.0
    %916 = vmatpush1.msra.mxu0 0.0
    %917 = vmatprep.subr.mxu0 0.0
    %918 = vmatpush1.msra.mxu0 0.0
    %919 = vmatprep.subr.mxu0 0.0
    %920 = vmatpush1.msra.mxu0 0.0
    %921 = vmatprep.subr.mxu0 0.0
    %922 = vmatpush1.msra.mxu0 0.0
    %923 = vmatprep.subr.mxu0 0.0
    %924 = vmatpush1.msra.mxu0 0.0
    %925 = vmatprep.subr.mxu0 0.0
    %926 = vmatpush1.msra.mxu0 0.0
    %927 = vmatprep.subr.mxu0 0.0
    %928 = vmatpush1.msra.mxu0 0.0
    %929 = vmatprep.subr.mxu0 0.0
    %930 = vmatpush1.msra.mxu0 0.0
    %931 = vmatprep.subr.mxu0 0.0
    %932 = vmatpush1.msra.mxu0 0.0
    %933 = vmatprep.subr.mxu0 0.0
    %934 = vmatpush1.msra.mxu0 0.0
    %935 = vmatprep.subr.mxu0 0.0
    %936 = vmatpush1.msra.mxu0 0.0
    %937 = vmatprep.subr.mxu0 0.0
    %938 = vmatpush1.msra.mxu0 0.0
    %939 = vmatprep.subr.mxu0 0.0
    %940 = vmatpush1.msra.mxu0 0.0
    %941 = vmatprep.subr.mxu0 0.0
    %942 = vmatpush1.msra.mxu0 0.0
    %943 = vmatprep.subr.mxu0 0.0
    %944 = vmatpush1.msra.mxu0 0.0
    %945 = vmatprep.subr.mxu0 0.0
    %946 = vmatpush1.msra.mxu0 0.0
    %947 = vmatprep.subr.mxu0 0.0
    %948 = vmatpush1.msra.mxu0 0.0
    %949 = vmatprep.subr.mxu0 0.0
    %950 = vmatpush1.msra.mxu0 0.0
    %951 = vmatprep.mubr.f32.mxu0 0.0
    %952 = vmatmul.mubr.f32.gmra.mrb[0].mxu0 %v815
    %v953 = vpop.f32.mrb[0].mxu0
    %v954 = vadd.f32 0.0, %v953
    %v955 = vpop.f32.mrb[0].mxu0
    %956 = vdwg.mxu0
    %957 = vmatprep.subr.mxu0 0.0
    %958 = vmatpush1.msra.mxu0 %v253
    %959 = vmatprep.subr.mxu0 0.0
    %960 = vmatpush1.msra.mxu0 %v254
    %961 = vmatprep.subr.mxu0 0.0
    %962 = vmatpush1.msra.mxu0 %v255
    %963 = vmatprep.subr.mxu0 0.0
    %964 = vmatpush1.msra.mxu0 %v256
    %965 = vmatprep.subr.mxu0 0.0
    %966 = vmatpush1.msra.mxu0 0.0
    %967 = vmatprep.subr.mxu0 0.0
    %968 = vmatpush1.msra.mxu0 0.0
    %969 = vmatprep.subr.mxu0 0.0
    %970 = vmatpush1.msra.mxu0 0.0
    %971 = vmatprep.subr.mxu0 0.0
    %972 = vmatpush1.msra.mxu0 0.0
    %973 = vmatprep.subr.mxu0 0.0
    %974 = vmatpush1.msra.mxu0 0.0
    %975 = vmatprep.subr.mxu0 0.0
    %976 = vmatpush1.msra.mxu0 0.0
    %977 = vmatprep.subr.mxu0 0.0
    %978 = vmatpush1.msra.mxu0 0.0
    %979 = vmatprep.subr.mxu0 0.0
    %980 = vmatpush1.msra.mxu0 0.0
    %981 = vmatprep.subr.mxu0 0.0
    %982 = vmatpush1.msra.mxu0 0.0
    %983 = vmatprep.subr.mxu0 0.0
    %984 = vmatpush1.msra.mxu0 0.0
    %985 = vmatprep.subr.mxu0 0.0
    %986 = vmatpush1.msra.mxu0 0.0
    %987 = vmatprep.subr.mxu0 0.0
    %988 = vmatpush1.msra.mxu0 0.0
    %989 = vmatprep.subr.mxu0 0.0
    %990 = vmatpush1.msra.mxu0 0.0
    %991 = vmatprep.subr.mxu0 0.0
    %992 = vmatpush1.msra.mxu0 0.0
    %993 = vmatprep.subr.mxu0 0.0
    %994 = vmatpush1.msra.mxu0 0.0
    %995 = vmatprep.subr.mxu0 0.0
    %996 = vmatpush1.msra.mxu0 0.0
    %997 = vmatprep.subr.mxu0 0.0
    %998 = vmatpush1.msra.mxu0 0.0
    %999 = vmatprep.subr.mxu0 0.0
    %1000 = vmatpush1.msra.mxu0 0.0
    %1001 = vmatprep.subr.mxu0 0.0
    %1002 = vmatpush1.msra.mxu0 0.0
    %1003 = vmatprep.subr.mxu0 0.0
    %1004 = vmatpush1.msra.mxu0 0.0
    %1005 = vmatprep.subr.mxu0 0.0
    %1006 = vmatpush1.msra.mxu0 0.0
    %1007 = vmatprep.subr.mxu0 0.0
    %1008 = vmatpush1.msra.mxu0 0.0
    %1009 = vmatprep.subr.mxu0 0.0
    %1010 = vmatpush1.msra.mxu0 0.0
    %1011 = vmatprep.subr.mxu0 0.0
    %1012 = vmatpush1.msra.mxu0 0.0
    %1013 = vmatprep.subr.mxu0 0.0
    %1014 = vmatpush1.msra.mxu0 0.0
    %1015 = vmatprep.subr.mxu0 0.0
    %1016 = vmatpush1.msra.mxu0 0.0
    %1017 = vmatprep.subr.mxu0 0.0
    %1018 = vmatpush1.msra.mxu0 0.0
    %1019 = vmatprep.subr.mxu0 0.0
    %1020 = vmatpush1.msra.mxu0 0.0
    %1021 = vmatprep.mubr.f32.mxu0 0.0
    %1022 = vmatmul.mubr.f32.gmra.mrb[0].mxu0 %v815
    %v1023 = vpop.f32.mrb[0].mxu0
    %v1024 = vadd.f32 %v267, %v1023
    %v1025 = vpop.f32.mrb[0].mxu0
    %1026 = vdwg.mxu0
    %v1028 = vrot.slane %v884, 2
    %v1030 = vadd.f32 %v237, %v1028
    %v1031 = vxor.u32 %v1030, 2147483648
    %v1032 = vmul.f32 %v1031, 1.442695
    %v1033 = vpow.pop %v1032
    %v1034 = vadd.f32 %v1033, 1.0
    %v1035 = vrcp.pop %v1034
    %v1036 = vmul.f32 1.0, %v1035
    %v1038 = vrot.slane %v954, 2
    %1039 = vrot.lane.b32.xlu0 %v1038, 32
    %v1040 = vpop.permute.xlu0 %1039
    %v1042 = vadd.f32 %v237, %v1040
    %v1043 = vxor.u32 %v1042, 2147483648
    %v1044 = vmul.f32 %v1043, 1.442695
    %v1045 = vpow.pop %v1044
    %v1046 = vadd.f32 %v1045, 1.0
    %v1047 = vrcp.pop %v1046
    %v1048 = vmul.f32 1.0, %v1047
    %v1050 = vrot.slane %v1024, 2
    %v1052 = vmul.f32 %v1036, %v1050
    %1054 = vrot.lane.b32.xlu0 %v1052, 64
    %v1055 = vpop.permute.xlu0 %1054
    %v1057 = vadd.f32 %v237, %v1055
    %v1058 = vtanh.pop %v1057
    %v1060 = vrot.slane %v1058, 2
    %v1062 = vsub.f32 %v810, %v1060
    %v1064 = vrot.slane %v1062, 6
    %1065 = vrot.lane.b32.xlu0 %v1064, 96
    %v1066 = vpop.permute.xlu0 %1065
    %v1068 = vmul.f32 %v1048, %v1066
    %1070 = vrot.lane.b32.xlu0 %v1068, 32
    %v1071 = vpop.permute.xlu0 %1070
    %v1073 = vadd.f32 %v1058, %v1071
    %v1075 = vrot.slane %v1073, 6
    %1076 = vrot.lane.b32.xlu0 %v1075, 64
    %v1077 = vpop.permute.xlu0 %1076
    %v1078 = vsel %vm288, %v1077, 0
    %1080 = vmatprep.subr.mxu0 0.0
    %1081 = vmatpush1.msra.mxu0 %v245
    %1082 = vmatprep.subr.mxu0 0.0
    %1083 = vmatpush1.msra.mxu0 %v246
    %1084 = vmatprep.subr.mxu0 0.0
    %1085 = vmatpush1.msra.mxu0 %v247
    %1086 = vmatprep.subr.mxu0 0.0
    %1087 = vmatpush1.msra.mxu0 %v248
    %1088 = vmatprep.subr.mxu0 0.0
    %1089 = vmatpush1.msra.mxu0 0.0
    %1090 = vmatprep.subr.mxu0 0.0
    %1091 = vmatpush1.msra.mxu0 0.0
    %1092 = vmatprep.subr.mxu0 0.0
    %1093 = vmatpush1.msra.mxu0 0.0
    %1094 = vmatprep.subr.mxu0 0.0
    %1095 = vmatpush1.msra.mxu0 0.0
    %1096 = vmatprep.subr.mxu0 0.0
    %1097 = vmatpush1.msra.mxu0 0.0
    %1098 = vmatprep.subr.mxu0 0.0
    %1099 = vmatpush1.msra.mxu0 0.0
    %1100 = vmatprep.subr.mxu0 0.0
    %1101 = vmatpush1.msra.mxu0 0.0
    %1102 = vmatprep.subr.mxu0 0.0
    %1103 = vmatpush1.msra.mxu0 0.0
    %1104 = vmatprep.subr.mxu0 0.0
    %1105 = vmatpush1.msra.mxu0 0.0
    %1106 = vmatprep.subr.mxu0 0.0
    %1107 = vmatpush1.msra.mxu0 0.0
    %1108 = vmatprep.subr.mxu0 0.0
    %1109 = vmatpush1.msra.mxu0 0.0
    %1110 = vmatprep.subr.mxu0 0.0
    %1111 = vmatpush1.msra.mxu0 0.0
    %1112 = vmatprep.subr.mxu0 0.0
    %1113 = vmatpush1.msra.mxu0 0.0
    %1114 = vmatprep.subr.mxu0 0.0
    %1115 = vmatpush1.msra.mxu0 0.0
    %1116 = vmatprep.subr.mxu0 0.0
    %1117 = vmatpush1.msra.mxu0 0.0
    %1118 = vmatprep.subr.mxu0 0.0
    %1119 = vmatpush1.msra.mxu0 0.0
    %1120 = vmatprep.subr.mxu0 0.0
    %1121 = vmatpush1.msra.mxu0 0.0
    %1122 = vmatprep.subr.mxu0 0.0
    %1123 = vmatpush1.msra.mxu0 0.0
    %1124 = vmatprep.subr.mxu0 0.0
    %1125 = vmatpush1.msra.mxu0 0.0
    %1126 = vmatprep.subr.mxu0 0.0
    %1127 = vmatpush1.msra.mxu0 0.0
    %1128 = vmatprep.subr.mxu0 0.0
    %1129 = vmatpush1.msra.mxu0 0.0
    %1130 = vmatprep.subr.mxu0 0.0
    %1131 = vmatpush1.msra.mxu0 0.0
    %1132 = vmatprep.subr.mxu0 0.0
    %1133 = vmatpush1.msra.mxu0 0.0
    %1134 = vmatprep.subr.mxu0 0.0
    %1135 = vmatpush1.msra.mxu0 0.0
    %1136 = vmatprep.subr.mxu0 0.0
    %1137 = vmatpush1.msra.mxu0 0.0
    %1138 = vmatprep.subr.mxu0 0.0
    %1139 = vmatpush1.msra.mxu0 0.0
    %1140 = vmatprep.subr.mxu0 0.0
    %1141 = vmatpush1.msra.mxu0 0.0
    %1142 = vmatprep.subr.mxu0 0.0
    %1143 = vmatpush1.msra.mxu0 0.0
    %1144 = vmatprep.mubr.f32.mxu0 0.0
    %1145 = vmatmul.mubr.f32.gmra.mrb[0].mxu0 %v1078
    %v1146 = vpop.f32.mrb[0].mxu0
    %v1147 = vadd.f32 0.0, %v1146
    %v1148 = vpop.f32.mrb[0].mxu0
    %1149 = vdwg.mxu0
    %1150 = vmatprep.subr.mxu0 0.0
    %1151 = vmatpush1.msra.mxu0 %v249
    %1152 = vmatprep.subr.mxu0 0.0
    %1153 = vmatpush1.msra.mxu0 %v250
    %1154 = vmatprep.subr.mxu0 0.0
    %1155 = vmatpush1.msra.mxu0 %v251
    %1156 = vmatprep.subr.mxu0 0.0
    %1157 = vmatpush1.msra.mxu0 %v252
    %1158 = vmatprep.subr.mxu0 0.0
    %1159 = vmatpush1.msra.mxu0 0.0
    %1160 = vmatprep.subr.mxu0 0.0
    %1161 = vmatpush1.msra.mxu0 0.0
    %1162 = vmatprep.subr.mxu0 0.0
    %1163 = vmatpush1.msra.mxu0 0.0
    %1164 = vmatprep.subr.mxu0 0.0
    %1165 = vmatpush1.msra.mxu0 0.0
    %1166 = vmatprep.subr.mxu0 0.0
    %1167 = vmatpush1.msra.mxu0 0.0
    %1168 = vmatprep.subr.mxu0 0.0
    %1169 = vmatpush1.msra.mxu0 0.0
    %1170 = vmatprep.subr.mxu0 0.0
    %1171 = vmatpush1.msra.mxu0 0.0
    %1172 = vmatprep.subr.mxu0 0.0
    %1173 = vmatpush1.msra.mxu0 0.0
    %1174 = vmatprep.subr.mxu0 0.0
    %1175 = vmatpush1.msra.mxu0 0.0
    %1176 = vmatprep.subr.mxu0 0.0
    %1177 = vmatpush1.msra.mxu0 0.0
    %1178 = vmatprep.subr.mxu0 0.0
    %1179 = vmatpush1.msra.mxu0 0.0
    %1180 = vmatprep.subr.mxu0 0.0
    %1181 = vmatpush1.msra.mxu0 0.0
    %1182 = vmatprep.subr.mxu0 0.0
    %1183 = vmatpush1.msra.mxu0 0.0
    %1184 = vmatprep.subr.mxu0 0.0
    %1185 = vmatpush1.msra.mxu0 0.0
    %1186 = vmatprep.subr.mxu0 0.0
    %1187 = vmatpush1.msra.mxu0 0.0
    %1188 = vmatprep.subr.mxu0 0.0
    %1189 = vmatpush1.msra.mxu0 0.0
    %1190 = vmatprep.subr.mxu0 0.0
    %1191 = vmatpush1.msra.mxu0 0.0
    %1192 = vmatprep.subr.mxu0 0.0
    %1193 = vmatpush1.msra.mxu0 0.0
    %1194 = vmatprep.subr.mxu0 0.0
    %1195 = vmatpush1.msra.mxu0 0.0
    %1196 = vmatprep.subr.mxu0 0.0
    %1197 = vmatpush1.msra.mxu0 0.0
    %1198 = vmatprep.subr.mxu0 0.0
    %1199 = vmatpush1.msra.mxu0 0.0
    %1200 = vmatprep.subr.mxu0 0.0
    %1201 = vmatpush1.msra.mxu0 0.0
    %1202 = vmatprep.subr.mxu0 0.0
    %1203 = vmatpush1.msra.mxu0 0.0
    %1204 = vmatprep.subr.mxu0 0.0
    %1205 = vmatpush1.msra.mxu0 0.0
    %1206 = vmatprep.subr.mxu0 0.0
    %1207 = vmatpush1.msra.mxu0 0.0
    %1208 = vmatprep.subr.mxu0 0.0
    %1209 = vmatpush1.msra.mxu0 0.0
    %1210 = vmatprep.subr.mxu0 0.0
    %1211 = vmatpush1.msra.mxu0 0.0
    %1212 = vmatprep.subr.mxu0 0.0
    %1213 = vmatpush1.msra.mxu0 0.0
    %1214 = vmatprep.mubr.f32.mxu0 0.0
    %1215 = vmatmul.mubr.f32.gmra.mrb[0].mxu0 %v1078
    %v1216 = vpop.f32.mrb[0].mxu0
    %v1217 = vadd.f32 0.0, %v1216
    %v1218 = vpop.f32.mrb[0].mxu0
    %1219 = vdwg.mxu0
    %1220 = vmatprep.subr.mxu0 0.0
    %1221 = vmatpush1.msra.mxu0 %v253
    %1222 = vmatprep.subr.mxu0 0.0
    %1223 = vmatpush1.msra.mxu0 %v254
    %1224 = vmatprep.subr.mxu0 0.0
    %1225 = vmatpush1.msra.mxu0 %v255
    %1226 = vmatprep.subr.mxu0 0.0
    %1227 = vmatpush1.msra.mxu0 %v256
    %1228 = vmatprep.subr.mxu0 0.0
    %1229 = vmatpush1.msra.mxu0 0.0
    %1230 = vmatprep.subr.mxu0 0.0
    %1231 = vmatpush1.msra.mxu0 0.0
    %1232 = vmatprep.subr.mxu0 0.0
    %1233 = vmatpush1.msra.mxu0 0.0
    %1234 = vmatprep.subr.mxu0 0.0
    %1235 = vmatpush1.msra.mxu0 0.0
    %1236 = vmatprep.subr.mxu0 0.0
    %1237 = vmatpush1.msra.mxu0 0.0
    %1238 = vmatprep.subr.mxu0 0.0
    %1239 = vmatpush1.msra.mxu0 0.0
    %1240 = vmatprep.subr.mxu0 0.0
    %1241 = vmatpush1.msra.mxu0 0.0
    %1242 = vmatprep.subr.mxu0 0.0
    %1243 = vmatpush1.msra.mxu0 0.0
    %1244 = vmatprep.subr.mxu0 0.0
    %1245 = vmatpush1.msra.mxu0 0.0
    %1246 = vmatprep.subr.mxu0 0.0
    %1247 = vmatpush1.msra.mxu0 0.0
    %1248 = vmatprep.subr.mxu0 0.0
    %1249 = vmatpush1.msra.mxu0 0.0
    %1250 = vmatprep.subr.mxu0 0.0
    %1251 = vmatpush1.msra.mxu0 0.0
    %1252 = vmatprep.subr.mxu0 0.0
    %1253 = vmatpush1.msra.mxu0 0.0
    %1254 = vmatprep.subr.mxu0 0.0
    %1255 = vmatpush1.msra.mxu0 0.0
    %1256 = vmatprep.subr.mxu0 0.0
    %1257 = vmatpush1.msra.mxu0 0.0
    %1258 = vmatprep.subr.mxu0 0.0
    %1259 = vmatpush1.msra.mxu0 0.0
    %1260 = vmatprep.subr.mxu0 0.0
    %1261 = vmatpush1.msra.mxu0 0.0
    %1262 = vmatprep.subr.mxu0 0.0
    %1263 = vmatpush1.msra.mxu0 0.0
    %1264 = vmatprep.subr.mxu0 0.0
    %1265 = vmatpush1.msra.mxu0 0.0
    %1266 = vmatprep.subr.mxu0 0.0
    %1267 = vmatpush1.msra.mxu0 0.0
    %1268 = vmatprep.subr.mxu0 0.0
    %1269 = vmatpush1.msra.mxu0 0.0
    %1270 = vmatprep.subr.mxu0 0.0
    %1271 = vmatpush1.msra.mxu0 0.0
    %1272 = vmatprep.subr.mxu0 0.0
    %1273 = vmatpush1.msra.mxu0 0.0
    %1274 = vmatprep.subr.mxu0 0.0
    %1275 = vmatpush1.msra.mxu0 0.0
    %1276 = vmatprep.subr.mxu0 0.0
    %1277 = vmatpush1.msra.mxu0 0.0
    %1278 = vmatprep.subr.mxu0 0.0
    %1279 = vmatpush1.msra.mxu0 0.0
    %1280 = vmatprep.subr.mxu0 0.0
    %1281 = vmatpush1.msra.mxu0 0.0
    %1282 = vmatprep.subr.mxu0 0.0
    %1283 = vmatpush1.msra.mxu0 0.0
    %1284 = vmatprep.mubr.f32.mxu0 0.0
    %1285 = vmatmul.mubr.f32.gmra.mrb[0].mxu0 %v1078
    %v1286 = vpop.f32.mrb[0].mxu0
    %v1287 = vadd.f32 %v267, %v1286
    %v1288 = vpop.f32.mrb[0].mxu0
    %1289 = vdwg.mxu0
    %v1290 = vadd.f32 %v242, %v1147
    %v1291 = vxor.u32 %v1290, 2147483648
    %v1292 = vmul.f32 %v1291, 1.442695
    %v1293 = vpow.pop %v1292
    %v1294 = vadd.f32 %v1293, 1.0
    %v1295 = vrcp.pop %v1294
    %v1296 = vmul.f32 1.0, %v1295
    %1298 = vrot.lane.b32.xlu0 %v1217, 32
    %v1299 = vpop.permute.xlu0 %1298
    %v1301 = vadd.f32 %v242, %v1299
    %v1302 = vxor.u32 %v1301, 2147483648
    %v1303 = vmul.f32 %v1302, 1.442695
    %v1304 = vpow.pop %v1303
    %v1305 = vadd.f32 %v1304, 1.0
    %v1306 = vrcp.pop %v1305
    %v1307 = vmul.f32 1.0, %v1306
    %v1308 = vmul.f32 %v1296, %v1287
    %1310 = vrot.lane.b32.xlu0 %v1308, 64
    %v1311 = vpop.permute.xlu0 %1310
    %v1313 = vadd.f32 %v242, %v1311
    %v1314 = vtanh.pop %v1313
    %v1316 = vrot.slane %v1314, 2
    %v1318 = vsub.f32 %v1073, %v1316
    %v1320 = vrot.slane %v1318, 6
    %1321 = vrot.lane.b32.xlu0 %v1320, 96
    %v1322 = vpop.permute.xlu0 %1321
    %v1324 = vmul.f32 %v1307, %v1322
    %1326 = vrot.lane.b32.xlu0 %v1324, 32
    %v1327 = vpop.permute.xlu0 %1326
    %v1329 = vadd.f32 %v1314, %v1327
    %1331 = vrot.lane.b32.xlu0 %v1329, 64
    %v1332 = vpop.permute.xlu0 %1331
    %v1333 = vsel %vm288, %v1332, 0
    %1335 = vmatprep.subr.mxu0 0.0
    %1336 = vmatpush1.msra.mxu0 %v245
    %1337 = vmatprep.subr.mxu0 0.0
    %1338 = vmatpush1.msra.mxu0 %v246
    %1339 = vmatprep.subr.mxu0 0.0
    %1340 = vmatpush1.msra.mxu0 %v247
    %1341 = vmatprep.subr.mxu0 0.0
    %1342 = vmatpush1.msra.mxu0 %v248
    %1343 = vmatprep.subr.mxu0 0.0
    %1344 = vmatpush1.msra.mxu0 0.0
    %1345 = vmatprep.subr.mxu0 0.0
    %1346 = vmatpush1.msra.mxu0 0.0
    %1347 = vmatprep.subr.mxu0 0.0
    %1348 = vmatpush1.msra.mxu0 0.0
    %1349 = vmatprep.subr.mxu0 0.0
    %1350 = vmatpush1.msra.mxu0 0.0
    %1351 = vmatprep.subr.mxu0 0.0
    %1352 = vmatpush1.msra.mxu0 0.0
    %1353 = vmatprep.subr.mxu0 0.0
    %1354 = vmatpush1.msra.mxu0 0.0
    %1355 = vmatprep.subr.mxu0 0.0
    %1356 = vmatpush1.msra.mxu0 0.0
    %1357 = vmatprep.subr.mxu0 0.0
    %1358 = vmatpush1.msra.mxu0 0.0
    %1359 = vmatprep.subr.mxu0 0.0
    %1360 = vmatpush1.msra.mxu0 0.0
    %1361 = vmatprep.subr.mxu0 0.0
    %1362 = vmatpush1.msra.mxu0 0.0
    %1363 = vmatprep.subr.mxu0 0.0
    %1364 = vmatpush1.msra.mxu0 0.0
    %1365 = vmatprep.subr.mxu0 0.0
    %1366 = vmatpush1.msra.mxu0 0.0
    %1367 = vmatprep.subr.mxu0 0.0
    %1368 = vmatpush1.msra.mxu0 0.0
    %1369 = vmatprep.subr.mxu0 0.0
    %1370 = vmatpush1.msra.mxu0 0.0
    %1371 = vmatprep.subr.mxu0 0.0
    %1372 = vmatpush1.msra.mxu0 0.0
    %1373 = vmatprep.subr.mxu0 0.0
    %1374 = vmatpush1.msra.mxu0 0.0
    %1375 = vmatprep.subr.mxu0 0.0
    %1376 = vmatpush1.msra.mxu0 0.0
    %1377 = vmatprep.subr.mxu0 0.0
    %1378 = vmatpush1.msra.mxu0 0.0
    %1379 = vmatprep.subr.mxu0 0.0
    %1380 = vmatpush1.msra.mxu0 0.0
    %1381 = vmatprep.subr.mxu0 0.0
    %1382 = vmatpush1.msra.mxu0 0.0
    %1383 = vmatprep.subr.mxu0 0.0
    %1384 = vmatpush1.msra.mxu0 0.0
    %1385 = vmatprep.subr.mxu0 0.0
    %1386 = vmatpush1.msra.mxu0 0.0
    %1387 = vmatprep.subr.mxu0 0.0
    %1388 = vmatpush1.msra.mxu0 0.0
    %1389 = vmatprep.subr.mxu0 0.0
    %1390 = vmatpush1.msra.mxu0 0.0
    %1391 = vmatprep.subr.mxu0 0.0
    %1392 = vmatpush1.msra.mxu0 0.0
    %1393 = vmatprep.subr.mxu0 0.0
    %1394 = vmatpush1.msra.mxu0 0.0
    %1395 = vmatprep.subr.mxu0 0.0
    %1396 = vmatpush1.msra.mxu0 0.0
    %1397 = vmatprep.subr.mxu0 0.0
    %1398 = vmatpush1.msra.mxu0 0.0
    %1399 = vmatprep.mubr.f32.mxu0 0.0
    %1400 = vmatmul.mubr.f32.gmra.mrb[0].mxu0 %v1333
    %v1401 = vpop.f32.mrb[0].mxu0
    %v1402 = vadd.f32 0.0, %v1401
    %v1403 = vpop.f32.mrb[0].mxu0
    %1404 = vdwg.mxu0
    %1405 = vmatprep.subr.mxu0 0.0
    %1406 = vmatpush1.msra.mxu0 %v249
    %1407 = vmatprep.subr.mxu0 0.0
    %1408 = vmatpush1.msra.mxu0 %v250
    %1409 = vmatprep.subr.mxu0 0.0
    %1410 = vmatpush1.msra.mxu0 %v251
    %1411 = vmatprep.subr.mxu0 0.0
    %1412 = vmatpush1.msra.mxu0 %v252
    %1413 = vmatprep.subr.mxu0 0.0
    %1414 = vmatpush1.msra.mxu0 0.0
    %1415 = vmatprep.subr.mxu0 0.0
    %1416 = vmatpush1.msra.mxu0 0.0
    %1417 = vmatprep.subr.mxu0 0.0
    %1418 = vmatpush1.msra.mxu0 0.0
    %1419 = vmatprep.subr.mxu0 0.0
    %1420 = vmatpush1.msra.mxu0 0.0
    %1421 = vmatprep.subr.mxu0 0.0
    %1422 = vmatpush1.msra.mxu0 0.0
    %1423 = vmatprep.subr.mxu0 0.0
    %1424 = vmatpush1.msra.mxu0 0.0
    %1425 = vmatprep.subr.mxu0 0.0
    %1426 = vmatpush1.msra.mxu0 0.0
    %1427 = vmatprep.subr.mxu0 0.0
    %1428 = vmatpush1.msra.mxu0 0.0
    %1429 = vmatprep.subr.mxu0 0.0
    %1430 = vmatpush1.msra.mxu0 0.0
    %1431 = vmatprep.subr.mxu0 0.0
    %1432 = vmatpush1.msra.mxu0 0.0
    %1433 = vmatprep.subr.mxu0 0.0
    %1434 = vmatpush1.msra.mxu0 0.0
    %1435 = vmatprep.subr.mxu0 0.0
    %1436 = vmatpush1.msra.mxu0 0.0
    %1437 = vmatprep.subr.mxu0 0.0
    %1438 = vmatpush1.msra.mxu0 0.0
    %1439 = vmatprep.subr.mxu0 0.0
    %1440 = vmatpush1.msra.mxu0 0.0
    %1441 = vmatprep.subr.mxu0 0.0
    %1442 = vmatpush1.msra.mxu0 0.0
    %1443 = vmatprep.subr.mxu0 0.0
    %1444 = vmatpush1.msra.mxu0 0.0
    %1445 = vmatprep.subr.mxu0 0.0
    %1446 = vmatpush1.msra.mxu0 0.0
    %1447 = vmatprep.subr.mxu0 0.0
    %1448 = vmatpush1.msra.mxu0 0.0
    %1449 = vmatprep.subr.mxu0 0.0
    %1450 = vmatpush1.msra.mxu0 0.0
    %1451 = vmatprep.subr.mxu0 0.0
    %1452 = vmatpush1.msra.mxu0 0.0
    %1453 = vmatprep.subr.mxu0 0.0
    %1454 = vmatpush1.msra.mxu0 0.0
    %1455 = vmatprep.subr.mxu0 0.0
    %1456 = vmatpush1.msra.mxu0 0.0
    %1457 = vmatprep.subr.mxu0 0.0
    %1458 = vmatpush1.msra.mxu0 0.0
    %1459 = vmatprep.subr.mxu0 0.0
    %1460 = vmatpush1.msra.mxu0 0.0
    %1461 = vmatprep.subr.mxu0 0.0
    %1462 = vmatpush1.msra.mxu0 0.0
    %1463 = vmatprep.subr.mxu0 0.0
    %1464 = vmatpush1.msra.mxu0 0.0
    %1465 = vmatprep.subr.mxu0 0.0
    %1466 = vmatpush1.msra.mxu0 0.0
    %1467 = vmatprep.subr.mxu0 0.0
    %1468 = vmatpush1.msra.mxu0 0.0
    %1469 = vmatprep.mubr.f32.mxu0 0.0
    %1470 = vmatmul.mubr.f32.gmra.mrb[0].mxu0 %v1333
    %v1471 = vpop.f32.mrb[0].mxu0
    %v1472 = vadd.f32 0.0, %v1471
    %v1473 = vpop.f32.mrb[0].mxu0
    %1474 = vdwg.mxu0
    %1475 = vmatprep.subr.mxu0 0.0
    %1476 = vmatpush1.msra.mxu0 %v253
    %1477 = vmatprep.subr.mxu0 0.0
    %1478 = vmatpush1.msra.mxu0 %v254
    %1479 = vmatprep.subr.mxu0 0.0
    %1480 = vmatpush1.msra.mxu0 %v255
    %1481 = vmatprep.subr.mxu0 0.0
    %1482 = vmatpush1.msra.mxu0 %v256
    %1483 = vmatprep.subr.mxu0 0.0
    %1484 = vmatpush1.msra.mxu0 0.0
    %1485 = vmatprep.subr.mxu0 0.0
    %1486 = vmatpush1.msra.mxu0 0.0
    %1487 = vmatprep.subr.mxu0 0.0
    %1488 = vmatpush1.msra.mxu0 0.0
    %1489 = vmatprep.subr.mxu0 0.0
    %1490 = vmatpush1.msra.mxu0 0.0
    %1491 = vmatprep.subr.mxu0 0.0
    %1492 = vmatpush1.msra.mxu0 0.0
    %1493 = vmatprep.subr.mxu0 0.0
    %1494 = vmatpush1.msra.mxu0 0.0
    %1495 = vmatprep.subr.mxu0 0.0
    %1496 = vmatpush1.msra.mxu0 0.0
    %1497 = vmatprep.subr.mxu0 0.0
    %1498 = vmatpush1.msra.mxu0 0.0
    %1499 = vmatprep.subr.mxu0 0.0
    %1500 = vmatpush1.msra.mxu0 0.0
    %1501 = vmatprep.subr.mxu0 0.0
    %1502 = vmatpush1.msra.mxu0 0.0
    %1503 = vmatprep.subr.mxu0 0.0
    %1504 = vmatpush1.msra.mxu0 0.0
    %1505 = vmatprep.subr.mxu0 0.0
    %1506 = vmatpush1.msra.mxu0 0.0
    %1507 = vmatprep.subr.mxu0 0.0
    %1508 = vmatpush1.msra.mxu0 0.0
    %1509 = vmatprep.subr.mxu0 0.0
    %1510 = vmatpush1.msra.mxu0 0.0
    %1511 = vmatprep.subr.mxu0 0.0
    %1512 = vmatpush1.msra.mxu0 0.0
    %1513 = vmatprep.subr.mxu0 0.0
    %1514 = vmatpush1.msra.mxu0 0.0
    %1515 = vmatprep.subr.mxu0 0.0
    %1516 = vmatpush1.msra.mxu0 0.0
    %1517 = vmatprep.subr.mxu0 0.0
    %1518 = vmatpush1.msra.mxu0 0.0
    %1519 = vmatprep.subr.mxu0 0.0
    %1520 = vmatpush1.msra.mxu0 0.0
    %1521 = vmatprep.subr.mxu0 0.0
    %1522 = vmatpush1.msra.mxu0 0.0
    %1523 = vmatprep.subr.mxu0 0.0
    %1524 = vmatpush1.msra.mxu0 0.0
    %1525 = vmatprep.subr.mxu0 0.0
    %1526 = vmatpush1.msra.mxu0 0.0
    %1527 = vmatprep.subr.mxu0 0.0
    %1528 = vmatpush1.msra.mxu0 0.0
    %1529 = vmatprep.subr.mxu0 0.0
    %1530 = vmatpush1.msra.mxu0 0.0
    %1531 = vmatprep.subr.mxu0 0.0
    %1532 = vmatpush1.msra.mxu0 0.0
    %1533 = vmatprep.subr.mxu0 0.0
    %1534 = vmatpush1.msra.mxu0 0.0
    %1535 = vmatprep.subr.mxu0 0.0
    %1536 = vmatpush1.msra.mxu0 0.0
    %1537 = vmatprep.subr.mxu0 0.0
    %1538 = vmatpush1.msra.mxu0 0.0
    %1539 = vmatprep.mubr.f32.mxu0 0.0
    %1540 = vmatmul.mubr.f32.gmra.mrb[0].mxu0 %v1333
    %v1541 = vpop.f32.mrb[0].mxu0
    %v1542 = vadd.f32 %v267, %v1541
    %v1543 = vpop.f32.mrb[0].mxu0
    %1544 = vdwg.mxu0
    %v1546 = vrot.slane %v1402, 6
    %v1548 = vadd.f32 %v242, %v1546
    %v1549 = vxor.u32 %v1548, 2147483648
    %v1550 = vmul.f32 %v1549, 1.442695
    %v1551 = vpow.pop %v1550
    %v1552 = vadd.f32 %v1551, 1.0
    %v1553 = vrcp.pop %v1552
    %v1554 = vmul.f32 1.0, %v1553
    %v1556 = vrot.slane %v1472, 6
    %1557 = vrot.lane.b32.xlu0 %v1556, 32
    %v1558 = vpop.permute.xlu0 %1557
    %v1560 = vadd.f32 %v242, %v1558
    %v1561 = vxor.u32 %v1560, 2147483648
    %v1562 = vmul.f32 %v1561, 1.442695
    %v1563 = vpow.pop %v1562
    %v1564 = vadd.f32 %v1563, 1.0
    %v1565 = vrcp.pop %v1564
    %v1566 = vmul.f32 1.0, %v1565
    %v1568 = vrot.slane %v1542, 6
    %v1570 = vmul.f32 %v1554, %v1568
    %1572 = vrot.lane.b32.xlu0 %v1570, 64
    %v1573 = vpop.permute.xlu0 %1572
    %v1575 = vadd.f32 %v242, %v1573
    %v1576 = vtanh.pop %v1575
    %v1578 = vrot.slane %v1576, 2
    %v1580 = vsub.f32 %v1329, %v1578
    %v1582 = vrot.slane %v1580, 6
    %1583 = vrot.lane.b32.xlu0 %v1582, 96
    %v1584 = vpop.permute.xlu0 %1583
    %v1586 = vmul.f32 %v1566, %v1584
    %1588 = vrot.lane.b32.xlu0 %v1586, 32
    %v1589 = vpop.permute.xlu0 %1588
    %v1591 = vadd.f32 %v1576, %v1589
    %v1593 = vrot.slane %v1591, 2
    %1594 = vrot.lane.b32.xlu0 %v1593, 64
    %v1595 = vpop.permute.xlu0 %1594
    %v1596 = vsel %vm288, %v1595, 0
    %1598 = vmatprep.subr.mxu0 0.0
    %1599 = vmatpush1.msra.mxu0 %v245
    %1600 = vmatprep.subr.mxu0 0.0
    %1601 = vmatpush1.msra.mxu0 %v246
    %1602 = vmatprep.subr.mxu0 0.0
    %1603 = vmatpush1.msra.mxu0 %v247
    %1604 = vmatprep.subr.mxu0 0.0
    %1605 = vmatpush1.msra.mxu0 %v248
    %1606 = vmatprep.subr.mxu0 0.0
    %1607 = vmatpush1.msra.mxu0 0.0
    %1608 = vmatprep.subr.mxu0 0.0
    %1609 = vmatpush1.msra.mxu0 0.0
    %1610 = vmatprep.subr.mxu0 0.0
    %1611 = vmatpush1.msra.mxu0 0.0
    %1612 = vmatprep.subr.mxu0 0.0
    %1613 = vmatpush1.msra.mxu0 0.0
    %1614 = vmatprep.subr.mxu0 0.0
    %1615 = vmatpush1.msra.mxu0 0.0
    %1616 = vmatprep.subr.mxu0 0.0
    %1617 = vmatpush1.msra.mxu0 0.0
    %1618 = vmatprep.subr.mxu0 0.0
    %1619 = vmatpush1.msra.mxu0 0.0
    %1620 = vmatprep.subr.mxu0 0.0
    %1621 = vmatpush1.msra.mxu0 0.0
    %1622 = vmatprep.subr.mxu0 0.0
    %1623 = vmatpush1.msra.mxu0 0.0
    %1624 = vmatprep.subr.mxu0 0.0
    %1625 = vmatpush1.msra.mxu0 0.0
    %1626 = vmatprep.subr.mxu0 0.0
    %1627 = vmatpush1.msra.mxu0 0.0
    %1628 = vmatprep.subr.mxu0 0.0
    %1629 = vmatpush1.msra.mxu0 0.0
    %1630 = vmatprep.subr.mxu0 0.0
    %1631 = vmatpush1.msra.mxu0 0.0
    %1632 = vmatprep.subr.mxu0 0.0
    %1633 = vmatpush1.msra.mxu0 0.0
    %1634 = vmatprep.subr.mxu0 0.0
    %1635 = vmatpush1.msra.mxu0 0.0
    %1636 = vmatprep.subr.mxu0 0.0
    %1637 = vmatpush1.msra.mxu0 0.0
    %1638 = vmatprep.subr.mxu0 0.0
    %1639 = vmatpush1.msra.mxu0 0.0
    %1640 = vmatprep.subr.mxu0 0.0
    %1641 = vmatpush1.msra.mxu0 0.0
    %1642 = vmatprep.subr.mxu0 0.0
    %1643 = vmatpush1.msra.mxu0 0.0
    %1644 = vmatprep.subr.mxu0 0.0
    %1645 = vmatpush1.msra.mxu0 0.0
    %1646 = vmatprep.subr.mxu0 0.0
    %1647 = vmatpush1.msra.mxu0 0.0
    %1648 = vmatprep.subr.mxu0 0.0
    %1649 = vmatpush1.msra.mxu0 0.0
    %1650 = vmatprep.subr.mxu0 0.0
    %1651 = vmatpush1.msra.mxu0 0.0
    %1652 = vmatprep.subr.mxu0 0.0
    %1653 = vmatpush1.msra.mxu0 0.0
    %1654 = vmatprep.subr.mxu0 0.0
    %1655 = vmatpush1.msra.mxu0 0.0
    %1656 = vmatprep.subr.mxu0 0.0
    %1657 = vmatpush1.msra.mxu0 0.0
    %1658 = vmatprep.subr.mxu0 0.0
    %1659 = vmatpush1.msra.mxu0 0.0
    %1660 = vmatprep.subr.mxu0 0.0
    %1661 = vmatpush1.msra.mxu0 0.0
    %1662 = vmatprep.mubr.f32.mxu0 0.0
    %1663 = vmatmul.mubr.f32.gmra.mrb[0].mxu0 %v1596
    %v1664 = vpop.f32.mrb[0].mxu0
    %v1665 = vadd.f32 0.0, %v1664
    %v1666 = vpop.f32.mrb[0].mxu0
    %1667 = vdwg.mxu0
    %1668 = vmatprep.subr.mxu0 0.0
    %1669 = vmatpush1.msra.mxu0 %v249
    %1670 = vmatprep.subr.mxu0 0.0
    %1671 = vmatpush1.msra.mxu0 %v250
    %1672 = vmatprep.subr.mxu0 0.0
    %1673 = vmatpush1.msra.mxu0 %v251
    %1674 = vmatprep.subr.mxu0 0.0
    %1675 = vmatpush1.msra.mxu0 %v252
    %1676 = vmatprep.subr.mxu0 0.0
    %1677 = vmatpush1.msra.mxu0 0.0
    %1678 = vmatprep.subr.mxu0 0.0
    %1679 = vmatpush1.msra.mxu0 0.0
    %1680 = vmatprep.subr.mxu0 0.0
    %1681 = vmatpush1.msra.mxu0 0.0
    %1682 = vmatprep.subr.mxu0 0.0
    %1683 = vmatpush1.msra.mxu0 0.0
    %1684 = vmatprep.subr.mxu0 0.0
    %1685 = vmatpush1.msra.mxu0 0.0
    %1686 = vmatprep.subr.mxu0 0.0
    %1687 = vmatpush1.msra.mxu0 0.0
    %1688 = vmatprep.subr.mxu0 0.0
    %1689 = vmatpush1.msra.mxu0 0.0
    %1690 = vmatprep.subr.mxu0 0.0
    %1691 = vmatpush1.msra.mxu0 0.0
    %1692 = vmatprep.subr.mxu0 0.0
    %1693 = vmatpush1.msra.mxu0 0.0
    %1694 = vmatprep.subr.mxu0 0.0
    %1695 = vmatpush1.msra.mxu0 0.0
    %1696 = vmatprep.subr.mxu0 0.0
    %1697 = vmatpush1.msra.mxu0 0.0
    %1698 = vmatprep.subr.mxu0 0.0
    %1699 = vmatpush1.msra.mxu0 0.0
    %1700 = vmatprep.subr.mxu0 0.0
    %1701 = vmatpush1.msra.mxu0 0.0
    %1702 = vmatprep.subr.mxu0 0.0
    %1703 = vmatpush1.msra.mxu0 0.0
    %1704 = vmatprep.subr.mxu0 0.0
    %1705 = vmatpush1.msra.mxu0 0.0
    %1706 = vmatprep.subr.mxu0 0.0
    %1707 = vmatpush1.msra.mxu0 0.0
    %1708 = vmatprep.subr.mxu0 0.0
    %1709 = vmatpush1.msra.mxu0 0.0
    %1710 = vmatprep.subr.mxu0 0.0
    %1711 = vmatpush1.msra.mxu0 0.0
    %1712 = vmatprep.subr.mxu0 0.0
    %1713 = vmatpush1.msra.mxu0 0.0
    %1714 = vmatprep.subr.mxu0 0.0
    %1715 = vmatpush1.msra.mxu0 0.0
    %1716 = vmatprep.subr.mxu0 0.0
    %1717 = vmatpush1.msra.mxu0 0.0
    %1718 = vmatprep.subr.mxu0 0.0
    %1719 = vmatpush1.msra.mxu0 0.0
    %1720 = vmatprep.subr.mxu0 0.0
    %1721 = vmatpush1.msra.mxu0 0.0
    %1722 = vmatprep.subr.mxu0 0.0
    %1723 = vmatpush1.msra.mxu0 0.0
    %1724 = vmatprep.subr.mxu0 0.0
    %1725 = vmatpush1.msra.mxu0 0.0
    %1726 = vmatprep.subr.mxu0 0.0
    %1727 = vmatpush1.msra.mxu0 0.0
    %1728 = vmatprep.subr.mxu0 0.0
    %1729 = vmatpush1.msra.mxu0 0.0
    %1730 = vmatprep.subr.mxu0 0.0
    %1731 = vmatpush1.msra.mxu0 0.0
    %1732 = vmatprep.mubr.f32.mxu0 0.0
    %1733 = vmatmul.mubr.f32.gmra.mrb[0].mxu0 %v1596
    %v1734 = vpop.f32.mrb[0].mxu0
    %v1735 = vadd.f32 0.0, %v1734
    %v1736 = vpop.f32.mrb[0].mxu0
    %1737 = vdwg.mxu0
    %1738 = vmatprep.subr.mxu0 0.0
    %1739 = vmatpush1.msra.mxu0 %v253
    %1740 = vmatprep.subr.mxu0 0.0
    %1741 = vmatpush1.msra.mxu0 %v254
    %1742 = vmatprep.subr.mxu0 0.0
    %1743 = vmatpush1.msra.mxu0 %v255
    %1744 = vmatprep.subr.mxu0 0.0
    %1745 = vmatpush1.msra.mxu0 %v256
    %1746 = vmatprep.subr.mxu0 0.0
    %1747 = vmatpush1.msra.mxu0 0.0
    %1748 = vmatprep.subr.mxu0 0.0
    %1749 = vmatpush1.msra.mxu0 0.0
    %1750 = vmatprep.subr.mxu0 0.0
    %1751 = vmatpush1.msra.mxu0 0.0
    %1752 = vmatprep.subr.mxu0 0.0
    %1753 = vmatpush1.msra.mxu0 0.0
    %1754 = vmatprep.subr.mxu0 0.0
    %1755 = vmatpush1.msra.mxu0 0.0
    %1756 = vmatprep.subr.mxu0 0.0
    %1757 = vmatpush1.msra.mxu0 0.0
    %1758 = vmatprep.subr.mxu0 0.0
    %1759 = vmatpush1.msra.mxu0 0.0
    %1760 = vmatprep.subr.mxu0 0.0
    %1761 = vmatpush1.msra.mxu0 0.0
    %1762 = vmatprep.subr.mxu0 0.0
    %1763 = vmatpush1.msra.mxu0 0.0
    %1764 = vmatprep.subr.mxu0 0.0
    %1765 = vmatpush1.msra.mxu0 0.0
    %1766 = vmatprep.subr.mxu0 0.0
    %1767 = vmatpush1.msra.mxu0 0.0
    %1768 = vmatprep.subr.mxu0 0.0
    %1769 = vmatpush1.msra.mxu0 0.0
    %1770 = vmatprep.subr.mxu0 0.0
    %1771 = vmatpush1.msra.mxu0 0.0
    %1772 = vmatprep.subr.mxu0 0.0
    %1773 = vmatpush1.msra.mxu0 0.0
    %1774 = vmatprep.subr.mxu0 0.0
    %1775 = vmatpush1.msra.mxu0 0.0
    %1776 = vmatprep.subr.mxu0 0.0
    %1777 = vmatpush1.msra.mxu0 0.0
    %1778 = vmatprep.subr.mxu0 0.0
    %1779 = vmatpush1.msra.mxu0 0.0
    %1780 = vmatprep.subr.mxu0 0.0
    %1781 = vmatpush1.msra.mxu0 0.0
    %1782 = vmatprep.subr.mxu0 0.0
    %1783 = vmatpush1.msra.mxu0 0.0
    %1784 = vmatprep.subr.mxu0 0.0
    %1785 = vmatpush1.msra.mxu0 0.0
    %1786 = vmatprep.subr.mxu0 0.0
    %1787 = vmatpush1.msra.mxu0 0.0
    %1788 = vmatprep.subr.mxu0 0.0
    %1789 = vmatpush1.msra.mxu0 0.0
    %1790 = vmatprep.subr.mxu0 0.0
    %1791 = vmatpush1.msra.mxu0 0.0
    %1792 = vmatprep.subr.mxu0 0.0
    %1793 = vmatpush1.msra.mxu0 0.0
    %1794 = vmatprep.subr.mxu0 0.0
    %1795 = vmatpush1.msra.mxu0 0.0
    %1796 = vmatprep.subr.mxu0 0.0
    %1797 = vmatpush1.msra.mxu0 0.0
    %1798 = vmatprep.subr.mxu0 0.0
    %1799 = vmatpush1.msra.mxu0 0.0
    %1800 = vmatprep.subr.mxu0 0.0
    %1801 = vmatpush1.msra.mxu0 0.0
    %1802 = vmatprep.mubr.f32.mxu0 0.0
    %1803 = vmatmul.mubr.f32.gmra.mrb[0].mxu0 %v1596
    %v1804 = vpop.f32.mrb[0].mxu0
    %v1805 = vadd.f32 %v267, %v1804
    %v1806 = vpop.f32.mrb[0].mxu0
    %1807 = vdwg.mxu0
    %v1809 = vrot.slane %v1665, 4
    %v1811 = vadd.f32 %v242, %v1809
    %v1812 = vxor.u32 %v1811, 2147483648
    %v1813 = vmul.f32 %v1812, 1.442695
    %v1814 = vpow.pop %v1813
    %v1815 = vadd.f32 %v1814, 1.0
    %v1816 = vrcp.pop %v1815
    %v1817 = vmul.f32 1.0, %v1816
    %v1819 = vrot.slane %v1735, 4
    %1820 = vrot.lane.b32.xlu0 %v1819, 32
    %v1821 = vpop.permute.xlu0 %1820
    %v1823 = vadd.f32 %v242, %v1821
    %v1824 = vxor.u32 %v1823, 2147483648
    %v1825 = vmul.f32 %v1824, 1.442695
    %v1826 = vpow.pop %v1825
    %v1827 = vadd.f32 %v1826, 1.0
    %v1828 = vrcp.pop %v1827
    %v1829 = vmul.f32 1.0, %v1828
    %v1831 = vrot.slane %v1805, 4
    %v1833 = vmul.f32 %v1817, %v1831
    %1835 = vrot.lane.b32.xlu0 %v1833, 64
    %v1836 = vpop.permute.xlu0 %1835
    %v1838 = vadd.f32 %v242, %v1836
    %v1839 = vtanh.pop %v1838
    %v1841 = vrot.slane %v1839, 2
    %v1843 = vsub.f32 %v1591, %v1841
    %v1845 = vrot.slane %v1843, 6
    %1846 = vrot.lane.b32.xlu0 %v1845, 96
    %v1847 = vpop.permute.xlu0 %1846
    %v1849 = vmul.f32 %v1829, %v1847
    %1851 = vrot.lane.b32.xlu0 %v1849, 32
    %v1852 = vpop.permute.xlu0 %1851
    %v1854 = vadd.f32 %v1839, %v1852
    %v1856 = vrot.slane %v1854, 4
    %1857 = vrot.lane.b32.xlu0 %v1856, 64
    %v1858 = vpop.permute.xlu0 %1857
    %v1859 = vsel %vm288, %v1858, 0
    %1861 = vmatprep.subr.mxu0 0.0
    %1862 = vmatpush1.msra.mxu0 %v245
    %1863 = vmatprep.subr.mxu0 0.0
    %1864 = vmatpush1.msra.mxu0 %v246
    %1865 = vmatprep.subr.mxu0 0.0
    %1866 = vmatpush1.msra.mxu0 %v247
    %1867 = vmatprep.subr.mxu0 0.0
    %1868 = vmatpush1.msra.mxu0 %v248
    %1869 = vmatprep.subr.mxu0 0.0
    %1870 = vmatpush1.msra.mxu0 0.0
    %1871 = vmatprep.subr.mxu0 0.0
    %1872 = vmatpush1.msra.mxu0 0.0
    %1873 = vmatprep.subr.mxu0 0.0
    %1874 = vmatpush1.msra.mxu0 0.0
    %1875 = vmatprep.subr.mxu0 0.0
    %1876 = vmatpush1.msra.mxu0 0.0
    %1877 = vmatprep.subr.mxu0 0.0
    %1878 = vmatpush1.msra.mxu0 0.0
    %1879 = vmatprep.subr.mxu0 0.0
    %1880 = vmatpush1.msra.mxu0 0.0
    %1881 = vmatprep.subr.mxu0 0.0
    %1882 = vmatpush1.msra.mxu0 0.0
    %1883 = vmatprep.subr.mxu0 0.0
    %1884 = vmatpush1.msra.mxu0 0.0
    %1885 = vmatprep.subr.mxu0 0.0
    %1886 = vmatpush1.msra.mxu0 0.0
    %1887 = vmatprep.subr.mxu0 0.0
    %1888 = vmatpush1.msra.mxu0 0.0
    %1889 = vmatprep.subr.mxu0 0.0
    %1890 = vmatpush1.msra.mxu0 0.0
    %1891 = vmatprep.subr.mxu0 0.0
    %1892 = vmatpush1.msra.mxu0 0.0
    %1893 = vmatprep.subr.mxu0 0.0
    %1894 = vmatpush1.msra.mxu0 0.0
    %1895 = vmatprep.subr.mxu0 0.0
    %1896 = vmatpush1.msra.mxu0 0.0
    %1897 = vmatprep.subr.mxu0 0.0
    %1898 = vmatpush1.msra.mxu0 0.0
    %1899 = vmatprep.subr.mxu0 0.0
    %1900 = vmatpush1.msra.mxu0 0.0
    %1901 = vmatprep.subr.mxu0 0.0
    %1902 = vmatpush1.msra.mxu0 0.0
    %1903 = vmatprep.subr.mxu0 0.0
    %1904 = vmatpush1.msra.mxu0 0.0
    %1905 = vmatprep.subr.mxu0 0.0
    %1906 = vmatpush1.msra.mxu0 0.0
    %1907 = vmatprep.subr.mxu0 0.0
    %1908 = vmatpush1.msra.mxu0 0.0
    %1909 = vmatprep.subr.mxu0 0.0
    %1910 = vmatpush1.msra.mxu0 0.0
    %1911 = vmatprep.subr.mxu0 0.0
    %1912 = vmatpush1.msra.mxu0 0.0
    %1913 = vmatprep.subr.mxu0 0.0
    %1914 = vmatpush1.msra.mxu0 0.0
    %1915 = vmatprep.subr.mxu0 0.0
    %1916 = vmatpush1.msra.mxu0 0.0
    %1917 = vmatprep.subr.mxu0 0.0
    %1918 = vmatpush1.msra.mxu0 0.0
    %1919 = vmatprep.subr.mxu0 0.0
    %1920 = vmatpush1.msra.mxu0 0.0
    %1921 = vmatprep.subr.mxu0 0.0
    %1922 = vmatpush1.msra.mxu0 0.0
    %1923 = vmatprep.subr.mxu0 0.0
    %1924 = vmatpush1.msra.mxu0 0.0
    %1925 = vmatprep.mubr.f32.mxu0 0.0
    %1926 = vmatmul.mubr.f32.gmra.mrb[0].mxu0 %v1859
    %v1927 = vpop.f32.mrb[0].mxu0
    %v1928 = vadd.f32 0.0, %v1927
    %v1929 = vpop.f32.mrb[0].mxu0
    %1930 = vdwg.mxu0
    %1931 = vmatprep.subr.mxu0 0.0
    %1932 = vmatpush1.msra.mxu0 %v249
    %1933 = vmatprep.subr.mxu0 0.0
    %1934 = vmatpush1.msra.mxu0 %v250
    %1935 = vmatprep.subr.mxu0 0.0
    %1936 = vmatpush1.msra.mxu0 %v251
    %1937 = vmatprep.subr.mxu0 0.0
    %1938 = vmatpush1.msra.mxu0 %v252
    %1939 = vmatprep.subr.mxu0 0.0
    %1940 = vmatpush1.msra.mxu0 0.0
    %1941 = vmatprep.subr.mxu0 0.0
    %1942 = vmatpush1.msra.mxu0 0.0
    %1943 = vmatprep.subr.mxu0 0.0
    %1944 = vmatpush1.msra.mxu0 0.0
    %1945 = vmatprep.subr.mxu0 0.0
    %1946 = vmatpush1.msra.mxu0 0.0
    %1947 = vmatprep.subr.mxu0 0.0
    %1948 = vmatpush1.msra.mxu0 0.0
    %1949 = vmatprep.subr.mxu0 0.0
    %1950 = vmatpush1.msra.mxu0 0.0
    %1951 = vmatprep.subr.mxu0 0.0
    %1952 = vmatpush1.msra.mxu0 0.0
    %1953 = vmatprep.subr.mxu0 0.0
    %1954 = vmatpush1.msra.mxu0 0.0
    %1955 = vmatprep.subr.mxu0 0.0
    %1956 = vmatpush1.msra.mxu0 0.0
    %1957 = vmatprep.subr.mxu0 0.0
    %1958 = vmatpush1.msra.mxu0 0.0
    %1959 = vmatprep.subr.mxu0 0.0
    %1960 = vmatpush1.msra.mxu0 0.0
    %1961 = vmatprep.subr.mxu0 0.0
    %1962 = vmatpush1.msra.mxu0 0.0
    %1963 = vmatprep.subr.mxu0 0.0
    %1964 = vmatpush1.msra.mxu0 0.0
    %1965 = vmatprep.subr.mxu0 0.0
    %1966 = vmatpush1.msra.mxu0 0.0
    %1967 = vmatprep.subr.mxu0 0.0
    %1968 = vmatpush1.msra.mxu0 0.0
    %1969 = vmatprep.subr.mxu0 0.0
    %1970 = vmatpush1.msra.mxu0 0.0
    %1971 = vmatprep.subr.mxu0 0.0
    %1972 = vmatpush1.msra.mxu0 0.0
    %1973 = vmatprep.subr.mxu0 0.0
    %1974 = vmatpush1.msra.mxu0 0.0
    %1975 = vmatprep.subr.mxu0 0.0
    %1976 = vmatpush1.msra.mxu0 0.0
    %1977 = vmatprep.subr.mxu0 0.0
    %1978 = vmatpush1.msra.mxu0 0.0
    %1979 = vmatprep.subr.mxu0 0.0
    %1980 = vmatpush1.msra.mxu0 0.0
    %1981 = vmatprep.subr.mxu0 0.0
    %1982 = vmatpush1.msra.mxu0 0.0
    %1983 = vmatprep.subr.mxu0 0.0
    %1984 = vmatpush1.msra.mxu0 0.0
    %1985 = vmatprep.subr.mxu0 0.0
    %1986 = vmatpush1.msra.mxu0 0.0
    %1987 = vmatprep.subr.mxu0 0.0
    %1988 = vmatpush1.msra.mxu0 0.0
    %1989 = vmatprep.subr.mxu0 0.0
    %1990 = vmatpush1.msra.mxu0 0.0
    %1991 = vmatprep.subr.mxu0 0.0
    %1992 = vmatpush1.msra.mxu0 0.0
    %1993 = vmatprep.subr.mxu0 0.0
    %1994 = vmatpush1.msra.mxu0 0.0
    %1995 = vmatprep.mubr.f32.mxu0 0.0
    %1996 = vmatmul.mubr.f32.gmra.mrb[0].mxu0 %v1859
    %v1997 = vpop.f32.mrb[0].mxu0
    %v1998 = vadd.f32 0.0, %v1997
    %v1999 = vpop.f32.mrb[0].mxu0
    %2000 = vdwg.mxu0
    %2001 = vmatprep.subr.mxu0 0.0
    %2002 = vmatpush1.msra.mxu0 %v253
    %2003 = vmatprep.subr.mxu0 0.0
    %2004 = vmatpush1.msra.mxu0 %v254
    %2005 = vmatprep.subr.mxu0 0.0
    %2006 = vmatpush1.msra.mxu0 %v255
    %2007 = vmatprep.subr.mxu0 0.0
    %2008 = vmatpush1.msra.mxu0 %v256
    %2009 = vmatprep.subr.mxu0 0.0
    %2010 = vmatpush1.msra.mxu0 0.0
    %2011 = vmatprep.subr.mxu0 0.0
    %2012 = vmatpush1.msra.mxu0 0.0
    %2013 = vmatprep.subr.mxu0 0.0
    %2014 = vmatpush1.msra.mxu0 0.0
    %2015 = vmatprep.subr.mxu0 0.0
    %2016 = vmatpush1.msra.mxu0 0.0
    %2017 = vmatprep.subr.mxu0 0.0
    %2018 = vmatpush1.msra.mxu0 0.0
    %2019 = vmatprep.subr.mxu0 0.0
    %2020 = vmatpush1.msra.mxu0 0.0
    %2021 = vmatprep.subr.mxu0 0.0
    %2022 = vmatpush1.msra.mxu0 0.0
    %2023 = vmatprep.subr.mxu0 0.0
    %2024 = vmatpush1.msra.mxu0 0.0
    %2025 = vmatprep.subr.mxu0 0.0
    %2026 = vmatpush1.msra.mxu0 0.0
    %2027 = vmatprep.subr.mxu0 0.0
    %2028 = vmatpush1.msra.mxu0 0.0
    %2029 = vmatprep.subr.mxu0 0.0
    %2030 = vmatpush1.msra.mxu0 0.0
    %2031 = vmatprep.subr.mxu0 0.0
    %2032 = vmatpush1.msra.mxu0 0.0
    %2033 = vmatprep.subr.mxu0 0.0
    %2034 = vmatpush1.msra.mxu0 0.0
    %2035 = vmatprep.subr.mxu0 0.0
    %2036 = vmatpush1.msra.mxu0 0.0
    %2037 = vmatprep.subr.mxu0 0.0
    %2038 = vmatpush1.msra.mxu0 0.0
    %2039 = vmatprep.subr.mxu0 0.0
    %2040 = vmatpush1.msra.mxu0 0.0
    %2041 = vmatprep.subr.mxu0 0.0
    %2042 = vmatpush1.msra.mxu0 0.0
    %2043 = vmatprep.subr.mxu0 0.0
    %2044 = vmatpush1.msra.mxu0 0.0
    %2045 = vmatprep.subr.mxu0 0.0
    %2046 = vmatpush1.msra.mxu0 0.0
    %2047 = vmatprep.subr.mxu0 0.0
    %2048 = vmatpush1.msra.mxu0 0.0
    %2049 = vmatprep.subr.mxu0 0.0
    %2050 = vmatpush1.msra.mxu0 0.0
    %2051 = vmatprep.subr.mxu0 0.0
    %2052 = vmatpush1.msra.mxu0 0.0
    %2053 = vmatprep.subr.mxu0 0.0
    %2054 = vmatpush1.msra.mxu0 0.0
    %2055 = vmatprep.subr.mxu0 0.0
    %2056 = vmatpush1.msra.mxu0 0.0
    %2057 = vmatprep.subr.mxu0 0.0
    %2058 = vmatpush1.msra.mxu0 0.0
    %2059 = vmatprep.subr.mxu0 0.0
    %2060 = vmatpush1.msra.mxu0 0.0
    %2061 = vmatprep.subr.mxu0 0.0
    %2062 = vmatpush1.msra.mxu0 0.0
    %2063 = vmatprep.subr.mxu0 0.0
    %2064 = vmatpush1.msra.mxu0 0.0
    %2065 = vmatprep.mubr.f32.mxu0 0.0
    %2066 = vmatmul.mubr.f32.gmra.mrb[0].mxu0 %v1859
    %v2067 = vpop.f32.mrb[0].mxu0
    %v2068 = vadd.f32 %v267, %v2067
    %v2069 = vpop.f32.mrb[0].mxu0
    %2070 = vdwg.mxu0
    %v2072 = vrot.slane %v1928, 2
    %v2074 = vadd.f32 %v242, %v2072
    %v2075 = vxor.u32 %v2074, 2147483648
    %v2076 = vmul.f32 %v2075, 1.442695
    %v2077 = vpow.pop %v2076
    %v2078 = vadd.f32 %v2077, 1.0
    %v2079 = vrcp.pop %v2078
    %v2080 = vmul.f32 1.0, %v2079
    %v2082 = vrot.slane %v1998, 2
    %2083 = vrot.lane.b32.xlu0 %v2082, 32
    %v2084 = vpop.permute.xlu0 %2083
    %v2086 = vadd.f32 %v242, %v2084
    %v2087 = vxor.u32 %v2086, 2147483648
    %v2088 = vmul.f32 %v2087, 1.442695
    %v2089 = vpow.pop %v2088
    %v2090 = vadd.f32 %v2089, 1.0
    %v2091 = vrcp.pop %v2090
    %v2092 = vmul.f32 1.0, %v2091
    %v2094 = vrot.slane %v2068, 2
    %v2096 = vmul.f32 %v2080, %v2094
    %2098 = vrot.lane.b32.xlu0 %v2096, 64
    %v2099 = vpop.permute.xlu0 %2098
    %v2101 = vadd.f32 %v242, %v2099
    %v2102 = vtanh.pop %v2101
    %v2104 = vrot.slane %v2102, 2
    %v2106 = vsub.f32 %v1854, %v2104
    %v2108 = vrot.slane %v2106, 6
    %2109 = vrot.lane.b32.xlu0 %v2108, 96
    %v2110 = vpop.permute.xlu0 %2109
    %v2112 = vmul.f32 %v2092, %v2110
    %2114 = vrot.lane.b32.xlu0 %v2112, 32
    %v2115 = vpop.permute.xlu0 %2114
    %v2117 = vadd.f32 %v2102, %v2115
    %v2118 = vld [vmem:[%s4 + $0x1e1] sm:$0xff]
    %v2119 = vld [vmem:[%s4 + $0x1e9] sm:$0xff]
    %v2120 = vld [vmem:[%s4 + $0x1f1] sm:$0xff]
    %v2121 = vld [vmem:[%s4 + $0x1f9] sm:$0xff]
    %v2122 = vld [vmem:[%s4 + $0x2a1] sm:$0x1]
    %v2123 = vlaneseq
    %v2124 = vshrl.u32 %v2123, 7
    %v2125 = vsub.s32 0, %v2124
    %v2126 = vrot.slane %v2122, %v2125
    %v2128 = vrot.slane %v2117, 6
    %2129 = vrot.lane.b32.xlu0 %v2128, 64
    %v2130 = vpop.permute.xlu0 %2129
    %v2131 = vsel %vm288, %v2130, 0
    %2133 = vmatprep.subr.mxu0 0.0
    %2134 = vmatpush1.msra.mxu0 %v2118
    %2135 = vmatprep.subr.mxu0 0.0
    %2136 = vmatpush1.msra.mxu0 %v2119
    %2137 = vmatprep.subr.mxu0 0.0
    %2138 = vmatpush1.msra.mxu0 %v2120
    %2139 = vmatprep.subr.mxu0 0.0
    %2140 = vmatpush1.msra.mxu0 %v2121
    %2141 = vmatprep.subr.mxu0 0.0
    %2142 = vmatpush1.msra.mxu0 0.0
    %2143 = vmatprep.subr.mxu0 0.0
    %2144 = vmatpush1.msra.mxu0 0.0
    %2145 = vmatprep.subr.mxu0 0.0
    %2146 = vmatpush1.msra.mxu0 0.0
    %2147 = vmatprep.subr.mxu0 0.0
    %2148 = vmatpush1.msra.mxu0 0.0
    %2149 = vmatprep.subr.mxu0 0.0
    %2150 = vmatpush1.msra.mxu0 0.0
    %2151 = vmatprep.subr.mxu0 0.0
    %2152 = vmatpush1.msra.mxu0 0.0
    %2153 = vmatprep.subr.mxu0 0.0
    %2154 = vmatpush1.msra.mxu0 0.0
    %2155 = vmatprep.subr.mxu0 0.0
    %2156 = vmatpush1.msra.mxu0 0.0
    %2157 = vmatprep.subr.mxu0 0.0
    %2158 = vmatpush1.msra.mxu0 0.0
    %2159 = vmatprep.subr.mxu0 0.0
    %2160 = vmatpush1.msra.mxu0 0.0
    %2161 = vmatprep.subr.mxu0 0.0
    %2162 = vmatpush1.msra.mxu0 0.0
    %2163 = vmatprep.subr.mxu0 0.0
    %2164 = vmatpush1.msra.mxu0 0.0
    %2165 = vmatprep.subr.mxu0 0.0
    %2166 = vmatpush1.msra.mxu0 0.0
    %2167 = vmatprep.subr.mxu0 0.0
    %2168 = vmatpush1.msra.mxu0 0.0
    %2169 = vmatprep.subr.mxu0 0.0
    %2170 = vmatpush1.msra.mxu0 0.0
    %2171 = vmatprep.subr.mxu0 0.0
    %2172 = vmatpush1.msra.mxu0 0.0
    %2173 = vmatprep.subr.mxu0 0.0
    %2174 = vmatpush1.msra.mxu0 0.0
    %2175 = vmatprep.subr.mxu0 0.0
    %2176 = vmatpush1.msra.mxu0 0.0
    %2177 = vmatprep.subr.mxu0 0.0
    %2178 = vmatpush1.msra.mxu0 0.0
    %2179 = vmatprep.subr.mxu0 0.0
    %2180 = vmatpush1.msra.mxu0 0.0
    %2181 = vmatprep.subr.mxu0 0.0
    %2182 = vmatpush1.msra.mxu0 0.0
    %2183 = vmatprep.subr.mxu0 0.0
    %2184 = vmatpush1.msra.mxu0 0.0
    %2185 = vmatprep.subr.mxu0 0.0
    %2186 = vmatpush1.msra.mxu0 0.0
    %2187 = vmatprep.subr.mxu0 0.0
    %2188 = vmatpush1.msra.mxu0 0.0
    %2189 = vmatprep.subr.mxu0 0.0
    %2190 = vmatpush1.msra.mxu0 0.0
    %2191 = vmatprep.subr.mxu0 0.0
    %2192 = vmatpush1.msra.mxu0 0.0
    %2193 = vmatprep.subr.mxu0 0.0
    %2194 = vmatpush1.msra.mxu0 0.0
    %2195 = vmatprep.subr.mxu0 0.0
    %2196 = vmatpush1.msra.mxu0 0.0
    %2197 = vmatprep.mubr.f32.mxu0 0.0
    %2198 = vmatmul.mubr.f32.gmra.mrb[0].mxu0 %v2131
    %v2199 = vpop.f32.mrb[0].mxu0
    %v2200 = vadd.f32 %v2126, %v2199
    %v2201 = vpop.f32.mrb[0].mxu0
    %2202 = vdwg.mxu0
    %v2203 = vld [vmem:[%s4 + $0x201] sm:$0xff]
    %v2204 = vld [vmem:[%s4 + $0x209] sm:$0xff]
    %v2205 = vld [vmem:[%s4 + $0x211] sm:$0xff]
    %v2206 = vld [vmem:[%s4 + $0x219] sm:$0xff]
    %v2207 = vld [vmem:[%s4 + $0x2a2] sm:$0x1]
    %v2208 = vlaneseq
    %v2209 = vshrl.u32 %v2208, 7
    %v2210 = vsub.s32 0, %v2209
    %v2211 = vrot.slane %v2207, %v2210
    %2212 = vmatprep.subr.mxu0 0.0
    %2213 = vmatpush1.msra.mxu0 %v2203
    %2214 = vmatprep.subr.mxu0 0.0
    %2215 = vmatpush1.msra.mxu0 %v2204
    %2216 = vmatprep.subr.mxu0 0.0
    %2217 = vmatpush1.msra.mxu0 %v2205
    %2218 = vmatprep.subr.mxu0 0.0
    %2219 = vmatpush1.msra.mxu0 %v2206
    %2220 = vmatprep.subr.mxu0 0.0
    %2221 = vmatpush1.msra.mxu0 0.0
    %2222 = vmatprep.subr.mxu0 0.0
    %2223 = vmatpush1.msra.mxu0 0.0
    %2224 = vmatprep.subr.mxu0 0.0
    %2225 = vmatpush1.msra.mxu0 0.0
    %2226 = vmatprep.subr.mxu0 0.0
    %2227 = vmatpush1.msra.mxu0 0.0
    %2228 = vmatprep.subr.mxu0 0.0
    %2229 = vmatpush1.msra.mxu0 0.0
    %2230 = vmatprep.subr.mxu0 0.0
    %2231 = vmatpush1.msra.mxu0 0.0
    %2232 = vmatprep.subr.mxu0 0.0
    %2233 = vmatpush1.msra.mxu0 0.0
    %2234 = vmatprep.subr.mxu0 0.0
    %2235 = vmatpush1.msra.mxu0 0.0
    %2236 = vmatprep.subr.mxu0 0.0
    %2237 = vmatpush1.msra.mxu0 0.0
    %2238 = vmatprep.subr.mxu0 0.0
    %2239 = vmatpush1.msra.mxu0 0.0
    %2240 = vmatprep.subr.mxu0 0.0
    %2241 = vmatpush1.msra.mxu0 0.0
    %2242 = vmatprep.subr.mxu0 0.0
    %2243 = vmatpush1.msra.mxu0 0.0
    %2244 = vmatprep.subr.mxu0 0.0
    %2245 = vmatpush1.msra.mxu0 0.0
    %2246 = vmatprep.subr.mxu0 0.0
    %2247 = vmatpush1.msra.mxu0 0.0
    %2248 = vmatprep.subr.mxu0 0.0
    %2249 = vmatpush1.msra.mxu0 0.0
    %2250 = vmatprep.subr.mxu0 0.0
    %2251 = vmatpush1.msra.mxu0 0.0
    %2252 = vmatprep.subr.mxu0 0.0
    %2253 = vmatpush1.msra.mxu0 0.0
    %2254 = vmatprep.subr.mxu0 0.0
    %2255 = vmatpush1.msra.mxu0 0.0
    %2256 = vmatprep.subr.mxu0 0.0
    %2257 = vmatpush1.msra.mxu0 0.0
    %2258 = vmatprep.subr.mxu0 0.0
    %2259 = vmatpush1.msra.mxu0 0.0
    %2260 = vmatprep.subr.mxu0 0.0
    %2261 = vmatpush1.msra.mxu0 0.0
    %2262 = vmatprep.subr.mxu0 0.0
    %2263 = vmatpush1.msra.mxu0 0.0
    %2264 = vmatprep.subr.mxu0 0.0
    %2265 = vmatpush1.msra.mxu0 0.0
    %2266 = vmatprep.subr.mxu0 0.0
    %2267 = vmatpush1.msra.mxu0 0.0
    %2268 = vmatprep.subr.mxu0 0.0
    %2269 = vmatpush1.msra.mxu0 0.0
    %2270 = vmatprep.subr.mxu0 0.0
    %2271 = vmatpush1.msra.mxu0 0.0
    %2272 = vmatprep.subr.mxu0 0.0
    %2273 = vmatpush1.msra.mxu0 0.0
    %2274 = vmatprep.subr.mxu0 0.0
    %2275 = vmatpush1.msra.mxu0 0.0
    %2276 = vmatprep.mubr.f32.mxu0 0.0
    %2277 = vmatmul.mubr.f32.gmra.mrb[0].mxu0 %v2131
    %v2278 = vpop.f32.mrb[0].mxu0
    %v2279 = vadd.f32 %v2211, %v2278
    %v2280 = vpop.f32.mrb[0].mxu0
    %2281 = vdwg.mxu0
    %v2282 = vld [vmem:[%s4 + $0x221] sm:$0xff]
    %v2283 = vld [vmem:[%s4 + $0x229] sm:$0xff]
    %v2284 = vld [vmem:[%s4 + $0x231] sm:$0xff]
    %v2285 = vld [vmem:[%s4 + $0x239] sm:$0xff]
    %v2286 = vld [vmem:[%s4 + $0x2a3] sm:$0x1]
    %v2287 = vlaneseq
    %v2288 = vshrl.u32 %v2287, 7
    %v2289 = vsub.s32 0, %v2288
    %v2290 = vrot.slane %v2286, %v2289
    %2291 = vmatprep.subr.mxu0 0.0
    %2292 = vmatpush1.msra.mxu0 %v2282
    %2293 = vmatprep.subr.mxu0 0.0
    %2294 = vmatpush1.msra.mxu0 %v2283
    %2295 = vmatprep.subr.mxu0 0.0
    %2296 = vmatpush1.msra.mxu0 %v2284
    %2297 = vmatprep.subr.mxu0 0.0
    %2298 = vmatpush1.msra.mxu0 %v2285
    %2299 = vmatprep.subr.mxu0 0.0
    %2300 = vmatpush1.msra.mxu0 0.0
    %2301 = vmatprep.subr.mxu0 0.0
    %2302 = vmatpush1.msra.mxu0 0.0
    %2303 = vmatprep.subr.mxu0 0.0
    %2304 = vmatpush1.msra.mxu0 0.0
    %2305 = vmatprep.subr.mxu0 0.0
    %2306 = vmatpush1.msra.mxu0 0.0
    %2307 = vmatprep.subr.mxu0 0.0
    %2308 = vmatpush1.msra.mxu0 0.0
    %2309 = vmatprep.subr.mxu0 0.0
    %2310 = vmatpush1.msra.mxu0 0.0
    %2311 = vmatprep.subr.mxu0 0.0
    %2312 = vmatpush1.msra.mxu0 0.0
    %2313 = vmatprep.subr.mxu0 0.0
    %2314 = vmatpush1.msra.mxu0 0.0
    %2315 = vmatprep.subr.mxu0 0.0
    %2316 = vmatpush1.msra.mxu0 0.0
    %2317 = vmatprep.subr.mxu0 0.0
    %2318 = vmatpush1.msra.mxu0 0.0
    %2319 = vmatprep.subr.mxu0 0.0
    %2320 = vmatpush1.msra.mxu0 0.0
    %2321 = vmatprep.subr.mxu0 0.0
    %2322 = vmatpush1.msra.mxu0 0.0
    %2323 = vmatprep.subr.mxu0 0.0
    %2324 = vmatpush1.msra.mxu0 0.0
    %2325 = vmatprep.subr.mxu0 0.0
    %2326 = vmatpush1.msra.mxu0 0.0
    %2327 = vmatprep.subr.mxu0 0.0
    %2328 = vmatpush1.msra.mxu0 0.0
    %2329 = vmatprep.subr.mxu0 0.0
    %2330 = vmatpush1.msra.mxu0 0.0
    %2331 = vmatprep.subr.mxu0 0.0
    %2332 = vmatpush1.msra.mxu0 0.0
    %2333 = vmatprep.subr.mxu0 0.0
    %2334 = vmatpush1.msra.mxu0 0.0
    %2335 = vmatprep.subr.mxu0 0.0
    %2336 = vmatpush1.msra.mxu0 0.0
    %2337 = vmatprep.subr.mxu0 0.0
    %2338 = vmatpush1.msra.mxu0 0.0
    %2339 = vmatprep.subr.mxu0 0.0
    %2340 = vmatpush1.msra.mxu0 0.0
    %2341 = vmatprep.subr.mxu0 0.0
    %2342 = vmatpush1.msra.mxu0 0.0
    %2343 = vmatprep.subr.mxu0 0.0
    %2344 = vmatpush1.msra.mxu0 0.0
    %2345 = vmatprep.subr.mxu0 0.0
    %2346 = vmatpush1.msra.mxu0 0.0
    %2347 = vmatprep.subr.mxu0 0.0
    %2348 = vmatpush1.msra.mxu0 0.0
    %2349 = vmatprep.subr.mxu0 0.0
    %2350 = vmatpush1.msra.mxu0 0.0
    %2351 = vmatprep.subr.mxu0 0.0
    %2352 = vmatpush1.msra.mxu0 0.0
    %2353 = vmatprep.subr.mxu0 0.0
    %2354 = vmatpush1.msra.mxu0 0.0
    %2355 = vmatprep.mubr.f32.mxu0 0.0
    %2356 = vmatmul.mubr.f32.gmra.mrb[0].mxu0 %v2131
    %v2357 = vpop.f32.mrb[0].mxu0
    %v2358 = vadd.f32 %v2290, %v2357
    %v2359 = vpop.f32.mrb[0].mxu0
    %2360 = vdwg.mxu0
    %v2361 = vld [vmem:[%s2 + $0x40] sm:$0xf8]
    %v2362 = vld [vmem:[%s2 + $0x48] sm:$0xf8]
    %v2363 = vld [vmem:[%s2 + $0x50] sm:$0xff]
    %v2364 = vld [vmem:[%s2 + $0x58] sm:$0xff]
    %v2365 = vld [vmem:[%s2 + $0x60] sm:$0xff]
    %v2366 = vld [vmem:[%s2 + $0x68] sm:$0xff]
    %v2367 = vld [vmem:[%s2 + $0x70] sm:$0xff]
    %v2368 = vld [vmem:[%s2 + $0x78] sm:$0xff]
    %v2369 = vld [vmem:[%s2 + $0x80] sm:$0x7]
    %v2370 = vld [vmem:[%s2 + $0x88] sm:$0x7]
    %s2371 = scalar_lea.vmem %s2, 131
    %v2372 = vld [vmem:[%s2371] ss:$8 sm:$0x3]
    %v2374 = vlaneseq
    %v2375 = vshrl.u32 %v2374, 7
    %v2376 = vsub.s32 0, %v2375
    %v2377 = vrot.slane %v2372, %v2376
    %v2378 = vlaneseq
    %v2379 = vshrl.u32 %v2378, 7
    %v2380 = vsub.s32 1, %v2379
    %v2381 = vrot.slane %v2372, %v2380
    %vm2394 = vcmask 1044480
    %v2395 = vrot.slane %v2361, 3
    %v2396 = vrot.slane %v2363, 3
    %v2397 = vsel %vm2394, %v2395, %v2396
    %v2398 = vrot.slane %v2362, 3
    %v2399 = vrot.slane %v2364, 3
    %v2400 = vsel %vm2394, %v2398, %v2399
    %v2401 = vrot.slane %v2365, 3
    %v2402 = vsel %vm2394, %v2396, %v2401
    %v2403 = vrot.slane %v2366, 3
    %v2404 = vsel %vm2394, %v2399, %v2403
    %v2405 = vrot.slane %v2367, 3
    %v2406 = vsel %vm2394, %v2401, %v2405
    %v2407 = vrot.slane %v2368, 3
    %v2408 = vsel %vm2394, %v2403, %v2407
    %v2409 = vrot.slane %v2369, 3
    %v2410 = vsel %vm2394, %v2405, %v2409
    %v2411 = vrot.slane %v2370, 3
    %v2412 = vsel %vm2394, %v2407, %v2411
    %2421 = vmatprep.subr.mxu0 %v2400
    %2422 = vmatpush1.msra.mxu0 %v2397
    %2423 = vmatprep.subr.mxu0 %v2404
    %2424 = vmatpush1.msra.mxu0 %v2402
    %2425 = vmatprep.subr.mxu0 %v2408
    %2426 = vmatpush1.msra.mxu0 %v2406
    %2427 = vmatprep.subr.mxu0 %v2412
    %2428 = vmatpush1.msra.mxu0 %v2410
    %2429 = vmatprep.subr.mxu0 0.0
    %2430 = vmatpush1.msra.mxu0 0.0
    %2431 = vmatprep.subr.mxu0 0.0
    %2432 = vmatpush1.msra.mxu0 0.0
    %2433 = vmatprep.subr.mxu0 0.0
    %2434 = vmatpush1.msra.mxu0 0.0
    %2435 = vmatprep.subr.mxu0 0.0
    %2436 = vmatpush1.msra.mxu0 0.0
    %2437 = vmatprep.subr.mxu0 0.0
    %2438 = vmatpush1.msra.mxu0 0.0
    %2439 = vmatprep.subr.mxu0 0.0
    %2440 = vmatpush1.msra.mxu0 0.0
    %2441 = vmatprep.subr.mxu0 0.0
    %2442 = vmatpush1.msra.mxu0 0.0
    %2443 = vmatprep.subr.mxu0 0.0
    %2444 = vmatpush1.msra.mxu0 0.0
    %2445 = vmatprep.subr.mxu0 0.0
    %2446 = vmatpush1.msra.mxu0 0.0
    %2447 = vmatprep.subr.mxu0 0.0
    %2448 = vmatpush1.msra.mxu0 0.0
    %2449 = vmatprep.subr.mxu0 0.0
    %2450 = vmatpush1.msra.mxu0 0.0
    %2451 = vmatprep.subr.mxu0 0.0
    %2452 = vmatpush1.msra.mxu0 0.0
    %2453 = vmatprep.subr.mxu0 0.0
    %2454 = vmatpush1.msra.mxu0 0.0
    %2455 = vmatprep.subr.mxu0 0.0
    %2456 = vmatpush1.msra.mxu0 0.0
    %2457 = vmatprep.subr.mxu0 0.0
    %2458 = vmatpush1.msra.mxu0 0.0
    %2459 = vmatprep.subr.mxu0 0.0
    %2460 = vmatpush1.msra.mxu0 0.0
    %2461 = vmatprep.subr.mxu0 0.0
    %2462 = vmatpush1.msra.mxu0 0.0
    %2463 = vmatprep.subr.mxu0 0.0
    %2464 = vmatpush1.msra.mxu0 0.0
    %2465 = vmatprep.subr.mxu0 0.0
    %2466 = vmatpush1.msra.mxu0 0.0
    %2467 = vmatprep.subr.mxu0 0.0
    %2468 = vmatpush1.msra.mxu0 0.0
    %2469 = vmatprep.subr.mxu0 0.0
    %2470 = vmatpush1.msra.mxu0 0.0
    %2471 = vmatprep.subr.mxu0 0.0
    %2472 = vmatpush1.msra.mxu0 0.0
    %2473 = vmatprep.subr.mxu0 0.0
    %2474 = vmatpush1.msra.mxu0 0.0
    %2475 = vmatprep.subr.mxu0 0.0
    %2476 = vmatpush1.msra.mxu0 0.0
    %2477 = vmatprep.subr.mxu0 0.0
    %2478 = vmatpush1.msra.mxu0 0.0
    %2479 = vmatprep.subr.mxu0 0.0
    %2480 = vmatpush1.msra.mxu0 0.0
    %2481 = vmatprep.subr.mxu0 0.0
    %2482 = vmatpush1.msra.mxu0 0.0
    %2483 = vmatprep.subr.mxu0 0.0
    %2484 = vmatpush1.msra.mxu0 0.0
    %2485 = vmatprep.mubr.f32.mxu0 0.0
    %2486 = vmatmul.mubr.f32.gmra.mrb[0].mxu0 %v2131
    %v2487 = vpop.f32.mrb[0].mxu0
    %v2488 = vadd.f32 %v2377, %v2487
    %v2489 = vpop.f32.mrb[0].mxu0
    %v2490 = vadd.f32 %v2381, %v2489
    %2491 = vdwg.mxu0
    %v2492 = vld [vmem:[%s4 + $0x61] sm:$0xff]
    %v2493 = vld [vmem:[%s4 + $0x69] sm:$0xff]
    %v2494 = vld [vmem:[%s4 + $0x71] sm:$0xff]
    %v2495 = vld [vmem:[%s4 + $0x79] sm:$0xff]
    %v2496 = vld [vmem:[%s4 + $0x81] sm:$0xff]
    %v2497 = vld [vmem:[%s4 + $0x89] sm:$0xff]
    %v2498 = vld [vmem:[%s4 + $0x91] sm:$0xff]
    %v2499 = vld [vmem:[%s4 + $0x99] sm:$0xff]
    %v2500 = vld [vmem:[%s4 + $0xa1] sm:$0xff]
    %v2501 = vld [vmem:[%s4 + $0xa9] sm:$0xff]
    %v2502 = vld [vmem:[%s4 + $0xb1] sm:$0xff]
    %v2503 = vld [vmem:[%s4 + $0xb9] sm:$0xff]
    %v2504 = vld [vmem:[%s4 + $0xc1] sm:$0xff]
    %v2505 = vld [vmem:[%s4 + $0xc9] sm:$0xff]
    %v2506 = vld [vmem:[%s4 + $0xd1] sm:$0xff]
    %v2507 = vld [vmem:[%s4 + $0xd9] sm:$0xff]
    %v2508 = vld [vmem:[%s4 + $0xe1] sm:$0xff]
    %v2509 = vld [vmem:[%s4 + $0xe9] sm:$0xff]
    %v2510 = vld [vmem:[%s4 + $0xf1] sm:$0xff]
    %v2511 = vld [vmem:[%s4 + $0xf9] sm:$0xff]
    %v2512 = vld [vmem:[%s4 + $0x101] sm:$0xff]
    %v2513 = vld [vmem:[%s4 + $0x109] sm:$0xff]
    %v2514 = vld [vmem:[%s4 + $0x111] sm:$0xff]
    %v2515 = vld [vmem:[%s4 + $0x119] sm:$0xff]
    %v2516 = vld [vmem:[%s4 + $0x121] sm:$0xff]
    %v2517 = vld [vmem:[%s4 + $0x129] sm:$0xff]
    %v2518 = vld [vmem:[%s4 + $0x131] sm:$0xff]
    %v2519 = vld [vmem:[%s4 + $0x139] sm:$0xff]
    %v2520 = vld [vmem:[%s4 + $0x141] sm:$0xff]
    %v2521 = vld [vmem:[%s4 + $0x149] sm:$0xff]
    %v2522 = vld [vmem:[%s4 + $0x151] sm:$0xff]
    %v2523 = vld [vmem:[%s4 + $0x159] sm:$0xff]
    %v2524 = vld [vmem:[%s4 + $0x161] sm:$0xff]
    %v2525 = vld [vmem:[%s4 + $0x169] sm:$0xff]
    %v2526 = vld [vmem:[%s4 + $0x171] sm:$0xff]
    %v2527 = vld [vmem:[%s4 + $0x179] sm:$0xff]
    %v2528 = vld [vmem:[%s4 + $0x181] sm:$0xff]
    %v2529 = vld [vmem:[%s4 + $0x189] sm:$0xff]
    %v2530 = vld [vmem:[%s4 + $0x191] sm:$0xff]
    %v2531 = vld [vmem:[%s4 + $0x199] sm:$0xff]
    %v2532 = vld [vmem:[%s4 + $0x1a1] sm:$0xff]
    %v2533 = vld [vmem:[%s4 + $0x1a9] sm:$0xff]
    %v2534 = vld [vmem:[%s4 + $0x1b1] sm:$0xff]
    %v2535 = vld [vmem:[%s4 + $0x1b9] sm:$0xff]
    %v2536 = vld [vmem:[%s4 + $0x1c1] sm:$0xff]
    %v2537 = vld [vmem:[%s4 + $0x1c9] sm:$0xff]
    %v2538 = vld [vmem:[%s4 + $0x1d1] sm:$0xff]
    %v2539 = vld [vmem:[%s4 + $0x1d9] sm:$0xff]
    %v2540 = vld [vmem:[%s2 + $0x80] sm:$0xf0]
    %v2541 = vld [vmem:[%s2 + $0x88] sm:$0xf0]
    %v2542 = vld [vmem:[%s2 + $0x90] sm:$0xff]
    %v2543 = vld [vmem:[%s2 + $0x98] sm:$0xff]
    %v2544 = vld [vmem:[%s2 + $0xa0] sm:$0xff]
    %v2545 = vld [vmem:[%s2 + $0xa8] sm:$0xff]
    %v2546 = vld [vmem:[%s2 + $0xb0] sm:$0xff]
    %v2547 = vld [vmem:[%s2 + $0xb8] sm:$0xff]
    %v2548 = vld [vmem:[%s2 + $0xc0] sm:$0xff]
    %v2549 = vld [vmem:[%s2 + $0xc8] sm:$0xff]
    %v2550 = vld [vmem:[%s2 + $0xd0] sm:$0xff]
    %v2551 = vld [vmem:[%s2 + $0xd8] sm:$0xff]
    %v2552 = vld [vmem:[%s2 + $0xe0] sm:$0xff]
    %v2553 = vld [vmem:[%s2 + $0xe8] sm:$0xff]
    %v2554 = vld [vmem:[%s2 + $0xf0] sm:$0xff]
    %v2555 = vld [vmem:[%s2 + $0xf8] sm:$0xff]
    %v2556 = vld [vmem:[%s2 + $0x100] sm:$0xff]
    %v2557 = vld [vmem:[%s2 + $0x108] sm:$0xff]
    %v2558 = vld [vmem:[%s2 + $0x110] sm:$0xff]
    %v2559 = vld [vmem:[%s2 + $0x118] sm:$0xff]
    %v2560 = vld [vmem:[%s2 + $0x120] sm:$0xff]
    %v2561 = vld [vmem:[%s2 + $0x128] sm:$0xff]
    %v2562 = vld [vmem:[%s2 + $0x130] sm:$0xff]
    %v2563 = vld [vmem:[%s2 + $0x138] sm:$0xff]
    %v2564 = vld [vmem:[%s2 + $0x140] sm:$0xff]
    %v2565 = vld [vmem:[%s2 + $0x148] sm:$0xff]
    %v2566 = vld [vmem:[%s2 + $0x150] sm:$0xff]
    %v2567 = vld [vmem:[%s2 + $0x158] sm:$0xff]
    %v2568 = vld [vmem:[%s2 + $0x160] sm:$0xff]
    %v2569 = vld [vmem:[%s2 + $0x168] sm:$0xff]
    %v2570 = vld [vmem:[%s2 + $0x170] sm:$0xff]
    %v2571 = vld [vmem:[%s2 + $0x178] sm:$0xff]
    %v2572 = vld [vmem:[%s2 + $0x180] sm:$0xf]
    %v2573 = vld [vmem:[%s2 + $0x188] sm:$0xf]
    %v2574 = vld [vmem:[%s4 + $0x241] sm:$0xff]
    %v2575 = vld [vmem:[%s4 + $0x249] sm:$0xff]
    %v2576 = vld [vmem:[%s4 + $0x251] sm:$0xff]
    %v2577 = vld [vmem:[%s4 + $0x259] sm:$0xff]
    %v2578 = vld [vmem:[%s4 + $0x261] sm:$0xff]
    %v2579 = vld [vmem:[%s4 + $0x269] sm:$0xff]
    %v2580 = vld [vmem:[%s4 + $0x271] sm:$0xff]
    %v2581 = vld [vmem:[%s4 + $0x279] sm:$0xff]
    %v2582 = vld [vmem:[%s4 + $0x281] sm:$0xff]
    %v2583 = vld [vmem:[%s4 + $0x289] sm:$0xff]
    %v2584 = vld [vmem:[%s4 + $0x291] sm:$0xff]
    %v2585 = vld [vmem:[%s4 + $0x299] sm:$0xff]
    %v2586 = vld [vmem:[%s4 + $0x2a4] sm:$0x1]
    %v2587 = vld [vmem:[%s2] sm:$0xf8]
    %v2588 = vld [vmem:[%s2 + $0x8] sm:$0xf8]
    %v2589 = vld [vmem:[%s2 + $0x10] sm:$0xff]
    %v2590 = vld [vmem:[%s2 + $0x18] sm:$0xff]
    %v2591 = vld [vmem:[%s2 + $0x20] sm:$0xff]
    %v2592 = vld [vmem:[%s2 + $0x28] sm:$0xff]
    %v2593 = vld [vmem:[%s2 + $0x30] sm:$0xff]
    %v2594 = vld [vmem:[%s2 + $0x38] sm:$0xff]
    %v2595 = vld [vmem:[%s2 + $0x40] sm:$0x7]
    %v2596 = vld [vmem:[%s2 + $0x48] sm:$0x7]
    %v2597 = vld [vmem:[%s3 + $0x101] sm:$0xff]
    %v2598 = vld [vmem:[%s3 + $0x109] sm:$0xff]
    %v2599 = vld [vmem:[%s3 + $0x111] sm:$0xff]
    %v2600 = vld [vmem:[%s3 + $0x119] sm:$0xff]
    %v2601 = vld [vmem:[%s3 + $0x121] sm:$0xff]
    %v2602 = vld [vmem:[%s3 + $0x129] sm:$0xff]
    %v2603 = vld [vmem:[%s3 + $0x131] sm:$0xff]
    %v2604 = vld [vmem:[%s3 + $0x139] sm:$0xff]
    %v2605 = vld [vmem:[%s3 + $0x141] sm:$0xff]
    %v2606 = vld [vmem:[%s3 + $0x149] sm:$0xff]
    %v2607 = vld [vmem:[%s3 + $0x151] sm:$0xff]
    %v2608 = vld [vmem:[%s3 + $0x159] sm:$0xff]
    %v2609 = vld [vmem:[%s3 + $0x161] sm:$0xff]
    %v2610 = vld [vmem:[%s3 + $0x169] sm:$0xff]
    %v2611 = vld [vmem:[%s3 + $0x171] sm:$0xff]
    %v2612 = vld [vmem:[%s3 + $0x179] sm:$0xff]
    %v2613 = vld [vmem:[%s3 + $0x181] sm:$0xff]
    %v2614 = vld [vmem:[%s3 + $0x189] sm:$0xff]
    %v2615 = vld [vmem:[%s3 + $0x191] sm:$0xff]
    %v2616 = vld [vmem:[%s3 + $0x199] sm:$0xff]
    %v2617 = vld [vmem:[%s3 + $0x1a1] sm:$0xff]
    %v2618 = vld [vmem:[%s3 + $0x1a9] sm:$0xff]
    %v2619 = vld [vmem:[%s3 + $0x1b1] sm:$0xff]
    %v2620 = vld [vmem:[%s3 + $0x1b9] sm:$0xff]
    %v2621 = vld [vmem:[%s3 + $0x1c1] sm:$0xff]
    %v2622 = vld [vmem:[%s3 + $0x1c9] sm:$0xff]
    %v2623 = vld [vmem:[%s3 + $0x1d1] sm:$0xff]
    %v2624 = vld [vmem:[%s3 + $0x1d9] sm:$0xff]
    %v2625 = vld [vmem:[%s3 + $0x1e1] sm:$0xff]
    %v2626 = vld [vmem:[%s3 + $0x1e9] sm:$0xff]
    %v2627 = vld [vmem:[%s3 + $0x1f1] sm:$0xff]
    %v2628 = vld [vmem:[%s3 + $0x1f9] sm:$0xff]
    %v2629 = vld [vmem:[%s3 + $0x201] sm:$0x1]
    %v2630 = vld [vmem:[%s1] sm:$0xff]
    %v2631 = vld [vmem:[%s1 + $0x8] sm:$0xff]
    %2632 = vmatprep.subr.mxu0 0.0
    %2633 = vmatpush1.msra.mxu0 %v2492
    %2634 = vmatprep.subr.mxu0 0.0
    %2635 = vmatpush1.msra.mxu0 %v2493
    %2636 = vmatprep.subr.mxu0 0.0
    %2637 = vmatpush1.msra.mxu0 %v2494
    %2638 = vmatprep.subr.mxu0 0.0
    %2639 = vmatpush1.msra.mxu0 %v2495
    %2640 = vmatprep.subr.mxu0 0.0
    %2641 = vmatpush1.msra.mxu0 %v2496
    %2642 = vmatprep.subr.mxu0 0.0
    %2643 = vmatpush1.msra.mxu0 %v2497
    %2644 = vmatprep.subr.mxu0 0.0
    %2645 = vmatpush1.msra.mxu0 %v2498
    %2646 = vmatprep.subr.mxu0 0.0
    %2647 = vmatpush1.msra.mxu0 %v2499
    %2648 = vmatprep.subr.mxu0 0.0
    %2649 = vmatpush1.msra.mxu0 %v2500
    %2650 = vmatprep.subr.mxu0 0.0
    %2651 = vmatpush1.msra.mxu0 %v2501
    %2652 = vmatprep.subr.mxu0 0.0
    %2653 = vmatpush1.msra.mxu0 %v2502
    %2654 = vmatprep.subr.mxu0 0.0
    %2655 = vmatpush1.msra.mxu0 %v2503
    %2656 = vmatprep.subr.mxu0 0.0
    %2657 = vmatpush1.msra.mxu0 %v2504
    %2658 = vmatprep.subr.mxu0 0.0
    %2659 = vmatpush1.msra.mxu0 %v2505
    %2660 = vmatprep.subr.mxu0 0.0
    %2661 = vmatpush1.msra.mxu0 %v2506
    %2662 = vmatprep.subr.mxu0 0.0
    %2663 = vmatpush1.msra.mxu0 %v2507
    %2664 = vmatprep.subr.mxu0 0.0
    %2665 = vmatpush1.msra.mxu0 0.0
    %2666 = vmatprep.subr.mxu0 0.0
    %2667 = vmatpush1.msra.mxu0 0.0
    %2668 = vmatprep.subr.mxu0 0.0
    %2669 = vmatpush1.msra.mxu0 0.0
    %2670 = vmatprep.subr.mxu0 0.0
    %2671 = vmatpush1.msra.mxu0 0.0
    %2672 = vmatprep.subr.mxu0 0.0
    %2673 = vmatpush1.msra.mxu0 0.0
    %2674 = vmatprep.subr.mxu0 0.0
    %2675 = vmatpush1.msra.mxu0 0.0
    %2676 = vmatprep.subr.mxu0 0.0
    %2677 = vmatpush1.msra.mxu0 0.0
    %2678 = vmatprep.subr.mxu0 0.0
    %2679 = vmatpush1.msra.mxu0 0.0
    %2680 = vmatprep.subr.mxu0 0.0
    %2681 = vmatpush1.msra.mxu0 0.0
    %2682 = vmatprep.subr.mxu0 0.0
    %2683 = vmatpush1.msra.mxu0 0.0
    %2684 = vmatprep.subr.mxu0 0.0
    %2685 = vmatpush1.msra.mxu0 0.0
    %2686 = vmatprep.subr.mxu0 0.0
    %2687 = vmatpush1.msra.mxu0 0.0
    %2688 = vmatprep.subr.mxu0 0.0
    %2689 = vmatpush1.msra.mxu0 0.0
    %2690 = vmatprep.subr.mxu0 0.0
    %2691 = vmatpush1.msra.mxu0 0.0
    %2692 = vmatprep.subr.mxu0 0.0
    %2693 = vmatpush1.msra.mxu0 0.0
    %2694 = vmatprep.subr.mxu0 0.0
    %2695 = vmatpush1.msra.mxu0 0.0
    %2696 = vmatprep.mubr.f32.mxu0 0.0
    %2697 = vmatmul.mubr.f32.gmra.mrb[0].mxu0 %v2630
    %v2698 = vpop.f32.mrb[0].mxu0
    %v2699 = vadd.f32 0.0, %v2698
    %v2700 = vpop.f32.mrb[0].mxu0
    %2701 = vmatprep.mubr.f32.mxu0 0.0
    %2702 = vmatmul.mubr.f32.gmra.mrb[0].mxu0 %v2631
    %v2703 = vpop.f32.mrb[0].mxu0
    %v2704 = vadd.f32 0.0, %v2703
    %v2705 = vpop.f32.mrb[0].mxu0
    %2706 = vdwg.mxu0
    %2707 = vmatprep.subr.mxu0 0.0
    %2708 = vmatpush1.msra.mxu0 %v2508
    %2709 = vmatprep.subr.mxu0 0.0
    %2710 = vmatpush1.msra.mxu0 %v2509
    %2711 = vmatprep.subr.mxu0 0.0
    %2712 = vmatpush1.msra.mxu0 %v2510
    %2713 = vmatprep.subr.mxu0 0.0
    %2714 = vmatpush1.msra.mxu0 %v2511
    %2715 = vmatprep.subr.mxu0 0.0
    %2716 = vmatpush1.msra.mxu0 %v2512
    %2717 = vmatprep.subr.mxu0 0.0
    %2718 = vmatpush1.msra.mxu0 %v2513
    %2719 = vmatprep.subr.mxu0 0.0
    %2720 = vmatpush1.msra.mxu0 %v2514
    %2721 = vmatprep.subr.mxu0 0.0
    %2722 = vmatpush1.msra.mxu0 %v2515
    %2723 = vmatprep.subr.mxu0 0.0
    %2724 = vmatpush1.msra.mxu0 %v2516
    %2725 = vmatprep.subr.mxu0 0.0
    %2726 = vmatpush1.msra.mxu0 %v2517
    %2727 = vmatprep.subr.mxu0 0.0
    %2728 = vmatpush1.msra.mxu0 %v2518
    %2729 = vmatprep.subr.mxu0 0.0
    %2730 = vmatpush1.msra.mxu0 %v2519
    %2731 = vmatprep.subr.mxu0 0.0
    %2732 = vmatpush1.msra.mxu0 %v2520
    %2733 = vmatprep.subr.mxu0 0.0
    %2734 = vmatpush1.msra.mxu0 %v2521
    %2735 = vmatprep.subr.mxu0 0.0
    %2736 = vmatpush1.msra.mxu0 %v2522
    %2737 = vmatprep.subr.mxu0 0.0
    %2738 = vmatpush1.msra.mxu0 %v2523
    %2739 = vmatprep.subr.mxu0 0.0
    %2740 = vmatpush1.msra.mxu0 0.0
    %2741 = vmatprep.subr.mxu0 0.0
    %2742 = vmatpush1.msra.mxu0 0.0
    %2743 = vmatprep.subr.mxu0 0.0
    %2744 = vmatpush1.msra.mxu0 0.0
    %2745 = vmatprep.subr.mxu0 0.0
    %2746 = vmatpush1.msra.mxu0 0.0
    %2747 = vmatprep.subr.mxu0 0.0
    %2748 = vmatpush1.msra.mxu0 0.0
    %2749 = vmatprep.subr.mxu0 0.0
    %2750 = vmatpush1.msra.mxu0 0.0
    %2751 = vmatprep.subr.mxu0 0.0
    %2752 = vmatpush1.msra.mxu0 0.0
    %2753 = vmatprep.subr.mxu0 0.0
    %2754 = vmatpush1.msra.mxu0 0.0
    %2755 = vmatprep.subr.mxu0 0.0
    %2756 = vmatpush1.msra.mxu0 0.0
    %2757 = vmatprep.subr.mxu0 0.0
    %2758 = vmatpush1.msra.mxu0 0.0
    %2759 = vmatprep.subr.mxu0 0.0
    %2760 = vmatpush1.msra.mxu0 0.0
    %2761 = vmatprep.subr.mxu0 0.0
    %2762 = vmatpush1.msra.mxu0 0.0
    %2763 = vmatprep.subr.mxu0 0.0
    %2764 = vmatpush1.msra.mxu0 0.0
    %2765 = vmatprep.subr.mxu0 0.0
    %2766 = vmatpush1.msra.mxu0 0.0
    %2767 = vmatprep.subr.mxu0 0.0
    %2768 = vmatpush1.msra.mxu0 0.0
    %2769 = vmatprep.subr.mxu0 0.0
    %2770 = vmatpush1.msra.mxu0 0.0
    %2771 = vmatprep.mubr.f32.mxu0 0.0
    %2772 = vmatmul.mubr.f32.gmra.mrb[0].mxu0 %v2630
    %v2773 = vpop.f32.mrb[0].mxu0
    %v2774 = vadd.f32 0.0, %v2773
    %v2775 = vpop.f32.mrb[0].mxu0
    %2776 = vmatprep.mubr.f32.mxu0 0.0
    %2777 = vmatmul.mubr.f32.gmra.mrb[0].mxu0 %v2631
    %v2778 = vpop.f32.mrb[0].mxu0
    %v2779 = vadd.f32 0.0, %v2778
    %v2780 = vpop.f32.mrb[0].mxu0
    %2781 = vdwg.mxu0
    %2782 = vmatprep.subr.mxu0 0.0
    %2783 = vmatpush1.msra.mxu0 %v2524
    %2784 = vmatprep.subr.mxu0 0.0
    %2785 = vmatpush1.msra.mxu0 %v2525
    %2786 = vmatprep.subr.mxu0 0.0
    %2787 = vmatpush1.msra.mxu0 %v2526
    %2788 = vmatprep.subr.mxu0 0.0
    %2789 = vmatpush1.msra.mxu0 %v2527
    %2790 = vmatprep.subr.mxu0 0.0
    %2791 = vmatpush1.msra.mxu0 %v2528
    %2792 = vmatprep.subr.mxu0 0.0
    %2793 = vmatpush1.msra.mxu0 %v2529
    %2794 = vmatprep.subr.mxu0 0.0
    %2795 = vmatpush1.msra.mxu0 %v2530
    %2796 = vmatprep.subr.mxu0 0.0
    %2797 = vmatpush1.msra.mxu0 %v2531
    %2798 = vmatprep.subr.mxu0 0.0
    %2799 = vmatpush1.msra.mxu0 %v2532
    %2800 = vmatprep.subr.mxu0 0.0
    %2801 = vmatpush1.msra.mxu0 %v2533
    %2802 = vmatprep.subr.mxu0 0.0
    %2803 = vmatpush1.msra.mxu0 %v2534
    %2804 = vmatprep.subr.mxu0 0.0
    %2805 = vmatpush1.msra.mxu0 %v2535
    %2806 = vmatprep.subr.mxu0 0.0
    %2807 = vmatpush1.msra.mxu0 %v2536
    %2808 = vmatprep.subr.mxu0 0.0
    %2809 = vmatpush1.msra.mxu0 %v2537
    %2810 = vmatprep.subr.mxu0 0.0
    %2811 = vmatpush1.msra.mxu0 %v2538
    %2812 = vmatprep.subr.mxu0 0.0
    %2813 = vmatpush1.msra.mxu0 %v2539
    %2814 = vmatprep.subr.mxu0 0.0
    %2815 = vmatpush1.msra.mxu0 0.0
    %2816 = vmatprep.subr.mxu0 0.0
    %2817 = vmatpush1.msra.mxu0 0.0
    %2818 = vmatprep.subr.mxu0 0.0
    %2819 = vmatpush1.msra.mxu0 0.0
    %2820 = vmatprep.subr.mxu0 0.0
    %2821 = vmatpush1.msra.mxu0 0.0
    %2822 = vmatprep.subr.mxu0 0.0
    %2823 = vmatpush1.msra.mxu0 0.0
    %2824 = vmatprep.subr.mxu0 0.0
    %2825 = vmatpush1.msra.mxu0 0.0
    %2826 = vmatprep.subr.mxu0 0.0
    %2827 = vmatpush1.msra.mxu0 0.0
    %2828 = vmatprep.subr.mxu0 0.0
    %2829 = vmatpush1.msra.mxu0 0.0
    %2830 = vmatprep.subr.mxu0 0.0
    %2831 = vmatpush1.msra.mxu0 0.0
    %2832 = vmatprep.subr.mxu0 0.0
    %2833 = vmatpush1.msra.mxu0 0.0
    %2834 = vmatprep.subr.mxu0 0.0
    %2835 = vmatpush1.msra.mxu0 0.0
    %2836 = vmatprep.subr.mxu0 0.0
    %2837 = vmatpush1.msra.mxu0 0.0
    %2838 = vmatprep.subr.mxu0 0.0
    %2839 = vmatpush1.msra.mxu0 0.0
    %2840 = vmatprep.subr.mxu0 0.0
    %2841 = vmatpush1.msra.mxu0 0.0
    %2842 = vmatprep.subr.mxu0 0.0
    %2843 = vmatpush1.msra.mxu0 0.0
    %2844 = vmatprep.subr.mxu0 0.0
    %2845 = vmatpush1.msra.mxu0 0.0
    %2846 = vmatprep.mubr.f32.mxu0 0.0
    %2847 = vmatmul.mubr.f32.gmra.mrb[0].mxu0 %v2630
    %v2848 = vpop.f32.mrb[0].mxu0
    %v2849 = vadd.f32 0.0, %v2848
    %v2850 = vpop.f32.mrb[0].mxu0
    %2851 = vmatprep.mubr.f32.mxu0 0.0
    %2852 = vmatmul.mubr.f32.gmra.mrb[0].mxu0 %v2631
    %v2853 = vpop.f32.mrb[0].mxu0
    %v2854 = vadd.f32 0.0, %v2853
    %v2855 = vpop.f32.mrb[0].mxu0
    %2856 = vdwg.mxu0
    %vm2891 = vcmask 1043456
    %v2892 = vrot.slane %v2540, 4
    %v2893 = vrot.slane %v2542, 4
    %v2894 = vsel %vm2891, %v2892, %v2893
    %v2895 = vrot.slane %v2541, 4
    %v2896 = vrot.slane %v2543, 4
    %v2897 = vsel %vm2891, %v2895, %v2896
    %v2898 = vrot.slane %v2544, 4
    %v2899 = vsel %vm2891, %v2893, %v2898
    %v2900 = vrot.slane %v2545, 4
    %v2901 = vsel %vm2891, %v2896, %v2900
    %v2902 = vrot.slane %v2546, 4
    %v2903 = vsel %vm2891, %v2898, %v2902
    %v2904 = vrot.slane %v2547, 4
    %v2905 = vsel %vm2891, %v2900, %v2904
    %v2906 = vrot.slane %v2548, 4
    %v2907 = vsel %vm2891, %v2902, %v2906
    %v2908 = vrot.slane %v2549, 4
    %v2909 = vsel %vm2891, %v2904, %v2908
    %v2910 = vrot.slane %v2550, 4
    %v2911 = vsel %vm2891, %v2906, %v2910
    %v2912 = vrot.slane %v2551, 4
    %v2913 = vsel %vm2891, %v2908, %v2912
    %v2914 = vrot.slane %v2552, 4
    %v2915 = vsel %vm2891, %v2910, %v2914
    %v2916 = vrot.slane %v2553, 4
    %v2917 = vsel %vm2891, %v2912, %v2916
    %v2918 = vrot.slane %v2554, 4
    %v2919 = vsel %vm2891, %v2914, %v2918
    %v2920 = vrot.slane %v2555, 4
    %v2921 = vsel %vm2891, %v2916, %v2920
    %v2922 = vrot.slane %v2556, 4
    %v2923 = vsel %vm2891, %v2918, %v2922
    %v2924 = vrot.slane %v2557, 4
    %v2925 = vsel %vm2891, %v2920, %v2924
    %v2926 = vrot.slane %v2558, 4
    %v2927 = vsel %vm2891, %v2922, %v2926
    %v2928 = vrot.slane %v2559, 4
    %v2929 = vsel %vm2891, %v2924, %v2928
    %v2930 = vrot.slane %v2560, 4
    %v2931 = vsel %vm2891, %v2926, %v2930
    %v2932 = vrot.slane %v2561, 4
    %v2933 = vsel %vm2891, %v2928, %v2932
    %v2934 = vrot.slane %v2562, 4
    %v2935 = vsel %vm2891, %v2930, %v2934
    %v2936 = vrot.slane %v2563, 4
    %v2937 = vsel %vm2891, %v2932, %v2936
    %v2938 = vrot.slane %v2564, 4
    %v2939 = vsel %vm2891, %v2934, %v2938
    %v2940 = vrot.slane %v2565, 4
    %v2941 = vsel %vm2891, %v2936, %v2940
    %v2942 = vrot.slane %v2566, 4
    %v2943 = vsel %vm2891, %v2938, %v2942
    %v2944 = vrot.slane %v2567, 4
    %v2945 = vsel %vm2891, %v2940, %v2944
    %v2946 = vrot.slane %v2568, 4
    %v2947 = vsel %vm2891, %v2942, %v2946
    %v2948 = vrot.slane %v2569, 4
    %v2949 = vsel %vm2891, %v2944, %v2948
    %v2950 = vrot.slane %v2570, 4
    %v2951 = vsel %vm2891, %v2946, %v2950
    %v2952 = vrot.slane %v2571, 4
    %v2953 = vsel %vm2891, %v2948, %v2952
    %v2954 = vrot.slane %v2572, 4
    %v2955 = vsel %vm2891, %v2950, %v2954
    %v2956 = vrot.slane %v2573, 4
    %v2957 = vsel %vm2891, %v2952, %v2956
    %2990 = vmatprep.subr.mxu0 %v2897
    %2991 = vmatpush1.msra.mxu0 %v2894
    %2992 = vmatprep.subr.mxu0 %v2901
    %2993 = vmatpush1.msra.mxu0 %v2899
    %2994 = vmatprep.subr.mxu0 %v2905
    %2995 = vmatpush1.msra.mxu0 %v2903
    %2996 = vmatprep.subr.mxu0 %v2909
    %2997 = vmatpush1.msra.mxu0 %v2907
    %2998 = vmatprep.subr.mxu0 %v2913
    %2999 = vmatpush1.msra.mxu0 %v2911
    %3000 = vmatprep.subr.mxu0 %v2917
    %3001 = vmatpush1.msra.mxu0 %v2915
    %3002 = vmatprep.subr.mxu0 %v2921
    %3003 = vmatpush1.msra.mxu0 %v2919
    %3004 = vmatprep.subr.mxu0 %v2925
    %3005 = vmatpush1.msra.mxu0 %v2923
    %3006 = vmatprep.subr.mxu0 %v2929
    %3007 = vmatpush1.msra.mxu0 %v2927
    %3008 = vmatprep.subr.mxu0 %v2933
    %3009 = vmatpush1.msra.mxu0 %v2931
    %3010 = vmatprep.subr.mxu0 %v2937
    %3011 = vmatpush1.msra.mxu0 %v2935
    %3012 = vmatprep.subr.mxu0 %v2941
    %3013 = vmatpush1.msra.mxu0 %v2939
    %3014 = vmatprep.subr.mxu0 %v2945
    %3015 = vmatpush1.msra.mxu0 %v2943
    %3016 = vmatprep.subr.mxu0 %v2949
    %3017 = vmatpush1.msra.mxu0 %v2947
    %3018 = vmatprep.subr.mxu0 %v2953
    %3019 = vmatpush1.msra.mxu0 %v2951
    %3020 = vmatprep.subr.mxu0 %v2957
    %3021 = vmatpush1.msra.mxu0 %v2955
    %3022 = vmatprep.subr.mxu0 0.0
    %3023 = vmatpush1.msra.mxu0 0.0
    %3024 = vmatprep.subr.mxu0 0.0
    %3025 = vmatpush1.msra.mxu0 0.0
    %3026 = vmatprep.subr.mxu0 0.0
    %3027 = vmatpush1.msra.mxu0 0.0
    %3028 = vmatprep.subr.mxu0 0.0
    %3029 = vmatpush1.msra.mxu0 0.0
    %3030 = vmatprep.subr.mxu0 0.0
    %3031 = vmatpush1.msra.mxu0 0.0
    %3032 = vmatprep.subr.mxu0 0.0
    %3033 = vmatpush1.msra.mxu0 0.0
    %3034 = vmatprep.subr.mxu0 0.0
    %3035 = vmatpush1.msra.mxu0 0.0
    %3036 = vmatprep.subr.mxu0 0.0
    %3037 = vmatpush1.msra.mxu0 0.0
    %3038 = vmatprep.subr.mxu0 0.0
    %3039 = vmatpush1.msra.mxu0 0.0
    %3040 = vmatprep.subr.mxu0 0.0
    %3041 = vmatpush1.msra.mxu0 0.0
    %3042 = vmatprep.subr.mxu0 0.0
    %3043 = vmatpush1.msra.mxu0 0.0
    %3044 = vmatprep.subr.mxu0 0.0
    %3045 = vmatpush1.msra.mxu0 0.0
    %3046 = vmatprep.subr.mxu0 0.0
    %3047 = vmatpush1.msra.mxu0 0.0
    %3048 = vmatprep.subr.mxu0 0.0
    %3049 = vmatpush1.msra.mxu0 0.0
    %3050 = vmatprep.subr.mxu0 0.0
    %3051 = vmatpush1.msra.mxu0 0.0
    %3052 = vmatprep.subr.mxu0 0.0
    %3053 = vmatpush1.msra.mxu0 0.0
    %3054 = vmatprep.mubr.f32.mxu0 0.0
    %3055 = vmatmul.mubr.f32.gmra.mrb[0].mxu0 %v2630
    %v3056 = vpop.f32.mrb[0].mxu0
    %v3057 = vadd.f32 0.0, %v3056
    %v3058 = vpop.f32.mrb[0].mxu0
    %v3059 = vadd.f32 0.0, %v3058
    %3060 = vmatprep.mubr.f32.mxu0 0.0
    %3061 = vmatmul.mubr.f32.gmra.mrb[0].mxu0 %v2631
    %v3062 = vpop.f32.mrb[0].mxu0
    %v3063 = vadd.f32 0.0, %v3062
    %v3064 = vpop.f32.mrb[0].mxu0
    %v3065 = vadd.f32 0.0, %v3064
    %3066 = vdwg.mxu0
    %v3067 = vlaneseq
    %v3068 = vand.u32 %v3067, 127
    %v3069 = vcvt.s32.f32 %v3068
    %v3070 = vadd.f32 %v3057, %v2488
    %v3071 = vadd.f32 %v3059, %v2490
    %3072 = vmatprep.subr.mxu0 0.0
    %3073 = vmatpush1.msra.mxu0 %v2574
    %3074 = vmatprep.subr.mxu0 0.0
    %3075 = vmatpush1.msra.mxu0 %v2575
    %3076 = vmatprep.subr.mxu0 0.0
    %3077 = vmatpush1.msra.mxu0 %v2576
    %3078 = vmatprep.subr.mxu0 0.0
    %3079 = vmatpush1.msra.mxu0 %v2577
    %3080 = vmatprep.subr.mxu0 0.0
    %3081 = vmatpush1.msra.mxu0 0.0
    %3082 = vmatprep.subr.mxu0 0.0
    %3083 = vmatpush1.msra.mxu0 0.0
    %3084 = vmatprep.subr.mxu0 0.0
    %3085 = vmatpush1.msra.mxu0 0.0
    %3086 = vmatprep.subr.mxu0 0.0
    %3087 = vmatpush1.msra.mxu0 0.0
    %3088 = vmatprep.subr.mxu0 0.0
    %3089 = vmatpush1.msra.mxu0 0.0
    %3090 = vmatprep.subr.mxu0 0.0
    %3091 = vmatpush1.msra.mxu0 0.0
    %3092 = vmatprep.subr.mxu0 0.0
    %3093 = vmatpush1.msra.mxu0 0.0
    %3094 = vmatprep.subr.mxu0 0.0
    %3095 = vmatpush1.msra.mxu0 0.0
    %3096 = vmatprep.subr.mxu0 0.0
    %3097 = vmatpush1.msra.mxu0 0.0
    %3098 = vmatprep.subr.mxu0 0.0
    %3099 = vmatpush1.msra.mxu0 0.0
    %3100 = vmatprep.subr.mxu0 0.0
    %3101 = vmatpush1.msra.mxu0 0.0
    %3102 = vmatprep.subr.mxu0 0.0
    %3103 = vmatpush1.msra.mxu0 0.0
    %3104 = vmatprep.subr.mxu0 0.0
    %3105 = vmatpush1.msra.mxu0 0.0
    %3106 = vmatprep.subr.mxu0 0.0
    %3107 = vmatpush1.msra.mxu0 0.0
    %3108 = vmatprep.subr.mxu0 0.0
    %3109 = vmatpush1.msra.mxu0 0.0
    %3110 = vmatprep.subr.mxu0 0.0
    %3111 = vmatpush1.msra.mxu0 0.0
    %3112 = vmatprep.subr.mxu0 0.0
    %3113 = vmatpush1.msra.mxu0 0.0
    %3114 = vmatprep.subr.mxu0 0.0
    %3115 = vmatpush1.msra.mxu0 0.0
    %3116 = vmatprep.subr.mxu0 0.0
    %3117 = vmatpush1.msra.mxu0 0.0
    %3118 = vmatprep.subr.mxu0 0.0
    %3119 = vmatpush1.msra.mxu0 0.0
    %3120 = vmatprep.subr.mxu0 0.0
    %3121 = vmatpush1.msra.mxu0 0.0
    %3122 = vmatprep.subr.mxu0 0.0
    %3123 = vmatpush1.msra.mxu0 0.0
    %3124 = vmatprep.subr.mxu0 0.0
    %3125 = vmatpush1.msra.mxu0 0.0
    %3126 = vmatprep.subr.mxu0 0.0
    %3127 = vmatpush1.msra.mxu0 0.0
    %3128 = vmatprep.subr.mxu0 0.0
    %3129 = vmatpush1.msra.mxu0 0.0
    %3130 = vmatprep.subr.mxu0 0.0
    %3131 = vmatpush1.msra.mxu0 0.0
    %3132 = vmatprep.subr.mxu0 0.0
    %3133 = vmatpush1.msra.mxu0 0.0
    %3134 = vmatprep.subr.mxu0 0.0
    %3135 = vmatpush1.msra.mxu0 0.0
    %3136 = vmatprep.mubr.f32.mxu0 0.0
    %3137 = vmatmul.mubr.f32.gmra.mrb[0].mxu0 %v2131
    %v3138 = vpop.f32.mrb[0].mxu0
    %v3139 = vadd.f32 0.0, %v3138
    %v3140 = vpop.f32.mrb[0].mxu0
    %3141 = vdwg.mxu0
    %3142 = vmatprep.subr.mxu0 0.0
    %3143 = vmatpush1.msra.mxu0 %v2578
    %3144 = vmatprep.subr.mxu0 0.0
    %3145 = vmatpush1.msra.mxu0 %v2579
    %3146 = vmatprep.subr.mxu0 0.0
    %3147 = vmatpush1.msra.mxu0 %v2580
    %3148 = vmatprep.subr.mxu0 0.0
    %3149 = vmatpush1.msra.mxu0 %v2581
    %3150 = vmatprep.subr.mxu0 0.0
    %3151 = vmatpush1.msra.mxu0 0.0
    %3152 = vmatprep.subr.mxu0 0.0
    %3153 = vmatpush1.msra.mxu0 0.0
    %3154 = vmatprep.subr.mxu0 0.0
    %3155 = vmatpush1.msra.mxu0 0.0
    %3156 = vmatprep.subr.mxu0 0.0
    %3157 = vmatpush1.msra.mxu0 0.0
    %3158 = vmatprep.subr.mxu0 0.0
    %3159 = vmatpush1.msra.mxu0 0.0
    %3160 = vmatprep.subr.mxu0 0.0
    %3161 = vmatpush1.msra.mxu0 0.0
    %3162 = vmatprep.subr.mxu0 0.0
    %3163 = vmatpush1.msra.mxu0 0.0
    %3164 = vmatprep.subr.mxu0 0.0
    %3165 = vmatpush1.msra.mxu0 0.0
    %3166 = vmatprep.subr.mxu0 0.0
    %3167 = vmatpush1.msra.mxu0 0.0
    %3168 = vmatprep.subr.mxu0 0.0
    %3169 = vmatpush1.msra.mxu0 0.0
    %3170 = vmatprep.subr.mxu0 0.0
    %3171 = vmatpush1.msra.mxu0 0.0
    %3172 = vmatprep.subr.mxu0 0.0
    %3173 = vmatpush1.msra.mxu0 0.0
    %3174 = vmatprep.subr.mxu0 0.0
    %3175 = vmatpush1.msra.mxu0 0.0
    %3176 = vmatprep.subr.mxu0 0.0
    %3177 = vmatpush1.msra.mxu0 0.0
    %3178 = vmatprep.subr.mxu0 0.0
    %3179 = vmatpush1.msra.mxu0 0.0
    %3180 = vmatprep.subr.mxu0 0.0
    %3181 = vmatpush1.msra.mxu0 0.0
    %3182 = vmatprep.subr.mxu0 0.0
    %3183 = vmatpush1.msra.mxu0 0.0
    %3184 = vmatprep.subr.mxu0 0.0
    %3185 = vmatpush1.msra.mxu0 0.0
    %3186 = vmatprep.subr.mxu0 0.0
    %3187 = vmatpush1.msra.mxu0 0.0
    %3188 = vmatprep.subr.mxu0 0.0
    %3189 = vmatpush1.msra.mxu0 0.0
    %3190 = vmatprep.subr.mxu0 0.0
    %3191 = vmatpush1.msra.mxu0 0.0
    %3192 = vmatprep.subr.mxu0 0.0
    %3193 = vmatpush1.msra.mxu0 0.0
    %3194 = vmatprep.subr.mxu0 0.0
    %3195 = vmatpush1.msra.mxu0 0.0
    %3196 = vmatprep.subr.mxu0 0.0
    %3197 = vmatpush1.msra.mxu0 0.0
    %3198 = vmatprep.subr.mxu0 0.0
    %3199 = vmatpush1.msra.mxu0 0.0
    %3200 = vmatprep.subr.mxu0 0.0
    %3201 = vmatpush1.msra.mxu0 0.0
    %3202 = vmatprep.subr.mxu0 0.0
    %3203 = vmatpush1.msra.mxu0 0.0
    %3204 = vmatprep.subr.mxu0 0.0
    %3205 = vmatpush1.msra.mxu0 0.0
    %3206 = vmatprep.mubr.f32.mxu0 0.0
    %3207 = vmatmul.mubr.f32.gmra.mrb[0].mxu0 %v2131
    %v3208 = vpop.f32.mrb[0].mxu0
    %v3209 = vadd.f32 0.0, %v3208
    %v3210 = vpop.f32.mrb[0].mxu0
    %3211 = vdwg.mxu0
    %v3212 = vlaneseq
    %v3213 = vshrl.u32 %v3212, 7
    %v3214 = vsub.s32 0, %v3213
    %v3215 = vrot.slane %v2586, %v3214
    %3216 = vmatprep.subr.mxu0 0.0
    %3217 = vmatpush1.msra.mxu0 %v2582
    %3218 = vmatprep.subr.mxu0 0.0
    %3219 = vmatpush1.msra.mxu0 %v2583
    %3220 = vmatprep.subr.mxu0 0.0
    %3221 = vmatpush1.msra.mxu0 %v2584
    %3222 = vmatprep.subr.mxu0 0.0
    %3223 = vmatpush1.msra.mxu0 %v2585
    %3224 = vmatprep.subr.mxu0 0.0
    %3225 = vmatpush1.msra.mxu0 0.0
    %3226 = vmatprep.subr.mxu0 0.0
    %3227 = vmatpush1.msra.mxu0 0.0
    %3228 = vmatprep.subr.mxu0 0.0
    %3229 = vmatpush1.msra.mxu0 0.0
    %3230 = vmatprep.subr.mxu0 0.0
    %3231 = vmatpush1.msra.mxu0 0.0
    %3232 = vmatprep.subr.mxu0 0.0
    %3233 = vmatpush1.msra.mxu0 0.0
    %3234 = vmatprep.subr.mxu0 0.0
    %3235 = vmatpush1.msra.mxu0 0.0
    %3236 = vmatprep.subr.mxu0 0.0
    %3237 = vmatpush1.msra.mxu0 0.0
    %3238 = vmatprep.subr.mxu0 0.0
    %3239 = vmatpush1.msra.mxu0 0.0
    %3240 = vmatprep.subr.mxu0 0.0
    %3241 = vmatpush1.msra.mxu0 0.0
    %3242 = vmatprep.subr.mxu0 0.0
    %3243 = vmatpush1.msra.mxu0 0.0
    %3244 = vmatprep.subr.mxu0 0.0
    %3245 = vmatpush1.msra.mxu0 0.0
    %3246 = vmatprep.subr.mxu0 0.0
    %3247 = vmatpush1.msra.mxu0 0.0
    %3248 = vmatprep.subr.mxu0 0.0
    %3249 = vmatpush1.msra.mxu0 0.0
    %3250 = vmatprep.subr.mxu0 0.0
    %3251 = vmatpush1.msra.mxu0 0.0
    %3252 = vmatprep.subr.mxu0 0.0
    %3253 = vmatpush1.msra.mxu0 0.0
    %3254 = vmatprep.subr.mxu0 0.0
    %3255 = vmatpush1.msra.mxu0 0.0
    %3256 = vmatprep.subr.mxu0 0.0
    %3257 = vmatpush1.msra.mxu0 0.0
    %3258 = vmatprep.subr.mxu0 0.0
    %3259 = vmatpush1.msra.mxu0 0.0
    %3260 = vmatprep.subr.mxu0 0.0
    %3261 = vmatpush1.msra.mxu0 0.0
    %3262 = vmatprep.subr.mxu0 0.0
    %3263 = vmatpush1.msra.mxu0 0.0
    %3264 = vmatprep.subr.mxu0 0.0
    %3265 = vmatpush1.msra.mxu0 0.0
    %3266 = vmatprep.subr.mxu0 0.0
    %3267 = vmatpush1.msra.mxu0 0.0
    %3268 = vmatprep.subr.mxu0 0.0
    %3269 = vmatpush1.msra.mxu0 0.0
    %3270 = vmatprep.subr.mxu0 0.0
    %3271 = vmatpush1.msra.mxu0 0.0
    %3272 = vmatprep.subr.mxu0 0.0
    %3273 = vmatpush1.msra.mxu0 0.0
    %3274 = vmatprep.subr.mxu0 0.0
    %3275 = vmatpush1.msra.mxu0 0.0
    %3276 = vmatprep.subr.mxu0 0.0
    %3277 = vmatpush1.msra.mxu0 0.0
    %3278 = vmatprep.subr.mxu0 0.0
    %3279 = vmatpush1.msra.mxu0 0.0
    %3280 = vmatprep.mubr.f32.mxu0 0.0
    %3281 = vmatmul.mubr.f32.gmra.mrb[0].mxu0 %v2131
    %v3282 = vpop.f32.mrb[0].mxu0
    %v3283 = vadd.f32 %v3215, %v3282
    %v3284 = vpop.f32.mrb[0].mxu0
    %3285 = vdwg.mxu0
    %v3286 = vadd.f32 %v2699, %v2200
    %v3287 = vadd.f32 %v3286, %v3139
    %v3288 = vxor.u32 %v3287, 2147483648
    %v3289 = vmul.f32 %v3288, 1.442695
    %v3290 = vpow.pop %v3289
    %v3291 = vadd.f32 %v3290, 1.0
    %v3292 = vrcp.pop %v3291
    %v3293 = vmul.f32 1.0, %v3292
    %v3294 = vadd.f32 %v2774, %v2279
    %v3295 = vadd.f32 %v3294, %v3209
    %v3296 = vxor.u32 %v3295, 2147483648
    %v3297 = vmul.f32 %v3296, 1.442695
    %v3298 = vpow.pop %v3297
    %v3299 = vadd.f32 %v3298, 1.0
    %v3300 = vrcp.pop %v3299
    %v3301 = vmul.f32 1.0, %v3300
    %v3302 = vadd.f32 %v2849, %v2358
    %v3303 = vmul.f32 %v3293, %v3283
    %v3304 = vadd.f32 %v3302, %v3303
    %v3305 = vtanh.pop %v3304
    %v3307 = vrot.slane %v3305, 2
    %3308 = vrot.lane.b32.xlu0 %v3307, 64
    %v3309 = vpop.permute.xlu0 %3308
    %v3311 = vsub.f32 %v2117, %v3309
    %v3313 = vrot.slane %v3311, 6
    %3314 = vrot.lane.b32.xlu0 %v3313, 64
    %v3315 = vpop.permute.xlu0 %3314
    %v3317 = vmul.f32 %v3301, %v3315
    %v3318 = vadd.f32 %v3305, %v3317
    %vm3319 = vcmask 254976
    %3320 = vst.msk [vmem:[#allocation2] sm:$0x3] %vm3319, %v3318
    %3321 = vst [vmem:[#allocation3] sm:$0x3] %v3070
    %3322 = vst [vmem:[#allocation3 + $0x8] sm:$0x3] %v3071
    %v3333 = vrot.slane %v2587, 3
    %v3334 = vrot.slane %v2589, 3
    %v3335 = vsel %vm2394, %v3333, %v3334
    %v3336 = vrot.slane %v2588, 3
    %v3337 = vrot.slane %v2590, 3
    %v3338 = vsel %vm2394, %v3336, %v3337
    %v3339 = vrot.slane %v2591, 3
    %v3340 = vsel %vm2394, %v3334, %v3339
    %v3341 = vrot.slane %v2592, 3
    %v3342 = vsel %vm2394, %v3337, %v3341
    %v3343 = vrot.slane %v2593, 3
    %v3344 = vsel %vm2394, %v3339, %v3343
    %v3345 = vrot.slane %v2594, 3
    %v3346 = vsel %vm2394, %v3341, %v3345
    %v3347 = vrot.slane %v2595, 3
    %v3348 = vsel %vm2394, %v3343, %v3347
    %v3349 = vrot.slane %v2596, 3
    %v3350 = vsel %vm2394, %v3345, %v3349
    %v3360 = vsel %vm288, %v3318, 0
    %3362 = vmatprep.subr.mxu0 %v3338
    %3363 = vmatpush1.msra.mxu0 %v3335
    %3364 = vmatprep.subr.mxu0 %v3342
    %3365 = vmatpush1.msra.mxu0 %v3340
    %3366 = vmatprep.subr.mxu0 %v3346
    %3367 = vmatpush1.msra.mxu0 %v3344
    %3368 = vmatprep.subr.mxu0 %v3350
    %3369 = vmatpush1.msra.mxu0 %v3348
    %3370 = vmatprep.subr.mxu0 0.0
    %3371 = vmatpush1.msra.mxu0 0.0
    %3372 = vmatprep.subr.mxu0 0.0
    %3373 = vmatpush1.msra.mxu0 0.0
    %3374 = vmatprep.subr.mxu0 0.0
    %3375 = vmatpush1.msra.mxu0 0.0
    %3376 = vmatprep.subr.mxu0 0.0
    %3377 = vmatpush1.msra.mxu0 0.0
    %3378 = vmatprep.subr.mxu0 0.0
    %3379 = vmatpush1.msra.mxu0 0.0
    %3380 = vmatprep.subr.mxu0 0.0
    %3381 = vmatpush1.msra.mxu0 0.0
    %3382 = vmatprep.subr.mxu0 0.0
    %3383 = vmatpush1.msra.mxu0 0.0
    %3384 = vmatprep.subr.mxu0 0.0
    %3385 = vmatpush1.msra.mxu0 0.0
    %3386 = vmatprep.subr.mxu0 0.0
    %3387 = vmatpush1.msra.mxu0 0.0
    %3388 = vmatprep.subr.mxu0 0.0
    %3389 = vmatpush1.msra.mxu0 0.0
    %3390 = vmatprep.subr.mxu0 0.0
    %3391 = vmatpush1.msra.mxu0 0.0
    %3392 = vmatprep.subr.mxu0 0.0
    %3393 = vmatpush1.msra.mxu0 0.0
    %3394 = vmatprep.subr.mxu0 0.0
    %3395 = vmatpush1.msra.mxu0 0.0
    %3396 = vmatprep.subr.mxu0 0.0
    %3397 = vmatpush1.msra.mxu0 0.0
    %3398 = vmatprep.subr.mxu0 0.0
    %3399 = vmatpush1.msra.mxu0 0.0
    %3400 = vmatprep.subr.mxu0 0.0
    %3401 = vmatpush1.msra.mxu0 0.0
    %3402 = vmatprep.subr.mxu0 0.0
    %3403 = vmatpush1.msra.mxu0 0.0
    %3404 = vmatprep.subr.mxu0 0.0
    %3405 = vmatpush1.msra.mxu0 0.0
    %3406 = vmatprep.subr.mxu0 0.0
    %3407 = vmatpush1.msra.mxu0 0.0
    %3408 = vmatprep.subr.mxu0 0.0
    %3409 = vmatpush1.msra.mxu0 0.0
    %3410 = vmatprep.subr.mxu0 0.0
    %3411 = vmatpush1.msra.mxu0 0.0
    %3412 = vmatprep.subr.mxu0 0.0
    %3413 = vmatpush1.msra.mxu0 0.0
    %3414 = vmatprep.subr.mxu0 0.0
    %3415 = vmatpush1.msra.mxu0 0.0
    %3416 = vmatprep.subr.mxu0 0.0
    %3417 = vmatpush1.msra.mxu0 0.0
    %3418 = vmatprep.subr.mxu0 0.0
    %3419 = vmatpush1.msra.mxu0 0.0
    %3420 = vmatprep.subr.mxu0 0.0
    %3421 = vmatpush1.msra.mxu0 0.0
    %3422 = vmatprep.subr.mxu0 0.0
    %3423 = vmatpush1.msra.mxu0 0.0
    %3424 = vmatprep.subr.mxu0 0.0
    %3425 = vmatpush1.msra.mxu0 0.0
    %3426 = vmatprep.mubr.f32.mxu0 0.0
    %3427 = vmatmul.mubr.f32.gmra.mrb[0].mxu0 %v3360
    %v3428 = vpop.f32.mrb[0].mxu0
    %v3429 = vadd.f32 0.0, %v3428
    %v3430 = vpop.f32.mrb[0].mxu0
    %v3431 = vadd.f32 0.0, %v3430
    %3432 = vdwg.mxu0
    %v3433 = vadd.f32 %v3070, %v3429
    %v3434 = vadd.f32 %v3071, %v3431
    %v3435 = vmax.f32 %v3433, 0.0
    %v3436 = vmax.f32 %v3434, 0.0
    %v3437 = vlaneseq
    %v3438 = vshrl.u32 %v3437, 7
    %v3439 = vsub.s32 0, %v3438
    %v3440 = vrot.slane %v2629, %v3439
    %3441 = vmatprep.subr.mxu0 0.0
    %3442 = vmatpush1.msra.mxu0 %v2597
    %3443 = vmatprep.subr.mxu0 0.0
    %3444 = vmatpush1.msra.mxu0 %v2598
    %3445 = vmatprep.subr.mxu0 0.0
    %3446 = vmatpush1.msra.mxu0 %v2599
    %3447 = vmatprep.subr.mxu0 0.0
    %3448 = vmatpush1.msra.mxu0 %v2600
    %3449 = vmatprep.subr.mxu0 0.0
    %3450 = vmatpush1.msra.mxu0 %v2601
    %3451 = vmatprep.subr.mxu0 0.0
    %3452 = vmatpush1.msra.mxu0 %v2602
    %3453 = vmatprep.subr.mxu0 0.0
    %3454 = vmatpush1.msra.mxu0 %v2603
    %3455 = vmatprep.subr.mxu0 0.0
    %3456 = vmatpush1.msra.mxu0 %v2604
    %3457 = vmatprep.subr.mxu0 0.0
    %3458 = vmatpush1.msra.mxu0 %v2605
    %3459 = vmatprep.subr.mxu0 0.0
    %3460 = vmatpush1.msra.mxu0 %v2606
    %3461 = vmatprep.subr.mxu0 0.0
    %3462 = vmatpush1.msra.mxu0 %v2607
    %3463 = vmatprep.subr.mxu0 0.0
    %3464 = vmatpush1.msra.mxu0 %v2608
    %3465 = vmatprep.subr.mxu0 0.0
    %3466 = vmatpush1.msra.mxu0 %v2609
    %3467 = vmatprep.subr.mxu0 0.0
    %3468 = vmatpush1.msra.mxu0 %v2610
    %3469 = vmatprep.subr.mxu0 0.0
    %3470 = vmatpush1.msra.mxu0 %v2611
    %3471 = vmatprep.subr.mxu0 0.0
    %3472 = vmatpush1.msra.mxu0 %v2612
    %3473 = vmatprep.subr.mxu0 0.0
    %3474 = vmatpush1.msra.mxu0 %v2613
    %3475 = vmatprep.subr.mxu0 0.0
    %3476 = vmatpush1.msra.mxu0 %v2614
    %3477 = vmatprep.subr.mxu0 0.0
    %3478 = vmatpush1.msra.mxu0 %v2615
    %3479 = vmatprep.subr.mxu0 0.0
    %3480 = vmatpush1.msra.mxu0 %v2616
    %3481 = vmatprep.subr.mxu0 0.0
    %3482 = vmatpush1.msra.mxu0 %v2617
    %3483 = vmatprep.subr.mxu0 0.0
    %3484 = vmatpush1.msra.mxu0 %v2618
    %3485 = vmatprep.subr.mxu0 0.0
    %3486 = vmatpush1.msra.mxu0 %v2619
    %3487 = vmatprep.subr.mxu0 0.0
    %3488 = vmatpush1.msra.mxu0 %v2620
    %3489 = vmatprep.subr.mxu0 0.0
    %3490 = vmatpush1.msra.mxu0 %v2621
    %3491 = vmatprep.subr.mxu0 0.0
    %3492 = vmatpush1.msra.mxu0 %v2622
    %3493 = vmatprep.subr.mxu0 0.0
    %3494 = vmatpush1.msra.mxu0 %v2623
    %3495 = vmatprep.subr.mxu0 0.0
    %3496 = vmatpush1.msra.mxu0 %v2624
    %3497 = vmatprep.subr.mxu0 0.0
    %3498 = vmatpush1.msra.mxu0 %v2625
    %3499 = vmatprep.subr.mxu0 0.0
    %3500 = vmatpush1.msra.mxu0 %v2626
    %3501 = vmatprep.subr.mxu0 0.0
    %3502 = vmatpush1.msra.mxu0 %v2627
    %3503 = vmatprep.subr.mxu0 0.0
    %3504 = vmatpush1.msra.mxu0 %v2628
    %3505 = vmatprep.mubr.f32.mxu0 %v3436
    %3506 = vmatmul.mubr.f32.gmra.mrb[0].mxu0 %v3435
    %v3507 = vpop.f32.mrb[0].mxu0
    %v3508 = vadd.f32 %v3440, %v3507
    %v3509 = vpop.f32.mrb[0].mxu0
    %3510 = vdwg.mxu0
    %v3511 = vsel %vm45, %v3508, -inf
    %3512 = vmax.xlane.f32.xlu0 %v3511
    %v3513 = vpop.xlane.xlu0 %3512
    %vm3514 = vcmp.eq.f32.partialorder %v3508, %v3513
    %v3515 = vsel %vm3514, %v3069, 128.0
    %v3516 = vsel %vm45, %v3515, inf
    %3517 = vmin.xlane.f32.xlu0 %v3516
    %v3518 = vpop.xlane.xlu0 %3517
    %vm3519 = vcmp.eq.f32.partialorder %v3069, %v3518
    %v3520 = vsel %vm3519, 1, 0
    %v3521 = vcvt.s32.f32 %v3520
    %3522 = vmatprep.subr.mxu0 %v2897
    %3523 = vmatpush1.msra.mxu0 %v2894
    %3524 = vmatprep.subr.mxu0 %v2901
    %3525 = vmatpush1.msra.mxu0 %v2899
    %3526 = vmatprep.subr.mxu0 %v2905
    %3527 = vmatpush1.msra.mxu0 %v2903
    %3528 = vmatprep.subr.mxu0 %v2909
    %3529 = vmatpush1.msra.mxu0 %v2907
    %3530 = vmatprep.subr.mxu0 %v2913
    %3531 = vmatpush1.msra.mxu0 %v2911
    %3532 = vmatprep.subr.mxu0 %v2917
    %3533 = vmatpush1.msra.mxu0 %v2915
    %3534 = vmatprep.subr.mxu0 %v2921
    %3535 = vmatpush1.msra.mxu0 %v2919
    %3536 = vmatprep.subr.mxu0 %v2925
    %3537 = vmatpush1.msra.mxu0 %v2923
    %3538 = vmatprep.subr.mxu0 %v2929
    %3539 = vmatpush1.msra.mxu0 %v2927
    %3540 = vmatprep.subr.mxu0 %v2933
    %3541 = vmatpush1.msra.mxu0 %v2931
    %3542 = vmatprep.subr.mxu0 %v2937
    %3543 = vmatpush1.msra.mxu0 %v2935
    %3544 = vmatprep.subr.mxu0 %v2941
    %3545 = vmatpush1.msra.mxu0 %v2939
    %3546 = vmatprep.subr.mxu0 %v2945
    %3547 = vmatpush1.msra.mxu0 %v2943
    %3548 = vmatprep.subr.mxu0 %v2949
    %3549 = vmatpush1.msra.mxu0 %v2947
    %3550 = vmatprep.subr.mxu0 %v2953
    %3551 = vmatpush1.msra.mxu0 %v2951
    %3552 = vmatprep.subr.mxu0 %v2957
    %3553 = vmatpush1.msra.mxu0 %v2955
    %3554 = vmatprep.subr.mxu0 0.0
    %3555 = vmatpush1.msra.mxu0 0.0
    %3556 = vmatprep.subr.mxu0 0.0
    %3557 = vmatpush1.msra.mxu0 0.0
    %3558 = vmatprep.subr.mxu0 0.0
    %3559 = vmatpush1.msra.mxu0 0.0
    %3560 = vmatprep.subr.mxu0 0.0
    %3561 = vmatpush1.msra.mxu0 0.0
    %3562 = vmatprep.subr.mxu0 0.0
    %3563 = vmatpush1.msra.mxu0 0.0
    %3564 = vmatprep.subr.mxu0 0.0
    %3565 = vmatpush1.msra.mxu0 0.0
    %3566 = vmatprep.subr.mxu0 0.0
    %3567 = vmatpush1.msra.mxu0 0.0
    %3568 = vmatprep.subr.mxu0 0.0
    %3569 = vmatpush1.msra.mxu0 0.0
    %3570 = vmatprep.subr.mxu0 0.0
    %3571 = vmatpush1.msra.mxu0 0.0
    %3572 = vmatprep.subr.mxu0 0.0
    %3573 = vmatpush1.msra.mxu0 0.0
    %3574 = vmatprep.subr.mxu0 0.0
    %3575 = vmatpush1.msra.mxu0 0.0
    %3576 = vmatprep.subr.mxu0 0.0
    %3577 = vmatpush1.msra.mxu0 0.0
    %3578 = vmatprep.subr.mxu0 0.0
    %3579 = vmatpush1.msra.mxu0 0.0
    %3580 = vmatprep.subr.mxu0 0.0
    %3581 = vmatpush1.msra.mxu0 0.0
    %3582 = vmatprep.subr.mxu0 0.0
    %3583 = vmatpush1.msra.mxu0 0.0
    %3584 = vmatprep.subr.mxu0 0.0
    %3585 = vmatpush1.msra.mxu0 0.0
    %3586 = vmatprep.mubr.f32.mxu0 0.0
    %3587 = vmatmul.mubr.f32.gmra.mrb[0].mxu0 %v3521
    %v3588 = vpop.f32.mrb[0].mxu0
    %v3589 = vadd.f32 %v2488, %v3588
    %v3590 = vpop.f32.mrb[0].mxu0
    %v3591 = vadd.f32 %v2490, %v3590
    %3592 = vdwg.mxu0
    %3593 = vmatprep.subr.mxu0 0.0
    %3594 = vmatpush1.msra.mxu0 %v2574
    %3595 = vmatprep.subr.mxu0 0.0
    %3596 = vmatpush1.msra.mxu0 %v2575
    %3597 = vmatprep.subr.mxu0 0.0
    %3598 = vmatpush1.msra.mxu0 %v2576
    %3599 = vmatprep.subr.mxu0 0.0
    %3600 = vmatpush1.msra.mxu0 %v2577
    %3601 = vmatprep.subr.mxu0 0.0
    %3602 = vmatpush1.msra.mxu0 0.0
    %3603 = vmatprep.subr.mxu0 0.0
    %3604 = vmatpush1.msra.mxu0 0.0
    %3605 = vmatprep.subr.mxu0 0.0
    %3606 = vmatpush1.msra.mxu0 0.0
    %3607 = vmatprep.subr.mxu0 0.0
    %3608 = vmatpush1.msra.mxu0 0.0
    %3609 = vmatprep.subr.mxu0 0.0
    %3610 = vmatpush1.msra.mxu0 0.0
    %3611 = vmatprep.subr.mxu0 0.0
    %3612 = vmatpush1.msra.mxu0 0.0
    %3613 = vmatprep.subr.mxu0 0.0
    %3614 = vmatpush1.msra.mxu0 0.0
    %3615 = vmatprep.subr.mxu0 0.0
    %3616 = vmatpush1.msra.mxu0 0.0
    %3617 = vmatprep.subr.mxu0 0.0
    %3618 = vmatpush1.msra.mxu0 0.0
    %3619 = vmatprep.subr.mxu0 0.0
    %3620 = vmatpush1.msra.mxu0 0.0
    %3621 = vmatprep.subr.mxu0 0.0
    %3622 = vmatpush1.msra.mxu0 0.0
    %3623 = vmatprep.subr.mxu0 0.0
    %3624 = vmatpush1.msra.mxu0 0.0
    %3625 = vmatprep.subr.mxu0 0.0
    %3626 = vmatpush1.msra.mxu0 0.0
    %3627 = vmatprep.subr.mxu0 0.0
    %3628 = vmatpush1.msra.mxu0 0.0
    %3629 = vmatprep.subr.mxu0 0.0
    %3630 = vmatpush1.msra.mxu0 0.0
    %3631 = vmatprep.subr.mxu0 0.0
    %3632 = vmatpush1.msra.mxu0 0.0
    %3633 = vmatprep.subr.mxu0 0.0
    %3634 = vmatpush1.msra.mxu0 0.0
    %3635 = vmatprep.subr.mxu0 0.0
    %3636 = vmatpush1.msra.mxu0 0.0
    %3637 = vmatprep.subr.mxu0 0.0
    %3638 = vmatpush1.msra.mxu0 0.0
    %3639 = vmatprep.subr.mxu0 0.0
    %3640 = vmatpush1.msra.mxu0 0.0
    %3641 = vmatprep.subr.mxu0 0.0
    %3642 = vmatpush1.msra.mxu0 0.0
    %3643 = vmatprep.subr.mxu0 0.0
    %3644 = vmatpush1.msra.mxu0 0.0
    %3645 = vmatprep.subr.mxu0 0.0
    %3646 = vmatpush1.msra.mxu0 0.0
    %3647 = vmatprep.subr.mxu0 0.0
    %3648 = vmatpush1.msra.mxu0 0.0
    %3649 = vmatprep.subr.mxu0 0.0
    %3650 = vmatpush1.msra.mxu0 0.0
    %3651 = vmatprep.subr.mxu0 0.0
    %3652 = vmatpush1.msra.mxu0 0.0
    %3653 = vmatprep.subr.mxu0 0.0
    %3654 = vmatpush1.msra.mxu0 0.0
    %3655 = vmatprep.subr.mxu0 0.0
    %3656 = vmatpush1.msra.mxu0 0.0
    %3657 = vmatprep.mubr.f32.mxu0 0.0
    %3658 = vmatmul.mubr.f32.gmra.mrb[0].mxu0 %v3360
    %v3659 = vpop.f32.mrb[0].mxu0
    %v3660 = vadd.f32 0.0, %v3659
    %v3661 = vpop.f32.mrb[0].mxu0
    %3662 = vdwg.mxu0
    %3663 = vmatprep.subr.mxu0 0.0
    %3664 = vmatpush1.msra.mxu0 %v2578
    %3665 = vmatprep.subr.mxu0 0.0
    %3666 = vmatpush1.msra.mxu0 %v2579
    %3667 = vmatprep.subr.mxu0 0.0
    %3668 = vmatpush1.msra.mxu0 %v2580
    %3669 = vmatprep.subr.mxu0 0.0
    %3670 = vmatpush1.msra.mxu0 %v2581
    %3671 = vmatprep.subr.mxu0 0.0
    %3672 = vmatpush1.msra.mxu0 0.0
    %3673 = vmatprep.subr.mxu0 0.0
    %3674 = vmatpush1.msra.mxu0 0.0
    %3675 = vmatprep.subr.mxu0 0.0
    %3676 = vmatpush1.msra.mxu0 0.0
    %3677 = vmatprep.subr.mxu0 0.0
    %3678 = vmatpush1.msra.mxu0 0.0
    %3679 = vmatprep.subr.mxu0 0.0
    %3680 = vmatpush1.msra.mxu0 0.0
    %3681 = vmatprep.subr.mxu0 0.0
    %3682 = vmatpush1.msra.mxu0 0.0
    %3683 = vmatprep.subr.mxu0 0.0
    %3684 = vmatpush1.msra.mxu0 0.0
    %3685 = vmatprep.subr.mxu0 0.0
    %3686 = vmatpush1.msra.mxu0 0.0
    %3687 = vmatprep.subr.mxu0 0.0
    %3688 = vmatpush1.msra.mxu0 0.0
    %3689 = vmatprep.subr.mxu0 0.0
    %3690 = vmatpush1.msra.mxu0 0.0
    %3691 = vmatprep.subr.mxu0 0.0
    %3692 = vmatpush1.msra.mxu0 0.0
    %3693 = vmatprep.subr.mxu0 0.0
    %3694 = vmatpush1.msra.mxu0 0.0
    %3695 = vmatprep.subr.mxu0 0.0
    %3696 = vmatpush1.msra.mxu0 0.0
    %3697 = vmatprep.subr.mxu0 0.0
    %3698 = vmatpush1.msra.mxu0 0.0
    %3699 = vmatprep.subr.mxu0 0.0
    %3700 = vmatpush1.msra.mxu0 0.0
    %3701 = vmatprep.subr.mxu0 0.0
    %3702 = vmatpush1.msra.mxu0 0.0
    %3703 = vmatprep.subr.mxu0 0.0
    %3704 = vmatpush1.msra.mxu0 0.0
    %3705 = vmatprep.subr.mxu0 0.0
    %3706 = vmatpush1.msra.mxu0 0.0
    %3707 = vmatprep.subr.mxu0 0.0
    %3708 = vmatpush1.msra.mxu0 0.0
    %3709 = vmatprep.subr.mxu0 0.0
    %3710 = vmatpush1.msra.mxu0 0.0
    %3711 = vmatprep.subr.mxu0 0.0
    %3712 = vmatpush1.msra.mxu0 0.0
    %3713 = vmatprep.subr.mxu0 0.0
    %3714 = vmatpush1.msra.mxu0 0.0
    %3715 = vmatprep.subr.mxu0 0.0
    %3716 = vmatpush1.msra.mxu0 0.0
    %3717 = vmatprep.subr.mxu0 0.0
    %3718 = vmatpush1.msra.mxu0 0.0
    %3719 = vmatprep.subr.mxu0 0.0
    %3720 = vmatpush1.msra.mxu0 0.0
    %3721 = vmatprep.subr.mxu0 0.0
    %3722 = vmatpush1.msra.mxu0 0.0
    %3723 = vmatprep.subr.mxu0 0.0
    %3724 = vmatpush1.msra.mxu0 0.0
    %3725 = vmatprep.subr.mxu0 0.0
    %3726 = vmatpush1.msra.mxu0 0.0
    %3727 = vmatprep.mubr.f32.mxu0 0.0
    %3728 = vmatmul.mubr.f32.gmra.mrb[0].mxu0 %v3360
    %v3729 = vpop.f32.mrb[0].mxu0
    %v3730 = vadd.f32 0.0, %v3729
    %v3731 = vpop.f32.mrb[0].mxu0
    %3732 = vdwg.mxu0
    %3733 = vmatprep.subr.mxu0 0.0
    %3734 = vmatpush1.msra.mxu0 %v2582
    %3735 = vmatprep.subr.mxu0 0.0
    %3736 = vmatpush1.msra.mxu0 %v2583
    %3737 = vmatprep.subr.mxu0 0.0
    %3738 = vmatpush1.msra.mxu0 %v2584
    %3739 = vmatprep.subr.mxu0 0.0
    %3740 = vmatpush1.msra.mxu0 %v2585
    %3741 = vmatprep.subr.mxu0 0.0
    %3742 = vmatpush1.msra.mxu0 0.0
    %3743 = vmatprep.subr.mxu0 0.0
    %3744 = vmatpush1.msra.mxu0 0.0
    %3745 = vmatprep.subr.mxu0 0.0
    %3746 = vmatpush1.msra.mxu0 0.0
    %3747 = vmatprep.subr.mxu0 0.0
    %3748 = vmatpush1.msra.mxu0 0.0
    %3749 = vmatprep.subr.mxu0 0.0
    %3750 = vmatpush1.msra.mxu0 0.0
    %3751 = vmatprep.subr.mxu0 0.0
    %3752 = vmatpush1.msra.mxu0 0.0
    %3753 = vmatprep.subr.mxu0 0.0
    %3754 = vmatpush1.msra.mxu0 0.0
    %3755 = vmatprep.subr.mxu0 0.0
    %3756 = vmatpush1.msra.mxu0 0.0
    %3757 = vmatprep.subr.mxu0 0.0
    %3758 = vmatpush1.msra.mxu0 0.0
    %3759 = vmatprep.subr.mxu0 0.0
    %3760 = vmatpush1.msra.mxu0 0.0
    %3761 = vmatprep.subr.mxu0 0.0
    %3762 = vmatpush1.msra.mxu0 0.0
    %3763 = vmatprep.subr.mxu0 0.0
    %3764 = vmatpush1.msra.mxu0 0.0
    %3765 = vmatprep.subr.mxu0 0.0
    %3766 = vmatpush1.msra.mxu0 0.0
    %3767 = vmatprep.subr.mxu0 0.0
    %3768 = vmatpush1.msra.mxu0 0.0
    %3769 = vmatprep.subr.mxu0 0.0
    %3770 = vmatpush1.msra.mxu0 0.0
    %3771 = vmatprep.subr.mxu0 0.0
    %3772 = vmatpush1.msra.mxu0 0.0
    %3773 = vmatprep.subr.mxu0 0.0
    %3774 = vmatpush1.msra.mxu0 0.0
    %3775 = vmatprep.subr.mxu0 0.0
    %3776 = vmatpush1.msra.mxu0 0.0
    %3777 = vmatprep.subr.mxu0 0.0
    %3778 = vmatpush1.msra.mxu0 0.0
    %3779 = vmatprep.subr.mxu0 0.0
    %3780 = vmatpush1.msra.mxu0 0.0
    %3781 = vmatprep.subr.mxu0 0.0
    %3782 = vmatpush1.msra.mxu0 0.0
    %3783 = vmatprep.subr.mxu0 0.0
    %3784 = vmatpush1.msra.mxu0 0.0
    %3785 = vmatprep.subr.mxu0 0.0
    %3786 = vmatpush1.msra.mxu0 0.0
    %3787 = vmatprep.subr.mxu0 0.0
    %3788 = vmatpush1.msra.mxu0 0.0
    %3789 = vmatprep.subr.mxu0 0.0
    %3790 = vmatpush1.msra.mxu0 0.0
    %3791 = vmatprep.subr.mxu0 0.0
    %3792 = vmatpush1.msra.mxu0 0.0
    %3793 = vmatprep.subr.mxu0 0.0
    %3794 = vmatpush1.msra.mxu0 0.0
    %3795 = vmatprep.subr.mxu0 0.0
    %3796 = vmatpush1.msra.mxu0 0.0
    %3797 = vmatprep.mubr.f32.mxu0 0.0
    %3798 = vmatmul.mubr.f32.gmra.mrb[0].mxu0 %v3360
    %v3799 = vpop.f32.mrb[0].mxu0
    %v3800 = vadd.f32 %v3215, %v3799
    %v3801 = vpop.f32.mrb[0].mxu0
    %3802 = vdwg.mxu0
    %3803 = vmatprep.subr.mxu0 0.0
    %3804 = vmatpush1.msra.mxu0 %v2492
    %3805 = vmatprep.subr.mxu0 0.0
    %3806 = vmatpush1.msra.mxu0 %v2493
    %3807 = vmatprep.subr.mxu0 0.0
    %3808 = vmatpush1.msra.mxu0 %v2494
    %3809 = vmatprep.subr.mxu0 0.0
    %3810 = vmatpush1.msra.mxu0 %v2495
    %3811 = vmatprep.subr.mxu0 0.0
    %3812 = vmatpush1.msra.mxu0 %v2496
    %3813 = vmatprep.subr.mxu0 0.0
    %3814 = vmatpush1.msra.mxu0 %v2497
    %3815 = vmatprep.subr.mxu0 0.0
    %3816 = vmatpush1.msra.mxu0 %v2498
    %3817 = vmatprep.subr.mxu0 0.0
    %3818 = vmatpush1.msra.mxu0 %v2499
    %3819 = vmatprep.subr.mxu0 0.0
    %3820 = vmatpush1.msra.mxu0 %v2500
    %3821 = vmatprep.subr.mxu0 0.0
    %3822 = vmatpush1.msra.mxu0 %v2501
    %3823 = vmatprep.subr.mxu0 0.0
    %3824 = vmatpush1.msra.mxu0 %v2502
    %3825 = vmatprep.subr.mxu0 0.0
    %3826 = vmatpush1.msra.mxu0 %v2503
    %3827 = vmatprep.subr.mxu0 0.0
    %3828 = vmatpush1.msra.mxu0 %v2504
    %3829 = vmatprep.subr.mxu0 0.0
    %3830 = vmatpush1.msra.mxu0 %v2505
    %3831 = vmatprep.subr.mxu0 0.0
    %3832 = vmatpush1.msra.mxu0 %v2506
    %3833 = vmatprep.subr.mxu0 0.0
    %3834 = vmatpush1.msra.mxu0 %v2507
    %3835 = vmatprep.subr.mxu0 0.0
    %3836 = vmatpush1.msra.mxu0 0.0
    %3837 = vmatprep.subr.mxu0 0.0
    %3838 = vmatpush1.msra.mxu0 0.0
    %3839 = vmatprep.subr.mxu0 0.0
    %3840 = vmatpush1.msra.mxu0 0.0
    %3841 = vmatprep.subr.mxu0 0.0
    %3842 = vmatpush1.msra.mxu0 0.0
    %3843 = vmatprep.subr.mxu0 0.0
    %3844 = vmatpush1.msra.mxu0 0.0
    %3845 = vmatprep.subr.mxu0 0.0
    %3846 = vmatpush1.msra.mxu0 0.0
    %3847 = vmatprep.subr.mxu0 0.0
    %3848 = vmatpush1.msra.mxu0 0.0
    %3849 = vmatprep.subr.mxu0 0.0
    %3850 = vmatpush1.msra.mxu0 0.0
    %3851 = vmatprep.subr.mxu0 0.0
    %3852 = vmatpush1.msra.mxu0 0.0
    %3853 = vmatprep.subr.mxu0 0.0
    %3854 = vmatpush1.msra.mxu0 0.0
    %3855 = vmatprep.subr.mxu0 0.0
    %3856 = vmatpush1.msra.mxu0 0.0
    %3857 = vmatprep.subr.mxu0 0.0
    %3858 = vmatpush1.msra.mxu0 0.0
    %3859 = vmatprep.subr.mxu0 0.0
    %3860 = vmatpush1.msra.mxu0 0.0
    %3861 = vmatprep.subr.mxu0 0.0
    %3862 = vmatpush1.msra.mxu0 0.0
    %3863 = vmatprep.subr.mxu0 0.0
    %3864 = vmatpush1.msra.mxu0 0.0
    %3865 = vmatprep.subr.mxu0 0.0
    %3866 = vmatpush1.msra.mxu0 0.0
    %3867 = vmatprep.mubr.f32.mxu0 0.0
    %3868 = vmatmul.mubr.f32.gmra.mrb[0].mxu0 %v3521
    %v3869 = vpop.f32.mrb[0].mxu0
    %v3870 = vadd.f32 %v2200, %v3869
    %v3871 = vpop.f32.mrb[0].mxu0
    %3872 = vdwg.mxu0
    %v3873 = vadd.f32 %v3870, %v3660
    %v3874 = vxor.u32 %v3873, 2147483648
    %v3875 = vmul.f32 %v3874, 1.442695
    %v3876 = vpow.pop %v3875
    %v3877 = vadd.f32 %v3876, 1.0
    %v3878 = vrcp.pop %v3877
    %v3879 = vmul.f32 1.0, %v3878
    %3880 = vmatprep.subr.mxu0 0.0
    %3881 = vmatpush1.msra.mxu0 %v2508
    %3882 = vmatprep.subr.mxu0 0.0
    %3883 = vmatpush1.msra.mxu0 %v2509
    %3884 = vmatprep.subr.mxu0 0.0
    %3885 = vmatpush1.msra.mxu0 %v2510
    %3886 = vmatprep.subr.mxu0 0.0
    %3887 = vmatpush1.msra.mxu0 %v2511
    %3888 = vmatprep.subr.mxu0 0.0
    %3889 = vmatpush1.msra.mxu0 %v2512
    %3890 = vmatprep.subr.mxu0 0.0
    %3891 = vmatpush1.msra.mxu0 %v2513
    %3892 = vmatprep.subr.mxu0 0.0
    %3893 = vmatpush1.msra.mxu0 %v2514
    %3894 = vmatprep.subr.mxu0 0.0
    %3895 = vmatpush1.msra.mxu0 %v2515
    %3896 = vmatprep.subr.mxu0 0.0
    %3897 = vmatpush1.msra.mxu0 %v2516
    %3898 = vmatprep.subr.mxu0 0.0
    %3899 = vmatpush1.msra.mxu0 %v2517
    %3900 = vmatprep.subr.mxu0 0.0
    %3901 = vmatpush1.msra.mxu0 %v2518
    %3902 = vmatprep.subr.mxu0 0.0
    %3903 = vmatpush1.msra.mxu0 %v2519
    %3904 = vmatprep.subr.mxu0 0.0
    %3905 = vmatpush1.msra.mxu0 %v2520
    %3906 = vmatprep.subr.mxu0 0.0
    %3907 = vmatpush1.msra.mxu0 %v2521
    %3908 = vmatprep.subr.mxu0 0.0
    %3909 = vmatpush1.msra.mxu0 %v2522
    %3910 = vmatprep.subr.mxu0 0.0
    %3911 = vmatpush1.msra.mxu0 %v2523
    %3912 = vmatprep.subr.mxu0 0.0
    %3913 = vmatpush1.msra.mxu0 0.0
    %3914 = vmatprep.subr.mxu0 0.0
    %3915 = vmatpush1.msra.mxu0 0.0
    %3916 = vmatprep.subr.mxu0 0.0
    %3917 = vmatpush1.msra.mxu0 0.0
    %3918 = vmatprep.subr.mxu0 0.0
    %3919 = vmatpush1.msra.mxu0 0.0
    %3920 = vmatprep.subr.mxu0 0.0
    %3921 = vmatpush1.msra.mxu0 0.0
    %3922 = vmatprep.subr.mxu0 0.0
    %3923 = vmatpush1.msra.mxu0 0.0
    %3924 = vmatprep.subr.mxu0 0.0
    %3925 = vmatpush1.msra.mxu0 0.0
    %3926 = vmatprep.subr.mxu0 0.0
    %3927 = vmatpush1.msra.mxu0 0.0
    %3928 = vmatprep.subr.mxu0 0.0
    %3929 = vmatpush1.msra.mxu0 0.0
    %3930 = vmatprep.subr.mxu0 0.0
    %3931 = vmatpush1.msra.mxu0 0.0
    %3932 = vmatprep.subr.mxu0 0.0
    %3933 = vmatpush1.msra.mxu0 0.0
    %3934 = vmatprep.subr.mxu0 0.0
    %3935 = vmatpush1.msra.mxu0 0.0
    %3936 = vmatprep.subr.mxu0 0.0
    %3937 = vmatpush1.msra.mxu0 0.0
    %3938 = vmatprep.subr.mxu0 0.0
    %3939 = vmatpush1.msra.mxu0 0.0
    %3940 = vmatprep.subr.mxu0 0.0
    %3941 = vmatpush1.msra.mxu0 0.0
    %3942 = vmatprep.subr.mxu0 0.0
    %3943 = vmatpush1.msra.mxu0 0.0
    %3944 = vmatprep.mubr.f32.mxu0 0.0
    %3945 = vmatmul.mubr.f32.gmra.mrb[0].mxu0 %v3521
    %v3946 = vpop.f32.mrb[0].mxu0
    %v3947 = vadd.f32 %v2279, %v3946
    %v3948 = vpop.f32.mrb[0].mxu0
    %3949 = vdwg.mxu0
    %v3950 = vadd.f32 %v3947, %v3730
    %v3951 = vxor.u32 %v3950, 2147483648
    %v3952 = vmul.f32 %v3951, 1.442695
    %v3953 = vpow.pop %v3952
    %v3954 = vadd.f32 %v3953, 1.0
    %v3955 = vrcp.pop %v3954
    %v3956 = vmul.f32 1.0, %v3955
    %3957 = vmatprep.subr.mxu0 0.0
    %3958 = vmatpush1.msra.mxu0 %v2524
    %3959 = vmatprep.subr.mxu0 0.0
    %3960 = vmatpush1.msra.mxu0 %v2525
    %3961 = vmatprep.subr.mxu0 0.0
    %3962 = vmatpush1.msra.mxu0 %v2526
    %3963 = vmatprep.subr.mxu0 0.0
    %3964 = vmatpush1.msra.mxu0 %v2527
    %3965 = vmatprep.subr.mxu0 0.0
    %3966 = vmatpush1.msra.mxu0 %v2528
    %3967 = vmatprep.subr.mxu0 0.0
    %3968 = vmatpush1.msra.mxu0 %v2529
    %3969 = vmatprep.subr.mxu0 0.0
    %3970 = vmatpush1.msra.mxu0 %v2530
    %3971 = vmatprep.subr.mxu0 0.0
    %3972 = vmatpush1.msra.mxu0 %v2531
    %3973 = vmatprep.subr.mxu0 0.0
    %3974 = vmatpush1.msra.mxu0 %v2532
    %3975 = vmatprep.subr.mxu0 0.0
    %3976 = vmatpush1.msra.mxu0 %v2533
    %3977 = vmatprep.subr.mxu0 0.0
    %3978 = vmatpush1.msra.mxu0 %v2534
    %3979 = vmatprep.subr.mxu0 0.0
    %3980 = vmatpush1.msra.mxu0 %v2535
    %3981 = vmatprep.subr.mxu0 0.0
    %3982 = vmatpush1.msra.mxu0 %v2536
    %3983 = vmatprep.subr.mxu0 0.0
    %3984 = vmatpush1.msra.mxu0 %v2537
    %3985 = vmatprep.subr.mxu0 0.0
    %3986 = vmatpush1.msra.mxu0 %v2538
    %3987 = vmatprep.subr.mxu0 0.0
    %3988 = vmatpush1.msra.mxu0 %v2539
    %3989 = vmatprep.subr.mxu0 0.0
    %3990 = vmatpush1.msra.mxu0 0.0
    %3991 = vmatprep.subr.mxu0 0.0
    %3992 = vmatpush1.msra.mxu0 0.0
    %3993 = vmatprep.subr.mxu0 0.0
    %3994 = vmatpush1.msra.mxu0 0.0
    %3995 = vmatprep.subr.mxu0 0.0
    %3996 = vmatpush1.msra.mxu0 0.0
    %3997 = vmatprep.subr.mxu0 0.0
    %3998 = vmatpush1.msra.mxu0 0.0
    %3999 = vmatprep.subr.mxu0 0.0
    %4000 = vmatpush1.msra.mxu0 0.0
    %4001 = vmatprep.subr.mxu0 0.0
    %4002 = vmatpush1.msra.mxu0 0.0
    %4003 = vmatprep.subr.mxu0 0.0
    %4004 = vmatpush1.msra.mxu0 0.0
    %4005 = vmatprep.subr.mxu0 0.0
    %4006 = vmatpush1.msra.mxu0 0.0
    %4007 = vmatprep.subr.mxu0 0.0
    %4008 = vmatpush1.msra.mxu0 0.0
    %4009 = vmatprep.subr.mxu0 0.0
    %4010 = vmatpush1.msra.mxu0 0.0
    %4011 = vmatprep.subr.mxu0 0.0
    %4012 = vmatpush1.msra.mxu0 0.0
    %4013 = vmatprep.subr.mxu0 0.0
    %4014 = vmatpush1.msra.mxu0 0.0
    %4015 = vmatprep.subr.mxu0 0.0
    %4016 = vmatpush1.msra.mxu0 0.0
    %4017 = vmatprep.subr.mxu0 0.0
    %4018 = vmatpush1.msra.mxu0 0.0
    %4019 = vmatprep.subr.mxu0 0.0
    %4020 = vmatpush1.msra.mxu0 0.0
    %4021 = vmatprep.mubr.f32.mxu0 0.0
    %4022 = vmatmul.mubr.f32.gmra.mrb[0].mxu0 %v3521
    %v4023 = vpop.f32.mrb[0].mxu0
    %v4024 = vadd.f32 %v2358, %v4023
    %v4025 = vpop.f32.mrb[0].mxu0
    %4026 = vdwg.mxu0
    %v4027 = vmul.f32 %v3879, %v3800
    %v4028 = vadd.f32 %v4024, %v4027
    %v4029 = vtanh.pop %v4028
    %v4030 = vsub.f32 %v3318, %v4029
    %v4031 = vmul.f32 %v3956, %v4030
    %v4032 = vadd.f32 %v4029, %v4031
    %4033 = vst.msk [vmem:[#allocation2 + $0x2] sm:$0x3] %vm3319, %v4032
    %v4036 = vrot.slane %v3589, 6
    %v4037 = vrot.slane %v3591, 6
    %4040 = vst [vmem:[#allocation3] sm:$0xc] %v4036
    %4041 = vst [vmem:[#allocation3 + $0x8] sm:$0xc] %v4037
    %v4043 = vsel %vm288, %v4032, 0
    %4045 = vmatprep.subr.mxu0 %v3338
    %4046 = vmatpush1.msra.mxu0 %v3335
    %4047 = vmatprep.subr.mxu0 %v3342
    %4048 = vmatpush1.msra.mxu0 %v3340
    %4049 = vmatprep.subr.mxu0 %v3346
    %4050 = vmatpush1.msra.mxu0 %v3344
    %4051 = vmatprep.subr.mxu0 %v3350
    %4052 = vmatpush1.msra.mxu0 %v3348
    %4053 = vmatprep.subr.mxu0 0.0
    %4054 = vmatpush1.msra.mxu0 0.0
    %4055 = vmatprep.subr.mxu0 0.0
    %4056 = vmatpush1.msra.mxu0 0.0
    %4057 = vmatprep.subr.mxu0 0.0
    %4058 = vmatpush1.msra.mxu0 0.0
    %4059 = vmatprep.subr.mxu0 0.0
    %4060 = vmatpush1.msra.mxu0 0.0
    %4061 = vmatprep.subr.mxu0 0.0
    %4062 = vmatpush1.msra.mxu0 0.0
    %4063 = vmatprep.subr.mxu0 0.0
    %4064 = vmatpush1.msra.mxu0 0.0
    %4065 = vmatprep.subr.mxu0 0.0
    %4066 = vmatpush1.msra.mxu0 0.0
    %4067 = vmatprep.subr.mxu0 0.0
    %4068 = vmatpush1.msra.mxu0 0.0
    %4069 = vmatprep.subr.mxu0 0.0
    %4070 = vmatpush1.msra.mxu0 0.0
    %4071 = vmatprep.subr.mxu0 0.0
    %4072 = vmatpush1.msra.mxu0 0.0
    %4073 = vmatprep.subr.mxu0 0.0
    %4074 = vmatpush1.msra.mxu0 0.0
    %4075 = vmatprep.subr.mxu0 0.0
    %4076 = vmatpush1.msra.mxu0 0.0
    %4077 = vmatprep.subr.mxu0 0.0
    %4078 = vmatpush1.msra.mxu0 0.0
    %4079 = vmatprep.subr.mxu0 0.0
    %4080 = vmatpush1.msra.mxu0 0.0
    %4081 = vmatprep.subr.mxu0 0.0
    %4082 = vmatpush1.msra.mxu0 0.0
    %4083 = vmatprep.subr.mxu0 0.0
    %4084 = vmatpush1.msra.mxu0 0.0
    %4085 = vmatprep.subr.mxu0 0.0
    %4086 = vmatpush1.msra.mxu0 0.0
    %4087 = vmatprep.subr.mxu0 0.0
    %4088 = vmatpush1.msra.mxu0 0.0
    %4089 = vmatprep.subr.mxu0 0.0
    %4090 = vmatpush1.msra.mxu0 0.0
    %4091 = vmatprep.subr.mxu0 0.0
    %4092 = vmatpush1.msra.mxu0 0.0
    %4093 = vmatprep.subr.mxu0 0.0
    %4094 = vmatpush1.msra.mxu0 0.0
    %4095 = vmatprep.subr.mxu0 0.0
    %4096 = vmatpush1.msra.mxu0 0.0
    %4097 = vmatprep.subr.mxu0 0.0
    %4098 = vmatpush1.msra.mxu0 0.0
    %4099 = vmatprep.subr.mxu0 0.0
    %4100 = vmatpush1.msra.mxu0 0.0
    %4101 = vmatprep.subr.mxu0 0.0
    %4102 = vmatpush1.msra.mxu0 0.0
    %4103 = vmatprep.subr.mxu0 0.0
    %4104 = vmatpush1.msra.mxu0 0.0
    %4105 = vmatprep.subr.mxu0 0.0
    %4106 = vmatpush1.msra.mxu0 0.0
    %4107 = vmatprep.subr.mxu0 0.0
    %4108 = vmatpush1.msra.mxu0 0.0
    %4109 = vmatprep.mubr.f32.mxu0 0.0
    %4110 = vmatmul.mubr.f32.gmra.mrb[0].mxu0 %v4043
    %v4111 = vpop.f32.mrb[0].mxu0
    %v4112 = vadd.f32 0.0, %v4111
    %v4113 = vpop.f32.mrb[0].mxu0
    %v4114 = vadd.f32 0.0, %v4113
    %4115 = vdwg.mxu0
    %v4116 = vadd.f32 %v3589, %v4112
    %v4117 = vadd.f32 %v3591, %v4114
    %v4118 = vmax.f32 %v4116, 0.0
    %v4119 = vmax.f32 %v4117, 0.0
    %4120 = vmatprep.subr.mxu0 0.0
    %4121 = vmatpush1.msra.mxu0 %v2597
    %4122 = vmatprep.subr.mxu0 0.0
    %4123 = vmatpush1.msra.mxu0 %v2598
    %4124 = vmatprep.subr.mxu0 0.0
    %4125 = vmatpush1.msra.mxu0 %v2599
    %4126 = vmatprep.subr.mxu0 0.0
    %4127 = vmatpush1.msra.mxu0 %v2600
    %4128 = vmatprep.subr.mxu0 0.0
    %4129 = vmatpush1.msra.mxu0 %v2601
    %4130 = vmatprep.subr.mxu0 0.0
    %4131 = vmatpush1.msra.mxu0 %v2602
    %4132 = vmatprep.subr.mxu0 0.0
    %4133 = vmatpush1.msra.mxu0 %v2603
    %4134 = vmatprep.subr.mxu0 0.0
    %4135 = vmatpush1.msra.mxu0 %v2604
    %4136 = vmatprep.subr.mxu0 0.0
    %4137 = vmatpush1.msra.mxu0 %v2605
    %4138 = vmatprep.subr.mxu0 0.0
    %4139 = vmatpush1.msra.mxu0 %v2606
    %4140 = vmatprep.subr.mxu0 0.0
    %4141 = vmatpush1.msra.mxu0 %v2607
    %4142 = vmatprep.subr.mxu0 0.0
    %4143 = vmatpush1.msra.mxu0 %v2608
    %4144 = vmatprep.subr.mxu0 0.0
    %4145 = vmatpush1.msra.mxu0 %v2609
    %4146 = vmatprep.subr.mxu0 0.0
    %4147 = vmatpush1.msra.mxu0 %v2610
    %4148 = vmatprep.subr.mxu0 0.0
    %4149 = vmatpush1.msra.mxu0 %v2611
    %4150 = vmatprep.subr.mxu0 0.0
    %4151 = vmatpush1.msra.mxu0 %v2612
    %4152 = vmatprep.subr.mxu0 0.0
    %4153 = vmatpush1.msra.mxu0 %v2613
    %4154 = vmatprep.subr.mxu0 0.0
    %4155 = vmatpush1.msra.mxu0 %v2614
    %4156 = vmatprep.subr.mxu0 0.0
    %4157 = vmatpush1.msra.mxu0 %v2615
    %4158 = vmatprep.subr.mxu0 0.0
    %4159 = vmatpush1.msra.mxu0 %v2616
    %4160 = vmatprep.subr.mxu0 0.0
    %4161 = vmatpush1.msra.mxu0 %v2617
    %4162 = vmatprep.subr.mxu0 0.0
    %4163 = vmatpush1.msra.mxu0 %v2618
    %4164 = vmatprep.subr.mxu0 0.0
    %4165 = vmatpush1.msra.mxu0 %v2619
    %4166 = vmatprep.subr.mxu0 0.0
    %4167 = vmatpush1.msra.mxu0 %v2620
    %4168 = vmatprep.subr.mxu0 0.0
    %4169 = vmatpush1.msra.mxu0 %v2621
    %4170 = vmatprep.subr.mxu0 0.0
    %4171 = vmatpush1.msra.mxu0 %v2622
    %4172 = vmatprep.subr.mxu0 0.0
    %4173 = vmatpush1.msra.mxu0 %v2623
    %4174 = vmatprep.subr.mxu0 0.0
    %4175 = vmatpush1.msra.mxu0 %v2624
    %4176 = vmatprep.subr.mxu0 0.0
    %4177 = vmatpush1.msra.mxu0 %v2625
    %4178 = vmatprep.subr.mxu0 0.0
    %4179 = vmatpush1.msra.mxu0 %v2626
    %4180 = vmatprep.subr.mxu0 0.0
    %4181 = vmatpush1.msra.mxu0 %v2627
    %4182 = vmatprep.subr.mxu0 0.0
    %4183 = vmatpush1.msra.mxu0 %v2628
    %4184 = vmatprep.mubr.f32.mxu0 %v4119
    %4185 = vmatmul.mubr.f32.gmra.mrb[0].mxu0 %v4118
    %v4186 = vpop.f32.mrb[0].mxu0
    %v4187 = vadd.f32 %v3440, %v4186
    %v4188 = vpop.f32.mrb[0].mxu0
    %4189 = vdwg.mxu0
    %v4190 = vsel %vm45, %v4187, -inf
    %4191 = vmax.xlane.f32.xlu0 %v4190
    %v4192 = vpop.xlane.xlu0 %4191
    %vm4193 = vcmp.eq.f32.partialorder %v4187, %v4192
    %v4194 = vsel %vm4193, %v3069, 128.0
    %v4195 = vsel %vm45, %v4194, inf
    %4196 = vmin.xlane.f32.xlu0 %v4195
    %v4197 = vpop.xlane.xlu0 %4196
    %vm4198 = vcmp.eq.f32.partialorder %v3069, %v4197
    %v4199 = vsel %vm4198, 1, 0
    %v4200 = vcvt.s32.f32 %v4199
    %4201 = vmatprep.subr.mxu0 %v2897
    %4202 = vmatpush1.msra.mxu0 %v2894
    %4203 = vmatprep.subr.mxu0 %v2901
    %4204 = vmatpush1.msra.mxu0 %v2899
    %4205 = vmatprep.subr.mxu0 %v2905
    %4206 = vmatpush1.msra.mxu0 %v2903
    %4207 = vmatprep.subr.mxu0 %v2909
    %4208 = vmatpush1.msra.mxu0 %v2907
    %4209 = vmatprep.subr.mxu0 %v2913
    %4210 = vmatpush1.msra.mxu0 %v2911
    %4211 = vmatprep.subr.mxu0 %v2917
    %4212 = vmatpush1.msra.mxu0 %v2915
    %4213 = vmatprep.subr.mxu0 %v2921
    %4214 = vmatpush1.msra.mxu0 %v2919
    %4215 = vmatprep.subr.mxu0 %v2925
    %4216 = vmatpush1.msra.mxu0 %v2923
    %4217 = vmatprep.subr.mxu0 %v2929
    %4218 = vmatpush1.msra.mxu0 %v2927
    %4219 = vmatprep.subr.mxu0 %v2933
    %4220 = vmatpush1.msra.mxu0 %v2931
    %4221 = vmatprep.subr.mxu0 %v2937
    %4222 = vmatpush1.msra.mxu0 %v2935
    %4223 = vmatprep.subr.mxu0 %v2941
    %4224 = vmatpush1.msra.mxu0 %v2939
    %4225 = vmatprep.subr.mxu0 %v2945
    %4226 = vmatpush1.msra.mxu0 %v2943
    %4227 = vmatprep.subr.mxu0 %v2949
    %4228 = vmatpush1.msra.mxu0 %v2947
    %4229 = vmatprep.subr.mxu0 %v2953
    %4230 = vmatpush1.msra.mxu0 %v2951
    %4231 = vmatprep.subr.mxu0 %v2957
    %4232 = vmatpush1.msra.mxu0 %v2955
    %4233 = vmatprep.subr.mxu0 0.0
    %4234 = vmatpush1.msra.mxu0 0.0
    %4235 = vmatprep.subr.mxu0 0.0
    %4236 = vmatpush1.msra.mxu0 0.0
    %4237 = vmatprep.subr.mxu0 0.0
    %4238 = vmatpush1.msra.mxu0 0.0
    %4239 = vmatprep.subr.mxu0 0.0
    %4240 = vmatpush1.msra.mxu0 0.0
    %4241 = vmatprep.subr.mxu0 0.0
    %4242 = vmatpush1.msra.mxu0 0.0
    %4243 = vmatprep.subr.mxu0 0.0
    %4244 = vmatpush1.msra.mxu0 0.0
    %4245 = vmatprep.subr.mxu0 0.0
    %4246 = vmatpush1.msra.mxu0 0.0
    %4247 = vmatprep.subr.mxu0 0.0
    %4248 = vmatpush1.msra.mxu0 0.0
    %4249 = vmatprep.subr.mxu0 0.0
    %4250 = vmatpush1.msra.mxu0 0.0
    %4251 = vmatprep.subr.mxu0 0.0
    %4252 = vmatpush1.msra.mxu0 0.0
    %4253 = vmatprep.subr.mxu0 0.0
    %4254 = vmatpush1.msra.mxu0 0.0
    %4255 = vmatprep.subr.mxu0 0.0
    %4256 = vmatpush1.msra.mxu0 0.0
    %4257 = vmatprep.subr.mxu0 0.0
    %4258 = vmatpush1.msra.mxu0 0.0
    %4259 = vmatprep.subr.mxu0 0.0
    %4260 = vmatpush1.msra.mxu0 0.0
    %4261 = vmatprep.subr.mxu0 0.0
    %4262 = vmatpush1.msra.mxu0 0.0
    %4263 = vmatprep.subr.mxu0 0.0
    %4264 = vmatpush1.msra.mxu0 0.0
    %4265 = vmatprep.mubr.f32.mxu0 0.0
    %4266 = vmatmul.mubr.f32.gmra.mrb[0].mxu0 %v4200
    %v4267 = vpop.f32.mrb[0].mxu0
    %v4268 = vadd.f32 %v2488, %v4267
    %v4269 = vpop.f32.mrb[0].mxu0
    %v4270 = vadd.f32 %v2490, %v4269
    %4271 = vdwg.mxu0
    %4272 = vmatprep.subr.mxu0 0.0
    %4273 = vmatpush1.msra.mxu0 %v2574
    %4274 = vmatprep.subr.mxu0 0.0
    %4275 = vmatpush1.msra.mxu0 %v2575
    %4276 = vmatprep.subr.mxu0 0.0
    %4277 = vmatpush1.msra.mxu0 %v2576
    %4278 = vmatprep.subr.mxu0 0.0
    %4279 = vmatpush1.msra.mxu0 %v2577
    %4280 = vmatprep.subr.mxu0 0.0
    %4281 = vmatpush1.msra.mxu0 0.0
    %4282 = vmatprep.subr.mxu0 0.0
    %4283 = vmatpush1.msra.mxu0 0.0
    %4284 = vmatprep.subr.mxu0 0.0
    %4285 = vmatpush1.msra.mxu0 0.0
    %4286 = vmatprep.subr.mxu0 0.0
    %4287 = vmatpush1.msra.mxu0 0.0
    %4288 = vmatprep.subr.mxu0 0.0
    %4289 = vmatpush1.msra.mxu0 0.0
    %4290 = vmatprep.subr.mxu0 0.0
    %4291 = vmatpush1.msra.mxu0 0.0
    %4292 = vmatprep.subr.mxu0 0.0
    %4293 = vmatpush1.msra.mxu0 0.0
    %4294 = vmatprep.subr.mxu0 0.0
    %4295 = vmatpush1.msra.mxu0 0.0
    %4296 = vmatprep.subr.mxu0 0.0
    %4297 = vmatpush1.msra.mxu0 0.0
    %4298 = vmatprep.subr.mxu0 0.0
    %4299 = vmatpush1.msra.mxu0 0.0
    %4300 = vmatprep.subr.mxu0 0.0
    %4301 = vmatpush1.msra.mxu0 0.0
    %4302 = vmatprep.subr.mxu0 0.0
    %4303 = vmatpush1.msra.mxu0 0.0
    %4304 = vmatprep.subr.mxu0 0.0
    %4305 = vmatpush1.msra.mxu0 0.0
    %4306 = vmatprep.subr.mxu0 0.0
    %4307 = vmatpush1.msra.mxu0 0.0
    %4308 = vmatprep.subr.mxu0 0.0
    %4309 = vmatpush1.msra.mxu0 0.0
    %4310 = vmatprep.subr.mxu0 0.0
    %4311 = vmatpush1.msra.mxu0 0.0
    %4312 = vmatprep.subr.mxu0 0.0
    %4313 = vmatpush1.msra.mxu0 0.0
    %4314 = vmatprep.subr.mxu0 0.0
    %4315 = vmatpush1.msra.mxu0 0.0
    %4316 = vmatprep.subr.mxu0 0.0
    %4317 = vmatpush1.msra.mxu0 0.0
    %4318 = vmatprep.subr.mxu0 0.0
    %4319 = vmatpush1.msra.mxu0 0.0
    %4320 = vmatprep.subr.mxu0 0.0
    %4321 = vmatpush1.msra.mxu0 0.0
    %4322 = vmatprep.subr.mxu0 0.0
    %4323 = vmatpush1.msra.mxu0 0.0
    %4324 = vmatprep.subr.mxu0 0.0
    %4325 = vmatpush1.msra.mxu0 0.0
    %4326 = vmatprep.subr.mxu0 0.0
    %4327 = vmatpush1.msra.mxu0 0.0
    %4328 = vmatprep.subr.mxu0 0.0
    %4329 = vmatpush1.msra.mxu0 0.0
    %4330 = vmatprep.subr.mxu0 0.0
    %4331 = vmatpush1.msra.mxu0 0.0
    %4332 = vmatprep.subr.mxu0 0.0
    %4333 = vmatpush1.msra.mxu0 0.0
    %4334 = vmatprep.subr.mxu0 0.0
    %4335 = vmatpush1.msra.mxu0 0.0
    %4336 = vmatprep.mubr.f32.mxu0 0.0
    %4337 = vmatmul.mubr.f32.gmra.mrb[0].mxu0 %v4043
    %v4338 = vpop.f32.mrb[0].mxu0
    %v4339 = vadd.f32 0.0, %v4338
    %v4340 = vpop.f32.mrb[0].mxu0
    %4341 = vdwg.mxu0
    %4342 = vmatprep.subr.mxu0 0.0
    %4343 = vmatpush1.msra.mxu0 %v2578
    %4344 = vmatprep.subr.mxu0 0.0
    %4345 = vmatpush1.msra.mxu0 %v2579
    %4346 = vmatprep.subr.mxu0 0.0
    %4347 = vmatpush1.msra.mxu0 %v2580
    %4348 = vmatprep.subr.mxu0 0.0
    %4349 = vmatpush1.msra.mxu0 %v2581
    %4350 = vmatprep.subr.mxu0 0.0
    %4351 = vmatpush1.msra.mxu0 0.0
    %4352 = vmatprep.subr.mxu0 0.0
    %4353 = vmatpush1.msra.mxu0 0.0
    %4354 = vmatprep.subr.mxu0 0.0
    %4355 = vmatpush1.msra.mxu0 0.0
    %4356 = vmatprep.subr.mxu0 0.0
    %4357 = vmatpush1.msra.mxu0 0.0
    %4358 = vmatprep.subr.mxu0 0.0
    %4359 = vmatpush1.msra.mxu0 0.0
    %4360 = vmatprep.subr.mxu0 0.0
    %4361 = vmatpush1.msra.mxu0 0.0
    %4362 = vmatprep.subr.mxu0 0.0
    %4363 = vmatpush1.msra.mxu0 0.0
    %4364 = vmatprep.subr.mxu0 0.0
    %4365 = vmatpush1.msra.mxu0 0.0
    %4366 = vmatprep.subr.mxu0 0.0
    %4367 = vmatpush1.msra.mxu0 0.0
    %4368 = vmatprep.subr.mxu0 0.0
    %4369 = vmatpush1.msra.mxu0 0.0
    %4370 = vmatprep.subr.mxu0 0.0
    %4371 = vmatpush1.msra.mxu0 0.0
    %4372 = vmatprep.subr.mxu0 0.0
    %4373 = vmatpush1.msra.mxu0 0.0
    %4374 = vmatprep.subr.mxu0 0.0
    %4375 = vmatpush1.msra.mxu0 0.0
    %4376 = vmatprep.subr.mxu0 0.0
    %4377 = vmatpush1.msra.mxu0 0.0
    %4378 = vmatprep.subr.mxu0 0.0
    %4379 = vmatpush1.msra.mxu0 0.0
    %4380 = vmatprep.subr.mxu0 0.0
    %4381 = vmatpush1.msra.mxu0 0.0
    %4382 = vmatprep.subr.mxu0 0.0
    %4383 = vmatpush1.msra.mxu0 0.0
    %4384 = vmatprep.subr.mxu0 0.0
    %4385 = vmatpush1.msra.mxu0 0.0
    %4386 = vmatprep.subr.mxu0 0.0
    %4387 = vmatpush1.msra.mxu0 0.0
    %4388 = vmatprep.subr.mxu0 0.0
    %4389 = vmatpush1.msra.mxu0 0.0
    %4390 = vmatprep.subr.mxu0 0.0
    %4391 = vmatpush1.msra.mxu0 0.0
    %4392 = vmatprep.subr.mxu0 0.0
    %4393 = vmatpush1.msra.mxu0 0.0
    %4394 = vmatprep.subr.mxu0 0.0
    %4395 = vmatpush1.msra.mxu0 0.0
    %4396 = vmatprep.subr.mxu0 0.0
    %4397 = vmatpush1.msra.mxu0 0.0
    %4398 = vmatprep.subr.mxu0 0.0
    %4399 = vmatpush1.msra.mxu0 0.0
    %4400 = vmatprep.subr.mxu0 0.0
    %4401 = vmatpush1.msra.mxu0 0.0
    %4402 = vmatprep.subr.mxu0 0.0
    %4403 = vmatpush1.msra.mxu0 0.0
    %4404 = vmatprep.subr.mxu0 0.0
    %4405 = vmatpush1.msra.mxu0 0.0
    %4406 = vmatprep.mubr.f32.mxu0 0.0
    %4407 = vmatmul.mubr.f32.gmra.mrb[0].mxu0 %v4043
    %v4408 = vpop.f32.mrb[0].mxu0
    %v4409 = vadd.f32 0.0, %v4408
    %v4410 = vpop.f32.mrb[0].mxu0
    %4411 = vdwg.mxu0
    %4412 = vmatprep.subr.mxu0 0.0
    %4413 = vmatpush1.msra.mxu0 %v2582
    %4414 = vmatprep.subr.mxu0 0.0
    %4415 = vmatpush1.msra.mxu0 %v2583
    %4416 = vmatprep.subr.mxu0 0.0
    %4417 = vmatpush1.msra.mxu0 %v2584
    %4418 = vmatprep.subr.mxu0 0.0
    %4419 = vmatpush1.msra.mxu0 %v2585
    %4420 = vmatprep.subr.mxu0 0.0
    %4421 = vmatpush1.msra.mxu0 0.0
    %4422 = vmatprep.subr.mxu0 0.0
    %4423 = vmatpush1.msra.mxu0 0.0
    %4424 = vmatprep.subr.mxu0 0.0
    %4425 = vmatpush1.msra.mxu0 0.0
    %4426 = vmatprep.subr.mxu0 0.0
    %4427 = vmatpush1.msra.mxu0 0.0
    %4428 = vmatprep.subr.mxu0 0.0
    %4429 = vmatpush1.msra.mxu0 0.0
    %4430 = vmatprep.subr.mxu0 0.0
    %4431 = vmatpush1.msra.mxu0 0.0
    %4432 = vmatprep.subr.mxu0 0.0
    %4433 = vmatpush1.msra.mxu0 0.0
    %4434 = vmatprep.subr.mxu0 0.0
    %4435 = vmatpush1.msra.mxu0 0.0
    %4436 = vmatprep.subr.mxu0 0.0
    %4437 = vmatpush1.msra.mxu0 0.0
    %4438 = vmatprep.subr.mxu0 0.0
    %4439 = vmatpush1.msra.mxu0 0.0
    %4440 = vmatprep.subr.mxu0 0.0
    %4441 = vmatpush1.msra.mxu0 0.0
    %4442 = vmatprep.subr.mxu0 0.0
    %4443 = vmatpush1.msra.mxu0 0.0
    %4444 = vmatprep.subr.mxu0 0.0
    %4445 = vmatpush1.msra.mxu0 0.0
    %4446 = vmatprep.subr.mxu0 0.0
    %4447 = vmatpush1.msra.mxu0 0.0
    %4448 = vmatprep.subr.mxu0 0.0
    %4449 = vmatpush1.msra.mxu0 0.0
    %4450 = vmatprep.subr.mxu0 0.0
    %4451 = vmatpush1.msra.mxu0 0.0
    %4452 = vmatprep.subr.mxu0 0.0
    %4453 = vmatpush1.msra.mxu0 0.0
    %4454 = vmatprep.subr.mxu0 0.0
    %4455 = vmatpush1.msra.mxu0 0.0
    %4456 = vmatprep.subr.mxu0 0.0
    %4457 = vmatpush1.msra.mxu0 0.0
    %4458 = vmatprep.subr.mxu0 0.0
    %4459 = vmatpush1.msra.mxu0 0.0
    %4460 = vmatprep.subr.mxu0 0.0
    %4461 = vmatpush1.msra.mxu0 0.0
    %4462 = vmatprep.subr.mxu0 0.0
    %4463 = vmatpush1.msra.mxu0 0.0
    %4464 = vmatprep.subr.mxu0 0.0
    %4465 = vmatpush1.msra.mxu0 0.0
    %4466 = vmatprep.subr.mxu0 0.0
    %4467 = vmatpush1.msra.mxu0 0.0
    %4468 = vmatprep.subr.mxu0 0.0
    %4469 = vmatpush1.msra.mxu0 0.0
    %4470 = vmatprep.subr.mxu0 0.0
    %4471 = vmatpush1.msra.mxu0 0.0
    %4472 = vmatprep.subr.mxu0 0.0
    %4473 = vmatpush1.msra.mxu0 0.0
    %4474 = vmatprep.subr.mxu0 0.0
    %4475 = vmatpush1.msra.mxu0 0.0
    %4476 = vmatprep.mubr.f32.mxu0 0.0
    %4477 = vmatmul.mubr.f32.gmra.mrb[0].mxu0 %v4043
    %v4478 = vpop.f32.mrb[0].mxu0
    %v4479 = vadd.f32 %v3215, %v4478
    %v4480 = vpop.f32.mrb[0].mxu0
    %4481 = vdwg.mxu0
    %4482 = vmatprep.subr.mxu0 0.0
    %4483 = vmatpush1.msra.mxu0 %v2492
    %4484 = vmatprep.subr.mxu0 0.0
    %4485 = vmatpush1.msra.mxu0 %v2493
    %4486 = vmatprep.subr.mxu0 0.0
    %4487 = vmatpush1.msra.mxu0 %v2494
    %4488 = vmatprep.subr.mxu0 0.0
    %4489 = vmatpush1.msra.mxu0 %v2495
    %4490 = vmatprep.subr.mxu0 0.0
    %4491 = vmatpush1.msra.mxu0 %v2496
    %4492 = vmatprep.subr.mxu0 0.0
    %4493 = vmatpush1.msra.mxu0 %v2497
    %4494 = vmatprep.subr.mxu0 0.0
    %4495 = vmatpush1.msra.mxu0 %v2498
    %4496 = vmatprep.subr.mxu0 0.0
    %4497 = vmatpush1.msra.mxu0 %v2499
    %4498 = vmatprep.subr.mxu0 0.0
    %4499 = vmatpush1.msra.mxu0 %v2500
    %4500 = vmatprep.subr.mxu0 0.0
    %4501 = vmatpush1.msra.mxu0 %v2501
    %4502 = vmatprep.subr.mxu0 0.0
    %4503 = vmatpush1.msra.mxu0 %v2502
    %4504 = vmatprep.subr.mxu0 0.0
    %4505 = vmatpush1.msra.mxu0 %v2503
    %4506 = vmatprep.subr.mxu0 0.0
    %4507 = vmatpush1.msra.mxu0 %v2504
    %4508 = vmatprep.subr.mxu0 0.0
    %4509 = vmatpush1.msra.mxu0 %v2505
    %4510 = vmatprep.subr.mxu0 0.0
    %4511 = vmatpush1.msra.mxu0 %v2506
    %4512 = vmatprep.subr.mxu0 0.0
    %4513 = vmatpush1.msra.mxu0 %v2507
    %4514 = vmatprep.subr.mxu0 0.0
    %4515 = vmatpush1.msra.mxu0 0.0
    %4516 = vmatprep.subr.mxu0 0.0
    %4517 = vmatpush1.msra.mxu0 0.0
    %4518 = vmatprep.subr.mxu0 0.0
    %4519 = vmatpush1.msra.mxu0 0.0
    %4520 = vmatprep.subr.mxu0 0.0
    %4521 = vmatpush1.msra.mxu0 0.0
    %4522 = vmatprep.subr.mxu0 0.0
    %4523 = vmatpush1.msra.mxu0 0.0
    %4524 = vmatprep.subr.mxu0 0.0
    %4525 = vmatpush1.msra.mxu0 0.0
    %4526 = vmatprep.subr.mxu0 0.0
    %4527 = vmatpush1.msra.mxu0 0.0
    %4528 = vmatprep.subr.mxu0 0.0
    %4529 = vmatpush1.msra.mxu0 0.0
    %4530 = vmatprep.subr.mxu0 0.0
    %4531 = vmatpush1.msra.mxu0 0.0
    %4532 = vmatprep.subr.mxu0 0.0
    %4533 = vmatpush1.msra.mxu0 0.0
    %4534 = vmatprep.subr.mxu0 0.0
    %4535 = vmatpush1.msra.mxu0 0.0
    %4536 = vmatprep.subr.mxu0 0.0
    %4537 = vmatpush1.msra.mxu0 0.0
    %4538 = vmatprep.subr.mxu0 0.0
    %4539 = vmatpush1.msra.mxu0 0.0
    %4540 = vmatprep.subr.mxu0 0.0
    %4541 = vmatpush1.msra.mxu0 0.0
    %4542 = vmatprep.subr.mxu0 0.0
    %4543 = vmatpush1.msra.mxu0 0.0
    %4544 = vmatprep.subr.mxu0 0.0
    %4545 = vmatpush1.msra.mxu0 0.0
    %4546 = vmatprep.mubr.f32.mxu0 0.0
    %4547 = vmatmul.mubr.f32.gmra.mrb[0].mxu0 %v4200
    %v4548 = vpop.f32.mrb[0].mxu0
    %v4549 = vadd.f32 %v2200, %v4548
    %v4550 = vpop.f32.mrb[0].mxu0
    %4551 = vdwg.mxu0
    %v4552 = vadd.f32 %v4549, %v4339
    %v4553 = vxor.u32 %v4552, 2147483648
    %v4554 = vmul.f32 %v4553, 1.442695
    %v4555 = vpow.pop %v4554
    %v4556 = vadd.f32 %v4555, 1.0
    %v4557 = vrcp.pop %v4556
    %v4558 = vmul.f32 1.0, %v4557
    %4559 = vmatprep.subr.mxu0 0.0
    %4560 = vmatpush1.msra.mxu0 %v2508
    %4561 = vmatprep.subr.mxu0 0.0
    %4562 = vmatpush1.msra.mxu0 %v2509
    %4563 = vmatprep.subr.mxu0 0.0
    %4564 = vmatpush1.msra.mxu0 %v2510
    %4565 = vmatprep.subr.mxu0 0.0
    %4566 = vmatpush1.msra.mxu0 %v2511
    %4567 = vmatprep.subr.mxu0 0.0
    %4568 = vmatpush1.msra.mxu0 %v2512
    %4569 = vmatprep.subr.mxu0 0.0
    %4570 = vmatpush1.msra.mxu0 %v2513
    %4571 = vmatprep.subr.mxu0 0.0
    %4572 = vmatpush1.msra.mxu0 %v2514
    %4573 = vmatprep.subr.mxu0 0.0
    %4574 = vmatpush1.msra.mxu0 %v2515
    %4575 = vmatprep.subr.mxu0 0.0
    %4576 = vmatpush1.msra.mxu0 %v2516
    %4577 = vmatprep.subr.mxu0 0.0
    %4578 = vmatpush1.msra.mxu0 %v2517
    %4579 = vmatprep.subr.mxu0 0.0
    %4580 = vmatpush1.msra.mxu0 %v2518
    %4581 = vmatprep.subr.mxu0 0.0
    %4582 = vmatpush1.msra.mxu0 %v2519
    %4583 = vmatprep.subr.mxu0 0.0
    %4584 = vmatpush1.msra.mxu0 %v2520
    %4585 = vmatprep.subr.mxu0 0.0
    %4586 = vmatpush1.msra.mxu0 %v2521
    %4587 = vmatprep.subr.mxu0 0.0
    %4588 = vmatpush1.msra.mxu0 %v2522
    %4589 = vmatprep.subr.mxu0 0.0
    %4590 = vmatpush1.msra.mxu0 %v2523
    %4591 = vmatprep.subr.mxu0 0.0
    %4592 = vmatpush1.msra.mxu0 0.0
    %4593 = vmatprep.subr.mxu0 0.0
    %4594 = vmatpush1.msra.mxu0 0.0
    %4595 = vmatprep.subr.mxu0 0.0
    %4596 = vmatpush1.msra.mxu0 0.0
    %4597 = vmatprep.subr.mxu0 0.0
    %4598 = vmatpush1.msra.mxu0 0.0
    %4599 = vmatprep.subr.mxu0 0.0
    %4600 = vmatpush1.msra.mxu0 0.0
    %4601 = vmatprep.subr.mxu0 0.0
    %4602 = vmatpush1.msra.mxu0 0.0
    %4603 = vmatprep.subr.mxu0 0.0
    %4604 = vmatpush1.msra.mxu0 0.0
    %4605 = vmatprep.subr.mxu0 0.0
    %4606 = vmatpush1.msra.mxu0 0.0
    %4607 = vmatprep.subr.mxu0 0.0
    %4608 = vmatpush1.msra.mxu0 0.0
    %4609 = vmatprep.subr.mxu0 0.0
    %4610 = vmatpush1.msra.mxu0 0.0
    %4611 = vmatprep.subr.mxu0 0.0
    %4612 = vmatpush1.msra.mxu0 0.0
    %4613 = vmatprep.subr.mxu0 0.0
    %4614 = vmatpush1.msra.mxu0 0.0
    %4615 = vmatprep.subr.mxu0 0.0
    %4616 = vmatpush1.msra.mxu0 0.0
    %4617 = vmatprep.subr.mxu0 0.0
    %4618 = vmatpush1.msra.mxu0 0.0
    %4619 = vmatprep.subr.mxu0 0.0
    %4620 = vmatpush1.msra.mxu0 0.0
    %4621 = vmatprep.subr.mxu0 0.0
    %4622 = vmatpush1.msra.mxu0 0.0
    %4623 = vmatprep.mubr.f32.mxu0 0.0
    %4624 = vmatmul.mubr.f32.gmra.mrb[0].mxu0 %v4200
    %v4625 = vpop.f32.mrb[0].mxu0
    %v4626 = vadd.f32 %v2279, %v4625
    %v4627 = vpop.f32.mrb[0].mxu0
    %4628 = vdwg.mxu0
    %v4629 = vadd.f32 %v4626, %v4409
    %v4630 = vxor.u32 %v4629, 2147483648
    %v4631 = vmul.f32 %v4630, 1.442695
    %v4632 = vpow.pop %v4631
    %v4633 = vadd.f32 %v4632, 1.0
    %v4634 = vrcp.pop %v4633
    %v4635 = vmul.f32 1.0, %v4634
    %4636 = vmatprep.subr.mxu0 0.0
    %4637 = vmatpush1.msra.mxu0 %v2524
    %4638 = vmatprep.subr.mxu0 0.0
    %4639 = vmatpush1.msra.mxu0 %v2525
    %4640 = vmatprep.subr.mxu0 0.0
    %4641 = vmatpush1.msra.mxu0 %v2526
    %4642 = vmatprep.subr.mxu0 0.0
    %4643 = vmatpush1.msra.mxu0 %v2527
    %4644 = vmatprep.subr.mxu0 0.0
    %4645 = vmatpush1.msra.mxu0 %v2528
    %4646 = vmatprep.subr.mxu0 0.0
    %4647 = vmatpush1.msra.mxu0 %v2529
    %4648 = vmatprep.subr.mxu0 0.0
    %4649 = vmatpush1.msra.mxu0 %v2530
    %4650 = vmatprep.subr.mxu0 0.0
    %4651 = vmatpush1.msra.mxu0 %v2531
    %4652 = vmatprep.subr.mxu0 0.0
    %4653 = vmatpush1.msra.mxu0 %v2532
    %4654 = vmatprep.subr.mxu0 0.0
    %4655 = vmatpush1.msra.mxu0 %v2533
    %4656 = vmatprep.subr.mxu0 0.0
    %4657 = vmatpush1.msra.mxu0 %v2534
    %4658 = vmatprep.subr.mxu0 0.0
    %4659 = vmatpush1.msra.mxu0 %v2535
    %4660 = vmatprep.subr.mxu0 0.0
    %4661 = vmatpush1.msra.mxu0 %v2536
    %4662 = vmatprep.subr.mxu0 0.0
    %4663 = vmatpush1.msra.mxu0 %v2537
    %4664 = vmatprep.subr.mxu0 0.0
    %4665 = vmatpush1.msra.mxu0 %v2538
    %4666 = vmatprep.subr.mxu0 0.0
    %4667 = vmatpush1.msra.mxu0 %v2539
    %4668 = vmatprep.subr.mxu0 0.0
    %4669 = vmatpush1.msra.mxu0 0.0
    %4670 = vmatprep.subr.mxu0 0.0
    %4671 = vmatpush1.msra.mxu0 0.0
    %4672 = vmatprep.subr.mxu0 0.0
    %4673 = vmatpush1.msra.mxu0 0.0
    %4674 = vmatprep.subr.mxu0 0.0
    %4675 = vmatpush1.msra.mxu0 0.0
    %4676 = vmatprep.subr.mxu0 0.0
    %4677 = vmatpush1.msra.mxu0 0.0
    %4678 = vmatprep.subr.mxu0 0.0
    %4679 = vmatpush1.msra.mxu0 0.0
    %4680 = vmatprep.subr.mxu0 0.0
    %4681 = vmatpush1.msra.mxu0 0.0
    %4682 = vmatprep.subr.mxu0 0.0
    %4683 = vmatpush1.msra.mxu0 0.0
    %4684 = vmatprep.subr.mxu0 0.0
    %4685 = vmatpush1.msra.mxu0 0.0
    %4686 = vmatprep.subr.mxu0 0.0
    %4687 = vmatpush1.msra.mxu0 0.0
    %4688 = vmatprep.subr.mxu0 0.0
    %4689 = vmatpush1.msra.mxu0 0.0
    %4690 = vmatprep.subr.mxu0 0.0
    %4691 = vmatpush1.msra.mxu0 0.0
    %4692 = vmatprep.subr.mxu0 0.0
    %4693 = vmatpush1.msra.mxu0 0.0
    %4694 = vmatprep.subr.mxu0 0.0
    %4695 = vmatpush1.msra.mxu0 0.0
    %4696 = vmatprep.subr.mxu0 0.0
    %4697 = vmatpush1.msra.mxu0 0.0
    %4698 = vmatprep.subr.mxu0 0.0
    %4699 = vmatpush1.msra.mxu0 0.0
    %4700 = vmatprep.mubr.f32.mxu0 0.0
    %4701 = vmatmul.mubr.f32.gmra.mrb[0].mxu0 %v4200
    %v4702 = vpop.f32.mrb[0].mxu0
    %v4703 = vadd.f32 %v2358, %v4702
    %v4704 = vpop.f32.mrb[0].mxu0
    %4705 = vdwg.mxu0
    %v4706 = vmul.f32 %v4558, %v4479
    %v4707 = vadd.f32 %v4703, %v4706
    %v4708 = vtanh.pop %v4707
    %v4709 = vsub.f32 %v4032, %v4708
    %v4710 = vmul.f32 %v4635, %v4709
    %v4711 = vadd.f32 %v4708, %v4710
    %4712 = vst.msk [vmem:[#allocation2 + $0x4] sm:$0x3] %vm3319, %v4711
    %v4715 = vrot.slane %v4268, 4
    %v4716 = vrot.slane %v4270, 4
    %4719 = vst [vmem:[#allocation3] sm:$0x30] %v4715
    %4720 = vst [vmem:[#allocation3 + $0x8] sm:$0x30] %v4716
    %v4723 = vrot.slane %v2488, 2
    %v4724 = vrot.slane %v2490, 2
    %v4727 = vadd.f32 %v3057, %v4723
    %v4728 = vadd.f32 %v3059, %v4724
    %v4730 = vsel %vm288, %v4711, 0
    %4732 = vmatprep.subr.mxu0 0.0
    %4733 = vmatpush1.msra.mxu0 %v2574
    %4734 = vmatprep.subr.mxu0 0.0
    %4735 = vmatpush1.msra.mxu0 %v2575
    %4736 = vmatprep.subr.mxu0 0.0
    %4737 = vmatpush1.msra.mxu0 %v2576
    %4738 = vmatprep.subr.mxu0 0.0
    %4739 = vmatpush1.msra.mxu0 %v2577
    %4740 = vmatprep.subr.mxu0 0.0
    %4741 = vmatpush1.msra.mxu0 0.0
    %4742 = vmatprep.subr.mxu0 0.0
    %4743 = vmatpush1.msra.mxu0 0.0
    %4744 = vmatprep.subr.mxu0 0.0
    %4745 = vmatpush1.msra.mxu0 0.0
    %4746 = vmatprep.subr.mxu0 0.0
    %4747 = vmatpush1.msra.mxu0 0.0
    %4748 = vmatprep.subr.mxu0 0.0
    %4749 = vmatpush1.msra.mxu0 0.0
    %4750 = vmatprep.subr.mxu0 0.0
    %4751 = vmatpush1.msra.mxu0 0.0
    %4752 = vmatprep.subr.mxu0 0.0
    %4753 = vmatpush1.msra.mxu0 0.0
    %4754 = vmatprep.subr.mxu0 0.0
    %4755 = vmatpush1.msra.mxu0 0.0
    %4756 = vmatprep.subr.mxu0 0.0
    %4757 = vmatpush1.msra.mxu0 0.0
    %4758 = vmatprep.subr.mxu0 0.0
    %4759 = vmatpush1.msra.mxu0 0.0
    %4760 = vmatprep.subr.mxu0 0.0
    %4761 = vmatpush1.msra.mxu0 0.0
    %4762 = vmatprep.subr.mxu0 0.0
    %4763 = vmatpush1.msra.mxu0 0.0
    %4764 = vmatprep.subr.mxu0 0.0
    %4765 = vmatpush1.msra.mxu0 0.0
    %4766 = vmatprep.subr.mxu0 0.0
    %4767 = vmatpush1.msra.mxu0 0.0
    %4768 = vmatprep.subr.mxu0 0.0
    %4769 = vmatpush1.msra.mxu0 0.0
    %4770 = vmatprep.subr.mxu0 0.0
    %4771 = vmatpush1.msra.mxu0 0.0
    %4772 = vmatprep.subr.mxu0 0.0
    %4773 = vmatpush1.msra.mxu0 0.0
    %4774 = vmatprep.subr.mxu0 0.0
    %4775 = vmatpush1.msra.mxu0 0.0
    %4776 = vmatprep.subr.mxu0 0.0
    %4777 = vmatpush1.msra.mxu0 0.0
    %4778 = vmatprep.subr.mxu0 0.0
    %4779 = vmatpush1.msra.mxu0 0.0
    %4780 = vmatprep.subr.mxu0 0.0
    %4781 = vmatpush1.msra.mxu0 0.0
    %4782 = vmatprep.subr.mxu0 0.0
    %4783 = vmatpush1.msra.mxu0 0.0
    %4784 = vmatprep.subr.mxu0 0.0
    %4785 = vmatpush1.msra.mxu0 0.0
    %4786 = vmatprep.subr.mxu0 0.0
    %4787 = vmatpush1.msra.mxu0 0.0
    %4788 = vmatprep.subr.mxu0 0.0
    %4789 = vmatpush1.msra.mxu0 0.0
    %4790 = vmatprep.subr.mxu0 0.0
    %4791 = vmatpush1.msra.mxu0 0.0
    %4792 = vmatprep.subr.mxu0 0.0
    %4793 = vmatpush1.msra.mxu0 0.0
    %4794 = vmatprep.subr.mxu0 0.0
    %4795 = vmatpush1.msra.mxu0 0.0
    %4796 = vmatprep.mubr.f32.mxu0 0.0
    %4797 = vmatmul.mubr.f32.gmra.mrb[0].mxu0 %v4730
    %v4798 = vpop.f32.mrb[0].mxu0
    %v4799 = vadd.f32 0.0, %v4798
    %v4800 = vpop.f32.mrb[0].mxu0
    %4801 = vdwg.mxu0
    %4802 = vmatprep.subr.mxu0 0.0
    %4803 = vmatpush1.msra.mxu0 %v2578
    %4804 = vmatprep.subr.mxu0 0.0
    %4805 = vmatpush1.msra.mxu0 %v2579
    %4806 = vmatprep.subr.mxu0 0.0
    %4807 = vmatpush1.msra.mxu0 %v2580
    %4808 = vmatprep.subr.mxu0 0.0
    %4809 = vmatpush1.msra.mxu0 %v2581
    %4810 = vmatprep.subr.mxu0 0.0
    %4811 = vmatpush1.msra.mxu0 0.0
    %4812 = vmatprep.subr.mxu0 0.0
    %4813 = vmatpush1.msra.mxu0 0.0
    %4814 = vmatprep.subr.mxu0 0.0
    %4815 = vmatpush1.msra.mxu0 0.0
    %4816 = vmatprep.subr.mxu0 0.0
    %4817 = vmatpush1.msra.mxu0 0.0
    %4818 = vmatprep.subr.mxu0 0.0
    %4819 = vmatpush1.msra.mxu0 0.0
    %4820 = vmatprep.subr.mxu0 0.0
    %4821 = vmatpush1.msra.mxu0 0.0
    %4822 = vmatprep.subr.mxu0 0.0
    %4823 = vmatpush1.msra.mxu0 0.0
    %4824 = vmatprep.subr.mxu0 0.0
    %4825 = vmatpush1.msra.mxu0 0.0
    %4826 = vmatprep.subr.mxu0 0.0
    %4827 = vmatpush1.msra.mxu0 0.0
    %4828 = vmatprep.subr.mxu0 0.0
    %4829 = vmatpush1.msra.mxu0 0.0
    %4830 = vmatprep.subr.mxu0 0.0
    %4831 = vmatpush1.msra.mxu0 0.0
    %4832 = vmatprep.subr.mxu0 0.0
    %4833 = vmatpush1.msra.mxu0 0.0
    %4834 = vmatprep.subr.mxu0 0.0
    %4835 = vmatpush1.msra.mxu0 0.0
    %4836 = vmatprep.subr.mxu0 0.0
    %4837 = vmatpush1.msra.mxu0 0.0
    %4838 = vmatprep.subr.mxu0 0.0
    %4839 = vmatpush1.msra.mxu0 0.0
    %4840 = vmatprep.subr.mxu0 0.0
    %4841 = vmatpush1.msra.mxu0 0.0
    %4842 = vmatprep.subr.mxu0 0.0
    %4843 = vmatpush1.msra.mxu0 0.0
    %4844 = vmatprep.subr.mxu0 0.0
    %4845 = vmatpush1.msra.mxu0 0.0
    %4846 = vmatprep.subr.mxu0 0.0
    %4847 = vmatpush1.msra.mxu0 0.0
    %4848 = vmatprep.subr.mxu0 0.0
    %4849 = vmatpush1.msra.mxu0 0.0
    %4850 = vmatprep.subr.mxu0 0.0
    %4851 = vmatpush1.msra.mxu0 0.0
    %4852 = vmatprep.subr.mxu0 0.0
    %4853 = vmatpush1.msra.mxu0 0.0
    %4854 = vmatprep.subr.mxu0 0.0
    %4855 = vmatpush1.msra.mxu0 0.0
    %4856 = vmatprep.subr.mxu0 0.0
    %4857 = vmatpush1.msra.mxu0 0.0
    %4858 = vmatprep.subr.mxu0 0.0
    %4859 = vmatpush1.msra.mxu0 0.0
    %4860 = vmatprep.subr.mxu0 0.0
    %4861 = vmatpush1.msra.mxu0 0.0
    %4862 = vmatprep.subr.mxu0 0.0
    %4863 = vmatpush1.msra.mxu0 0.0
    %4864 = vmatprep.subr.mxu0 0.0
    %4865 = vmatpush1.msra.mxu0 0.0
    %4866 = vmatprep.mubr.f32.mxu0 0.0
    %4867 = vmatmul.mubr.f32.gmra.mrb[0].mxu0 %v4730
    %v4868 = vpop.f32.mrb[0].mxu0
    %v4869 = vadd.f32 0.0, %v4868
    %v4870 = vpop.f32.mrb[0].mxu0
    %4871 = vdwg.mxu0
    %4872 = vmatprep.subr.mxu0 0.0
    %4873 = vmatpush1.msra.mxu0 %v2582
    %4874 = vmatprep.subr.mxu0 0.0
    %4875 = vmatpush1.msra.mxu0 %v2583
    %4876 = vmatprep.subr.mxu0 0.0
    %4877 = vmatpush1.msra.mxu0 %v2584
    %4878 = vmatprep.subr.mxu0 0.0
    %4879 = vmatpush1.msra.mxu0 %v2585
    %4880 = vmatprep.subr.mxu0 0.0
    %4881 = vmatpush1.msra.mxu0 0.0
    %4882 = vmatprep.subr.mxu0 0.0
    %4883 = vmatpush1.msra.mxu0 0.0
    %4884 = vmatprep.subr.mxu0 0.0
    %4885 = vmatpush1.msra.mxu0 0.0
    %4886 = vmatprep.subr.mxu0 0.0
    %4887 = vmatpush1.msra.mxu0 0.0
    %4888 = vmatprep.subr.mxu0 0.0
    %4889 = vmatpush1.msra.mxu0 0.0
    %4890 = vmatprep.subr.mxu0 0.0
    %4891 = vmatpush1.msra.mxu0 0.0
    %4892 = vmatprep.subr.mxu0 0.0
    %4893 = vmatpush1.msra.mxu0 0.0
    %4894 = vmatprep.subr.mxu0 0.0
    %4895 = vmatpush1.msra.mxu0 0.0
    %4896 = vmatprep.subr.mxu0 0.0
    %4897 = vmatpush1.msra.mxu0 0.0
    %4898 = vmatprep.subr.mxu0 0.0
    %4899 = vmatpush1.msra.mxu0 0.0
    %4900 = vmatprep.subr.mxu0 0.0
    %4901 = vmatpush1.msra.mxu0 0.0
    %4902 = vmatprep.subr.mxu0 0.0
    %4903 = vmatpush1.msra.mxu0 0.0
    %4904 = vmatprep.subr.mxu0 0.0
    %4905 = vmatpush1.msra.mxu0 0.0
    %4906 = vmatprep.subr.mxu0 0.0
    %4907 = vmatpush1.msra.mxu0 0.0
    %4908 = vmatprep.subr.mxu0 0.0
    %4909 = vmatpush1.msra.mxu0 0.0
    %4910 = vmatprep.subr.mxu0 0.0
    %4911 = vmatpush1.msra.mxu0 0.0
    %4912 = vmatprep.subr.mxu0 0.0
    %4913 = vmatpush1.msra.mxu0 0.0
    %4914 = vmatprep.subr.mxu0 0.0
    %4915 = vmatpush1.msra.mxu0 0.0
    %4916 = vmatprep.subr.mxu0 0.0
    %4917 = vmatpush1.msra.mxu0 0.0
    %4918 = vmatprep.subr.mxu0 0.0
    %4919 = vmatpush1.msra.mxu0 0.0
    %4920 = vmatprep.subr.mxu0 0.0
    %4921 = vmatpush1.msra.mxu0 0.0
    %4922 = vmatprep.subr.mxu0 0.0
    %4923 = vmatpush1.msra.mxu0 0.0
    %4924 = vmatprep.subr.mxu0 0.0
    %4925 = vmatpush1.msra.mxu0 0.0
    %4926 = vmatprep.subr.mxu0 0.0
    %4927 = vmatpush1.msra.mxu0 0.0
    %4928 = vmatprep.subr.mxu0 0.0
    %4929 = vmatpush1.msra.mxu0 0.0
    %4930 = vmatprep.subr.mxu0 0.0
    %4931 = vmatpush1.msra.mxu0 0.0
    %4932 = vmatprep.subr.mxu0 0.0
    %4933 = vmatpush1.msra.mxu0 0.0
    %4934 = vmatprep.subr.mxu0 0.0
    %4935 = vmatpush1.msra.mxu0 0.0
    %4936 = vmatprep.mubr.f32.mxu0 0.0
    %4937 = vmatmul.mubr.f32.gmra.mrb[0].mxu0 %v4730
    %v4938 = vpop.f32.mrb[0].mxu0
    %v4939 = vadd.f32 %v3215, %v4938
    %v4940 = vpop.f32.mrb[0].mxu0
    %4941 = vdwg.mxu0
    %v4943 = vrot.slane %v2200, 2
    %v4945 = vadd.f32 %v2699, %v4943
    %v4947 = vrot.slane %v4799, 2
    %v4949 = vadd.f32 %v4945, %v4947
    %v4950 = vxor.u32 %v4949, 2147483648
    %v4951 = vmul.f32 %v4950, 1.442695
    %v4952 = vpow.pop %v4951
    %v4953 = vadd.f32 %v4952, 1.0
    %v4954 = vrcp.pop %v4953
    %v4955 = vmul.f32 1.0, %v4954
    %v4957 = vrot.slane %v2279, 2
    %v4959 = vadd.f32 %v2774, %v4957
    %v4961 = vrot.slane %v4869, 2
    %v4963 = vadd.f32 %v4959, %v4961
    %v4964 = vxor.u32 %v4963, 2147483648
    %v4965 = vmul.f32 %v4964, 1.442695
    %v4966 = vpow.pop %v4965
    %v4967 = vadd.f32 %v4966, 1.0
    %v4968 = vrcp.pop %v4967
    %v4969 = vmul.f32 1.0, %v4968
    %v4971 = vrot.slane %v2358, 2
    %v4973 = vadd.f32 %v2849, %v4971
    %v4975 = vrot.slane %v4939, 2
    %v4977 = vmul.f32 %v4955, %v4975
    %v4978 = vadd.f32 %v4973, %v4977
    %v4979 = vtanh.pop %v4978
    %v4981 = vrot.slane %v4979, 6
    %v4983 = vsub.f32 %v4711, %v4981
    %v4985 = vrot.slane %v4983, 2
    %v4987 = vmul.f32 %v4969, %v4985
    %v4988 = vadd.f32 %v4979, %v4987
    %vm4989 = vcmask 261126
    %4990 = vst.msk [vmem:[#allocation2] sm:$0xc0] %vm4989, %v4988
    %4991 = vst [vmem:[#allocation3] sm:$0xc0] %v4727
    %4992 = vst [vmem:[#allocation3 + $0x8] sm:$0xc0] %v4728
    %v4993 = vadd.f32 %v3063, %v2488
    %v4994 = vadd.f32 %v3065, %v2490
    %v4996 = vrot.slane %v4988, 6
    %v4997 = vsel %vm288, %v4996, 0
    %4999 = vmatprep.subr.mxu0 0.0
    %5000 = vmatpush1.msra.mxu0 %v2574
    %5001 = vmatprep.subr.mxu0 0.0
    %5002 = vmatpush1.msra.mxu0 %v2575
    %5003 = vmatprep.subr.mxu0 0.0
    %5004 = vmatpush1.msra.mxu0 %v2576
    %5005 = vmatprep.subr.mxu0 0.0
    %5006 = vmatpush1.msra.mxu0 %v2577
    %5007 = vmatprep.subr.mxu0 0.0
    %5008 = vmatpush1.msra.mxu0 0.0
    %5009 = vmatprep.subr.mxu0 0.0
    %5010 = vmatpush1.msra.mxu0 0.0
    %5011 = vmatprep.subr.mxu0 0.0
    %5012 = vmatpush1.msra.mxu0 0.0
    %5013 = vmatprep.subr.mxu0 0.0
    %5014 = vmatpush1.msra.mxu0 0.0
    %5015 = vmatprep.subr.mxu0 0.0
    %5016 = vmatpush1.msra.mxu0 0.0
    %5017 = vmatprep.subr.mxu0 0.0
    %5018 = vmatpush1.msra.mxu0 0.0
    %5019 = vmatprep.subr.mxu0 0.0
    %5020 = vmatpush1.msra.mxu0 0.0
    %5021 = vmatprep.subr.mxu0 0.0
    %5022 = vmatpush1.msra.mxu0 0.0
    %5023 = vmatprep.subr.mxu0 0.0
    %5024 = vmatpush1.msra.mxu0 0.0
    %5025 = vmatprep.subr.mxu0 0.0
    %5026 = vmatpush1.msra.mxu0 0.0
    %5027 = vmatprep.subr.mxu0 0.0
    %5028 = vmatpush1.msra.mxu0 0.0
    %5029 = vmatprep.subr.mxu0 0.0
    %5030 = vmatpush1.msra.mxu0 0.0
    %5031 = vmatprep.subr.mxu0 0.0
    %5032 = vmatpush1.msra.mxu0 0.0
    %5033 = vmatprep.subr.mxu0 0.0
    %5034 = vmatpush1.msra.mxu0 0.0
    %5035 = vmatprep.subr.mxu0 0.0
    %5036 = vmatpush1.msra.mxu0 0.0
    %5037 = vmatprep.subr.mxu0 0.0
    %5038 = vmatpush1.msra.mxu0 0.0
    %5039 = vmatprep.subr.mxu0 0.0
    %5040 = vmatpush1.msra.mxu0 0.0
    %5041 = vmatprep.subr.mxu0 0.0
    %5042 = vmatpush1.msra.mxu0 0.0
    %5043 = vmatprep.subr.mxu0 0.0
    %5044 = vmatpush1.msra.mxu0 0.0
    %5045 = vmatprep.subr.mxu0 0.0
    %5046 = vmatpush1.msra.mxu0 0.0
    %5047 = vmatprep.subr.mxu0 0.0
    %5048 = vmatpush1.msra.mxu0 0.0
    %5049 = vmatprep.subr.mxu0 0.0
    %5050 = vmatpush1.msra.mxu0 0.0
    %5051 = vmatprep.subr.mxu0 0.0
    %5052 = vmatpush1.msra.mxu0 0.0
    %5053 = vmatprep.subr.mxu0 0.0
    %5054 = vmatpush1.msra.mxu0 0.0
    %5055 = vmatprep.subr.mxu0 0.0
    %5056 = vmatpush1.msra.mxu0 0.0
    %5057 = vmatprep.subr.mxu0 0.0
    %5058 = vmatpush1.msra.mxu0 0.0
    %5059 = vmatprep.subr.mxu0 0.0
    %5060 = vmatpush1.msra.mxu0 0.0
    %5061 = vmatprep.subr.mxu0 0.0
    %5062 = vmatpush1.msra.mxu0 0.0
    %5063 = vmatprep.mubr.f32.mxu0 0.0
    %5064 = vmatmul.mubr.f32.gmra.mrb[0].mxu0 %v4997
    %v5065 = vpop.f32.mrb[0].mxu0
    %v5066 = vadd.f32 0.0, %v5065
    %v5067 = vpop.f32.mrb[0].mxu0
    %5068 = vdwg.mxu0
    %5069 = vmatprep.subr.mxu0 0.0
    %5070 = vmatpush1.msra.mxu0 %v2578
    %5071 = vmatprep.subr.mxu0 0.0
    %5072 = vmatpush1.msra.mxu0 %v2579
    %5073 = vmatprep.subr.mxu0 0.0
    %5074 = vmatpush1.msra.mxu0 %v2580
    %5075 = vmatprep.subr.mxu0 0.0
    %5076 = vmatpush1.msra.mxu0 %v2581
    %5077 = vmatprep.subr.mxu0 0.0
    %5078 = vmatpush1.msra.mxu0 0.0
    %5079 = vmatprep.subr.mxu0 0.0
    %5080 = vmatpush1.msra.mxu0 0.0
    %5081 = vmatprep.subr.mxu0 0.0
    %5082 = vmatpush1.msra.mxu0 0.0
    %5083 = vmatprep.subr.mxu0 0.0
    %5084 = vmatpush1.msra.mxu0 0.0
    %5085 = vmatprep.subr.mxu0 0.0
    %5086 = vmatpush1.msra.mxu0 0.0
    %5087 = vmatprep.subr.mxu0 0.0
    %5088 = vmatpush1.msra.mxu0 0.0
    %5089 = vmatprep.subr.mxu0 0.0
    %5090 = vmatpush1.msra.mxu0 0.0
    %5091 = vmatprep.subr.mxu0 0.0
    %5092 = vmatpush1.msra.mxu0 0.0
    %5093 = vmatprep.subr.mxu0 0.0
    %5094 = vmatpush1.msra.mxu0 0.0
    %5095 = vmatprep.subr.mxu0 0.0
    %5096 = vmatpush1.msra.mxu0 0.0
    %5097 = vmatprep.subr.mxu0 0.0
    %5098 = vmatpush1.msra.mxu0 0.0
    %5099 = vmatprep.subr.mxu0 0.0
    %5100 = vmatpush1.msra.mxu0 0.0
    %5101 = vmatprep.subr.mxu0 0.0
    %5102 = vmatpush1.msra.mxu0 0.0
    %5103 = vmatprep.subr.mxu0 0.0
    %5104 = vmatpush1.msra.mxu0 0.0
    %5105 = vmatprep.subr.mxu0 0.0
    %5106 = vmatpush1.msra.mxu0 0.0
    %5107 = vmatprep.subr.mxu0 0.0
    %5108 = vmatpush1.msra.mxu0 0.0
    %5109 = vmatprep.subr.mxu0 0.0
    %5110 = vmatpush1.msra.mxu0 0.0
    %5111 = vmatprep.subr.mxu0 0.0
    %5112 = vmatpush1.msra.mxu0 0.0
    %5113 = vmatprep.subr.mxu0 0.0
    %5114 = vmatpush1.msra.mxu0 0.0
    %5115 = vmatprep.subr.mxu0 0.0
    %5116 = vmatpush1.msra.mxu0 0.0
    %5117 = vmatprep.subr.mxu0 0.0
    %5118 = vmatpush1.msra.mxu0 0.0
    %5119 = vmatprep.subr.mxu0 0.0
    %5120 = vmatpush1.msra.mxu0 0.0
    %5121 = vmatprep.subr.mxu0 0.0
    %5122 = vmatpush1.msra.mxu0 0.0
    %5123 = vmatprep.subr.mxu0 0.0
    %5124 = vmatpush1.msra.mxu0 0.0
    %5125 = vmatprep.subr.mxu0 0.0
    %5126 = vmatpush1.msra.mxu0 0.0
    %5127 = vmatprep.subr.mxu0 0.0
    %5128 = vmatpush1.msra.mxu0 0.0
    %5129 = vmatprep.subr.mxu0 0.0
    %5130 = vmatpush1.msra.mxu0 0.0
    %5131 = vmatprep.subr.mxu0 0.0
    %5132 = vmatpush1.msra.mxu0 0.0
    %5133 = vmatprep.mubr.f32.mxu0 0.0
    %5134 = vmatmul.mubr.f32.gmra.mrb[0].mxu0 %v4997
    %v5135 = vpop.f32.mrb[0].mxu0
    %v5136 = vadd.f32 0.0, %v5135
    %v5137 = vpop.f32.mrb[0].mxu0
    %5138 = vdwg.mxu0
    %5139 = vmatprep.subr.mxu0 0.0
    %5140 = vmatpush1.msra.mxu0 %v2582
    %5141 = vmatprep.subr.mxu0 0.0
    %5142 = vmatpush1.msra.mxu0 %v2583
    %5143 = vmatprep.subr.mxu0 0.0
    %5144 = vmatpush1.msra.mxu0 %v2584
    %5145 = vmatprep.subr.mxu0 0.0
    %5146 = vmatpush1.msra.mxu0 %v2585
    %5147 = vmatprep.subr.mxu0 0.0
    %5148 = vmatpush1.msra.mxu0 0.0
    %5149 = vmatprep.subr.mxu0 0.0
    %5150 = vmatpush1.msra.mxu0 0.0
    %5151 = vmatprep.subr.mxu0 0.0
    %5152 = vmatpush1.msra.mxu0 0.0
    %5153 = vmatprep.subr.mxu0 0.0
    %5154 = vmatpush1.msra.mxu0 0.0
    %5155 = vmatprep.subr.mxu0 0.0
    %5156 = vmatpush1.msra.mxu0 0.0
    %5157 = vmatprep.subr.mxu0 0.0
    %5158 = vmatpush1.msra.mxu0 0.0
    %5159 = vmatprep.subr.mxu0 0.0
    %5160 = vmatpush1.msra.mxu0 0.0
    %5161 = vmatprep.subr.mxu0 0.0
    %5162 = vmatpush1.msra.mxu0 0.0
    %5163 = vmatprep.subr.mxu0 0.0
    %5164 = vmatpush1.msra.mxu0 0.0
    %5165 = vmatprep.subr.mxu0 0.0
    %5166 = vmatpush1.msra.mxu0 0.0
    %5167 = vmatprep.subr.mxu0 0.0
    %5168 = vmatpush1.msra.mxu0 0.0
    %5169 = vmatprep.subr.mxu0 0.0
    %5170 = vmatpush1.msra.mxu0 0.0
    %5171 = vmatprep.subr.mxu0 0.0
    %5172 = vmatpush1.msra.mxu0 0.0
    %5173 = vmatprep.subr.mxu0 0.0
    %5174 = vmatpush1.msra.mxu0 0.0
    %5175 = vmatprep.subr.mxu0 0.0
    %5176 = vmatpush1.msra.mxu0 0.0
    %5177 = vmatprep.subr.mxu0 0.0
    %5178 = vmatpush1.msra.mxu0 0.0
    %5179 = vmatprep.subr.mxu0 0.0
    %5180 = vmatpush1.msra.mxu0 0.0
    %5181 = vmatprep.subr.mxu0 0.0
    %5182 = vmatpush1.msra.mxu0 0.0
    %5183 = vmatprep.subr.mxu0 0.0
    %5184 = vmatpush1.msra.mxu0 0.0
    %5185 = vmatprep.subr.mxu0 0.0
    %5186 = vmatpush1.msra.mxu0 0.0
    %5187 = vmatprep.subr.mxu0 0.0
    %5188 = vmatpush1.msra.mxu0 0.0
    %5189 = vmatprep.subr.mxu0 0.0
    %5190 = vmatpush1.msra.mxu0 0.0
    %5191 = vmatprep.subr.mxu0 0.0
    %5192 = vmatpush1.msra.mxu0 0.0
    %5193 = vmatprep.subr.mxu0 0.0
    %5194 = vmatpush1.msra.mxu0 0.0
    %5195 = vmatprep.subr.mxu0 0.0
    %5196 = vmatpush1.msra.mxu0 0.0
    %5197 = vmatprep.subr.mxu0 0.0
    %5198 = vmatpush1.msra.mxu0 0.0
    %5199 = vmatprep.subr.mxu0 0.0
    %5200 = vmatpush1.msra.mxu0 0.0
    %5201 = vmatprep.subr.mxu0 0.0
    %5202 = vmatpush1.msra.mxu0 0.0
    %5203 = vmatprep.mubr.f32.mxu0 0.0
    %5204 = vmatmul.mubr.f32.gmra.mrb[0].mxu0 %v4997
    %v5205 = vpop.f32.mrb[0].mxu0
    %v5206 = vadd.f32 %v3215, %v5205
    %v5207 = vpop.f32.mrb[0].mxu0
    %5208 = vdwg.mxu0
    %v5209 = vadd.f32 %v2704, %v2200
    %v5210 = vadd.f32 %v5209, %v5066
    %v5211 = vxor.u32 %v5210, 2147483648
    %v5212 = vmul.f32 %v5211, 1.442695
    %v5213 = vpow.pop %v5212
    %v5214 = vadd.f32 %v5213, 1.0
    %v5215 = vrcp.pop %v5214
    %v5216 = vmul.f32 1.0, %v5215
    %v5217 = vadd.f32 %v2779, %v2279
    %v5218 = vadd.f32 %v5217, %v5136
    %v5219 = vxor.u32 %v5218, 2147483648
    %v5220 = vmul.f32 %v5219, 1.442695
    %v5221 = vpow.pop %v5220
    %v5222 = vadd.f32 %v5221, 1.0
    %v5223 = vrcp.pop %v5222
    %v5224 = vmul.f32 1.0, %v5223
    %v5225 = vadd.f32 %v2854, %v2358
    %v5226 = vmul.f32 %v5216, %v5206
    %v5227 = vadd.f32 %v5225, %v5226
    %v5228 = vtanh.pop %v5227
    %v5230 = vrot.slane %v5228, 2
    %v5232 = vsub.f32 %v4988, %v5230
    %v5234 = vrot.slane %v5232, 6
    %v5236 = vmul.f32 %v5224, %v5234
    %v5237 = vadd.f32 %v5228, %v5236
    %5238 = vst.msk [vmem:[#allocation2 + $0x8] sm:$0x3] %vm3319, %v5237
    %5239 = vst [vmem:[#allocation3 + $0x10] sm:$0x3] %v4993
    %5240 = vst [vmem:[#allocation3 + $0x18] sm:$0x3] %v4994
    %v5241 = vrot.slane %v2488, 6
    %v5242 = vrot.slane %v2490, 6
    %v5245 = vadd.f32 %v3063, %v5241
    %v5246 = vadd.f32 %v3065, %v5242
    %v5248 = vsel %vm288, %v5237, 0
    %5250 = vmatprep.subr.mxu0 0.0
    %5251 = vmatpush1.msra.mxu0 %v2574
    %5252 = vmatprep.subr.mxu0 0.0
    %5253 = vmatpush1.msra.mxu0 %v2575
    %5254 = vmatprep.subr.mxu0 0.0
    %5255 = vmatpush1.msra.mxu0 %v2576
    %5256 = vmatprep.subr.mxu0 0.0
    %5257 = vmatpush1.msra.mxu0 %v2577
    %5258 = vmatprep.subr.mxu0 0.0
    %5259 = vmatpush1.msra.mxu0 0.0
    %5260 = vmatprep.subr.mxu0 0.0
    %5261 = vmatpush1.msra.mxu0 0.0
    %5262 = vmatprep.subr.mxu0 0.0
    %5263 = vmatpush1.msra.mxu0 0.0
    %5264 = vmatprep.subr.mxu0 0.0
    %5265 = vmatpush1.msra.mxu0 0.0
    %5266 = vmatprep.subr.mxu0 0.0
    %5267 = vmatpush1.msra.mxu0 0.0
    %5268 = vmatprep.subr.mxu0 0.0
    %5269 = vmatpush1.msra.mxu0 0.0
    %5270 = vmatprep.subr.mxu0 0.0
    %5271 = vmatpush1.msra.mxu0 0.0
    %5272 = vmatprep.subr.mxu0 0.0
    %5273 = vmatpush1.msra.mxu0 0.0
    %5274 = vmatprep.subr.mxu0 0.0
    %5275 = vmatpush1.msra.mxu0 0.0
    %5276 = vmatprep.subr.mxu0 0.0
    %5277 = vmatpush1.msra.mxu0 0.0
    %5278 = vmatprep.subr.mxu0 0.0
    %5279 = vmatpush1.msra.mxu0 0.0
    %5280 = vmatprep.subr.mxu0 0.0
    %5281 = vmatpush1.msra.mxu0 0.0
    %5282 = vmatprep.subr.mxu0 0.0
    %5283 = vmatpush1.msra.mxu0 0.0
    %5284 = vmatprep.subr.mxu0 0.0
    %5285 = vmatpush1.msra.mxu0 0.0
    %5286 = vmatprep.subr.mxu0 0.0
    %5287 = vmatpush1.msra.mxu0 0.0
    %5288 = vmatprep.subr.mxu0 0.0
    %5289 = vmatpush1.msra.mxu0 0.0
    %5290 = vmatprep.subr.mxu0 0.0
    %5291 = vmatpush1.msra.mxu0 0.0
    %5292 = vmatprep.subr.mxu0 0.0
    %5293 = vmatpush1.msra.mxu0 0.0
    %5294 = vmatprep.subr.mxu0 0.0
    %5295 = vmatpush1.msra.mxu0 0.0
    %5296 = vmatprep.subr.mxu0 0.0
    %5297 = vmatpush1.msra.mxu0 0.0
    %5298 = vmatprep.subr.mxu0 0.0
    %5299 = vmatpush1.msra.mxu0 0.0
    %5300 = vmatprep.subr.mxu0 0.0
    %5301 = vmatpush1.msra.mxu0 0.0
    %5302 = vmatprep.subr.mxu0 0.0
    %5303 = vmatpush1.msra.mxu0 0.0
    %5304 = vmatprep.subr.mxu0 0.0
    %5305 = vmatpush1.msra.mxu0 0.0
    %5306 = vmatprep.subr.mxu0 0.0
    %5307 = vmatpush1.msra.mxu0 0.0
    %5308 = vmatprep.subr.mxu0 0.0
    %5309 = vmatpush1.msra.mxu0 0.0
    %5310 = vmatprep.subr.mxu0 0.0
    %5311 = vmatpush1.msra.mxu0 0.0
    %5312 = vmatprep.subr.mxu0 0.0
    %5313 = vmatpush1.msra.mxu0 0.0
    %5314 = vmatprep.mubr.f32.mxu0 0.0
    %5315 = vmatmul.mubr.f32.gmra.mrb[0].mxu0 %v5248
    %v5316 = vpop.f32.mrb[0].mxu0
    %v5317 = vadd.f32 0.0, %v5316
    %v5318 = vpop.f32.mrb[0].mxu0
    %5319 = vdwg.mxu0
    %5320 = vmatprep.subr.mxu0 0.0
    %5321 = vmatpush1.msra.mxu0 %v2578
    %5322 = vmatprep.subr.mxu0 0.0
    %5323 = vmatpush1.msra.mxu0 %v2579
    %5324 = vmatprep.subr.mxu0 0.0
    %5325 = vmatpush1.msra.mxu0 %v2580
    %5326 = vmatprep.subr.mxu0 0.0
    %5327 = vmatpush1.msra.mxu0 %v2581
    %5328 = vmatprep.subr.mxu0 0.0
    %5329 = vmatpush1.msra.mxu0 0.0
    %5330 = vmatprep.subr.mxu0 0.0
    %5331 = vmatpush1.msra.mxu0 0.0
    %5332 = vmatprep.subr.mxu0 0.0
    %5333 = vmatpush1.msra.mxu0 0.0
    %5334 = vmatprep.subr.mxu0 0.0
    %5335 = vmatpush1.msra.mxu0 0.0
    %5336 = vmatprep.subr.mxu0 0.0
    %5337 = vmatpush1.msra.mxu0 0.0
    %5338 = vmatprep.subr.mxu0 0.0
    %5339 = vmatpush1.msra.mxu0 0.0
    %5340 = vmatprep.subr.mxu0 0.0
    %5341 = vmatpush1.msra.mxu0 0.0
    %5342 = vmatprep.subr.mxu0 0.0
    %5343 = vmatpush1.msra.mxu0 0.0
    %5344 = vmatprep.subr.mxu0 0.0
    %5345 = vmatpush1.msra.mxu0 0.0
    %5346 = vmatprep.subr.mxu0 0.0
    %5347 = vmatpush1.msra.mxu0 0.0
    %5348 = vmatprep.subr.mxu0 0.0
    %5349 = vmatpush1.msra.mxu0 0.0
    %5350 = vmatprep.subr.mxu0 0.0
    %5351 = vmatpush1.msra.mxu0 0.0
    %5352 = vmatprep.subr.mxu0 0.0
    %5353 = vmatpush1.msra.mxu0 0.0
    %5354 = vmatprep.subr.mxu0 0.0
    %5355 = vmatpush1.msra.mxu0 0.0
    %5356 = vmatprep.subr.mxu0 0.0
    %5357 = vmatpush1.msra.mxu0 0.0
    %5358 = vmatprep.subr.mxu0 0.0
    %5359 = vmatpush1.msra.mxu0 0.0
    %5360 = vmatprep.subr.mxu0 0.0
    %5361 = vmatpush1.msra.mxu0 0.0
    %5362 = vmatprep.subr.mxu0 0.0
    %5363 = vmatpush1.msra.mxu0 0.0
    %5364 = vmatprep.subr.mxu0 0.0
    %5365 = vmatpush1.msra.mxu0 0.0
    %5366 = vmatprep.subr.mxu0 0.0
    %5367 = vmatpush1.msra.mxu0 0.0
    %5368 = vmatprep.subr.mxu0 0.0
    %5369 = vmatpush1.msra.mxu0 0.0
    %5370 = vmatprep.subr.mxu0 0.0
    %5371 = vmatpush1.msra.mxu0 0.0
    %5372 = vmatprep.subr.mxu0 0.0
    %5373 = vmatpush1.msra.mxu0 0.0
    %5374 = vmatprep.subr.mxu0 0.0
    %5375 = vmatpush1.msra.mxu0 0.0
    %5376 = vmatprep.subr.mxu0 0.0
    %5377 = vmatpush1.msra.mxu0 0.0
    %5378 = vmatprep.subr.mxu0 0.0
    %5379 = vmatpush1.msra.mxu0 0.0
    %5380 = vmatprep.subr.mxu0 0.0
    %5381 = vmatpush1.msra.mxu0 0.0
    %5382 = vmatprep.subr.mxu0 0.0
    %5383 = vmatpush1.msra.mxu0 0.0
    %5384 = vmatprep.mubr.f32.mxu0 0.0
    %5385 = vmatmul.mubr.f32.gmra.mrb[0].mxu0 %v5248
    %v5386 = vpop.f32.mrb[0].mxu0
    %v5387 = vadd.f32 0.0, %v5386
    %v5388 = vpop.f32.mrb[0].mxu0
    %5389 = vdwg.mxu0
    %5390 = vmatprep.subr.mxu0 0.0
    %5391 = vmatpush1.msra.mxu0 %v2582
    %5392 = vmatprep.subr.mxu0 0.0
    %5393 = vmatpush1.msra.mxu0 %v2583
    %5394 = vmatprep.subr.mxu0 0.0
    %5395 = vmatpush1.msra.mxu0 %v2584
    %5396 = vmatprep.subr.mxu0 0.0
    %5397 = vmatpush1.msra.mxu0 %v2585
    %5398 = vmatprep.subr.mxu0 0.0
    %5399 = vmatpush1.msra.mxu0 0.0
    %5400 = vmatprep.subr.mxu0 0.0
    %5401 = vmatpush1.msra.mxu0 0.0
    %5402 = vmatprep.subr.mxu0 0.0
    %5403 = vmatpush1.msra.mxu0 0.0
    %5404 = vmatprep.subr.mxu0 0.0
    %5405 = vmatpush1.msra.mxu0 0.0
    %5406 = vmatprep.subr.mxu0 0.0
    %5407 = vmatpush1.msra.mxu0 0.0
    %5408 = vmatprep.subr.mxu0 0.0
    %5409 = vmatpush1.msra.mxu0 0.0
    %5410 = vmatprep.subr.mxu0 0.0
    %5411 = vmatpush1.msra.mxu0 0.0
    %5412 = vmatprep.subr.mxu0 0.0
    %5413 = vmatpush1.msra.mxu0 0.0
    %5414 = vmatprep.subr.mxu0 0.0
    %5415 = vmatpush1.msra.mxu0 0.0
    %5416 = vmatprep.subr.mxu0 0.0
    %5417 = vmatpush1.msra.mxu0 0.0
    %5418 = vmatprep.subr.mxu0 0.0
    %5419 = vmatpush1.msra.mxu0 0.0
    %5420 = vmatprep.subr.mxu0 0.0
    %5421 = vmatpush1.msra.mxu0 0.0
    %5422 = vmatprep.subr.mxu0 0.0
    %5423 = vmatpush1.msra.mxu0 0.0
    %5424 = vmatprep.subr.mxu0 0.0
    %5425 = vmatpush1.msra.mxu0 0.0
    %5426 = vmatprep.subr.mxu0 0.0
    %5427 = vmatpush1.msra.mxu0 0.0
    %5428 = vmatprep.subr.mxu0 0.0
    %5429 = vmatpush1.msra.mxu0 0.0
    %5430 = vmatprep.subr.mxu0 0.0
    %5431 = vmatpush1.msra.mxu0 0.0
    %5432 = vmatprep.subr.mxu0 0.0
    %5433 = vmatpush1.msra.mxu0 0.0
    %5434 = vmatprep.subr.mxu0 0.0
    %5435 = vmatpush1.msra.mxu0 0.0
    %5436 = vmatprep.subr.mxu0 0.0
    %5437 = vmatpush1.msra.mxu0 0.0
    %5438 = vmatprep.subr.mxu0 0.0
    %5439 = vmatpush1.msra.mxu0 0.0
    %5440 = vmatprep.subr.mxu0 0.0
    %5441 = vmatpush1.msra.mxu0 0.0
    %5442 = vmatprep.subr.mxu0 0.0
    %5443 = vmatpush1.msra.mxu0 0.0
    %5444 = vmatprep.subr.mxu0 0.0
    %5445 = vmatpush1.msra.mxu0 0.0
    %5446 = vmatprep.subr.mxu0 0.0
    %5447 = vmatpush1.msra.mxu0 0.0
    %5448 = vmatprep.subr.mxu0 0.0
    %5449 = vmatpush1.msra.mxu0 0.0
    %5450 = vmatprep.subr.mxu0 0.0
    %5451 = vmatpush1.msra.mxu0 0.0
    %5452 = vmatprep.subr.mxu0 0.0
    %5453 = vmatpush1.msra.mxu0 0.0
    %5454 = vmatprep.mubr.f32.mxu0 0.0
    %5455 = vmatmul.mubr.f32.gmra.mrb[0].mxu0 %v5248
    %v5456 = vpop.f32.mrb[0].mxu0
    %v5457 = vadd.f32 %v3215, %v5456
    %v5458 = vpop.f32.mrb[0].mxu0
    %5459 = vdwg.mxu0
    %v5460 = vrot.slane %v2200, 6
    %v5462 = vadd.f32 %v2704, %v5460
    %v5464 = vrot.slane %v5317, 6
    %v5466 = vadd.f32 %v5462, %v5464
    %v5467 = vxor.u32 %v5466, 2147483648
    %v5468 = vmul.f32 %v5467, 1.442695
    %v5469 = vpow.pop %v5468
    %v5470 = vadd.f32 %v5469, 1.0
    %v5471 = vrcp.pop %v5470
    %v5472 = vmul.f32 1.0, %v5471
    %v5473 = vrot.slane %v2279, 6
    %v5475 = vadd.f32 %v2779, %v5473
    %v5477 = vrot.slane %v5387, 6
    %v5479 = vadd.f32 %v5475, %v5477
    %v5480 = vxor.u32 %v5479, 2147483648
    %v5481 = vmul.f32 %v5480, 1.442695
    %v5482 = vpow.pop %v5481
    %v5483 = vadd.f32 %v5482, 1.0
    %v5484 = vrcp.pop %v5483
    %v5485 = vmul.f32 1.0, %v5484
    %v5486 = vrot.slane %v2358, 6
    %v5488 = vadd.f32 %v2854, %v5486
    %v5490 = vrot.slane %v5457, 6
    %v5492 = vmul.f32 %v5472, %v5490
    %v5493 = vadd.f32 %v5488, %v5492
    %v5494 = vtanh.pop %v5493
    %v5496 = vrot.slane %v5494, 2
    %v5498 = vsub.f32 %v5237, %v5496
    %v5500 = vrot.slane %v5498, 6
    %v5502 = vmul.f32 %v5485, %v5500
    %v5503 = vadd.f32 %v5494, %v5502
    %vm5504 = vcmask 257026
    %5505 = vst.msk [vmem:[#allocation2 + $0x8] sm:$0xc] %vm5504, %v5503
    %5506 = vst [vmem:[#allocation3 + $0x10] sm:$0xc] %v5245
    %5507 = vst [vmem:[#allocation3 + $0x18] sm:$0xc] %v5246
    %v5508 = vrot.slane %v2488, 4
    %v5509 = vrot.slane %v2490, 4
    %v5512 = vadd.f32 %v3063, %v5508
    %v5513 = vadd.f32 %v3065, %v5509
    %v5515 = vrot.slane %v5503, 2
    %v5516 = vsel %vm288, %v5515, 0
    %5518 = vmatprep.subr.mxu0 0.0
    %5519 = vmatpush1.msra.mxu0 %v2574
    %5520 = vmatprep.subr.mxu0 0.0
    %5521 = vmatpush1.msra.mxu0 %v2575
    %5522 = vmatprep.subr.mxu0 0.0
    %5523 = vmatpush1.msra.mxu0 %v2576
    %5524 = vmatprep.subr.mxu0 0.0
    %5525 = vmatpush1.msra.mxu0 %v2577
    %5526 = vmatprep.subr.mxu0 0.0
    %5527 = vmatpush1.msra.mxu0 0.0
    %5528 = vmatprep.subr.mxu0 0.0
    %5529 = vmatpush1.msra.mxu0 0.0
    %5530 = vmatprep.subr.mxu0 0.0
    %5531 = vmatpush1.msra.mxu0 0.0
    %5532 = vmatprep.subr.mxu0 0.0
    %5533 = vmatpush1.msra.mxu0 0.0
    %5534 = vmatprep.subr.mxu0 0.0
    %5535 = vmatpush1.msra.mxu0 0.0
    %5536 = vmatprep.subr.mxu0 0.0
    %5537 = vmatpush1.msra.mxu0 0.0
    %5538 = vmatprep.subr.mxu0 0.0
    %5539 = vmatpush1.msra.mxu0 0.0
    %5540 = vmatprep.subr.mxu0 0.0
    %5541 = vmatpush1.msra.mxu0 0.0
    %5542 = vmatprep.subr.mxu0 0.0
    %5543 = vmatpush1.msra.mxu0 0.0
    %5544 = vmatprep.subr.mxu0 0.0
    %5545 = vmatpush1.msra.mxu0 0.0
    %5546 = vmatprep.subr.mxu0 0.0
    %5547 = vmatpush1.msra.mxu0 0.0
    %5548 = vmatprep.subr.mxu0 0.0
    %5549 = vmatpush1.msra.mxu0 0.0
    %5550 = vmatprep.subr.mxu0 0.0
    %5551 = vmatpush1.msra.mxu0 0.0
    %5552 = vmatprep.subr.mxu0 0.0
    %5553 = vmatpush1.msra.mxu0 0.0
    %5554 = vmatprep.subr.mxu0 0.0
    %5555 = vmatpush1.msra.mxu0 0.0
    %5556 = vmatprep.subr.mxu0 0.0
    %5557 = vmatpush1.msra.mxu0 0.0
    %5558 = vmatprep.subr.mxu0 0.0
    %5559 = vmatpush1.msra.mxu0 0.0
    %5560 = vmatprep.subr.mxu0 0.0
    %5561 = vmatpush1.msra.mxu0 0.0
    %5562 = vmatprep.subr.mxu0 0.0
    %5563 = vmatpush1.msra.mxu0 0.0
    %5564 = vmatprep.subr.mxu0 0.0
    %5565 = vmatpush1.msra.mxu0 0.0
    %5566 = vmatprep.subr.mxu0 0.0
    %5567 = vmatpush1.msra.mxu0 0.0
    %5568 = vmatprep.subr.mxu0 0.0
    %5569 = vmatpush1.msra.mxu0 0.0
    %5570 = vmatprep.subr.mxu0 0.0
    %5571 = vmatpush1.msra.mxu0 0.0
    %5572 = vmatprep.subr.mxu0 0.0
    %5573 = vmatpush1.msra.mxu0 0.0
    %5574 = vmatprep.subr.mxu0 0.0
    %5575 = vmatpush1.msra.mxu0 0.0
    %5576 = vmatprep.subr.mxu0 0.0
    %5577 = vmatpush1.msra.mxu0 0.0
    %5578 = vmatprep.subr.mxu0 0.0
    %5579 = vmatpush1.msra.mxu0 0.0
    %5580 = vmatprep.subr.mxu0 0.0
    %5581 = vmatpush1.msra.mxu0 0.0
    %5582 = vmatprep.mubr.f32.mxu0 0.0
    %5583 = vmatmul.mubr.f32.gmra.mrb[0].mxu0 %v5516
    %v5584 = vpop.f32.mrb[0].mxu0
    %v5585 = vadd.f32 0.0, %v5584
    %v5586 = vpop.f32.mrb[0].mxu0
    %5587 = vdwg.mxu0
    %5588 = vmatprep.subr.mxu0 0.0
    %5589 = vmatpush1.msra.mxu0 %v2578
    %5590 = vmatprep.subr.mxu0 0.0
    %5591 = vmatpush1.msra.mxu0 %v2579
    %5592 = vmatprep.subr.mxu0 0.0
    %5593 = vmatpush1.msra.mxu0 %v2580
    %5594 = vmatprep.subr.mxu0 0.0
    %5595 = vmatpush1.msra.mxu0 %v2581
    %5596 = vmatprep.subr.mxu0 0.0
    %5597 = vmatpush1.msra.mxu0 0.0
    %5598 = vmatprep.subr.mxu0 0.0
    %5599 = vmatpush1.msra.mxu0 0.0
    %5600 = vmatprep.subr.mxu0 0.0
    %5601 = vmatpush1.msra.mxu0 0.0
    %5602 = vmatprep.subr.mxu0 0.0
    %5603 = vmatpush1.msra.mxu0 0.0
    %5604 = vmatprep.subr.mxu0 0.0
    %5605 = vmatpush1.msra.mxu0 0.0
    %5606 = vmatprep.subr.mxu0 0.0
    %5607 = vmatpush1.msra.mxu0 0.0
    %5608 = vmatprep.subr.mxu0 0.0
    %5609 = vmatpush1.msra.mxu0 0.0
    %5610 = vmatprep.subr.mxu0 0.0
    %5611 = vmatpush1.msra.mxu0 0.0
    %5612 = vmatprep.subr.mxu0 0.0
    %5613 = vmatpush1.msra.mxu0 0.0
    %5614 = vmatprep.subr.mxu0 0.0
    %5615 = vmatpush1.msra.mxu0 0.0
    %5616 = vmatprep.subr.mxu0 0.0
    %5617 = vmatpush1.msra.mxu0 0.0
    %5618 = vmatprep.subr.mxu0 0.0
    %5619 = vmatpush1.msra.mxu0 0.0
    %5620 = vmatprep.subr.mxu0 0.0
    %5621 = vmatpush1.msra.mxu0 0.0
    %5622 = vmatprep.subr.mxu0 0.0
    %5623 = vmatpush1.msra.mxu0 0.0
    %5624 = vmatprep.subr.mxu0 0.0
    %5625 = vmatpush1.msra.mxu0 0.0
    %5626 = vmatprep.subr.mxu0 0.0
    %5627 = vmatpush1.msra.mxu0 0.0
    %5628 = vmatprep.subr.mxu0 0.0
    %5629 = vmatpush1.msra.mxu0 0.0
    %5630 = vmatprep.subr.mxu0 0.0
    %5631 = vmatpush1.msra.mxu0 0.0
    %5632 = vmatprep.subr.mxu0 0.0
    %5633 = vmatpush1.msra.mxu0 0.0
    %5634 = vmatprep.subr.mxu0 0.0
    %5635 = vmatpush1.msra.mxu0 0.0
    %5636 = vmatprep.subr.mxu0 0.0
    %5637 = vmatpush1.msra.mxu0 0.0
    %5638 = vmatprep.subr.mxu0 0.0
    %5639 = vmatpush1.msra.mxu0 0.0
    %5640 = vmatprep.subr.mxu0 0.0
    %5641 = vmatpush1.msra.mxu0 0.0
    %5642 = vmatprep.subr.mxu0 0.0
    %5643 = vmatpush1.msra.mxu0 0.0
    %5644 = vmatprep.subr.mxu0 0.0
    %5645 = vmatpush1.msra.mxu0 0.0
    %5646 = vmatprep.subr.mxu0 0.0
    %5647 = vmatpush1.msra.mxu0 0.0
    %5648 = vmatprep.subr.mxu0 0.0
    %5649 = vmatpush1.msra.mxu0 0.0
    %5650 = vmatprep.subr.mxu0 0.0
    %5651 = vmatpush1.msra.mxu0 0.0
    %5652 = vmatprep.mubr.f32.mxu0 0.0
    %5653 = vmatmul.mubr.f32.gmra.mrb[0].mxu0 %v5516
    %v5654 = vpop.f32.mrb[0].mxu0
    %v5655 = vadd.f32 0.0, %v5654
    %v5656 = vpop.f32.mrb[0].mxu0
    %5657 = vdwg.mxu0
    %5658 = vmatprep.subr.mxu0 0.0
    %5659 = vmatpush1.msra.mxu0 %v2582
    %5660 = vmatprep.subr.mxu0 0.0
    %5661 = vmatpush1.msra.mxu0 %v2583
    %5662 = vmatprep.subr.mxu0 0.0
    %5663 = vmatpush1.msra.mxu0 %v2584
    %5664 = vmatprep.subr.mxu0 0.0
    %5665 = vmatpush1.msra.mxu0 %v2585
    %5666 = vmatprep.subr.mxu0 0.0
    %5667 = vmatpush1.msra.mxu0 0.0
    %5668 = vmatprep.subr.mxu0 0.0
    %5669 = vmatpush1.msra.mxu0 0.0
    %5670 = vmatprep.subr.mxu0 0.0
    %5671 = vmatpush1.msra.mxu0 0.0
    %5672 = vmatprep.subr.mxu0 0.0
    %5673 = vmatpush1.msra.mxu0 0.0
    %5674 = vmatprep.subr.mxu0 0.0
    %5675 = vmatpush1.msra.mxu0 0.0
    %5676 = vmatprep.subr.mxu0 0.0
    %5677 = vmatpush1.msra.mxu0 0.0
    %5678 = vmatprep.subr.mxu0 0.0
    %5679 = vmatpush1.msra.mxu0 0.0
    %5680 = vmatprep.subr.mxu0 0.0
    %5681 = vmatpush1.msra.mxu0 0.0
    %5682 = vmatprep.subr.mxu0 0.0
    %5683 = vmatpush1.msra.mxu0 0.0
    %5684 = vmatprep.subr.mxu0 0.0
    %5685 = vmatpush1.msra.mxu0 0.0
    %5686 = vmatprep.subr.mxu0 0.0
    %5687 = vmatpush1.msra.mxu0 0.0
    %5688 = vmatprep.subr.mxu0 0.0
    %5689 = vmatpush1.msra.mxu0 0.0
    %5690 = vmatprep.subr.mxu0 0.0
    %5691 = vmatpush1.msra.mxu0 0.0
    %5692 = vmatprep.subr.mxu0 0.0
    %5693 = vmatpush1.msra.mxu0 0.0
    %5694 = vmatprep.subr.mxu0 0.0
    %5695 = vmatpush1.msra.mxu0 0.0
    %5696 = vmatprep.subr.mxu0 0.0
    %5697 = vmatpush1.msra.mxu0 0.0
    %5698 = vmatprep.subr.mxu0 0.0
    %5699 = vmatpush1.msra.mxu0 0.0
    %5700 = vmatprep.subr.mxu0 0.0
    %5701 = vmatpush1.msra.mxu0 0.0
    %5702 = vmatprep.subr.mxu0 0.0
    %5703 = vmatpush1.msra.mxu0 0.0
    %5704 = vmatprep.subr.mxu0 0.0
    %5705 = vmatpush1.msra.mxu0 0.0
    %5706 = vmatprep.subr.mxu0 0.0
    %5707 = vmatpush1.msra.mxu0 0.0
    %5708 = vmatprep.subr.mxu0 0.0
    %5709 = vmatpush1.msra.mxu0 0.0
    %5710 = vmatprep.subr.mxu0 0.0
    %5711 = vmatpush1.msra.mxu0 0.0
    %5712 = vmatprep.subr.mxu0 0.0
    %5713 = vmatpush1.msra.mxu0 0.0
    %5714 = vmatprep.subr.mxu0 0.0
    %5715 = vmatpush1.msra.mxu0 0.0
    %5716 = vmatprep.subr.mxu0 0.0
    %5717 = vmatpush1.msra.mxu0 0.0
    %5718 = vmatprep.subr.mxu0 0.0
    %5719 = vmatpush1.msra.mxu0 0.0
    %5720 = vmatprep.subr.mxu0 0.0
    %5721 = vmatpush1.msra.mxu0 0.0
    %5722 = vmatprep.mubr.f32.mxu0 0.0
    %5723 = vmatmul.mubr.f32.gmra.mrb[0].mxu0 %v5516
    %v5724 = vpop.f32.mrb[0].mxu0
    %v5725 = vadd.f32 %v3215, %v5724
    %v5726 = vpop.f32.mrb[0].mxu0
    %5727 = vdwg.mxu0
    %v5728 = vrot.slane %v2200, 4
    %v5730 = vadd.f32 %v2704, %v5728
    %v5732 = vrot.slane %v5585, 4
    %v5734 = vadd.f32 %v5730, %v5732
    %v5735 = vxor.u32 %v5734, 2147483648
    %v5736 = vmul.f32 %v5735, 1.442695
    %v5737 = vpow.pop %v5736
    %v5738 = vadd.f32 %v5737, 1.0
    %v5739 = vrcp.pop %v5738
    %v5740 = vmul.f32 1.0, %v5739
    %v5741 = vrot.slane %v2279, 4
    %v5743 = vadd.f32 %v2779, %v5741
    %v5745 = vrot.slane %v5655, 4
    %v5747 = vadd.f32 %v5743, %v5745
    %v5748 = vxor.u32 %v5747, 2147483648
    %v5749 = vmul.f32 %v5748, 1.442695
    %v5750 = vpow.pop %v5749
    %v5751 = vadd.f32 %v5750, 1.0
    %v5752 = vrcp.pop %v5751
    %v5753 = vmul.f32 1.0, %v5752
    %v5754 = vrot.slane %v2358, 4
    %v5756 = vadd.f32 %v2854, %v5754
    %v5758 = vrot.slane %v5725, 4
    %v5760 = vmul.f32 %v5740, %v5758
    %v5761 = vadd.f32 %v5756, %v5760
    %v5762 = vtanh.pop %v5761
    %v5764 = vrot.slane %v5762, 2
    %v5766 = vsub.f32 %v5503, %v5764
    %v5768 = vrot.slane %v5766, 6
    %v5770 = vmul.f32 %v5753, %v5768
    %v5771 = vadd.f32 %v5762, %v5770
    %vm5772 = vcmask 259076
    %5773 = vst.msk [vmem:[#allocation2 + $0x8] sm:$0x30] %vm5772, %v5771
    %5774 = vst [vmem:[#allocation3 + $0x10] sm:$0x30] %v5512
    %5775 = vst [vmem:[#allocation3 + $0x18] sm:$0x30] %v5513
    %v5776 = vld [vmem:[#allocation3] sm:$0xff]
    %v5777 = vld [vmem:[#allocation3 + $0x8] sm:$0xff]
    %v5778 = vld [vmem:[#allocation3 + $0x10] sm:$0x3f]
    %v5779 = vld [vmem:[#allocation3 + $0x18] sm:$0x3f]
    %v5780 = vld [vmem:[#allocation2] sm:$0xff]
    %v5781 = vld [vmem:[#allocation2 + $0x8] sm:$0x3f]
    %v5783 = vsel %vm288, %v5780, 0
    %v5786 = vsel %vm288, %v5781, 0
    %5788 = vmatprep.subr.mxu0 %v3338
    %5789 = vmatpush1.msra.mxu0 %v3335
    %5790 = vmatprep.subr.mxu0 %v3342
    %5791 = vmatpush1.msra.mxu0 %v3340
    %5792 = vmatprep.subr.mxu0 %v3346
    %5793 = vmatpush1.msra.mxu0 %v3344
    %5794 = vmatprep.subr.mxu0 %v3350
    %5795 = vmatpush1.msra.mxu0 %v3348
    %5796 = vmatprep.subr.mxu0 0.0
    %5797 = vmatpush1.msra.mxu0 0.0
    %5798 = vmatprep.subr.mxu0 0.0
    %5799 = vmatpush1.msra.mxu0 0.0
    %5800 = vmatprep.subr.mxu0 0.0
    %5801 = vmatpush1.msra.mxu0 0.0
    %5802 = vmatprep.subr.mxu0 0.0
    %5803 = vmatpush1.msra.mxu0 0.0
    %5804 = vmatprep.subr.mxu0 0.0
    %5805 = vmatpush1.msra.mxu0 0.0
    %5806 = vmatprep.subr.mxu0 0.0
    %5807 = vmatpush1.msra.mxu0 0.0
    %5808 = vmatprep.subr.mxu0 0.0
    %5809 = vmatpush1.msra.mxu0 0.0
    %5810 = vmatprep.subr.mxu0 0.0
    %5811 = vmatpush1.msra.mxu0 0.0
    %5812 = vmatprep.subr.mxu0 0.0
    %5813 = vmatpush1.msra.mxu0 0.0
    %5814 = vmatprep.subr.mxu0 0.0
    %5815 = vmatpush1.msra.mxu0 0.0
    %5816 = vmatprep.subr.mxu0 0.0
    %5817 = vmatpush1.msra.mxu0 0.0
    %5818 = vmatprep.subr.mxu0 0.0
    %5819 = vmatpush1.msra.mxu0 0.0
    %5820 = vmatprep.subr.mxu0 0.0
    %5821 = vmatpush1.msra.mxu0 0.0
    %5822 = vmatprep.subr.mxu0 0.0
    %5823 = vmatpush1.msra.mxu0 0.0
    %5824 = vmatprep.subr.mxu0 0.0
    %5825 = vmatpush1.msra.mxu0 0.0
    %5826 = vmatprep.subr.mxu0 0.0
    %5827 = vmatpush1.msra.mxu0 0.0
    %5828 = vmatprep.subr.mxu0 0.0
    %5829 = vmatpush1.msra.mxu0 0.0
    %5830 = vmatprep.subr.mxu0 0.0
    %5831 = vmatpush1.msra.mxu0 0.0
    %5832 = vmatprep.subr.mxu0 0.0
    %5833 = vmatpush1.msra.mxu0 0.0
    %5834 = vmatprep.subr.mxu0 0.0
    %5835 = vmatpush1.msra.mxu0 0.0
    %5836 = vmatprep.subr.mxu0 0.0
    %5837 = vmatpush1.msra.mxu0 0.0
    %5838 = vmatprep.subr.mxu0 0.0
    %5839 = vmatpush1.msra.mxu0 0.0
    %5840 = vmatprep.subr.mxu0 0.0
    %5841 = vmatpush1.msra.mxu0 0.0
    %5842 = vmatprep.subr.mxu0 0.0
    %5843 = vmatpush1.msra.mxu0 0.0
    %5844 = vmatprep.subr.mxu0 0.0
    %5845 = vmatpush1.msra.mxu0 0.0
    %5846 = vmatprep.subr.mxu0 0.0
    %5847 = vmatpush1.msra.mxu0 0.0
    %5848 = vmatprep.subr.mxu0 0.0
    %5849 = vmatpush1.msra.mxu0 0.0
    %5850 = vmatprep.subr.mxu0 0.0
    %5851 = vmatpush1.msra.mxu0 0.0
    %5852 = vmatprep.mubr.f32.mxu0 0.0
    %5853 = vmatmul.mubr.f32.gmra.mrb[0].mxu0 %v5783
    %v5854 = vpop.f32.mrb[0].mxu0
    %v5855 = vadd.f32 0.0, %v5854
    %v5856 = vpop.f32.mrb[0].mxu0
    %v5857 = vadd.f32 0.0, %v5856
    %5858 = vmatprep.mubr.f32.mxu0 0.0
    %5859 = vmatmul.mubr.f32.gmra.mrb[0].mxu0 %v5786
    %v5860 = vpop.f32.mrb[0].mxu0
    %v5861 = vadd.f32 0.0, %v5860
    %v5862 = vpop.f32.mrb[0].mxu0
    %v5863 = vadd.f32 0.0, %v5862
    %5864 = vdwg.mxu0
    %v5865 = vadd.f32 %v5776, %v5855
    %v5866 = vadd.f32 %v5777, %v5857
    %v5867 = vadd.f32 %v5778, %v5861
    %v5868 = vadd.f32 %v5779, %v5863
    %v5869 = vmax.f32 %v5865, 0.0
    %v5870 = vmax.f32 %v5866, 0.0
    %v5871 = vmax.f32 %v5867, 0.0
    %v5872 = vmax.f32 %v5868, 0.0
    %5873 = vmatprep.subr.mxu0 0.0
    %5874 = vmatpush1.msra.mxu0 %v2597
    %5875 = vmatprep.subr.mxu0 0.0
    %5876 = vmatpush1.msra.mxu0 %v2598
    %5877 = vmatprep.subr.mxu0 0.0
    %5878 = vmatpush1.msra.mxu0 %v2599
    %5879 = vmatprep.subr.mxu0 0.0
    %5880 = vmatpush1.msra.mxu0 %v2600
    %5881 = vmatprep.subr.mxu0 0.0
    %5882 = vmatpush1.msra.mxu0 %v2601
    %5883 = vmatprep.subr.mxu0 0.0
    %5884 = vmatpush1.msra.mxu0 %v2602
    %5885 = vmatprep.subr.mxu0 0.0
    %5886 = vmatpush1.msra.mxu0 %v2603
    %5887 = vmatprep.subr.mxu0 0.0
    %5888 = vmatpush1.msra.mxu0 %v2604
    %5889 = vmatprep.subr.mxu0 0.0
    %5890 = vmatpush1.msra.mxu0 %v2605
    %5891 = vmatprep.subr.mxu0 0.0
    %5892 = vmatpush1.msra.mxu0 %v2606
    %5893 = vmatprep.subr.mxu0 0.0
    %5894 = vmatpush1.msra.mxu0 %v2607
    %5895 = vmatprep.subr.mxu0 0.0
    %5896 = vmatpush1.msra.mxu0 %v2608
    %5897 = vmatprep.subr.mxu0 0.0
    %5898 = vmatpush1.msra.mxu0 %v2609
    %5899 = vmatprep.subr.mxu0 0.0
    %5900 = vmatpush1.msra.mxu0 %v2610
    %5901 = vmatprep.subr.mxu0 0.0
    %5902 = vmatpush1.msra.mxu0 %v2611
    %5903 = vmatprep.subr.mxu0 0.0
    %5904 = vmatpush1.msra.mxu0 %v2612
    %5905 = vmatprep.subr.mxu0 0.0
    %5906 = vmatpush1.msra.mxu0 %v2613
    %5907 = vmatprep.subr.mxu0 0.0
    %5908 = vmatpush1.msra.mxu0 %v2614
    %5909 = vmatprep.subr.mxu0 0.0
    %5910 = vmatpush1.msra.mxu0 %v2615
    %5911 = vmatprep.subr.mxu0 0.0
    %5912 = vmatpush1.msra.mxu0 %v2616
    %5913 = vmatprep.subr.mxu0 0.0
    %5914 = vmatpush1.msra.mxu0 %v2617
    %5915 = vmatprep.subr.mxu0 0.0
    %5916 = vmatpush1.msra.mxu0 %v2618
    %5917 = vmatprep.subr.mxu0 0.0
    %5918 = vmatpush1.msra.mxu0 %v2619
    %5919 = vmatprep.subr.mxu0 0.0
    %5920 = vmatpush1.msra.mxu0 %v2620
    %5921 = vmatprep.subr.mxu0 0.0
    %5922 = vmatpush1.msra.mxu0 %v2621
    %5923 = vmatprep.subr.mxu0 0.0
    %5924 = vmatpush1.msra.mxu0 %v2622
    %5925 = vmatprep.subr.mxu0 0.0
    %5926 = vmatpush1.msra.mxu0 %v2623
    %5927 = vmatprep.subr.mxu0 0.0
    %5928 = vmatpush1.msra.mxu0 %v2624
    %5929 = vmatprep.subr.mxu0 0.0
    %5930 = vmatpush1.msra.mxu0 %v2625
    %5931 = vmatprep.subr.mxu0 0.0
    %5932 = vmatpush1.msra.mxu0 %v2626
    %5933 = vmatprep.subr.mxu0 0.0
    %5934 = vmatpush1.msra.mxu0 %v2627
    %5935 = vmatprep.subr.mxu0 0.0
    %5936 = vmatpush1.msra.mxu0 %v2628
    %5937 = vmatprep.mubr.f32.mxu0 %v5870
    %5938 = vmatmul.mubr.f32.gmra.mrb[0].mxu0 %v5869
    %v5939 = vpop.f32.mrb[0].mxu0
    %v5940 = vadd.f32 %v3440, %v5939
    %v5941 = vpop.f32.mrb[0].mxu0
    %5942 = vmatprep.mubr.f32.mxu0 %v5872
    %5943 = vmatmul.mubr.f32.gmra.mrb[0].mxu0 %v5871
    %v5944 = vpop.f32.mrb[0].mxu0
    %v5945 = vadd.f32 %v3440, %v5944
    %v5946 = vpop.f32.mrb[0].mxu0
    %5947 = vdwg.mxu0
    %5948 = vmax.xlane.f32.xlu0 %v5940
    %v5949 = vpop.xlane.xlu0 %5948
    %vm5950 = vcmask 1045504
    %v5951 = vsel %vm5950, %v5945, -inf
    %5952 = vmax.xlane.f32.xlu0 %v5951
    %v5953 = vpop.xlane.xlu0 %5952
    %v5954 = vsub.f32 %v5940, %v5949
    %v5955 = vsub.f32 %v5945, %v5953
    %v5956 = vmul.f32 %v5954, 1.442695
    %v5957 = vpow.pop %v5956
    %v5958 = vmul.f32 %v5955, 1.442695
    %v5959 = vpow.pop %v5958
    %5960 = vadd.xlane.f32.xlu0 %v5957
    %v5961 = vpop.xlane.xlu0 %5960
    %v5962 = vsel %vm5950, %v5959, 0.0
    %5963 = vadd.xlane.f32.xlu0 %v5962
    %v5964 = vpop.xlane.xlu0 %5963
    %v5965 = vlog2.pop %v5961
    %v5966 = vmul.f32 %v5965, 0.6931472
    %v5967 = vlog2.pop %v5964
    %v5968 = vmul.f32 %v5967, 0.6931472
    %v5969 = vadd.f32 %v5949, %v5966
    %v5970 = vadd.f32 %v5953, %v5968
    %v5973 = vrot.slane %v5940, 6
    %v5974 = vrot.slane %v5945, 6
    %v5975 = vsel %vm45, %v5973, %v5974
    %v5978 = vmul.f32 %v2630, %v5973
    %v5979 = vmul.f32 %v2631, %v5975
    %vm5980 = vcmask 1047554
    %v5981 = vsel %vm5980, %v5978, 0.0
    %5982 = vadd.xlane.f32.xlu0 %v5981
    %v5983 = vpop.xlane.xlu0 %5982
    %5984 = vadd.xlane.f32.xlu0 %v5979
    %v5985 = vpop.xlane.xlu0 %5984
    %v5988 = vrot.slane %v5983, 2
    %v5989 = vrot.slane %v5985, 2
    %v5990 = vsel %vm5950, %v5988, %v5989
    %v5993 = vsub.f32 %v5969, %v5990
    %v5994 = vsub.f32 %v5970, %v5989
    %vm5995 = vcmask 7168
    %v5996 = vsel %vm5995, %v5993, 0.0
    %vm5997 = vcmask 5120
    %v5998 = vsel %vm5997, %v5994, 0.0
    %v5999 = vadd.f32 %v5996, %v5998
    %v6000 = vrot.slane %v5999, 4
    %v6001 = vadd.f32 %v5999, %v6000
    %v6002 = vrot.slane %v6001, 2
    %v6003 = vadd.f32 %v6001, %v6002
    %v6004 = vrot.slane %v6003, 1
    %v6005 = vadd.f32 %v6003, %v6004
    %v6006 = vrcp.pop 14.0
    %v6007 = vmul.f32 %v6005, %v6006
    %vm6008 = vcmask 0
    %6009 = vst.msk [vmem:[#allocation4] sm:$0x1] %vm6008, %v6007
    // Predicated region
    $region22: #{model_forward.1} parent=1 // pred_check
      _
    $region23: #{model_forward.1} parent=1 // pred_check_branch
      %6011 = sbr.rel (0) target = $region25
    $region24: #{model_forward.1} parent=1 // pred_region
      %s6013 = ssub.s32 16, 16
      %6014 = vsyncadd [#allocation5], %s6013
      %s6016 = sshll.u32 [#allocation4], 4
      %s6017 = int_to_ptr.vmem [resolvable:$true] %s6016
      %6019 = dma.vmem_to_hbm [thread:$0]  %s6017, 16, %s5, [#allocation5]
    $region25: #{model_forward.1} parent=1 // pred_fallthru
      _
    // Predicated region
    $region26: #{model_forward.1} parent=1 // pred_check
      _
    $region27: #{model_forward.1} parent=1 // pred_check_branch
      %6021 = sbr.rel (0) target = $region29
    $region28: #{model_forward.1} parent=1 // pred_region
      %6022 = dma.done [#allocation5], 16
    $region29: #{model_forward.1} parent=1 // pred_fallthru
      _
    %6023 = vsyncpa [#allocation5], 1

</llo_original>
